<compile_context>
chip_gen: v6e
topology: v6e:2x2x1
jax: 0.10.0
libtpu: 0.0.40
codegen_flags: <defaults>
</compile_context>

<pallas_src>
import functools

import jax
import jax.numpy as jnp
import numpy as np
from jax.experimental import pallas as pl
from jax.experimental.pallas import tpu as pltpu


# ----------------------------- Pallas kernel ------------------------------ #
def _fused_matmul_kernel(x_ref, w_ref, shift_ref, o_ref, acc_ref, *, activation):
    # bf16 (tm, tk) @ (tk, tn) on the MXU, accumulated in f32; fused per-channel
    # shift + activation epilogue in f32 on the VPU/EUP (f32 kept for v5e).
    @pl.when(pl.program_id(2) == 0)
    def _():
        acc_ref[...] = jnp.zeros_like(acc_ref)

    acc_ref[...] += jnp.dot(x_ref[...], w_ref[...],
                            preferred_element_type=jnp.float32)

    @pl.when(pl.program_id(2) == pl.num_programs(2) - 1)
    def _():
        y = acc_ref[...] + shift_ref[...]
        if activation == "relu":
            y = jnp.maximum(y, 0.0)
        elif activation == "tanh":
            y = jnp.tanh(y)
        o_ref[...] = y.astype(o_ref.dtype)


def _choose_tm(M):
    if M >= 1024:
        return 512
    if M >= 128 and (M // 2) % 8 == 0:
        return M // 2          # >=2 parallel M steps for megacore / pipelining
    return M                   # tiny layers: one full-M tile (no row padding)


def _choose_tk(K):
    if K <= 1024:
        return K
    for cand in (1024, 512, 256, 128):
        if K % cand == 0:
            return cand
    return K


def fused_matmul(patches, wmat, shift, activation):
    """out = act(patches @ wmat + shift), tiled over (M, N, K).

    patches: (M, K) bf16, wmat: (K, N) bf16 (scale already folded in, N % 128 == 0),
    shift: (N,) f32. Returns (M, N) f32.
    """
    M, K = patches.shape
    K2, N = wmat.shape
    assert K == K2 and N % 128 == 0 and shift.shape == (N,)

    tm = _choose_tm(M)
    tn = 128
    tk = _choose_tk(K)

    Mp = pl.cdiv(M, tm) * tm
    if Mp != M:  # pad rows so the grid divides evenly; padded rows are discarded
        patches = jnp.pad(patches, ((0, Mp - M), (0, 0)))

    out = pl.pallas_call(
        functools.partial(_fused_matmul_kernel, activation=activation),
        out_shape=jax.ShapeDtypeStruct((Mp, N), jnp.float32),
        grid=(Mp // tm, N // tn, K // tk),
        in_specs=[
            pl.BlockSpec((tm, tk), lambda i, j, k: (i, k)),   # patches tile (bf16)
            pl.BlockSpec((tk, tn), lambda i, j, k: (k, j)),   # weight tile (bf16)
            pl.BlockSpec((1, tn), lambda i, j, k: (0, j)),    # per-channel shift (f32)
        ],
        out_specs=pl.BlockSpec((tm, tn), lambda i, j, k: (i, j)),
        scratch_shapes=[pltpu.VMEM((tm, tn), jnp.float32)],
        compiler_params=pltpu.CompilerParams(
            dimension_semantics=("parallel", "parallel", "arbitrary")),
    )(patches, wmat, shift.reshape(1, N).astype(jnp.float32))
    return out[:M]


# --------------------------- ConvTranspose2d glue -------------------------- #
def conv_transpose_layer(x, W, k, s, p, scale, shift, activation):
    """x: (B, H, W, Cin) NHWC; W: (Cin, Cout, k, k) (PyTorch ConvTranspose2d layout)."""
    B, H, Wd, Cin = x.shape
    Cout = W.shape[1]

    # ConvTranspose2d == standard conv on the zero-dilated input with pad k-1-p
    # and the spatially-flipped, channel-transposed kernel. Cast to bf16 early so
    # the materialized im2col carries half the HBM bytes.
    xd = x.astype(jnp.bfloat16)
    if s > 1:
        Hd, Wdd = (H - 1) * s + 1, (Wd - 1) * s + 1
        xd = jnp.zeros((B, Hd, Wdd, Cin), xd.dtype).at[:, ::s, ::s, :].set(xd)
    pad = k - 1 - p
    if pad > 0:
        xd = jnp.pad(xd, ((0, 0), (pad, pad), (pad, pad), (0, 0)))
    elif pad < 0:
        xd = xd[:, -pad:pad, -pad:pad, :]

    _, Hp, Wp, _ = xd.shape
    Ho, Wo = Hp - k + 1, Wp - k + 1

    # im2col in NHWC: columns ordered as (a, b, ci) — channels-last, no transpose.
    cols = [xd[:, a:a + Ho, b:b + Wo, :] for a in range(k) for b in range(k)]
    pmat = jnp.stack(cols, axis=3).reshape(B * Ho * Wo, k * k * Cin)

    # Wmat[(a, b, ci), co] = W[ci, co, k-1-a, k-1-b]; fold the per-channel BN/bias
    # scale into the weights and zero-pad Cout to a lane-dense multiple of 128.
    wmat = jnp.flip(W, axis=(2, 3)).transpose(2, 3, 0, 1).reshape(k * k * Cin, Cout)
    wmat = wmat * scale[None, :]
    Np = pl.cdiv(Cout, 128) * 128
    if Np != Cout:
        wmat = jnp.pad(wmat, ((0, 0), (0, Np - Cout)))    # padded cols -> exact zeros
        shift = jnp.pad(shift, (0, Np - Cout))

    out = fused_matmul(pmat, wmat.astype(jnp.bfloat16), shift, activation)  # (M, Np)
    return out[:, :Cout].reshape(B, Ho, Wo, Cout)          # stays NHWC


# ------------------------------- Parameters -------------------------------- #
def layer_specs(ch=1, nz=64, nf=32):
    # (Cin, Cout, kernel, stride, padding) per ConvTranspose2d in Decoder.main
    return ((nz,     nf * 8, 4, 1, 0),
            (nf * 8, nf * 4, 4, 2, 1),
            (nf * 4, nf * 2, 4, 2, 1),
            (nf * 2, nf,     4, 2, 1),
            (nf,     ch,     1, 1, 2))


def init_params(key, specs):
    layers = []
    keys = jax.random.split(key, len(specs))
    for (cin, cout, k, s, p), kk in zip(specs, keys):
        k1, k2, k3, k4, k5, k6 = jax.random.split(kk, 6)
        layers.append(dict(
            W=0.02 * jax.random.normal(k1, (cin, cout, k, k), jnp.float32),
            b=0.02 * jax.random.normal(k2, (cout,), jnp.float32),
            gamma=1.0 + 0.1 * jax.random.normal(k3, (cout,), jnp.float32),
            beta=0.1 * jax.random.normal(k4, (cout,), jnp.float32),
            mean=0.1 * jax.random.normal(k5, (cout,), jnp.float32),
            var=1.0 + 0.1 * jnp.abs(jax.random.normal(k6, (cout,), jnp.float32)),
        ))
    return layers


# ------------------------------ Decoder forward ---------------------------- #
def decoder_forward(x, params, specs, eps=1e-5):
    """x: (B, nz, 1, 1) NCHW latent. Returns (B, ch, Hout, Wout) NCHW."""
    h = jnp.transpose(x, (0, 2, 3, 1))                     # NHWC internally
    n = len(specs)
    for idx, (L, (cin, cout, k, s, p)) in enumerate(zip(params, specs)):
        if idx == n - 1:
            # Final ConvTranspose2d(k=1, s=1, p) + Tanh == central crop by p, then a
            # per-pixel Cin->Cout channel mix + bias + tanh. Kept in plain JAX (VPU
            # reduction) per perf review: Cout=1 would give ~1/256 MXU column
            # utilization and 1-lane masked stores.
            assert k == 1 and s == 1 and p >= 0
            if p > 0:
                h = h[:, p:h.shape[1] - p, p:h.shape[2] - p, :]
            w = L["W"][:, :, 0, 0]                          # (Cin, Cout)
            h = jnp.tanh(jnp.einsum("bhwc,cd->bhwd", h, w) + L["b"])
        else:
            # ConvTranspose2d + BatchNorm2d (eval) + ReLU, BN folded to scale/shift.
            inv_std = 1.0 / jnp.sqrt(L["var"] + eps)
            scale = L["gamma"] * inv_std
            shift = (L["b"] - L["mean"]) * scale + L["beta"]
            h = conv_transpose_layer(h, L["W"], k, s, p, scale, shift, "relu")
    return jnp.transpose(h, (0, 3, 1, 2))                   # back to NCHW


# --------------------------- Pure-JAX reference ----------------------------- #
def decoder_ref(x, params, specs, eps=1e-5):
    n = len(specs)
    for idx, (L, (cin, cout, k, s, p)) in enumerate(zip(params, specs)):
        Wc = jnp.flip(L["W"], (2, 3)).transpose(1, 0, 2, 3)  # (Cout, Cin, k, k)
        pad = k - 1 - p
        xi = x
        if pad < 0:
            xi = xi[:, :, -pad:pad, -pad:pad]
            pad = 0
        y = jax.lax.conv_general_dilated(
            xi, Wc, window_strides=(1, 1), padding=[(pad, pad), (pad, pad)],
            lhs_dilation=(s, s), dimension_numbers=("NCHW", "OIHW", "NCHW"))
        y = y + L["b"][None, :, None, None]
        if idx == n - 1:
            x = jnp.tanh(y)
        else:
            inv_std = 1.0 / jnp.sqrt(L["var"] + eps)
            y = (y - L["mean"][None, :, None, None]) * (L["gamma"] * inv_std)[None, :, None, None] \
                + L["beta"][None, :, None, None]
            x = jnp.maximum(y, 0.0)
    return x


if __name__ == "__main__":
    key = jax.random.PRNGKey(0)
    kx, kp = jax.random.split(key)

    B, ch, nz, nf = 2, 1, 64, 32
    specs = layer_specs(ch=ch, nz=nz, nf=nf)
    x = jax.random.normal(kx, (B, nz, 1, 1), jnp.float32)   # latent code, NCHW
    params = init_params(kp, specs)

    fwd = jax.jit(decoder_forward, static_argnums=2)
    out = jax.block_until_ready(fwd(x, params, specs))
    assert out.shape == (B, ch, 28, 28), out.shape

    ref = jax.block_until_ready(decoder_ref(x, params, specs))
    np.testing.assert_allclose(np.asarray(out), np.asarray(ref), atol=3e-2, rtol=3e-2)

    print("KERNEL_OK")
</pallas_src>

<mosaic_0001>
module attributes {stable_mosaic.version = 11 : i64} {
  func.func @_fused_matmul_kernel(%arg0: i32, %arg1: i32, %arg2: i32, %arg3: memref<32x1024xbf16, #tpu.memory_space<vmem>>, %arg4: memref<1024x128xbf16, #tpu.memory_space<vmem>>, %arg5: memref<1x128xf32, #tpu.memory_space<vmem>>, %arg6: memref<32x128xf32, #tpu.memory_space<vmem>>, %arg7: memref<32x128xf32, #tpu.memory_space<vmem>>) attributes {dimension_semantics = [#tpu.dimension_semantics<parallel>, #tpu.dimension_semantics<parallel>, #tpu.dimension_semantics<arbitrary>], iteration_bounds = array<i64: 1, 2, 1>, scalar_prefetch = 0 : i64, scratch_operands = 1 : i64, tpu.core_type = #tpu.core_type<tc>, window_params = [{transform_indices = @transform_0, window_bounds = array<i64: 32, 1024>}, {transform_indices = @transform_1, window_bounds = array<i64: 1024, 128>}, {transform_indices = @transform_2, window_bounds = array<i64: 1, 128>}, {transform_indices = @transform_3, window_bounds = array<i64: 32, 128>}]} {
    %c0_i32 = arith.constant 0 : i32
    %0 = arith.cmpi eq, %arg2, %c0_i32 : i32
    %1 = arith.extui %0 : i1 to i32
    %c0_i32_0 = arith.constant 0 : i32
    %2 = arith.cmpi ne, %1, %c0_i32_0 : i32
    scf.if %2 {
      %cst_10 = arith.constant 0.000000e+00 : f32
      %12 = vector.broadcast %cst_10 : f32 to vector<32x128xf32>
      %c0_11 = arith.constant 0 : index
      %c0_12 = arith.constant 0 : index
      %13 = vector.load %arg7[%c0_11, %c0_12] : memref<32x128xf32, #tpu.memory_space<vmem>>, vector<32x128xf32>
      tpu.vector_store %arg7[%c0_11, %c0_12], %12 {strides = array<i32>} : memref<32x128xf32, #tpu.memory_space<vmem>>, vector<32x128xf32>,
    } else {
    }
    %c0 = arith.constant 0 : index
    %c0_1 = arith.constant 0 : index
    %3 = vector.load %arg7[%c0, %c0_1] : memref<32x128xf32, #tpu.memory_space<vmem>>, vector<32x128xf32>
    %c0_2 = arith.constant 0 : index
    %c0_3 = arith.constant 0 : index
    %4 = vector.load %arg3[%c0_2, %c0_3] : memref<32x1024xbf16, #tpu.memory_space<vmem>>, vector<32x1024xbf16>
    %c0_4 = arith.constant 0 : index
    %c0_5 = arith.constant 0 : index
    %5 = vector.load %arg4[%c0_4, %c0_5] : memref<1024x128xbf16, #tpu.memory_space<vmem>>, vector<1024x128xbf16>
    %cst = arith.constant dense<0.000000e+00> : vector<32x128xf32>
    %6 = tpu.matmul %4, %5, %cst {dimension_numbers = #tpu.dot_dimension_numbers<[1], [0], [0], [1], [0, 0, 1, 1], [], []>} : vector<32x1024xbf16>, vector<1024x128xbf16>, vector<32x128xf32> -> vector<32x128xf32>
    %7 = arith.addf %3, %6 : vector<32x128xf32>
    %c0_6 = arith.constant 0 : index
    %c0_7 = arith.constant 0 : index
    %8 = vector.load %arg7[%c0_6, %c0_7] : memref<32x128xf32, #tpu.memory_space<vmem>>, vector<32x128xf32>
    tpu.vector_store %arg7[%c0_6, %c0_7], %7 {strides = array<i32>} : memref<32x128xf32, #tpu.memory_space<vmem>>, vector<32x128xf32>,
    %c0_i32_8 = arith.constant 0 : i32
    %9 = arith.cmpi eq, %arg2, %c0_i32_8 : i32
    %10 = arith.extui %9 : i1 to i32
    %c0_i32_9 = arith.constant 0 : i32
    %11 = arith.cmpi ne, %10, %c0_i32_9 : i32
    scf.if %11 {
      %c0_10 = arith.constant 0 : index
      %c0_11 = arith.constant 0 : index
      %12 = vector.load %arg7[%c0_10, %c0_11] : memref<32x128xf32, #tpu.memory_space<vmem>>, vector<32x128xf32>
      %c0_12 = arith.constant 0 : index
      %c0_13 = arith.constant 0 : index
      %13 = vector.load %arg5[%c0_12, %c0_13] : memref<1x128xf32, #tpu.memory_space<vmem>>, vector<1x128xf32>
      %14 = vector.broadcast %13 : vector<1x128xf32> to vector<32x128xf32>
      %15 = arith.addf %12, %14 : vector<32x128xf32>
      %cst_14 = arith.constant 0.000000e+00 : f32
      %16 = vector.broadcast %cst_14 : f32 to vector<32x128xf32>
      %17 = arith.maximumf %15, %16 : vector<32x128xf32>
      %c0_15 = arith.constant 0 : index
      %c0_16 = arith.constant 0 : index
      %18 = vector.load %arg6[%c0_15, %c0_16] : memref<32x128xf32, #tpu.memory_space<vmem>>, vector<32x128xf32>
      tpu.vector_store %arg6[%c0_15, %c0_16], %17 {strides = array<i32>} : memref<32x128xf32, #tpu.memory_space<vmem>>, vector<32x128xf32>,
    } else {
    }
    return
  }
  func.func @transform_0(%arg0: i32, %arg1: i32, %arg2: i32) -> (i32, i32) {
    %c0_i32 = arith.constant 0 : i32
    return %arg0, %arg2 : i32, i32
  }
  func.func @transform_1(%arg0: i32, %arg1: i32, %arg2: i32) -> (i32, i32) {
    %c0_i32 = arith.constant 0 : i32
    return %arg2, %arg1 : i32, i32
  }
  func.func @transform_2(%arg0: i32, %arg1: i32, %arg2: i32) -> (i32, i32) {
    %c0_i32 = arith.constant 0 : i32
    %c0_i32_0 = arith.constant 0 : i32
    return %c0_i32, %arg1 : i32, i32
  }
  func.func @transform_3(%arg0: i32, %arg1: i32, %arg2: i32) -> (i32, i32) {
    %c0_i32 = arith.constant 0 : i32
    return %arg0, %arg1 : i32, i32
  }
}

module attributes {stable_mosaic.version = 11 : i64} {
  func.func @_fused_matmul_kernel(%arg0: i32, %arg1: i32, %arg2: i32, %arg3: memref<64x1024xbf16, #tpu.memory_space<vmem>>, %arg4: memref<1024x128xbf16, #tpu.memory_space<vmem>>, %arg5: memref<1x128xf32, #tpu.memory_space<vmem>>, %arg6: memref<64x128xf32, #tpu.memory_space<vmem>>, %arg7: memref<64x128xf32, #tpu.memory_space<vmem>>) attributes {dimension_semantics = [#tpu.dimension_semantics<parallel>, #tpu.dimension_semantics<parallel>, #tpu.dimension_semantics<arbitrary>], iteration_bounds = array<i64: 2, 1, 4>, scalar_prefetch = 0 : i64, scratch_operands = 1 : i64, tpu.core_type = #tpu.core_type<tc>, window_params = [{transform_indices = @transform_0, window_bounds = array<i64: 64, 1024>}, {transform_indices = @transform_1, window_bounds = array<i64: 1024, 128>}, {transform_indices = @transform_2, window_bounds = array<i64: 1, 128>}, {transform_indices = @transform_3, window_bounds = array<i64: 64, 128>}]} {
    %c0_i32 = arith.constant 0 : i32
    %0 = arith.cmpi eq, %arg2, %c0_i32 : i32
    %1 = arith.extui %0 : i1 to i32
    %c0_i32_0 = arith.constant 0 : i32
    %2 = arith.cmpi ne, %1, %c0_i32_0 : i32
    scf.if %2 {
      %cst_9 = arith.constant 0.000000e+00 : f32
      %12 = vector.broadcast %cst_9 : f32 to vector<64x128xf32>
      %c0_10 = arith.constant 0 : index
      %c0_11 = arith.constant 0 : index
      %13 = vector.load %arg7[%c0_10, %c0_11] : memref<64x128xf32, #tpu.memory_space<vmem>>, vector<64x128xf32>
      tpu.vector_store %arg7[%c0_10, %c0_11], %12 {strides = array<i32>} : memref<64x128xf32, #tpu.memory_space<vmem>>, vector<64x128xf32>,
    } else {
    }
    %c0 = arith.constant 0 : index
    %c0_1 = arith.constant 0 : index
    %3 = vector.load %arg7[%c0, %c0_1] : memref<64x128xf32, #tpu.memory_space<vmem>>, vector<64x128xf32>
    %c0_2 = arith.constant 0 : index
    %c0_3 = arith.constant 0 : index
    %4 = vector.load %arg3[%c0_2, %c0_3] : memref<64x1024xbf16, #tpu.memory_space<vmem>>, vector<64x1024xbf16>
    %c0_4 = arith.constant 0 : index
    %c0_5 = arith.constant 0 : index
    %5 = vector.load %arg4[%c0_4, %c0_5] : memref<1024x128xbf16, #tpu.memory_space<vmem>>, vector<1024x128xbf16>
    %cst = arith.constant dense<0.000000e+00> : vector<64x128xf32>
    %6 = tpu.matmul %4, %5, %cst {dimension_numbers = #tpu.dot_dimension_numbers<[1], [0], [0], [1], [0, 0, 1, 1], [], []>} : vector<64x1024xbf16>, vector<1024x128xbf16>, vector<64x128xf32> -> vector<64x128xf32>
    %7 = arith.addf %3, %6 : vector<64x128xf32>
    %c0_6 = arith.constant 0 : index
    %c0_7 = arith.constant 0 : index
    %8 = vector.load %arg7[%c0_6, %c0_7] : memref<64x128xf32, #tpu.memory_space<vmem>>, vector<64x128xf32>
    tpu.vector_store %arg7[%c0_6, %c0_7], %7 {strides = array<i32>} : memref<64x128xf32, #tpu.memory_space<vmem>>, vector<64x128xf32>,
    %c3_i32 = arith.constant 3 : i32
    %9 = arith.cmpi eq, %arg2, %c3_i32 : i32
    %10 = arith.extui %9 : i1 to i32
    %c0_i32_8 = arith.constant 0 : i32
    %11 = arith.cmpi ne, %10, %c0_i32_8 : i32
    scf.if %11 {
      %c0_9 = arith.constant 0 : index
      %c0_10 = arith.constant 0 : index
      %12 = vector.load %arg7[%c0_9, %c0_10] : memref<64x128xf32, #tpu.memory_space<vmem>>, vector<64x128xf32>
      %c0_11 = arith.constant 0 : index
      %c0_12 = arith.constant 0 : index
      %13 = vector.load %arg5[%c0_11, %c0_12] : memref<1x128xf32, #tpu.memory_space<vmem>>, vector<1x128xf32>
      %14 = vector.broadcast %13 : vector<1x128xf32> to vector<64x128xf32>
      %15 = arith.addf %12, %14 : vector<64x128xf32>
      %cst_13 = arith.constant 0.000000e+00 : f32
      %16 = vector.broadcast %cst_13 : f32 to vector<64x128xf32>
      %17 = arith.maximumf %15, %16 : vector<64x128xf32>
      %c0_14 = arith.constant 0 : index
      %c0_15 = arith.constant 0 : index
      %18 = vector.load %arg6[%c0_14, %c0_15] : memref<64x128xf32, #tpu.memory_space<vmem>>, vector<64x128xf32>
      tpu.vector_store %arg6[%c0_14, %c0_15], %17 {strides = array<i32>} : memref<64x128xf32, #tpu.memory_space<vmem>>, vector<64x128xf32>,
    } else {
    }
    return
  }
  func.func @transform_0(%arg0: i32, %arg1: i32, %arg2: i32) -> (i32, i32) {
    %c0_i32 = arith.constant 0 : i32
    return %arg0, %arg2 : i32, i32
  }
  func.func @transform_1(%arg0: i32, %arg1: i32, %arg2: i32) -> (i32, i32) {
    %c0_i32 = arith.constant 0 : i32
    return %arg2, %arg1 : i32, i32
  }
  func.func @transform_2(%arg0: i32, %arg1: i32, %arg2: i32) -> (i32, i32) {
    %c0_i32 = arith.constant 0 : i32
    %c0_i32_0 = arith.constant 0 : i32
    return %c0_i32, %arg1 : i32, i32
  }
  func.func @transform_3(%arg0: i32, %arg1: i32, %arg2: i32) -> (i32, i32) {
    %c0_i32 = arith.constant 0 : i32
    return %arg0, %arg1 : i32, i32
  }
}

module attributes {stable_mosaic.version = 11 : i64} {
  func.func @_fused_matmul_kernel(%arg0: i32, %arg1: i32, %arg2: i32, %arg3: memref<256x1024xbf16, #tpu.memory_space<vmem>>, %arg4: memref<1024x128xbf16, #tpu.memory_space<vmem>>, %arg5: memref<1x128xf32, #tpu.memory_space<vmem>>, %arg6: memref<256x128xf32, #tpu.memory_space<vmem>>, %arg7: memref<256x128xf32, #tpu.memory_space<vmem>>) attributes {dimension_semantics = [#tpu.dimension_semantics<parallel>, #tpu.dimension_semantics<parallel>, #tpu.dimension_semantics<arbitrary>], iteration_bounds = array<i64: 2, 1, 2>, scalar_prefetch = 0 : i64, scratch_operands = 1 : i64, tpu.core_type = #tpu.core_type<tc>, window_params = [{transform_indices = @transform_0, window_bounds = array<i64: 256, 1024>}, {transform_indices = @transform_1, window_bounds = array<i64: 1024, 128>}, {transform_indices = @transform_2, window_bounds = array<i64: 1, 128>}, {transform_indices = @transform_3, window_bounds = array<i64: 256, 128>}]} {
    %c0_i32 = arith.constant 0 : i32
    %0 = arith.cmpi eq, %arg2, %c0_i32 : i32
    %1 = arith.extui %0 : i1 to i32
    %c0_i32_0 = arith.constant 0 : i32
    %2 = arith.cmpi ne, %1, %c0_i32_0 : i32
    scf.if %2 {
      %cst_9 = arith.constant 0.000000e+00 : f32
      %12 = vector.broadcast %cst_9 : f32 to vector<256x128xf32>
      %c0_10 = arith.constant 0 : index
      %c0_11 = arith.constant 0 : index
      %13 = vector.load %arg7[%c0_10, %c0_11] : memref<256x128xf32, #tpu.memory_space<vmem>>, vector<256x128xf32>
      tpu.vector_store %arg7[%c0_10, %c0_11], %12 {strides = array<i32>} : memref<256x128xf32, #tpu.memory_space<vmem>>, vector<256x128xf32>,
    } else {
    }
    %c0 = arith.constant 0 : index
    %c0_1 = arith.constant 0 : index
    %3 = vector.load %arg7[%c0, %c0_1] : memref<256x128xf32, #tpu.memory_space<vmem>>, vector<256x128xf32>
    %c0_2 = arith.constant 0 : index
    %c0_3 = arith.constant 0 : index
    %4 = vector.load %arg3[%c0_2, %c0_3] : memref<256x1024xbf16, #tpu.memory_space<vmem>>, vector<256x1024xbf16>
    %c0_4 = arith.constant 0 : index
    %c0_5 = arith.constant 0 : index
    %5 = vector.load %arg4[%c0_4, %c0_5] : memref<1024x128xbf16, #tpu.memory_space<vmem>>, vector<1024x128xbf16>
    %cst = arith.constant dense<0.000000e+00> : vector<256x128xf32>
    %6 = tpu.matmul %4, %5, %cst {dimension_numbers = #tpu.dot_dimension_numbers<[1], [0], [0], [1], [0, 0, 1, 1], [], []>} : vector<256x1024xbf16>, vector<1024x128xbf16>, vector<256x128xf32> -> vector<256x128xf32>
    %7 = arith.addf %3, %6 : vector<256x128xf32>
    %c0_6 = arith.constant 0 : index
    %c0_7 = arith.constant 0 : index
    %8 = vector.load %arg7[%c0_6, %c0_7] : memref<256x128xf32, #tpu.memory_space<vmem>>, vector<256x128xf32>
    tpu.vector_store %arg7[%c0_6, %c0_7], %7 {strides = array<i32>} : memref<256x128xf32, #tpu.memory_space<vmem>>, vector<256x128xf32>,
    %c1_i32 = arith.constant 1 : i32
    %9 = arith.cmpi eq, %arg2, %c1_i32 : i32
    %10 = arith.extui %9 : i1 to i32
    %c0_i32_8 = arith.constant 0 : i32
    %11 = arith.cmpi ne, %10, %c0_i32_8 : i32
    scf.if %11 {
      %c0_9 = arith.constant 0 : index
      %c0_10 = arith.constant 0 : index
      %12 = vector.load %arg7[%c0_9, %c0_10] : memref<256x128xf32, #tpu.memory_space<vmem>>, vector<256x128xf32>
      %c0_11 = arith.constant 0 : index
      %c0_12 = arith.constant 0 : index
      %13 = vector.load %arg5[%c0_11, %c0_12] : memref<1x128xf32, #tpu.memory_space<vmem>>, vector<1x128xf32>
      %14 = vector.broadcast %13 : vector<1x128xf32> to vector<256x128xf32>
      %15 = arith.addf %12, %14 : vector<256x128xf32>
      %cst_13 = arith.constant 0.000000e+00 : f32
      %16 = vector.broadcast %cst_13 : f32 to vector<256x128xf32>
      %17 = arith.maximumf %15, %16 : vector<256x128xf32>
      %c0_14 = arith.constant 0 : index
      %c0_15 = arith.constant 0 : index
      %18 = vector.load %arg6[%c0_14, %c0_15] : memref<256x128xf32, #tpu.memory_space<vmem>>, vector<256x128xf32>
      tpu.vector_store %arg6[%c0_14, %c0_15], %17 {strides = array<i32>} : memref<256x128xf32, #tpu.memory_space<vmem>>, vector<256x128xf32>,
    } else {
    }
    return
  }
  func.func @transform_0(%arg0: i32, %arg1: i32, %arg2: i32) -> (i32, i32) {
    %c0_i32 = arith.constant 0 : i32
    return %arg0, %arg2 : i32, i32
  }
  func.func @transform_1(%arg0: i32, %arg1: i32, %arg2: i32) -> (i32, i32) {
    %c0_i32 = arith.constant 0 : i32
    return %arg2, %arg1 : i32, i32
  }
  func.func @transform_2(%arg0: i32, %arg1: i32, %arg2: i32) -> (i32, i32) {
    %c0_i32 = arith.constant 0 : i32
    %c0_i32_0 = arith.constant 0 : i32
    return %c0_i32, %arg1 : i32, i32
  }
  func.func @transform_3(%arg0: i32, %arg1: i32, %arg2: i32) -> (i32, i32) {
    %c0_i32 = arith.constant 0 : i32
    return %arg0, %arg1 : i32, i32
  }
}

module attributes {stable_mosaic.version = 11 : i64} {
  func.func @_fused_matmul_kernel(%arg0: i32, %arg1: i32, %arg2: i32, %arg3: memref<512x1024xbf16, #tpu.memory_space<vmem>>, %arg4: memref<1024x128xbf16, #tpu.memory_space<vmem>>, %arg5: memref<1x128xf32, #tpu.memory_space<vmem>>, %arg6: memref<512x128xf32, #tpu.memory_space<vmem>>, %arg7: memref<512x128xf32, #tpu.memory_space<vmem>>) attributes {dimension_semantics = [#tpu.dimension_semantics<parallel>, #tpu.dimension_semantics<parallel>, #tpu.dimension_semantics<arbitrary>], iteration_bounds = array<i64: 4, 1, 1>, scalar_prefetch = 0 : i64, scratch_operands = 1 : i64, tpu.core_type = #tpu.core_type<tc>, window_params = [{transform_indices = @transform_0, window_bounds = array<i64: 512, 1024>}, {transform_indices = @transform_1, window_bounds = array<i64: 1024, 128>}, {transform_indices = @transform_2, window_bounds = array<i64: 1, 128>}, {transform_indices = @transform_3, window_bounds = array<i64: 512, 128>}]} {
    %c0_i32 = arith.constant 0 : i32
    %0 = arith.cmpi eq, %arg2, %c0_i32 : i32
    %1 = arith.extui %0 : i1 to i32
    %c0_i32_0 = arith.constant 0 : i32
    %2 = arith.cmpi ne, %1, %c0_i32_0 : i32
    scf.if %2 {
      %cst_10 = arith.constant 0.000000e+00 : f32
      %12 = vector.broadcast %cst_10 : f32 to vector<512x128xf32>
      %c0_11 = arith.constant 0 : index
      %c0_12 = arith.constant 0 : index
      %13 = vector.load %arg7[%c0_11, %c0_12] : memref<512x128xf32, #tpu.memory_space<vmem>>, vector<512x128xf32>
      tpu.vector_store %arg7[%c0_11, %c0_12], %12 {strides = array<i32>} : memref<512x128xf32, #tpu.memory_space<vmem>>, vector<512x128xf32>,
    } else {
    }
    %c0 = arith.constant 0 : index
    %c0_1 = arith.constant 0 : index
    %3 = vector.load %arg7[%c0, %c0_1] : memref<512x128xf32, #tpu.memory_space<vmem>>, vector<512x128xf32>
    %c0_2 = arith.constant 0 : index
    %c0_3 = arith.constant 0 : index
    %4 = vector.load %arg3[%c0_2, %c0_3] : memref<512x1024xbf16, #tpu.memory_space<vmem>>, vector<512x1024xbf16>
    %c0_4 = arith.constant 0 : index
    %c0_5 = arith.constant 0 : index
    %5 = vector.load %arg4[%c0_4, %c0_5] : memref<1024x128xbf16, #tpu.memory_space<vmem>>, vector<1024x128xbf16>
    %cst = arith.constant dense<0.000000e+00> : vector<512x128xf32>
    %6 = tpu.matmul %4, %5, %cst {dimension_numbers = #tpu.dot_dimension_numbers<[1], [0], [0], [1], [0, 0, 1, 1], [], []>} : vector<512x1024xbf16>, vector<1024x128xbf16>, vector<512x128xf32> -> vector<512x128xf32>
    %7 = arith.addf %3, %6 : vector<512x128xf32>
    %c0_6 = arith.constant 0 : index
    %c0_7 = arith.constant 0 : index
    %8 = vector.load %arg7[%c0_6, %c0_7] : memref<512x128xf32, #tpu.memory_space<vmem>>, vector<512x128xf32>
    tpu.vector_store %arg7[%c0_6, %c0_7], %7 {strides = array<i32>} : memref<512x128xf32, #tpu.memory_space<vmem>>, vector<512x128xf32>,
    %c0_i32_8 = arith.constant 0 : i32
    %9 = arith.cmpi eq, %arg2, %c0_i32_8 : i32
    %10 = arith.extui %9 : i1 to i32
    %c0_i32_9 = arith.constant 0 : i32
    %11 = arith.cmpi ne, %10, %c0_i32_9 : i32
    scf.if %11 {
      %c0_10 = arith.constant 0 : index
      %c0_11 = arith.constant 0 : index
      %12 = vector.load %arg7[%c0_10, %c0_11] : memref<512x128xf32, #tpu.memory_space<vmem>>, vector<512x128xf32>
      %c0_12 = arith.constant 0 : index
      %c0_13 = arith.constant 0 : index
      %13 = vector.load %arg5[%c0_12, %c0_13] : memref<1x128xf32, #tpu.memory_space<vmem>>, vector<1x128xf32>
      %14 = vector.broadcast %13 : vector<1x128xf32> to vector<512x128xf32>
      %15 = arith.addf %12, %14 : vector<512x128xf32>
      %cst_14 = arith.constant 0.000000e+00 : f32
      %16 = vector.broadcast %cst_14 : f32 to vector<512x128xf32>
      %17 = arith.maximumf %15, %16 : vector<512x128xf32>
      %c0_15 = arith.constant 0 : index
      %c0_16 = arith.constant 0 : index
      %18 = vector.load %arg6[%c0_15, %c0_16] : memref<512x128xf32, #tpu.memory_space<vmem>>, vector<512x128xf32>
      tpu.vector_store %arg6[%c0_15, %c0_16], %17 {strides = array<i32>} : memref<512x128xf32, #tpu.memory_space<vmem>>, vector<512x128xf32>,
    } else {
    }
    return
  }
  func.func @transform_0(%arg0: i32, %arg1: i32, %arg2: i32) -> (i32, i32) {
    %c0_i32 = arith.constant 0 : i32
    return %arg0, %arg2 : i32, i32
  }
  func.func @transform_1(%arg0: i32, %arg1: i32, %arg2: i32) -> (i32, i32) {
    %c0_i32 = arith.constant 0 : i32
    return %arg2, %arg1 : i32, i32
  }
  func.func @transform_2(%arg0: i32, %arg1: i32, %arg2: i32) -> (i32, i32) {
    %c0_i32 = arith.constant 0 : i32
    %c0_i32_0 = arith.constant 0 : i32
    return %c0_i32, %arg1 : i32, i32
  }
  func.func @transform_3(%arg0: i32, %arg1: i32, %arg2: i32) -> (i32, i32) {
    %c0_i32 = arith.constant 0 : i32
    return %arg0, %arg1 : i32, i32
  }
}

</mosaic_0001>

<llo_original>
// kernel: decoder_forward.4
$region0: #{decoder_forward.4}
  #allocation0 [shape = 'u32[]', space=smem, size = 0x4, offset = 0x4, fixed_abs, tag = 'smem constant byte address 0x4 - core index']
  #allocation1 [shape = 'u32[144,128]{1,0:T(1,128)}', space=vmem, size = 0x12000, scoped, tag = 'internal scratch']
  #allocation2 [shape = 'f32[32,128]{1,0:T(8,128)}', space=vmem, size = 0x4000, scoped, tag = 'scratch operand']
  %s0 = inlined_call_operand.vmem [shape: bf16[32,1024], index: 0, kind: input, shape index: {}]
  %s1 = inlined_call_operand.vmem [shape: bf16[1024,256], index: 1, kind: input, shape index: {}]
  %s2 = inlined_call_operand.vmem [shape: f32[1,256], index: 2, kind: input, shape index: {}]
  %s3 = inlined_call_operand.vmem [shape: f32[32,256], index: 3, kind: output, shape index: {}]
  %s4 = sld [smem:[#allocation0]]
  $region128: #{decoder_forward.4} parent=0
    _
  %s6 = ssub.s32 1, %s4
  %s7 = scalar_select 0, %s6, %s4
  $region1: #{decoder_forward.4} parent=0
    #allocation3 [shape = 'u8[524288]{0}', space=vmem, size = 0x80000, scoped, tag = 'input window, operand 1']
    #allocation4 [shape = 'u8[32768]{0}', space=vmem, size = 0x8000, scoped, tag = 'output window, operand 0']
    loop: start=0, step=1, limit=4
    $region2: #{decoder_forward.4} parent=1 // loop_pre_header
      _
    $region3: #{decoder_forward.4} parent=1 // loop_header
      %s9 = sphi 0, %s13
      %p10 = scmp.ge.s32.totalorder %s9, 4
      %s16 = sphi 0, %s35
      %s17 = sphi 0, %s31
      %s18 = sphi 0, %s27
      %s19 = sphi 0, %s16
      %s20 = sphi 0, %s17
      %s21 = sphi 0, %s18
      %s22 = sphi 0, %s19
      %s23 = sphi 0, %s20
      %s24 = sphi 0, %s21
      %s40 = sphi 0, %s42
      %s43 = sphi 0, %s40
      %s44 = sphi 0, %s43
      %s60 = sphi 0, %s44
      %s68 = sphi 0, %s70
      %s71 = sphi 0, %s68
      %s72 = sphi 0, %s71
      %s88 = sphi 0, %s72
      %s94 = sphi 0, %s96
      %s97 = sphi 0, %s94
      %s98 = sphi 0, %s97
      %s114 = sphi 0, %s98
      %s122 = sphi 0, %s124
      %s125 = sphi 0, %s122
      %s126 = sphi 0, %s125
      %s142 = sphi 0, %s126
    $region4: #{decoder_forward.4} parent=1 // loop_header_branch
      %12 = sbr.rel (%p10) target = $region8
    $region5: #{decoder_forward.4} parent=1 // loop_body
      %s14 = ssub.s32 %s9, 1
      %s15 = ssub.s32 %s9, 2
      %s25 = sadd.s32 1, %s18
      %p26 = scmp.ge.s32.totalorder %s25, 1
      %s27 = scalar_select %p26, 0, %s25
      %s28 = sadd.s32 1, %s17
      %s29 = scalar_select %p26, %s28, %s17
      %p30 = scmp.ge.s32.totalorder %s29, 2
      %s31 = scalar_select %p30, 0, %s29
      %s32 = sadd.s32 1, %s16
      %s33 = scalar_select %p30, %s32, %s16
      %p34 = scmp.ge.s32.totalorder %s33, 1
      %s35 = scalar_select %p34, 0, %s33
      %s36 = ssub.s32 %s16, %s35
      %s37 = ssub.s32 %s18, %s27
      %s38 = sor.u32 %s36, %s37
      %p39 = scmp.eq.s32.totalorder %s38, 0
      %s41 = sadd.s32 %s40, 1
      %s42 = scalar_select %p39, %s40, %s41
      %p45 = pneg %p39
      %p46 = scmp.eq.s32.totalorder %s9, 1
      %p47 = por %p45, %p46
      %p48 = scmp.ne.s32.totalorder %s40, %s43
      %p49 = scmp.eq.s32.totalorder %s9, 0
      %p50 = por %p48, %p49
      %p51 = scmp.ne.s32.totalorder %s40, %s43
      %p52 = scmp.eq.s32.totalorder %s14, 1
      %p53 = por %p51, %p52
      %p54 = scmp.ne.s32.totalorder %s43, %s44
      %p55 = scmp.eq.s32.totalorder %s14, 0
      %p56 = por %p54, %p55
      %p57 = scmp.ne.s32.totalorder %s43, %s44
      %p58 = scmp.eq.s32.totalorder %s15, 1
      %p59 = por %p57, %p58
      %p61 = scmp.ne.s32.totalorder %s44, %s60
      %p62 = scmp.eq.s32.totalorder %s15, 0
      %p63 = por %p61, %p62
      %s64 = ssub.s32 %s18, %s27
      %s65 = ssub.s32 %s17, %s31
      %s66 = sor.u32 %s64, %s65
      %p67 = scmp.eq.s32.totalorder %s66, 0
      %s69 = sadd.s32 %s68, 1
      %s70 = scalar_select %p67, %s68, %s69
      %p73 = pneg %p67
      %p74 = scmp.eq.s32.totalorder %s9, 1
      %p75 = por %p73, %p74
      %p76 = scmp.ne.s32.totalorder %s68, %s71
      %p77 = scmp.eq.s32.totalorder %s9, 0
      %p78 = por %p76, %p77
      %p79 = scmp.ne.s32.totalorder %s68, %s71
      %p80 = scmp.eq.s32.totalorder %s14, 1
      %p81 = por %p79, %p80
      %p82 = scmp.ne.s32.totalorder %s71, %s72
      %p83 = scmp.eq.s32.totalorder %s14, 0
      %p84 = por %p82, %p83
      %p85 = scmp.ne.s32.totalorder %s71, %s72
      %p86 = scmp.eq.s32.totalorder %s15, 1
      %p87 = por %p85, %p86
      %p89 = scmp.ne.s32.totalorder %s72, %s88
      %p90 = scmp.eq.s32.totalorder %s15, 0
      %p91 = por %p89, %p90
      %s92 = ssub.s32 %s17, %s31
      %p93 = scmp.eq.s32.totalorder %s92, 0
      %s95 = sadd.s32 %s94, 1
      %s96 = scalar_select %p93, %s94, %s95
      %p99 = pneg %p93
      %p100 = scmp.eq.s32.totalorder %s9, 1
      %p101 = por %p99, %p100
      %p102 = scmp.ne.s32.totalorder %s94, %s97
      %p103 = scmp.eq.s32.totalorder %s9, 0
      %p104 = por %p102, %p103
      %p105 = scmp.ne.s32.totalorder %s94, %s97
      %p106 = scmp.eq.s32.totalorder %s14, 1
      %p107 = por %p105, %p106
      %p108 = scmp.ne.s32.totalorder %s97, %s98
      %p109 = scmp.eq.s32.totalorder %s14, 0
      %p110 = por %p108, %p109
      %p111 = scmp.ne.s32.totalorder %s97, %s98
      %p112 = scmp.eq.s32.totalorder %s15, 1
      %p113 = por %p111, %p112
      %p115 = scmp.ne.s32.totalorder %s98, %s114
      %p116 = scmp.eq.s32.totalorder %s15, 0
      %p117 = por %p115, %p116
      %s118 = ssub.s32 %s16, %s35
      %s119 = ssub.s32 %s17, %s31
      %s120 = sor.u32 %s118, %s119
      %p121 = scmp.eq.s32.totalorder %s120, 0
      %s123 = sadd.s32 %s122, 1
      %s124 = scalar_select %p121, %s122, %s123
      %p127 = pneg %p121
      %p128 = scmp.eq.s32.totalorder %s9, 1
      %p129 = por %p127, %p128
      %p130 = scmp.ne.s32.totalorder %s122, %s125
      %p131 = scmp.eq.s32.totalorder %s9, 0
      %p132 = por %p130, %p131
      %p133 = scmp.ne.s32.totalorder %s122, %s125
      %p134 = scmp.eq.s32.totalorder %s14, 1
      %p135 = por %p133, %p134
      %p136 = scmp.ne.s32.totalorder %s125, %s126
      %p137 = scmp.eq.s32.totalorder %s14, 0
      %p138 = por %p136, %p137
      %p139 = scmp.ne.s32.totalorder %s125, %s126
      %p140 = scmp.eq.s32.totalorder %s15, 1
      %p141 = por %p139, %p140
      %p143 = scmp.ne.s32.totalorder %s126, %s142
      %p144 = scmp.eq.s32.totalorder %s15, 0
      %p145 = por %p143, %p144
      %p146 = scmp.le.s32.totalorder 1, %s9
      %p147 = scmp.lt.s32.totalorder %s9, 3
      %p148 = pnand %p146, %p147
      %p149 = pneg %p148
      // Predicated region
      $region9: #{decoder_forward.4} parent=5 // pred_check
        _
      $region10: #{decoder_forward.4} parent=5 // pred_check_branch
        %151 = sbr.rel (%p148) target = $region12
      $region11: #{decoder_forward.4} parent=5 // pred_region
        %s152 = ssub.s32 %s9, 1
        // Predicated region
        $region13: #{decoder_forward.4} parent=11 // pred_check
          %p153 = pneg %p56
        $region14: #{decoder_forward.4} parent=11 // pred_check_branch
          %155 = sbr.rel (%p153) target = $region16
        $region15: #{decoder_forward.4} parent=11 // pred_region
          %s156 = smul.u32 4, %s19
          %s157 = smul.u32 8, %s21
          %p158 = scmp.lt.s32.totalorder %s156, 3
          %s159 = scalar_select %p158, %s156, 3
          %p160 = scmp.lt.s32.totalorder %s157, 7
          %s161 = scalar_select %p160, %s157, 7
          %s162 = smul.addr %s159, 8
          %s163 = sadd.s32 %s161, %s162
          %s164 = smul.addr %s163, 4
          %s165 = scalar_lea.vmem %s0, %s164
          %s166 = smul.u32 4, %s19
          %s167 = smul.u32 8, %s21
        $region16: #{decoder_forward.4} parent=11 // pred_fallthru
          _
      $region12: #{decoder_forward.4} parent=5 // pred_fallthru
        _
      %p168 = scmp.lt.s32.totalorder %s9, 2
      // Predicated region
      $region17: #{decoder_forward.4} parent=5 // pred_check
        %p169 = pneg %p168
      $region18: #{decoder_forward.4} parent=5 // pred_check_branch
        %171 = sbr.rel (%p169) target = $region20
      $region19: #{decoder_forward.4} parent=5 // pred_region
        // Predicated region
        $region21: #{decoder_forward.4} parent=19 // pred_check
          %p172 = pneg %p78
        $region22: #{decoder_forward.4} parent=19 // pred_check_branch
          %174 = sbr.rel (%p172) target = $region24
        $region23: #{decoder_forward.4} parent=19 // pred_region
          %s175 = sand.u32 %s68, 1
          %s176 = sand.u32 %s68, 1
          %s177 = smul.addr %s176, 512
          %s178 = scalar_lea.vmem [#allocation3], %s177
          %s179 = smul.u32 128, %s18
          %s180 = smul.addr %s179, 2
          %s181 = sadd.s32 %s17, %s180
          %s182 = smul.addr %s181, 4
          %s183 = scalar_lea.vmem %s1, %s182
          // Predicated region
          $region25: #{decoder_forward.4} parent=23 // pred_check
            _
          $region26: #{decoder_forward.4} parent=23 // pred_check_branch
            %185 = sbr.rel (0) target = $region28
          $region27: #{decoder_forward.4} parent=23 // pred_region
            // Predicated region
            $region29: #{decoder_forward.4} parent=27 // pred_check
              _
            $region30: #{decoder_forward.4} parent=27 // pred_check_branch
              %187 = sbr.rel target = $region32
            $region31: #{decoder_forward.4} parent=27 // pred_region
              // Predicated region
              $region44: #{decoder_forward.4} parent=31 // pred_check
                _
              $region45: #{decoder_forward.4} parent=31 // pred_check_branch
                %457 = sbr.rel (0) target = $region47
              $region46: #{decoder_forward.4} parent=31 // pred_region
                loop: start=0, step=1, limit=1
                $region48: #{decoder_forward.4} parent=46 // loop_pre_header
                  _
                $region49: #{decoder_forward.4} parent=46 // loop_header
                  %s459 = sphi 0, %s463
                  %p460 = scmp.ge.s32.totalorder %s459, 1
                  %s464 = sphi %s183, %s183
                  %s465 = sphi %s178, %s178
                $region50: #{decoder_forward.4} parent=46 // loop_header_branch
                  %462 = sbr.rel (%p460) target = $region54
                $region51: #{decoder_forward.4} parent=46 // loop_body
                  _
                $region52: #{decoder_forward.4} parent=46 // loop_footer
                  %s463 = sadd.s32 1, %s459
                $region53: #{decoder_forward.4} parent=46 // loop_footer_branch
                  %458 = sbr.rel target = $region49
                $region54: #{decoder_forward.4} parent=46 // loop_exit
                  _
                %s467 = ssub.s32 16, 1
                loop: start=0, step=1, limit=1
                $region55: #{decoder_forward.4} parent=46 // loop_pre_header
                  _
                $region56: #{decoder_forward.4} parent=46 // loop_header
                  %s469 = sphi 0, %s473
                  %p470 = scmp.ge.s32.totalorder %s469, 1
                  %s474 = sphi %s183, %s183
                  %s475 = sphi %s178, %s178
                $region57: #{decoder_forward.4} parent=46 // loop_header_branch
                  %472 = sbr.rel (%p470) target = $region61
                $region58: #{decoder_forward.4} parent=46 // loop_body
                  %v476 = vld [vmem:[%s474] sm:%s467]
                  %477 = vst [vmem:[%s475] sm:%s467] %v476
                  %v478 = vld [vmem:[%s474 + $0x8] sm:%s467]
                  %479 = vst [vmem:[%s475 + $0x4] sm:%s467] %v478
                  %v480 = vld [vmem:[%s474 + $0x10] sm:%s467]
                  %481 = vst [vmem:[%s475 + $0x8] sm:%s467] %v480
                  %v482 = vld [vmem:[%s474 + $0x18] sm:%s467]
                  %483 = vst [vmem:[%s475 + $0xc] sm:%s467] %v482
                  %v484 = vld [vmem:[%s474 + $0x20] sm:%s467]
                  %485 = vst [vmem:[%s475 + $0x10] sm:%s467] %v484
                  %v486 = vld [vmem:[%s474 + $0x28] sm:%s467]
                  %487 = vst [vmem:[%s475 + $0x14] sm:%s467] %v486
                  %v488 = vld [vmem:[%s474 + $0x30] sm:%s467]
                  %489 = vst [vmem:[%s475 + $0x18] sm:%s467] %v488
                  %v490 = vld [vmem:[%s474 + $0x38] sm:%s467]
                  %491 = vst [vmem:[%s475 + $0x1c] sm:%s467] %v490
                  %v492 = vld [vmem:[%s474 + $0x40] sm:%s467]
                  %493 = vst [vmem:[%s475 + $0x20] sm:%s467] %v492
                  %v494 = vld [vmem:[%s474 + $0x48] sm:%s467]
                  %495 = vst [vmem:[%s475 + $0x24] sm:%s467] %v494
                  %v496 = vld [vmem:[%s474 + $0x50] sm:%s467]
                  %497 = vst [vmem:[%s475 + $0x28] sm:%s467] %v496
                  %v498 = vld [vmem:[%s474 + $0x58] sm:%s467]
                  %499 = vst [vmem:[%s475 + $0x2c] sm:%s467] %v498
                  %v500 = vld [vmem:[%s474 + $0x60] sm:%s467]
                  %501 = vst [vmem:[%s475 + $0x30] sm:%s467] %v500
                  %v502 = vld [vmem:[%s474 + $0x68] sm:%s467]
                  %503 = vst [vmem:[%s475 + $0x34] sm:%s467] %v502
                  %v504 = vld [vmem:[%s474 + $0x70] sm:%s467]
                  %505 = vst [vmem:[%s475 + $0x38] sm:%s467] %v504
                  %v506 = vld [vmem:[%s474 + $0x78] sm:%s467]
                  %507 = vst [vmem:[%s475 + $0x3c] sm:%s467] %v506
                  %v508 = vld [vmem:[%s474 + $0x80] sm:%s467]
                  %509 = vst [vmem:[%s475 + $0x40] sm:%s467] %v508
                  %v510 = vld [vmem:[%s474 + $0x88] sm:%s467]
                  %511 = vst [vmem:[%s475 + $0x44] sm:%s467] %v510
                  %v512 = vld [vmem:[%s474 + $0x90] sm:%s467]
                  %513 = vst [vmem:[%s475 + $0x48] sm:%s467] %v512
                  %v514 = vld [vmem:[%s474 + $0x98] sm:%s467]
                  %515 = vst [vmem:[%s475 + $0x4c] sm:%s467] %v514
                  %v516 = vld [vmem:[%s474 + $0xa0] sm:%s467]
                  %517 = vst [vmem:[%s475 + $0x50] sm:%s467] %v516
                  %v518 = vld [vmem:[%s474 + $0xa8] sm:%s467]
                  %519 = vst [vmem:[%s475 + $0x54] sm:%s467] %v518
                  %v520 = vld [vmem:[%s474 + $0xb0] sm:%s467]
                  %521 = vst [vmem:[%s475 + $0x58] sm:%s467] %v520
                  %v522 = vld [vmem:[%s474 + $0xb8] sm:%s467]
                  %523 = vst [vmem:[%s475 + $0x5c] sm:%s467] %v522
                  %v524 = vld [vmem:[%s474 + $0xc0] sm:%s467]
                  %525 = vst [vmem:[%s475 + $0x60] sm:%s467] %v524
                  %v526 = vld [vmem:[%s474 + $0xc8] sm:%s467]
                  %527 = vst [vmem:[%s475 + $0x64] sm:%s467] %v526
                  %v528 = vld [vmem:[%s474 + $0xd0] sm:%s467]
                  %529 = vst [vmem:[%s475 + $0x68] sm:%s467] %v528
                  %v530 = vld [vmem:[%s474 + $0xd8] sm:%s467]
                  %531 = vst [vmem:[%s475 + $0x6c] sm:%s467] %v530
                  %v532 = vld [vmem:[%s474 + $0xe0] sm:%s467]
                  %533 = vst [vmem:[%s475 + $0x70] sm:%s467] %v532
                  %v534 = vld [vmem:[%s474 + $0xe8] sm:%s467]
                  %535 = vst [vmem:[%s475 + $0x74] sm:%s467] %v534
                  %v536 = vld [vmem:[%s474 + $0xf0] sm:%s467]
                  %537 = vst [vmem:[%s475 + $0x78] sm:%s467] %v536
                  %v538 = vld [vmem:[%s474 + $0xf8] sm:%s467]
                  %539 = vst [vmem:[%s475 + $0x7c] sm:%s467] %v538
                  %v540 = vld [vmem:[%s474 + $0x100] sm:%s467]
                  %541 = vst [vmem:[%s475 + $0x80] sm:%s467] %v540
                  %v542 = vld [vmem:[%s474 + $0x108] sm:%s467]
                  %543 = vst [vmem:[%s475 + $0x84] sm:%s467] %v542
                  %v544 = vld [vmem:[%s474 + $0x110] sm:%s467]
                  %545 = vst [vmem:[%s475 + $0x88] sm:%s467] %v544
                  %v546 = vld [vmem:[%s474 + $0x118] sm:%s467]
                  %547 = vst [vmem:[%s475 + $0x8c] sm:%s467] %v546
                  %v548 = vld [vmem:[%s474 + $0x120] sm:%s467]
                  %549 = vst [vmem:[%s475 + $0x90] sm:%s467] %v548
                  %v550 = vld [vmem:[%s474 + $0x128] sm:%s467]
                  %551 = vst [vmem:[%s475 + $0x94] sm:%s467] %v550
                  %v552 = vld [vmem:[%s474 + $0x130] sm:%s467]
                  %553 = vst [vmem:[%s475 + $0x98] sm:%s467] %v552
                  %v554 = vld [vmem:[%s474 + $0x138] sm:%s467]
                  %555 = vst [vmem:[%s475 + $0x9c] sm:%s467] %v554
                  %v556 = vld [vmem:[%s474 + $0x140] sm:%s467]
                  %557 = vst [vmem:[%s475 + $0xa0] sm:%s467] %v556
                  %v558 = vld [vmem:[%s474 + $0x148] sm:%s467]
                  %559 = vst [vmem:[%s475 + $0xa4] sm:%s467] %v558
                  %v560 = vld [vmem:[%s474 + $0x150] sm:%s467]
                  %561 = vst [vmem:[%s475 + $0xa8] sm:%s467] %v560
                  %v562 = vld [vmem:[%s474 + $0x158] sm:%s467]
                  %563 = vst [vmem:[%s475 + $0xac] sm:%s467] %v562
                  %v564 = vld [vmem:[%s474 + $0x160] sm:%s467]
                  %565 = vst [vmem:[%s475 + $0xb0] sm:%s467] %v564
                  %v566 = vld [vmem:[%s474 + $0x168] sm:%s467]
                  %567 = vst [vmem:[%s475 + $0xb4] sm:%s467] %v566
                  %v568 = vld [vmem:[%s474 + $0x170] sm:%s467]
                  %569 = vst [vmem:[%s475 + $0xb8] sm:%s467] %v568
                  %v570 = vld [vmem:[%s474 + $0x178] sm:%s467]
                  %571 = vst [vmem:[%s475 + $0xbc] sm:%s467] %v570
                  %v572 = vld [vmem:[%s474 + $0x180] sm:%s467]
                  %573 = vst [vmem:[%s475 + $0xc0] sm:%s467] %v572
                  %v574 = vld [vmem:[%s474 + $0x188] sm:%s467]
                  %575 = vst [vmem:[%s475 + $0xc4] sm:%s467] %v574
                  %v576 = vld [vmem:[%s474 + $0x190] sm:%s467]
                  %577 = vst [vmem:[%s475 + $0xc8] sm:%s467] %v576
                  %v578 = vld [vmem:[%s474 + $0x198] sm:%s467]
                  %579 = vst [vmem:[%s475 + $0xcc] sm:%s467] %v578
                  %v580 = vld [vmem:[%s474 + $0x1a0] sm:%s467]
                  %581 = vst [vmem:[%s475 + $0xd0] sm:%s467] %v580
                  %v582 = vld [vmem:[%s474 + $0x1a8] sm:%s467]
                  %583 = vst [vmem:[%s475 + $0xd4] sm:%s467] %v582
                  %v584 = vld [vmem:[%s474 + $0x1b0] sm:%s467]
                  %585 = vst [vmem:[%s475 + $0xd8] sm:%s467] %v584
                  %v586 = vld [vmem:[%s474 + $0x1b8] sm:%s467]
                  %587 = vst [vmem:[%s475 + $0xdc] sm:%s467] %v586
                  %v588 = vld [vmem:[%s474 + $0x1c0] sm:%s467]
                  %589 = vst [vmem:[%s475 + $0xe0] sm:%s467] %v588
                  %v590 = vld [vmem:[%s474 + $0x1c8] sm:%s467]
                  %591 = vst [vmem:[%s475 + $0xe4] sm:%s467] %v590
                  %v592 = vld [vmem:[%s474 + $0x1d0] sm:%s467]
                  %593 = vst [vmem:[%s475 + $0xe8] sm:%s467] %v592
                  %v594 = vld [vmem:[%s474 + $0x1d8] sm:%s467]
                  %595 = vst [vmem:[%s475 + $0xec] sm:%s467] %v594
                  %v596 = vld [vmem:[%s474 + $0x1e0] sm:%s467]
                  %597 = vst [vmem:[%s475 + $0xf0] sm:%s467] %v596
                  %v598 = vld [vmem:[%s474 + $0x1e8] sm:%s467]
                  %599 = vst [vmem:[%s475 + $0xf4] sm:%s467] %v598
                  %v600 = vld [vmem:[%s474 + $0x1f0] sm:%s467]
                  %601 = vst [vmem:[%s475 + $0xf8] sm:%s467] %v600
                  %v602 = vld [vmem:[%s474 + $0x1f8] sm:%s467]
                  %603 = vst [vmem:[%s475 + $0xfc] sm:%s467] %v602
                  %v604 = vld [vmem:[%s474 + $0x200] sm:%s467]
                  %605 = vst [vmem:[%s475 + $0x100] sm:%s467] %v604
                  %v606 = vld [vmem:[%s474 + $0x208] sm:%s467]
                  %607 = vst [vmem:[%s475 + $0x104] sm:%s467] %v606
                  %v608 = vld [vmem:[%s474 + $0x210] sm:%s467]
                  %609 = vst [vmem:[%s475 + $0x108] sm:%s467] %v608
                  %v610 = vld [vmem:[%s474 + $0x218] sm:%s467]
                  %611 = vst [vmem:[%s475 + $0x10c] sm:%s467] %v610
                  %v612 = vld [vmem:[%s474 + $0x220] sm:%s467]
                  %613 = vst [vmem:[%s475 + $0x110] sm:%s467] %v612
                  %v614 = vld [vmem:[%s474 + $0x228] sm:%s467]
                  %615 = vst [vmem:[%s475 + $0x114] sm:%s467] %v614
                  %v616 = vld [vmem:[%s474 + $0x230] sm:%s467]
                  %617 = vst [vmem:[%s475 + $0x118] sm:%s467] %v616
                  %v618 = vld [vmem:[%s474 + $0x238] sm:%s467]
                  %619 = vst [vmem:[%s475 + $0x11c] sm:%s467] %v618
                  %v620 = vld [vmem:[%s474 + $0x240] sm:%s467]
                  %621 = vst [vmem:[%s475 + $0x120] sm:%s467] %v620
                  %v622 = vld [vmem:[%s474 + $0x248] sm:%s467]
                  %623 = vst [vmem:[%s475 + $0x124] sm:%s467] %v622
                  %v624 = vld [vmem:[%s474 + $0x250] sm:%s467]
                  %625 = vst [vmem:[%s475 + $0x128] sm:%s467] %v624
                  %v626 = vld [vmem:[%s474 + $0x258] sm:%s467]
                  %627 = vst [vmem:[%s475 + $0x12c] sm:%s467] %v626
                  %v628 = vld [vmem:[%s474 + $0x260] sm:%s467]
                  %629 = vst [vmem:[%s475 + $0x130] sm:%s467] %v628
                  %v630 = vld [vmem:[%s474 + $0x268] sm:%s467]
                  %631 = vst [vmem:[%s475 + $0x134] sm:%s467] %v630
                  %v632 = vld [vmem:[%s474 + $0x270] sm:%s467]
                  %633 = vst [vmem:[%s475 + $0x138] sm:%s467] %v632
                  %v634 = vld [vmem:[%s474 + $0x278] sm:%s467]
                  %635 = vst [vmem:[%s475 + $0x13c] sm:%s467] %v634
                  %v636 = vld [vmem:[%s474 + $0x280] sm:%s467]
                  %637 = vst [vmem:[%s475 + $0x140] sm:%s467] %v636
                  %v638 = vld [vmem:[%s474 + $0x288] sm:%s467]
                  %639 = vst [vmem:[%s475 + $0x144] sm:%s467] %v638
                  %v640 = vld [vmem:[%s474 + $0x290] sm:%s467]
                  %641 = vst [vmem:[%s475 + $0x148] sm:%s467] %v640
                  %v642 = vld [vmem:[%s474 + $0x298] sm:%s467]
                  %643 = vst [vmem:[%s475 + $0x14c] sm:%s467] %v642
                  %v644 = vld [vmem:[%s474 + $0x2a0] sm:%s467]
                  %645 = vst [vmem:[%s475 + $0x150] sm:%s467] %v644
                  %v646 = vld [vmem:[%s474 + $0x2a8] sm:%s467]
                  %647 = vst [vmem:[%s475 + $0x154] sm:%s467] %v646
                  %v648 = vld [vmem:[%s474 + $0x2b0] sm:%s467]
                  %649 = vst [vmem:[%s475 + $0x158] sm:%s467] %v648
                  %v650 = vld [vmem:[%s474 + $0x2b8] sm:%s467]
                  %651 = vst [vmem:[%s475 + $0x15c] sm:%s467] %v650
                  %v652 = vld [vmem:[%s474 + $0x2c0] sm:%s467]
                  %653 = vst [vmem:[%s475 + $0x160] sm:%s467] %v652
                  %v654 = vld [vmem:[%s474 + $0x2c8] sm:%s467]
                  %655 = vst [vmem:[%s475 + $0x164] sm:%s467] %v654
                  %v656 = vld [vmem:[%s474 + $0x2d0] sm:%s467]
                  %657 = vst [vmem:[%s475 + $0x168] sm:%s467] %v656
                  %v658 = vld [vmem:[%s474 + $0x2d8] sm:%s467]
                  %659 = vst [vmem:[%s475 + $0x16c] sm:%s467] %v658
                  %v660 = vld [vmem:[%s474 + $0x2e0] sm:%s467]
                  %661 = vst [vmem:[%s475 + $0x170] sm:%s467] %v660
                  %v662 = vld [vmem:[%s474 + $0x2e8] sm:%s467]
                  %663 = vst [vmem:[%s475 + $0x174] sm:%s467] %v662
                  %v664 = vld [vmem:[%s474 + $0x2f0] sm:%s467]
                  %665 = vst [vmem:[%s475 + $0x178] sm:%s467] %v664
                  %v666 = vld [vmem:[%s474 + $0x2f8] sm:%s467]
                  %667 = vst [vmem:[%s475 + $0x17c] sm:%s467] %v666
                  %v668 = vld [vmem:[%s474 + $0x300] sm:%s467]
                  %669 = vst [vmem:[%s475 + $0x180] sm:%s467] %v668
                  %v670 = vld [vmem:[%s474 + $0x308] sm:%s467]
                  %671 = vst [vmem:[%s475 + $0x184] sm:%s467] %v670
                  %v672 = vld [vmem:[%s474 + $0x310] sm:%s467]
                  %673 = vst [vmem:[%s475 + $0x188] sm:%s467] %v672
                  %v674 = vld [vmem:[%s474 + $0x318] sm:%s467]
                  %675 = vst [vmem:[%s475 + $0x18c] sm:%s467] %v674
                  %v676 = vld [vmem:[%s474 + $0x320] sm:%s467]
                  %677 = vst [vmem:[%s475 + $0x190] sm:%s467] %v676
                  %v678 = vld [vmem:[%s474 + $0x328] sm:%s467]
                  %679 = vst [vmem:[%s475 + $0x194] sm:%s467] %v678
                  %v680 = vld [vmem:[%s474 + $0x330] sm:%s467]
                  %681 = vst [vmem:[%s475 + $0x198] sm:%s467] %v680
                  %v682 = vld [vmem:[%s474 + $0x338] sm:%s467]
                  %683 = vst [vmem:[%s475 + $0x19c] sm:%s467] %v682
                  %v684 = vld [vmem:[%s474 + $0x340] sm:%s467]
                  %685 = vst [vmem:[%s475 + $0x1a0] sm:%s467] %v684
                  %v686 = vld [vmem:[%s474 + $0x348] sm:%s467]
                  %687 = vst [vmem:[%s475 + $0x1a4] sm:%s467] %v686
                  %v688 = vld [vmem:[%s474 + $0x350] sm:%s467]
                  %689 = vst [vmem:[%s475 + $0x1a8] sm:%s467] %v688
                  %v690 = vld [vmem:[%s474 + $0x358] sm:%s467]
                  %691 = vst [vmem:[%s475 + $0x1ac] sm:%s467] %v690
                  %v692 = vld [vmem:[%s474 + $0x360] sm:%s467]
                  %693 = vst [vmem:[%s475 + $0x1b0] sm:%s467] %v692
                  %v694 = vld [vmem:[%s474 + $0x368] sm:%s467]
                  %695 = vst [vmem:[%s475 + $0x1b4] sm:%s467] %v694
                  %v696 = vld [vmem:[%s474 + $0x370] sm:%s467]
                  %697 = vst [vmem:[%s475 + $0x1b8] sm:%s467] %v696
                  %v698 = vld [vmem:[%s474 + $0x378] sm:%s467]
                  %699 = vst [vmem:[%s475 + $0x1bc] sm:%s467] %v698
                  %v700 = vld [vmem:[%s474 + $0x380] sm:%s467]
                  %701 = vst [vmem:[%s475 + $0x1c0] sm:%s467] %v700
                  %v702 = vld [vmem:[%s474 + $0x388] sm:%s467]
                  %703 = vst [vmem:[%s475 + $0x1c4] sm:%s467] %v702
                  %v704 = vld [vmem:[%s474 + $0x390] sm:%s467]
                  %705 = vst [vmem:[%s475 + $0x1c8] sm:%s467] %v704
                  %v706 = vld [vmem:[%s474 + $0x398] sm:%s467]
                  %707 = vst [vmem:[%s475 + $0x1cc] sm:%s467] %v706
                  %v708 = vld [vmem:[%s474 + $0x3a0] sm:%s467]
                  %709 = vst [vmem:[%s475 + $0x1d0] sm:%s467] %v708
                  %v710 = vld [vmem:[%s474 + $0x3a8] sm:%s467]
                  %711 = vst [vmem:[%s475 + $0x1d4] sm:%s467] %v710
                  %v712 = vld [vmem:[%s474 + $0x3b0] sm:%s467]
                  %713 = vst [vmem:[%s475 + $0x1d8] sm:%s467] %v712
                  %v714 = vld [vmem:[%s474 + $0x3b8] sm:%s467]
                  %715 = vst [vmem:[%s475 + $0x1dc] sm:%s467] %v714
                  %v716 = vld [vmem:[%s474 + $0x3c0] sm:%s467]
                  %717 = vst [vmem:[%s475 + $0x1e0] sm:%s467] %v716
                  %v718 = vld [vmem:[%s474 + $0x3c8] sm:%s467]
                  %719 = vst [vmem:[%s475 + $0x1e4] sm:%s467] %v718
                  %v720 = vld [vmem:[%s474 + $0x3d0] sm:%s467]
                  %721 = vst [vmem:[%s475 + $0x1e8] sm:%s467] %v720
                  %v722 = vld [vmem:[%s474 + $0x3d8] sm:%s467]
                  %723 = vst [vmem:[%s475 + $0x1ec] sm:%s467] %v722
                  %v724 = vld [vmem:[%s474 + $0x3e0] sm:%s467]
                  %725 = vst [vmem:[%s475 + $0x1f0] sm:%s467] %v724
                  %v726 = vld [vmem:[%s474 + $0x3e8] sm:%s467]
                  %727 = vst [vmem:[%s475 + $0x1f4] sm:%s467] %v726
                  %v728 = vld [vmem:[%s474 + $0x3f0] sm:%s467]
                  %729 = vst [vmem:[%s475 + $0x1f8] sm:%s467] %v728
                  %v730 = vld [vmem:[%s474 + $0x3f8] sm:%s467]
                  %731 = vst [vmem:[%s475 + $0x1fc] sm:%s467] %v730
                $region59: #{decoder_forward.4} parent=46 // loop_footer
                  %s473 = sadd.s32 1, %s469
                $region60: #{decoder_forward.4} parent=46 // loop_footer_branch
                  %468 = sbr.rel target = $region56
                $region61: #{decoder_forward.4} parent=46 // loop_exit
                  _
              $region47: #{decoder_forward.4} parent=31 // pred_fallthru
                _
            $region32: #{decoder_forward.4} parent=27 // pred_fallthru
              _
            // Predicated region
            $region33: #{decoder_forward.4} parent=27 // pred_check
              _
            $region34: #{decoder_forward.4} parent=27 // pred_check_branch
              %189 = sbr.rel (0) target = $region36
            $region35: #{decoder_forward.4} parent=27 // pred_region
              %s191 = ssub.s32 16, 1
              loop: start=0, step=1, limit=1
              $region37: #{decoder_forward.4} parent=35 // loop_pre_header
                _
              $region38: #{decoder_forward.4} parent=35 // loop_header
                %s193 = sphi 0, %s197
                %p194 = scmp.ge.s32.totalorder %s193, 1
                %s198 = sphi %s183, %s183
                %s199 = sphi %s178, %s178
              $region39: #{decoder_forward.4} parent=35 // loop_header_branch
                %196 = sbr.rel (%p194) target = $region43
              $region40: #{decoder_forward.4} parent=35 // loop_body
                %v200 = vld [vmem:[%s198] sm:%s191]
                %201 = vst [vmem:[%s199] sm:%s191] %v200
                %v202 = vld [vmem:[%s198 + $0x8] sm:%s191]
                %203 = vst [vmem:[%s199 + $0x4] sm:%s191] %v202
                %v204 = vld [vmem:[%s198 + $0x10] sm:%s191]
                %205 = vst [vmem:[%s199 + $0x8] sm:%s191] %v204
                %v206 = vld [vmem:[%s198 + $0x18] sm:%s191]
                %207 = vst [vmem:[%s199 + $0xc] sm:%s191] %v206
                %v208 = vld [vmem:[%s198 + $0x20] sm:%s191]
                %209 = vst [vmem:[%s199 + $0x10] sm:%s191] %v208
                %v210 = vld [vmem:[%s198 + $0x28] sm:%s191]
                %211 = vst [vmem:[%s199 + $0x14] sm:%s191] %v210
                %v212 = vld [vmem:[%s198 + $0x30] sm:%s191]
                %213 = vst [vmem:[%s199 + $0x18] sm:%s191] %v212
                %v214 = vld [vmem:[%s198 + $0x38] sm:%s191]
                %215 = vst [vmem:[%s199 + $0x1c] sm:%s191] %v214
                %v216 = vld [vmem:[%s198 + $0x40] sm:%s191]
                %217 = vst [vmem:[%s199 + $0x20] sm:%s191] %v216
                %v218 = vld [vmem:[%s198 + $0x48] sm:%s191]
                %219 = vst [vmem:[%s199 + $0x24] sm:%s191] %v218
                %v220 = vld [vmem:[%s198 + $0x50] sm:%s191]
                %221 = vst [vmem:[%s199 + $0x28] sm:%s191] %v220
                %v222 = vld [vmem:[%s198 + $0x58] sm:%s191]
                %223 = vst [vmem:[%s199 + $0x2c] sm:%s191] %v222
                %v224 = vld [vmem:[%s198 + $0x60] sm:%s191]
                %225 = vst [vmem:[%s199 + $0x30] sm:%s191] %v224
                %v226 = vld [vmem:[%s198 + $0x68] sm:%s191]
                %227 = vst [vmem:[%s199 + $0x34] sm:%s191] %v226
                %v228 = vld [vmem:[%s198 + $0x70] sm:%s191]
                %229 = vst [vmem:[%s199 + $0x38] sm:%s191] %v228
                %v230 = vld [vmem:[%s198 + $0x78] sm:%s191]
                %231 = vst [vmem:[%s199 + $0x3c] sm:%s191] %v230
                %v232 = vld [vmem:[%s198 + $0x80] sm:%s191]
                %233 = vst [vmem:[%s199 + $0x40] sm:%s191] %v232
                %v234 = vld [vmem:[%s198 + $0x88] sm:%s191]
                %235 = vst [vmem:[%s199 + $0x44] sm:%s191] %v234
                %v236 = vld [vmem:[%s198 + $0x90] sm:%s191]
                %237 = vst [vmem:[%s199 + $0x48] sm:%s191] %v236
                %v238 = vld [vmem:[%s198 + $0x98] sm:%s191]
                %239 = vst [vmem:[%s199 + $0x4c] sm:%s191] %v238
                %v240 = vld [vmem:[%s198 + $0xa0] sm:%s191]
                %241 = vst [vmem:[%s199 + $0x50] sm:%s191] %v240
                %v242 = vld [vmem:[%s198 + $0xa8] sm:%s191]
                %243 = vst [vmem:[%s199 + $0x54] sm:%s191] %v242
                %v244 = vld [vmem:[%s198 + $0xb0] sm:%s191]
                %245 = vst [vmem:[%s199 + $0x58] sm:%s191] %v244
                %v246 = vld [vmem:[%s198 + $0xb8] sm:%s191]
                %247 = vst [vmem:[%s199 + $0x5c] sm:%s191] %v246
                %v248 = vld [vmem:[%s198 + $0xc0] sm:%s191]
                %249 = vst [vmem:[%s199 + $0x60] sm:%s191] %v248
                %v250 = vld [vmem:[%s198 + $0xc8] sm:%s191]
                %251 = vst [vmem:[%s199 + $0x64] sm:%s191] %v250
                %v252 = vld [vmem:[%s198 + $0xd0] sm:%s191]
                %253 = vst [vmem:[%s199 + $0x68] sm:%s191] %v252
                %v254 = vld [vmem:[%s198 + $0xd8] sm:%s191]
                %255 = vst [vmem:[%s199 + $0x6c] sm:%s191] %v254
                %v256 = vld [vmem:[%s198 + $0xe0] sm:%s191]
                %257 = vst [vmem:[%s199 + $0x70] sm:%s191] %v256
                %v258 = vld [vmem:[%s198 + $0xe8] sm:%s191]
                %259 = vst [vmem:[%s199 + $0x74] sm:%s191] %v258
                %v260 = vld [vmem:[%s198 + $0xf0] sm:%s191]
                %261 = vst [vmem:[%s199 + $0x78] sm:%s191] %v260
                %v262 = vld [vmem:[%s198 + $0xf8] sm:%s191]
                %263 = vst [vmem:[%s199 + $0x7c] sm:%s191] %v262
                %v264 = vld [vmem:[%s198 + $0x100] sm:%s191]
                %265 = vst [vmem:[%s199 + $0x80] sm:%s191] %v264
                %v266 = vld [vmem:[%s198 + $0x108] sm:%s191]
                %267 = vst [vmem:[%s199 + $0x84] sm:%s191] %v266
                %v268 = vld [vmem:[%s198 + $0x110] sm:%s191]
                %269 = vst [vmem:[%s199 + $0x88] sm:%s191] %v268
                %v270 = vld [vmem:[%s198 + $0x118] sm:%s191]
                %271 = vst [vmem:[%s199 + $0x8c] sm:%s191] %v270
                %v272 = vld [vmem:[%s198 + $0x120] sm:%s191]
                %273 = vst [vmem:[%s199 + $0x90] sm:%s191] %v272
                %v274 = vld [vmem:[%s198 + $0x128] sm:%s191]
                %275 = vst [vmem:[%s199 + $0x94] sm:%s191] %v274
                %v276 = vld [vmem:[%s198 + $0x130] sm:%s191]
                %277 = vst [vmem:[%s199 + $0x98] sm:%s191] %v276
                %v278 = vld [vmem:[%s198 + $0x138] sm:%s191]
                %279 = vst [vmem:[%s199 + $0x9c] sm:%s191] %v278
                %v280 = vld [vmem:[%s198 + $0x140] sm:%s191]
                %281 = vst [vmem:[%s199 + $0xa0] sm:%s191] %v280
                %v282 = vld [vmem:[%s198 + $0x148] sm:%s191]
                %283 = vst [vmem:[%s199 + $0xa4] sm:%s191] %v282
                %v284 = vld [vmem:[%s198 + $0x150] sm:%s191]
                %285 = vst [vmem:[%s199 + $0xa8] sm:%s191] %v284
                %v286 = vld [vmem:[%s198 + $0x158] sm:%s191]
                %287 = vst [vmem:[%s199 + $0xac] sm:%s191] %v286
                %v288 = vld [vmem:[%s198 + $0x160] sm:%s191]
                %289 = vst [vmem:[%s199 + $0xb0] sm:%s191] %v288
                %v290 = vld [vmem:[%s198 + $0x168] sm:%s191]
                %291 = vst [vmem:[%s199 + $0xb4] sm:%s191] %v290
                %v292 = vld [vmem:[%s198 + $0x170] sm:%s191]
                %293 = vst [vmem:[%s199 + $0xb8] sm:%s191] %v292
                %v294 = vld [vmem:[%s198 + $0x178] sm:%s191]
                %295 = vst [vmem:[%s199 + $0xbc] sm:%s191] %v294
                %v296 = vld [vmem:[%s198 + $0x180] sm:%s191]
                %297 = vst [vmem:[%s199 + $0xc0] sm:%s191] %v296
                %v298 = vld [vmem:[%s198 + $0x188] sm:%s191]
                %299 = vst [vmem:[%s199 + $0xc4] sm:%s191] %v298
                %v300 = vld [vmem:[%s198 + $0x190] sm:%s191]
                %301 = vst [vmem:[%s199 + $0xc8] sm:%s191] %v300
                %v302 = vld [vmem:[%s198 + $0x198] sm:%s191]
                %303 = vst [vmem:[%s199 + $0xcc] sm:%s191] %v302
                %v304 = vld [vmem:[%s198 + $0x1a0] sm:%s191]
                %305 = vst [vmem:[%s199 + $0xd0] sm:%s191] %v304
                %v306 = vld [vmem:[%s198 + $0x1a8] sm:%s191]
                %307 = vst [vmem:[%s199 + $0xd4] sm:%s191] %v306
                %v308 = vld [vmem:[%s198 + $0x1b0] sm:%s191]
                %309 = vst [vmem:[%s199 + $0xd8] sm:%s191] %v308
                %v310 = vld [vmem:[%s198 + $0x1b8] sm:%s191]
                %311 = vst [vmem:[%s199 + $0xdc] sm:%s191] %v310
                %v312 = vld [vmem:[%s198 + $0x1c0] sm:%s191]
                %313 = vst [vmem:[%s199 + $0xe0] sm:%s191] %v312
                %v314 = vld [vmem:[%s198 + $0x1c8] sm:%s191]
                %315 = vst [vmem:[%s199 + $0xe4] sm:%s191] %v314
                %v316 = vld [vmem:[%s198 + $0x1d0] sm:%s191]
                %317 = vst [vmem:[%s199 + $0xe8] sm:%s191] %v316
                %v318 = vld [vmem:[%s198 + $0x1d8] sm:%s191]
                %319 = vst [vmem:[%s199 + $0xec] sm:%s191] %v318
                %v320 = vld [vmem:[%s198 + $0x1e0] sm:%s191]
                %321 = vst [vmem:[%s199 + $0xf0] sm:%s191] %v320
                %v322 = vld [vmem:[%s198 + $0x1e8] sm:%s191]
                %323 = vst [vmem:[%s199 + $0xf4] sm:%s191] %v322
                %v324 = vld [vmem:[%s198 + $0x1f0] sm:%s191]
                %325 = vst [vmem:[%s199 + $0xf8] sm:%s191] %v324
                %v326 = vld [vmem:[%s198 + $0x1f8] sm:%s191]
                %327 = vst [vmem:[%s199 + $0xfc] sm:%s191] %v326
                %v328 = vld [vmem:[%s198 + $0x200] sm:%s191]
                %329 = vst [vmem:[%s199 + $0x100] sm:%s191] %v328
                %v330 = vld [vmem:[%s198 + $0x208] sm:%s191]
                %331 = vst [vmem:[%s199 + $0x104] sm:%s191] %v330
                %v332 = vld [vmem:[%s198 + $0x210] sm:%s191]
                %333 = vst [vmem:[%s199 + $0x108] sm:%s191] %v332
                %v334 = vld [vmem:[%s198 + $0x218] sm:%s191]
                %335 = vst [vmem:[%s199 + $0x10c] sm:%s191] %v334
                %v336 = vld [vmem:[%s198 + $0x220] sm:%s191]
                %337 = vst [vmem:[%s199 + $0x110] sm:%s191] %v336
                %v338 = vld [vmem:[%s198 + $0x228] sm:%s191]
                %339 = vst [vmem:[%s199 + $0x114] sm:%s191] %v338
                %v340 = vld [vmem:[%s198 + $0x230] sm:%s191]
                %341 = vst [vmem:[%s199 + $0x118] sm:%s191] %v340
                %v342 = vld [vmem:[%s198 + $0x238] sm:%s191]
                %343 = vst [vmem:[%s199 + $0x11c] sm:%s191] %v342
                %v344 = vld [vmem:[%s198 + $0x240] sm:%s191]
                %345 = vst [vmem:[%s199 + $0x120] sm:%s191] %v344
                %v346 = vld [vmem:[%s198 + $0x248] sm:%s191]
                %347 = vst [vmem:[%s199 + $0x124] sm:%s191] %v346
                %v348 = vld [vmem:[%s198 + $0x250] sm:%s191]
                %349 = vst [vmem:[%s199 + $0x128] sm:%s191] %v348
                %v350 = vld [vmem:[%s198 + $0x258] sm:%s191]
                %351 = vst [vmem:[%s199 + $0x12c] sm:%s191] %v350
                %v352 = vld [vmem:[%s198 + $0x260] sm:%s191]
                %353 = vst [vmem:[%s199 + $0x130] sm:%s191] %v352
                %v354 = vld [vmem:[%s198 + $0x268] sm:%s191]
                %355 = vst [vmem:[%s199 + $0x134] sm:%s191] %v354
                %v356 = vld [vmem:[%s198 + $0x270] sm:%s191]
                %357 = vst [vmem:[%s199 + $0x138] sm:%s191] %v356
                %v358 = vld [vmem:[%s198 + $0x278] sm:%s191]
                %359 = vst [vmem:[%s199 + $0x13c] sm:%s191] %v358
                %v360 = vld [vmem:[%s198 + $0x280] sm:%s191]
                %361 = vst [vmem:[%s199 + $0x140] sm:%s191] %v360
                %v362 = vld [vmem:[%s198 + $0x288] sm:%s191]
                %363 = vst [vmem:[%s199 + $0x144] sm:%s191] %v362
                %v364 = vld [vmem:[%s198 + $0x290] sm:%s191]
                %365 = vst [vmem:[%s199 + $0x148] sm:%s191] %v364
                %v366 = vld [vmem:[%s198 + $0x298] sm:%s191]
                %367 = vst [vmem:[%s199 + $0x14c] sm:%s191] %v366
                %v368 = vld [vmem:[%s198 + $0x2a0] sm:%s191]
                %369 = vst [vmem:[%s199 + $0x150] sm:%s191] %v368
                %v370 = vld [vmem:[%s198 + $0x2a8] sm:%s191]
                %371 = vst [vmem:[%s199 + $0x154] sm:%s191] %v370
                %v372 = vld [vmem:[%s198 + $0x2b0] sm:%s191]
                %373 = vst [vmem:[%s199 + $0x158] sm:%s191] %v372
                %v374 = vld [vmem:[%s198 + $0x2b8] sm:%s191]
                %375 = vst [vmem:[%s199 + $0x15c] sm:%s191] %v374
                %v376 = vld [vmem:[%s198 + $0x2c0] sm:%s191]
                %377 = vst [vmem:[%s199 + $0x160] sm:%s191] %v376
                %v378 = vld [vmem:[%s198 + $0x2c8] sm:%s191]
                %379 = vst [vmem:[%s199 + $0x164] sm:%s191] %v378
                %v380 = vld [vmem:[%s198 + $0x2d0] sm:%s191]
                %381 = vst [vmem:[%s199 + $0x168] sm:%s191] %v380
                %v382 = vld [vmem:[%s198 + $0x2d8] sm:%s191]
                %383 = vst [vmem:[%s199 + $0x16c] sm:%s191] %v382
                %v384 = vld [vmem:[%s198 + $0x2e0] sm:%s191]
                %385 = vst [vmem:[%s199 + $0x170] sm:%s191] %v384
                %v386 = vld [vmem:[%s198 + $0x2e8] sm:%s191]
                %387 = vst [vmem:[%s199 + $0x174] sm:%s191] %v386
                %v388 = vld [vmem:[%s198 + $0x2f0] sm:%s191]
                %389 = vst [vmem:[%s199 + $0x178] sm:%s191] %v388
                %v390 = vld [vmem:[%s198 + $0x2f8] sm:%s191]
                %391 = vst [vmem:[%s199 + $0x17c] sm:%s191] %v390
                %v392 = vld [vmem:[%s198 + $0x300] sm:%s191]
                %393 = vst [vmem:[%s199 + $0x180] sm:%s191] %v392
                %v394 = vld [vmem:[%s198 + $0x308] sm:%s191]
                %395 = vst [vmem:[%s199 + $0x184] sm:%s191] %v394
                %v396 = vld [vmem:[%s198 + $0x310] sm:%s191]
                %397 = vst [vmem:[%s199 + $0x188] sm:%s191] %v396
                %v398 = vld [vmem:[%s198 + $0x318] sm:%s191]
                %399 = vst [vmem:[%s199 + $0x18c] sm:%s191] %v398
                %v400 = vld [vmem:[%s198 + $0x320] sm:%s191]
                %401 = vst [vmem:[%s199 + $0x190] sm:%s191] %v400
                %v402 = vld [vmem:[%s198 + $0x328] sm:%s191]
                %403 = vst [vmem:[%s199 + $0x194] sm:%s191] %v402
                %v404 = vld [vmem:[%s198 + $0x330] sm:%s191]
                %405 = vst [vmem:[%s199 + $0x198] sm:%s191] %v404
                %v406 = vld [vmem:[%s198 + $0x338] sm:%s191]
                %407 = vst [vmem:[%s199 + $0x19c] sm:%s191] %v406
                %v408 = vld [vmem:[%s198 + $0x340] sm:%s191]
                %409 = vst [vmem:[%s199 + $0x1a0] sm:%s191] %v408
                %v410 = vld [vmem:[%s198 + $0x348] sm:%s191]
                %411 = vst [vmem:[%s199 + $0x1a4] sm:%s191] %v410
                %v412 = vld [vmem:[%s198 + $0x350] sm:%s191]
                %413 = vst [vmem:[%s199 + $0x1a8] sm:%s191] %v412
                %v414 = vld [vmem:[%s198 + $0x358] sm:%s191]
                %415 = vst [vmem:[%s199 + $0x1ac] sm:%s191] %v414
                %v416 = vld [vmem:[%s198 + $0x360] sm:%s191]
                %417 = vst [vmem:[%s199 + $0x1b0] sm:%s191] %v416
                %v418 = vld [vmem:[%s198 + $0x368] sm:%s191]
                %419 = vst [vmem:[%s199 + $0x1b4] sm:%s191] %v418
                %v420 = vld [vmem:[%s198 + $0x370] sm:%s191]
                %421 = vst [vmem:[%s199 + $0x1b8] sm:%s191] %v420
                %v422 = vld [vmem:[%s198 + $0x378] sm:%s191]
                %423 = vst [vmem:[%s199 + $0x1bc] sm:%s191] %v422
                %v424 = vld [vmem:[%s198 + $0x380] sm:%s191]
                %425 = vst [vmem:[%s199 + $0x1c0] sm:%s191] %v424
                %v426 = vld [vmem:[%s198 + $0x388] sm:%s191]
                %427 = vst [vmem:[%s199 + $0x1c4] sm:%s191] %v426
                %v428 = vld [vmem:[%s198 + $0x390] sm:%s191]
                %429 = vst [vmem:[%s199 + $0x1c8] sm:%s191] %v428
                %v430 = vld [vmem:[%s198 + $0x398] sm:%s191]
                %431 = vst [vmem:[%s199 + $0x1cc] sm:%s191] %v430
                %v432 = vld [vmem:[%s198 + $0x3a0] sm:%s191]
                %433 = vst [vmem:[%s199 + $0x1d0] sm:%s191] %v432
                %v434 = vld [vmem:[%s198 + $0x3a8] sm:%s191]
                %435 = vst [vmem:[%s199 + $0x1d4] sm:%s191] %v434
                %v436 = vld [vmem:[%s198 + $0x3b0] sm:%s191]
                %437 = vst [vmem:[%s199 + $0x1d8] sm:%s191] %v436
                %v438 = vld [vmem:[%s198 + $0x3b8] sm:%s191]
                %439 = vst [vmem:[%s199 + $0x1dc] sm:%s191] %v438
                %v440 = vld [vmem:[%s198 + $0x3c0] sm:%s191]
                %441 = vst [vmem:[%s199 + $0x1e0] sm:%s191] %v440
                %v442 = vld [vmem:[%s198 + $0x3c8] sm:%s191]
                %443 = vst [vmem:[%s199 + $0x1e4] sm:%s191] %v442
                %v444 = vld [vmem:[%s198 + $0x3d0] sm:%s191]
                %445 = vst [vmem:[%s199 + $0x1e8] sm:%s191] %v444
                %v446 = vld [vmem:[%s198 + $0x3d8] sm:%s191]
                %447 = vst [vmem:[%s199 + $0x1ec] sm:%s191] %v446
                %v448 = vld [vmem:[%s198 + $0x3e0] sm:%s191]
                %449 = vst [vmem:[%s199 + $0x1f0] sm:%s191] %v448
                %v450 = vld [vmem:[%s198 + $0x3e8] sm:%s191]
                %451 = vst [vmem:[%s199 + $0x1f4] sm:%s191] %v450
                %v452 = vld [vmem:[%s198 + $0x3f0] sm:%s191]
                %453 = vst [vmem:[%s199 + $0x1f8] sm:%s191] %v452
                %v454 = vld [vmem:[%s198 + $0x3f8] sm:%s191]
                %455 = vst [vmem:[%s199 + $0x1fc] sm:%s191] %v454
              $region41: #{decoder_forward.4} parent=35 // loop_footer
                %s197 = sadd.s32 1, %s193
              $region42: #{decoder_forward.4} parent=35 // loop_footer_branch
                %192 = sbr.rel target = $region38
              $region43: #{decoder_forward.4} parent=35 // loop_exit
                _
            $region36: #{decoder_forward.4} parent=27 // pred_fallthru
              _
          $region28: #{decoder_forward.4} parent=23 // pred_fallthru
            _
          %732 = vnop
        $region24: #{decoder_forward.4} parent=19 // pred_fallthru
          _
        // Predicated region
        $region62: #{decoder_forward.4} parent=19 // pred_check
          %p733 = pneg %p104
        $region63: #{decoder_forward.4} parent=19 // pred_check_branch
          %735 = sbr.rel (%p733) target = $region65
        $region64: #{decoder_forward.4} parent=19 // pred_region
          %p736 = scmp.lt.s32.totalorder %s17, 1
          %s737 = scalar_select %p736, %s17, 1
          %s738 = scalar_lea.vmem %s2, %s737
        $region65: #{decoder_forward.4} parent=19 // pred_fallthru
          _
      $region20: #{decoder_forward.4} parent=5 // pred_fallthru
        _
      %p739 = scmp.le.s32.totalorder 1, %s9
      %p740 = scmp.lt.s32.totalorder %s9, 3
      %p741 = pnand %p739, %p740
      %p742 = pneg %p741
      // Predicated region
      $region66: #{decoder_forward.4} parent=5 // pred_check
        _
      $region67: #{decoder_forward.4} parent=5 // pred_check_branch
        %744 = sbr.rel (%p741) target = $region69
      $region68: #{decoder_forward.4} parent=5 // pred_region
        %s745 = ssub.s32 %s9, 1
        %s746 = sand.u32 %s71, 1
        %s747 = sand.u32 %s71, 1
        %s748 = smul.addr %s747, 512
        %s749 = scalar_lea.vmem [#allocation3], %s748
        // Predicated region
        $region70: #{decoder_forward.4} parent=68 // pred_check
          %p750 = pneg %p84
        $region71: #{decoder_forward.4} parent=68 // pred_check_branch
          %752 = sbr.rel (%p750) target = $region73
        $region72: #{decoder_forward.4} parent=68 // pred_region
          _
        $region73: #{decoder_forward.4} parent=68 // pred_fallthru
          _
        %s753 = smul.u32 4, %s19
        %s754 = smul.u32 8, %s21
        %p755 = scmp.lt.s32.totalorder %s753, 3
        %s756 = scalar_select %p755, %s753, 3
        %p757 = scmp.lt.s32.totalorder %s754, 7
        %s758 = scalar_select %p757, %s754, 7
        %s759 = smul.addr %s756, 8
        %s760 = sadd.s32 %s758, %s759
        %s761 = smul.addr %s760, 4
        %s762 = scalar_lea.vmem %s0, %s761
        %p763 = pneg %p56
        %p764 = pneg %p53
        %s765 = sand.u32 %s71, 1
        %s766 = sand.u32 %s71, 1
        %s767 = smul.addr %s766, 512
        %s768 = scalar_lea.vmem [#allocation3], %s767
        %p769 = pneg %p84
        %p770 = pneg %p81
        %p771 = scmp.lt.s32.totalorder %s20, 1
        %s772 = scalar_select %p771, %s20, 1
        %s773 = scalar_lea.vmem %s2, %s772
        %p774 = pneg %p110
        %p775 = pneg %p107
        %p776 = pneg %p138
        %p777 = pneg %p135
        %s778 = sand.u32 %s125, 1
        %s779 = sand.u32 %s125, 1
        %s780 = smul.addr %s779, 32
        %s781 = scalar_lea.vmem [#allocation4], %s780
        %s782 = smul.u32 4, %s19
        %s783 = smul.u32 8, %s21
        %p784 = scmp.lt.s32.totalorder %s782, 3
        %s785 = scalar_select %p784, %s782, 3
        %p786 = scmp.lt.s32.totalorder %s783, 7
        %s787 = scalar_select %p786, %s783, 7
        %s788 = smul.addr %s785, 8
        %s789 = sadd.s32 %s787, %s788
        %s790 = smul.addr %s789, 4
        %s791 = scalar_lea.vmem %s0, %s790
        %s792 = smul.u32 4, %s19
        %s793 = smul.u32 8, %s21
        %s794 = smul.u32 128, %s21
        %p795 = scmp.lt.s32.totalorder %s20, 1
        %s796 = scalar_select %p795, %s20, 1
        %s797 = scalar_lea.vmem %s2, %s796
        %s798 = smul.u32 4, %s19
        %p800 = scmp.eq.s32.totalorder %s21, 0
        // Predicated region
        $region74: #{decoder_forward.4} parent=68 // pred_check
          %p801 = pneg %p800
        $region75: #{decoder_forward.4} parent=68 // pred_check_branch
          %803 = sbr.rel (%p801) target = $region77
        $region76: #{decoder_forward.4} parent=68 // pred_region
          %804 = vst [vmem:[#allocation2] sm:$0xff] 0.0
          %805 = vst [vmem:[#allocation2 + $0x8] sm:$0xff] 0.0
          %806 = vst [vmem:[#allocation2 + $0x10] sm:$0xff] 0.0
          %807 = vst [vmem:[#allocation2 + $0x18] sm:$0xff] 0.0
        $region77: #{decoder_forward.4} parent=68 // pred_fallthru
          _
        %v808 = vld [vmem:[#allocation2] sm:$0xff]
        %v809 = vld [vmem:[#allocation2 + $0x8] sm:$0xff]
        %v810 = vld [vmem:[#allocation2 + $0x10] sm:$0xff]
        %v811 = vld [vmem:[#allocation2 + $0x18] sm:$0xff]
        %v812 = vld [vmem:[%s791] sm:$0xff]
        %v813 = vld [vmem:[%s791 + $0x8] sm:$0xff]
        %v814 = vld [vmem:[%s791 + $0x10] sm:$0xff]
        %v815 = vld [vmem:[%s791 + $0x18] sm:$0xff]
        %v816 = vld [vmem:[%s791 + $0x20] sm:$0xff]
        %v817 = vld [vmem:[%s791 + $0x28] sm:$0xff]
        %v818 = vld [vmem:[%s791 + $0x30] sm:$0xff]
        %v819 = vld [vmem:[%s791 + $0x38] sm:$0xff]
        %v820 = vld [vmem:[%s791 + $0x40] sm:$0xff]
        %v821 = vld [vmem:[%s791 + $0x48] sm:$0xff]
        %v822 = vld [vmem:[%s791 + $0x50] sm:$0xff]
        %v823 = vld [vmem:[%s791 + $0x58] sm:$0xff]
        %v824 = vld [vmem:[%s791 + $0x60] sm:$0xff]
        %v825 = vld [vmem:[%s791 + $0x68] sm:$0xff]
        %v826 = vld [vmem:[%s791 + $0x70] sm:$0xff]
        %v827 = vld [vmem:[%s791 + $0x78] sm:$0xff]
        %v828 = vld [vmem:[%s749] sm:$0xf]
        %v829 = vld [vmem:[%s749 + $0x4] sm:$0xf]
        %v830 = vld [vmem:[%s749 + $0x8] sm:$0xf]
        %v831 = vld [vmem:[%s749 + $0xc] sm:$0xf]
        %v832 = vld [vmem:[%s749 + $0x10] sm:$0xf]
        %v833 = vld [vmem:[%s749 + $0x14] sm:$0xf]
        %v834 = vld [vmem:[%s749 + $0x18] sm:$0xf]
        %v835 = vld [vmem:[%s749 + $0x1c] sm:$0xf]
        %v836 = vld [vmem:[%s749 + $0x20] sm:$0xf]
        %v837 = vld [vmem:[%s749 + $0x24] sm:$0xf]
        %v838 = vld [vmem:[%s749 + $0x28] sm:$0xf]
        %v839 = vld [vmem:[%s749 + $0x2c] sm:$0xf]
        %v840 = vld [vmem:[%s749 + $0x30] sm:$0xf]
        %v841 = vld [vmem:[%s749 + $0x34] sm:$0xf]
        %v842 = vld [vmem:[%s749 + $0x38] sm:$0xf]
        %v843 = vld [vmem:[%s749 + $0x3c] sm:$0xf]
        %v844 = vld [vmem:[%s749 + $0x40] sm:$0xf]
        %v845 = vld [vmem:[%s749 + $0x44] sm:$0xf]
        %v846 = vld [vmem:[%s749 + $0x48] sm:$0xf]
        %v847 = vld [vmem:[%s749 + $0x4c] sm:$0xf]
        %v848 = vld [vmem:[%s749 + $0x50] sm:$0xf]
        %v849 = vld [vmem:[%s749 + $0x54] sm:$0xf]
        %v850 = vld [vmem:[%s749 + $0x58] sm:$0xf]
        %v851 = vld [vmem:[%s749 + $0x5c] sm:$0xf]
        %v852 = vld [vmem:[%s749 + $0x60] sm:$0xf]
        %v853 = vld [vmem:[%s749 + $0x64] sm:$0xf]
        %v854 = vld [vmem:[%s749 + $0x68] sm:$0xf]
        %v855 = vld [vmem:[%s749 + $0x6c] sm:$0xf]
        %v856 = vld [vmem:[%s749 + $0x70] sm:$0xf]
        %v857 = vld [vmem:[%s749 + $0x74] sm:$0xf]
        %v858 = vld [vmem:[%s749 + $0x78] sm:$0xf]
        %v859 = vld [vmem:[%s749 + $0x7c] sm:$0xf]
        %v860 = vld [vmem:[%s749 + $0x80] sm:$0xf]
        %v861 = vld [vmem:[%s749 + $0x84] sm:$0xf]
        %v862 = vld [vmem:[%s749 + $0x88] sm:$0xf]
        %v863 = vld [vmem:[%s749 + $0x8c] sm:$0xf]
        %v864 = vld [vmem:[%s749 + $0x90] sm:$0xf]
        %v865 = vld [vmem:[%s749 + $0x94] sm:$0xf]
        %v866 = vld [vmem:[%s749 + $0x98] sm:$0xf]
        %v867 = vld [vmem:[%s749 + $0x9c] sm:$0xf]
        %v868 = vld [vmem:[%s749 + $0xa0] sm:$0xf]
        %v869 = vld [vmem:[%s749 + $0xa4] sm:$0xf]
        %v870 = vld [vmem:[%s749 + $0xa8] sm:$0xf]
        %v871 = vld [vmem:[%s749 + $0xac] sm:$0xf]
        %v872 = vld [vmem:[%s749 + $0xb0] sm:$0xf]
        %v873 = vld [vmem:[%s749 + $0xb4] sm:$0xf]
        %v874 = vld [vmem:[%s749 + $0xb8] sm:$0xf]
        %v875 = vld [vmem:[%s749 + $0xbc] sm:$0xf]
        %v876 = vld [vmem:[%s749 + $0xc0] sm:$0xf]
        %v877 = vld [vmem:[%s749 + $0xc4] sm:$0xf]
        %v878 = vld [vmem:[%s749 + $0xc8] sm:$0xf]
        %v879 = vld [vmem:[%s749 + $0xcc] sm:$0xf]
        %v880 = vld [vmem:[%s749 + $0xd0] sm:$0xf]
        %v881 = vld [vmem:[%s749 + $0xd4] sm:$0xf]
        %v882 = vld [vmem:[%s749 + $0xd8] sm:$0xf]
        %v883 = vld [vmem:[%s749 + $0xdc] sm:$0xf]
        %v884 = vld [vmem:[%s749 + $0xe0] sm:$0xf]
        %v885 = vld [vmem:[%s749 + $0xe4] sm:$0xf]
        %v886 = vld [vmem:[%s749 + $0xe8] sm:$0xf]
        %v887 = vld [vmem:[%s749 + $0xec] sm:$0xf]
        %v888 = vld [vmem:[%s749 + $0xf0] sm:$0xf]
        %v889 = vld [vmem:[%s749 + $0xf4] sm:$0xf]
        %v890 = vld [vmem:[%s749 + $0xf8] sm:$0xf]
        %v891 = vld [vmem:[%s749 + $0xfc] sm:$0xf]
        %v892 = vld [vmem:[%s749 + $0x100] sm:$0xf]
        %v893 = vld [vmem:[%s749 + $0x104] sm:$0xf]
        %v894 = vld [vmem:[%s749 + $0x108] sm:$0xf]
        %v895 = vld [vmem:[%s749 + $0x10c] sm:$0xf]
        %v896 = vld [vmem:[%s749 + $0x110] sm:$0xf]
        %v897 = vld [vmem:[%s749 + $0x114] sm:$0xf]
        %v898 = vld [vmem:[%s749 + $0x118] sm:$0xf]
        %v899 = vld [vmem:[%s749 + $0x11c] sm:$0xf]
        %v900 = vld [vmem:[%s749 + $0x120] sm:$0xf]
        %v901 = vld [vmem:[%s749 + $0x124] sm:$0xf]
        %v902 = vld [vmem:[%s749 + $0x128] sm:$0xf]
        %v903 = vld [vmem:[%s749 + $0x12c] sm:$0xf]
        %v904 = vld [vmem:[%s749 + $0x130] sm:$0xf]
        %v905 = vld [vmem:[%s749 + $0x134] sm:$0xf]
        %v906 = vld [vmem:[%s749 + $0x138] sm:$0xf]
        %v907 = vld [vmem:[%s749 + $0x13c] sm:$0xf]
        %v908 = vld [vmem:[%s749 + $0x140] sm:$0xf]
        %v909 = vld [vmem:[%s749 + $0x144] sm:$0xf]
        %v910 = vld [vmem:[%s749 + $0x148] sm:$0xf]
        %v911 = vld [vmem:[%s749 + $0x14c] sm:$0xf]
        %v912 = vld [vmem:[%s749 + $0x150] sm:$0xf]
        %v913 = vld [vmem:[%s749 + $0x154] sm:$0xf]
        %v914 = vld [vmem:[%s749 + $0x158] sm:$0xf]
        %v915 = vld [vmem:[%s749 + $0x15c] sm:$0xf]
        %v916 = vld [vmem:[%s749 + $0x160] sm:$0xf]
        %v917 = vld [vmem:[%s749 + $0x164] sm:$0xf]
        %v918 = vld [vmem:[%s749 + $0x168] sm:$0xf]
        %v919 = vld [vmem:[%s749 + $0x16c] sm:$0xf]
        %v920 = vld [vmem:[%s749 + $0x170] sm:$0xf]
        %v921 = vld [vmem:[%s749 + $0x174] sm:$0xf]
        %v922 = vld [vmem:[%s749 + $0x178] sm:$0xf]
        %v923 = vld [vmem:[%s749 + $0x17c] sm:$0xf]
        %v924 = vld [vmem:[%s749 + $0x180] sm:$0xf]
        %v925 = vld [vmem:[%s749 + $0x184] sm:$0xf]
        %v926 = vld [vmem:[%s749 + $0x188] sm:$0xf]
        %v927 = vld [vmem:[%s749 + $0x18c] sm:$0xf]
        %v928 = vld [vmem:[%s749 + $0x190] sm:$0xf]
        %v929 = vld [vmem:[%s749 + $0x194] sm:$0xf]
        %v930 = vld [vmem:[%s749 + $0x198] sm:$0xf]
        %v931 = vld [vmem:[%s749 + $0x19c] sm:$0xf]
        %v932 = vld [vmem:[%s749 + $0x1a0] sm:$0xf]
        %v933 = vld [vmem:[%s749 + $0x1a4] sm:$0xf]
        %v934 = vld [vmem:[%s749 + $0x1a8] sm:$0xf]
        %v935 = vld [vmem:[%s749 + $0x1ac] sm:$0xf]
        %v936 = vld [vmem:[%s749 + $0x1b0] sm:$0xf]
        %v937 = vld [vmem:[%s749 + $0x1b4] sm:$0xf]
        %v938 = vld [vmem:[%s749 + $0x1b8] sm:$0xf]
        %v939 = vld [vmem:[%s749 + $0x1bc] sm:$0xf]
        %v940 = vld [vmem:[%s749 + $0x1c0] sm:$0xf]
        %v941 = vld [vmem:[%s749 + $0x1c4] sm:$0xf]
        %v942 = vld [vmem:[%s749 + $0x1c8] sm:$0xf]
        %v943 = vld [vmem:[%s749 + $0x1cc] sm:$0xf]
        %v944 = vld [vmem:[%s749 + $0x1d0] sm:$0xf]
        %v945 = vld [vmem:[%s749 + $0x1d4] sm:$0xf]
        %v946 = vld [vmem:[%s749 + $0x1d8] sm:$0xf]
        %v947 = vld [vmem:[%s749 + $0x1dc] sm:$0xf]
        %v948 = vld [vmem:[%s749 + $0x1e0] sm:$0xf]
        %v949 = vld [vmem:[%s749 + $0x1e4] sm:$0xf]
        %v950 = vld [vmem:[%s749 + $0x1e8] sm:$0xf]
        %v951 = vld [vmem:[%s749 + $0x1ec] sm:$0xf]
        %v952 = vld [vmem:[%s749 + $0x1f0] sm:$0xf]
        %v953 = vld [vmem:[%s749 + $0x1f4] sm:$0xf]
        %v954 = vld [vmem:[%s749 + $0x1f8] sm:$0xf]
        %v955 = vld [vmem:[%s749 + $0x1fc] sm:$0xf]
        %v972 = vunpack.c.l.b16 %v812
        %v973 = vunpack.c.h.b16 %v812
        %v974 = vunpack.c.l.b16 %v813
        %v975 = vunpack.c.h.b16 %v813
        %v976 = vunpack.c.l.b16 %v814
        %v977 = vunpack.c.h.b16 %v814
        %v978 = vunpack.c.l.b16 %v815
        %v979 = vunpack.c.h.b16 %v815
        %v980 = vunpack.c.l.b16 %v816
        %v981 = vunpack.c.h.b16 %v816
        %v982 = vunpack.c.l.b16 %v817
        %v983 = vunpack.c.h.b16 %v817
        %v984 = vunpack.c.l.b16 %v818
        %v985 = vunpack.c.h.b16 %v818
        %v986 = vunpack.c.l.b16 %v819
        %v987 = vunpack.c.h.b16 %v819
        %v988 = vunpack.c.l.b16 %v820
        %v989 = vunpack.c.h.b16 %v820
        %v990 = vunpack.c.l.b16 %v821
        %v991 = vunpack.c.h.b16 %v821
        %v992 = vunpack.c.l.b16 %v822
        %v993 = vunpack.c.h.b16 %v822
        %v994 = vunpack.c.l.b16 %v823
        %v995 = vunpack.c.h.b16 %v823
        %v996 = vunpack.c.l.b16 %v824
        %v997 = vunpack.c.h.b16 %v824
        %v998 = vunpack.c.l.b16 %v825
        %v999 = vunpack.c.h.b16 %v825
        %v1000 = vunpack.c.l.b16 %v826
        %v1001 = vunpack.c.h.b16 %v826
        %v1002 = vunpack.c.l.b16 %v827
        %v1003 = vunpack.c.h.b16 %v827
        %v1004 = vpack.c.b16 %v980, %v972
        %v1005 = vpack.c.b16 %v981, %v973
        %v1006 = vpack.c.b16 %v982, %v974
        %v1007 = vpack.c.b16 %v983, %v975
        %v1008 = vpack.c.b16 %v984, %v976
        %v1009 = vpack.c.b16 %v985, %v977
        %v1010 = vpack.c.b16 %v986, %v978
        %v1011 = vpack.c.b16 %v987, %v979
        %v1012 = vpack.c.b16 %v996, %v988
        %v1013 = vpack.c.b16 %v997, %v989
        %v1014 = vpack.c.b16 %v998, %v990
        %v1015 = vpack.c.b16 %v999, %v991
        %v1016 = vpack.c.b16 %v1000, %v992
        %v1017 = vpack.c.b16 %v1001, %v993
        %v1018 = vpack.c.b16 %v1002, %v994
        %v1019 = vpack.c.b16 %v1003, %v995
        %v1164 = vunpack.c.l.b16 %v828
        %v1165 = vunpack.c.l.b16 %v829
        %v1166 = vunpack.c.l.b16 %v830
        %v1167 = vunpack.c.l.b16 %v831
        %v1168 = vunpack.c.l.b16 %v832
        %v1169 = vunpack.c.l.b16 %v833
        %v1170 = vunpack.c.l.b16 %v834
        %v1171 = vunpack.c.l.b16 %v835
        %v1172 = vunpack.c.l.b16 %v836
        %v1173 = vunpack.c.l.b16 %v837
        %v1174 = vunpack.c.l.b16 %v838
        %v1175 = vunpack.c.l.b16 %v839
        %v1176 = vunpack.c.l.b16 %v840
        %v1177 = vunpack.c.l.b16 %v841
        %v1178 = vunpack.c.l.b16 %v842
        %v1179 = vunpack.c.l.b16 %v843
        %v1180 = vunpack.c.l.b16 %v844
        %v1181 = vunpack.c.l.b16 %v845
        %v1182 = vunpack.c.l.b16 %v846
        %v1183 = vunpack.c.l.b16 %v847
        %v1184 = vunpack.c.l.b16 %v848
        %v1185 = vunpack.c.l.b16 %v849
        %v1186 = vunpack.c.l.b16 %v850
        %v1187 = vunpack.c.l.b16 %v851
        %v1188 = vunpack.c.l.b16 %v852
        %v1189 = vunpack.c.l.b16 %v853
        %v1190 = vunpack.c.l.b16 %v854
        %v1191 = vunpack.c.l.b16 %v855
        %v1192 = vunpack.c.l.b16 %v856
        %v1193 = vunpack.c.l.b16 %v857
        %v1194 = vunpack.c.l.b16 %v858
        %v1195 = vunpack.c.l.b16 %v859
        %v1196 = vunpack.c.l.b16 %v860
        %v1197 = vunpack.c.l.b16 %v861
        %v1198 = vunpack.c.l.b16 %v862
        %v1199 = vunpack.c.l.b16 %v863
        %v1200 = vunpack.c.l.b16 %v864
        %v1201 = vunpack.c.l.b16 %v865
        %v1202 = vunpack.c.l.b16 %v866
        %v1203 = vunpack.c.l.b16 %v867
        %v1204 = vunpack.c.l.b16 %v868
        %v1205 = vunpack.c.l.b16 %v869
        %v1206 = vunpack.c.l.b16 %v870
        %v1207 = vunpack.c.l.b16 %v871
        %v1208 = vunpack.c.l.b16 %v872
        %v1209 = vunpack.c.l.b16 %v873
        %v1210 = vunpack.c.l.b16 %v874
        %v1211 = vunpack.c.l.b16 %v875
        %v1212 = vunpack.c.l.b16 %v876
        %v1213 = vunpack.c.l.b16 %v877
        %v1214 = vunpack.c.l.b16 %v878
        %v1215 = vunpack.c.l.b16 %v879
        %v1216 = vunpack.c.l.b16 %v880
        %v1217 = vunpack.c.l.b16 %v881
        %v1218 = vunpack.c.l.b16 %v882
        %v1219 = vunpack.c.l.b16 %v883
        %v1220 = vunpack.c.l.b16 %v884
        %v1221 = vunpack.c.l.b16 %v885
        %v1222 = vunpack.c.l.b16 %v886
        %v1223 = vunpack.c.l.b16 %v887
        %v1224 = vunpack.c.l.b16 %v888
        %v1225 = vunpack.c.l.b16 %v889
        %v1226 = vunpack.c.l.b16 %v890
        %v1227 = vunpack.c.l.b16 %v891
        %v1228 = vunpack.c.l.b16 %v892
        %v1229 = vunpack.c.l.b16 %v893
        %v1230 = vunpack.c.l.b16 %v894
        %v1231 = vunpack.c.l.b16 %v895
        %v1232 = vunpack.c.l.b16 %v896
        %v1233 = vunpack.c.l.b16 %v897
        %v1234 = vunpack.c.l.b16 %v898
        %v1235 = vunpack.c.l.b16 %v899
        %v1236 = vunpack.c.l.b16 %v900
        %v1237 = vunpack.c.l.b16 %v901
        %v1238 = vunpack.c.l.b16 %v902
        %v1239 = vunpack.c.l.b16 %v903
        %v1240 = vunpack.c.l.b16 %v904
        %v1241 = vunpack.c.l.b16 %v905
        %v1242 = vunpack.c.l.b16 %v906
        %v1243 = vunpack.c.l.b16 %v907
        %v1244 = vunpack.c.l.b16 %v908
        %v1245 = vunpack.c.l.b16 %v909
        %v1246 = vunpack.c.l.b16 %v910
        %v1247 = vunpack.c.l.b16 %v911
        %v1248 = vunpack.c.l.b16 %v912
        %v1249 = vunpack.c.l.b16 %v913
        %v1250 = vunpack.c.l.b16 %v914
        %v1251 = vunpack.c.l.b16 %v915
        %v1252 = vunpack.c.l.b16 %v916
        %v1253 = vunpack.c.l.b16 %v917
        %v1254 = vunpack.c.l.b16 %v918
        %v1255 = vunpack.c.l.b16 %v919
        %v1256 = vunpack.c.l.b16 %v920
        %v1257 = vunpack.c.l.b16 %v921
        %v1258 = vunpack.c.l.b16 %v922
        %v1259 = vunpack.c.l.b16 %v923
        %v1260 = vunpack.c.l.b16 %v924
        %v1261 = vunpack.c.l.b16 %v925
        %v1262 = vunpack.c.l.b16 %v926
        %v1263 = vunpack.c.l.b16 %v927
        %v1264 = vunpack.c.l.b16 %v928
        %v1265 = vunpack.c.l.b16 %v929
        %v1266 = vunpack.c.l.b16 %v930
        %v1267 = vunpack.c.l.b16 %v931
        %v1268 = vunpack.c.l.b16 %v932
        %v1269 = vunpack.c.l.b16 %v933
        %v1270 = vunpack.c.l.b16 %v934
        %v1271 = vunpack.c.l.b16 %v935
        %v1272 = vunpack.c.l.b16 %v936
        %v1273 = vunpack.c.l.b16 %v937
        %v1274 = vunpack.c.l.b16 %v938
        %v1275 = vunpack.c.l.b16 %v939
        %v1276 = vunpack.c.l.b16 %v940
        %v1277 = vunpack.c.l.b16 %v941
        %v1278 = vunpack.c.l.b16 %v942
        %v1279 = vunpack.c.l.b16 %v943
        %v1280 = vunpack.c.l.b16 %v944
        %v1281 = vunpack.c.l.b16 %v945
        %v1282 = vunpack.c.l.b16 %v946
        %v1283 = vunpack.c.l.b16 %v947
        %v1284 = vunpack.c.l.b16 %v948
        %v1285 = vunpack.c.l.b16 %v949
        %v1286 = vunpack.c.l.b16 %v950
        %v1287 = vunpack.c.l.b16 %v951
        %v1288 = vunpack.c.l.b16 %v952
        %v1289 = vunpack.c.l.b16 %v953
        %v1290 = vunpack.c.l.b16 %v954
        %v1291 = vunpack.c.l.b16 %v955
        %v1292 = vpack.c.b16 %v1165, %v1164
        %v1293 = vpack.c.b16 %v1167, %v1166
        %v1294 = vpack.c.b16 %v1169, %v1168
        %v1295 = vpack.c.b16 %v1171, %v1170
        %v1296 = vpack.c.b16 %v1173, %v1172
        %v1297 = vpack.c.b16 %v1175, %v1174
        %v1298 = vpack.c.b16 %v1177, %v1176
        %v1299 = vpack.c.b16 %v1179, %v1178
        %v1300 = vpack.c.b16 %v1181, %v1180
        %v1301 = vpack.c.b16 %v1183, %v1182
        %v1302 = vpack.c.b16 %v1185, %v1184
        %v1303 = vpack.c.b16 %v1187, %v1186
        %v1304 = vpack.c.b16 %v1189, %v1188
        %v1305 = vpack.c.b16 %v1191, %v1190
        %v1306 = vpack.c.b16 %v1193, %v1192
        %v1307 = vpack.c.b16 %v1195, %v1194
        %v1308 = vpack.c.b16 %v1197, %v1196
        %v1309 = vpack.c.b16 %v1199, %v1198
        %v1310 = vpack.c.b16 %v1201, %v1200
        %v1311 = vpack.c.b16 %v1203, %v1202
        %v1312 = vpack.c.b16 %v1205, %v1204
        %v1313 = vpack.c.b16 %v1207, %v1206
        %v1314 = vpack.c.b16 %v1209, %v1208
        %v1315 = vpack.c.b16 %v1211, %v1210
        %v1316 = vpack.c.b16 %v1213, %v1212
        %v1317 = vpack.c.b16 %v1215, %v1214
        %v1318 = vpack.c.b16 %v1217, %v1216
        %v1319 = vpack.c.b16 %v1219, %v1218
        %v1320 = vpack.c.b16 %v1221, %v1220
        %v1321 = vpack.c.b16 %v1223, %v1222
        %v1322 = vpack.c.b16 %v1225, %v1224
        %v1323 = vpack.c.b16 %v1227, %v1226
        %v1324 = vpack.c.b16 %v1229, %v1228
        %v1325 = vpack.c.b16 %v1231, %v1230
        %v1326 = vpack.c.b16 %v1233, %v1232
        %v1327 = vpack.c.b16 %v1235, %v1234
        %v1328 = vpack.c.b16 %v1237, %v1236
        %v1329 = vpack.c.b16 %v1239, %v1238
        %v1330 = vpack.c.b16 %v1241, %v1240
        %v1331 = vpack.c.b16 %v1243, %v1242
        %v1332 = vpack.c.b16 %v1245, %v1244
        %v1333 = vpack.c.b16 %v1247, %v1246
        %v1334 = vpack.c.b16 %v1249, %v1248
        %v1335 = vpack.c.b16 %v1251, %v1250
        %v1336 = vpack.c.b16 %v1253, %v1252
        %v1337 = vpack.c.b16 %v1255, %v1254
        %v1338 = vpack.c.b16 %v1257, %v1256
        %v1339 = vpack.c.b16 %v1259, %v1258
        %v1340 = vpack.c.b16 %v1261, %v1260
        %v1341 = vpack.c.b16 %v1263, %v1262
        %v1342 = vpack.c.b16 %v1265, %v1264
        %v1343 = vpack.c.b16 %v1267, %v1266
        %v1344 = vpack.c.b16 %v1269, %v1268
        %v1345 = vpack.c.b16 %v1271, %v1270
        %v1346 = vpack.c.b16 %v1273, %v1272
        %v1347 = vpack.c.b16 %v1275, %v1274
        %v1348 = vpack.c.b16 %v1277, %v1276
        %v1349 = vpack.c.b16 %v1279, %v1278
        %v1350 = vpack.c.b16 %v1281, %v1280
        %v1351 = vpack.c.b16 %v1283, %v1282
        %v1352 = vpack.c.b16 %v1285, %v1284
        %v1353 = vpack.c.b16 %v1287, %v1286
        %v1354 = vpack.c.b16 %v1289, %v1288
        %v1355 = vpack.c.b16 %v1291, %v1290
        %1420 = vmatprep.subr.bf16.mxu0 0
        %1421 = vmatpush1.bf16.msra.mxu0 %v1299
        %1422 = vmatprep.subr.bf16.mxu0 0
        %1423 = vmatpush1.bf16.msra.mxu0 %v1298
        %1424 = vmatprep.subr.bf16.mxu0 0
        %1425 = vmatpush1.bf16.msra.mxu0 %v1297
        %1426 = vmatprep.subr.bf16.mxu0 0
        %1427 = vmatpush1.bf16.msra.mxu0 %v1296
        %1428 = vmatprep.subr.bf16.mxu0 0
        %1429 = vmatpush1.bf16.msra.mxu0 %v1295
        %1430 = vmatprep.subr.bf16.mxu0 0
        %1431 = vmatpush1.bf16.msra.mxu0 %v1294
        %1432 = vmatprep.subr.bf16.mxu0 0
        %1433 = vmatpush1.bf16.msra.mxu0 %v1293
        %1434 = vmatprep.subr.bf16.mxu0 0
        %1435 = vmatpush1.bf16.msra.mxu0 %v1292
        %1436 = vmatprep.subr.bf16.mxu0 0
        %1437 = vmatpush2.bf16.msra.mxu0 %v1307
        %1438 = vmatprep.subr.bf16.mxu0 0
        %1439 = vmatpush2.bf16.msra.mxu0 %v1306
        %1440 = vmatprep.subr.bf16.mxu0 0
        %1441 = vmatpush2.bf16.msra.mxu0 %v1305
        %1442 = vmatprep.subr.bf16.mxu0 0
        %1443 = vmatpush2.bf16.msra.mxu0 %v1304
        %1444 = vmatprep.subr.bf16.mxu0 0
        %1445 = vmatpush2.bf16.msra.mxu0 %v1303
        %1446 = vmatprep.subr.bf16.mxu0 0
        %1447 = vmatpush2.bf16.msra.mxu0 %v1302
        %1448 = vmatprep.subr.bf16.mxu0 0
        %1449 = vmatpush2.bf16.msra.mxu0 %v1301
        %1450 = vmatprep.subr.bf16.mxu0 0
        %1451 = vmatpush2.bf16.msra.mxu0 %v1300
        %1452 = vmatprep.mubr.bf16.mxu0 %v1005
        %1453 = vmatmul.mubr.bf16.gmra.mxu0 %v1004
        %v1454 = vpop.f32.mrf.mxu0
        %v1455 = vadd.f32 0.0, %v1454
        %v1456 = vpop.f32.mrf.mxu0
        %v1457 = vpop.f32.mrf.mxu0
        %v1458 = vadd.f32 0.0, %v1457
        %v1459 = vpop.f32.mrf.mxu0
        %1460 = vmatprep.mubr.bf16.mxu0 %v1013
        %1461 = vmatmul.mubr.bf16.gmra.mxu0 %v1012
        %v1462 = vpop.f32.mrf.mxu0
        %v1463 = vadd.f32 0.0, %v1462
        %v1464 = vpop.f32.mrf.mxu0
        %v1465 = vpop.f32.mrf.mxu0
        %v1466 = vadd.f32 0.0, %v1465
        %v1467 = vpop.f32.mrf.mxu0
        %1468 = vdwg.mxu0
        %1469 = vmatprep.subr.bf16.mxu0 0
        %1470 = vmatpush1.bf16.msra.mxu0 %v1315
        %1471 = vmatprep.subr.bf16.mxu0 0
        %1472 = vmatpush1.bf16.msra.mxu0 %v1314
        %1473 = vmatprep.subr.bf16.mxu0 0
        %1474 = vmatpush1.bf16.msra.mxu0 %v1313
        %1475 = vmatprep.subr.bf16.mxu0 0
        %1476 = vmatpush1.bf16.msra.mxu0 %v1312
        %1477 = vmatprep.subr.bf16.mxu0 0
        %1478 = vmatpush1.bf16.msra.mxu0 %v1311
        %1479 = vmatprep.subr.bf16.mxu0 0
        %1480 = vmatpush1.bf16.msra.mxu0 %v1310
        %1481 = vmatprep.subr.bf16.mxu0 0
        %1482 = vmatpush1.bf16.msra.mxu0 %v1309
        %1483 = vmatprep.subr.bf16.mxu0 0
        %1484 = vmatpush1.bf16.msra.mxu0 %v1308
        %1485 = vmatprep.subr.bf16.mxu0 0
        %1486 = vmatpush2.bf16.msra.mxu0 %v1323
        %1487 = vmatprep.subr.bf16.mxu0 0
        %1488 = vmatpush2.bf16.msra.mxu0 %v1322
        %1489 = vmatprep.subr.bf16.mxu0 0
        %1490 = vmatpush2.bf16.msra.mxu0 %v1321
        %1491 = vmatprep.subr.bf16.mxu0 0
        %1492 = vmatpush2.bf16.msra.mxu0 %v1320
        %1493 = vmatprep.subr.bf16.mxu0 0
        %1494 = vmatpush2.bf16.msra.mxu0 %v1319
        %1495 = vmatprep.subr.bf16.mxu0 0
        %1496 = vmatpush2.bf16.msra.mxu0 %v1318
        %1497 = vmatprep.subr.bf16.mxu0 0
        %1498 = vmatpush2.bf16.msra.mxu0 %v1317
        %1499 = vmatprep.subr.bf16.mxu0 0
        %1500 = vmatpush2.bf16.msra.mxu0 %v1316
        %1501 = vmatprep.mubr.bf16.mxu0 %v1007
        %1502 = vmatmul.mubr.bf16.gmra.mxu0 %v1006
        %v1503 = vpop.f32.mrf.mxu0
        %v1504 = vadd.f32 %v1455, %v1503
        %v1505 = vpop.f32.mrf.mxu0
        %v1506 = vpop.f32.mrf.mxu0
        %v1507 = vadd.f32 %v1458, %v1506
        %v1508 = vpop.f32.mrf.mxu0
        %1509 = vmatprep.mubr.bf16.mxu0 %v1015
        %1510 = vmatmul.mubr.bf16.gmra.mxu0 %v1014
        %v1511 = vpop.f32.mrf.mxu0
        %v1512 = vadd.f32 %v1463, %v1511
        %v1513 = vpop.f32.mrf.mxu0
        %v1514 = vpop.f32.mrf.mxu0
        %v1515 = vadd.f32 %v1466, %v1514
        %v1516 = vpop.f32.mrf.mxu0
        %1517 = vdwg.mxu0
        %1518 = vmatprep.subr.bf16.mxu0 0
        %1519 = vmatpush1.bf16.msra.mxu0 %v1331
        %1520 = vmatprep.subr.bf16.mxu0 0
        %1521 = vmatpush1.bf16.msra.mxu0 %v1330
        %1522 = vmatprep.subr.bf16.mxu0 0
        %1523 = vmatpush1.bf16.msra.mxu0 %v1329
        %1524 = vmatprep.subr.bf16.mxu0 0
        %1525 = vmatpush1.bf16.msra.mxu0 %v1328
        %1526 = vmatprep.subr.bf16.mxu0 0
        %1527 = vmatpush1.bf16.msra.mxu0 %v1327
        %1528 = vmatprep.subr.bf16.mxu0 0
        %1529 = vmatpush1.bf16.msra.mxu0 %v1326
        %1530 = vmatprep.subr.bf16.mxu0 0
        %1531 = vmatpush1.bf16.msra.mxu0 %v1325
        %1532 = vmatprep.subr.bf16.mxu0 0
        %1533 = vmatpush1.bf16.msra.mxu0 %v1324
        %1534 = vmatprep.subr.bf16.mxu0 0
        %1535 = vmatpush2.bf16.msra.mxu0 %v1339
        %1536 = vmatprep.subr.bf16.mxu0 0
        %1537 = vmatpush2.bf16.msra.mxu0 %v1338
        %1538 = vmatprep.subr.bf16.mxu0 0
        %1539 = vmatpush2.bf16.msra.mxu0 %v1337
        %1540 = vmatprep.subr.bf16.mxu0 0
        %1541 = vmatpush2.bf16.msra.mxu0 %v1336
        %1542 = vmatprep.subr.bf16.mxu0 0
        %1543 = vmatpush2.bf16.msra.mxu0 %v1335
        %1544 = vmatprep.subr.bf16.mxu0 0
        %1545 = vmatpush2.bf16.msra.mxu0 %v1334
        %1546 = vmatprep.subr.bf16.mxu0 0
        %1547 = vmatpush2.bf16.msra.mxu0 %v1333
        %1548 = vmatprep.subr.bf16.mxu0 0
        %1549 = vmatpush2.bf16.msra.mxu0 %v1332
        %1550 = vmatprep.mubr.bf16.mxu0 %v1009
        %1551 = vmatmul.mubr.bf16.gmra.mxu0 %v1008
        %v1552 = vpop.f32.mrf.mxu0
        %v1553 = vadd.f32 %v1504, %v1552
        %v1554 = vpop.f32.mrf.mxu0
        %v1555 = vpop.f32.mrf.mxu0
        %v1556 = vadd.f32 %v1507, %v1555
        %v1557 = vpop.f32.mrf.mxu0
        %1558 = vmatprep.mubr.bf16.mxu0 %v1017
        %1559 = vmatmul.mubr.bf16.gmra.mxu0 %v1016
        %v1560 = vpop.f32.mrf.mxu0
        %v1561 = vadd.f32 %v1512, %v1560
        %v1562 = vpop.f32.mrf.mxu0
        %v1563 = vpop.f32.mrf.mxu0
        %v1564 = vadd.f32 %v1515, %v1563
        %v1565 = vpop.f32.mrf.mxu0
        %1566 = vdwg.mxu0
        %1567 = vmatprep.subr.bf16.mxu0 0
        %1568 = vmatpush1.bf16.msra.mxu0 %v1347
        %1569 = vmatprep.subr.bf16.mxu0 0
        %1570 = vmatpush1.bf16.msra.mxu0 %v1346
        %1571 = vmatprep.subr.bf16.mxu0 0
        %1572 = vmatpush1.bf16.msra.mxu0 %v1345
        %1573 = vmatprep.subr.bf16.mxu0 0
        %1574 = vmatpush1.bf16.msra.mxu0 %v1344
        %1575 = vmatprep.subr.bf16.mxu0 0
        %1576 = vmatpush1.bf16.msra.mxu0 %v1343
        %1577 = vmatprep.subr.bf16.mxu0 0
        %1578 = vmatpush1.bf16.msra.mxu0 %v1342
        %1579 = vmatprep.subr.bf16.mxu0 0
        %1580 = vmatpush1.bf16.msra.mxu0 %v1341
        %1581 = vmatprep.subr.bf16.mxu0 0
        %1582 = vmatpush1.bf16.msra.mxu0 %v1340
        %1583 = vmatprep.subr.bf16.mxu0 0
        %1584 = vmatpush2.bf16.msra.mxu0 %v1355
        %1585 = vmatprep.subr.bf16.mxu0 0
        %1586 = vmatpush2.bf16.msra.mxu0 %v1354
        %1587 = vmatprep.subr.bf16.mxu0 0
        %1588 = vmatpush2.bf16.msra.mxu0 %v1353
        %1589 = vmatprep.subr.bf16.mxu0 0
        %1590 = vmatpush2.bf16.msra.mxu0 %v1352
        %1591 = vmatprep.subr.bf16.mxu0 0
        %1592 = vmatpush2.bf16.msra.mxu0 %v1351
        %1593 = vmatprep.subr.bf16.mxu0 0
        %1594 = vmatpush2.bf16.msra.mxu0 %v1350
        %1595 = vmatprep.subr.bf16.mxu0 0
        %1596 = vmatpush2.bf16.msra.mxu0 %v1349
        %1597 = vmatprep.subr.bf16.mxu0 0
        %1598 = vmatpush2.bf16.msra.mxu0 %v1348
        %1599 = vmatprep.mubr.bf16.mxu0 %v1011
        %1600 = vmatmul.mubr.bf16.gmra.mxu0 %v1010
        %v1601 = vpop.f32.mrf.mxu0
        %v1602 = vadd.f32 %v1553, %v1601
        %v1603 = vpop.f32.mrf.mxu0
        %v1604 = vpop.f32.mrf.mxu0
        %v1605 = vadd.f32 %v1556, %v1604
        %v1606 = vpop.f32.mrf.mxu0
        %1607 = vmatprep.mubr.bf16.mxu0 %v1019
        %1608 = vmatmul.mubr.bf16.gmra.mxu0 %v1018
        %v1609 = vpop.f32.mrf.mxu0
        %v1610 = vadd.f32 %v1561, %v1609
        %v1611 = vpop.f32.mrf.mxu0
        %v1612 = vpop.f32.mrf.mxu0
        %v1613 = vadd.f32 %v1564, %v1612
        %v1614 = vpop.f32.mrf.mxu0
        %1615 = vdwg.mxu0
        %v1616 = vadd.f32 %v808, %v1602
        %v1617 = vadd.f32 %v809, %v1605
        %v1618 = vadd.f32 %v810, %v1610
        %v1619 = vadd.f32 %v811, %v1613
        %1620 = vst [vmem:[#allocation2] sm:$0xff] %v1616
        %1621 = vst [vmem:[#allocation2 + $0x8] sm:$0xff] %v1617
        %1622 = vst [vmem:[#allocation2 + $0x10] sm:$0xff] %v1618
        %1623 = vst [vmem:[#allocation2 + $0x18] sm:$0xff] %v1619
        // Predicated region
        $region78: #{decoder_forward.4} parent=68 // pred_check
          %p1624 = pneg %p800
        $region79: #{decoder_forward.4} parent=68 // pred_check_branch
          %1626 = sbr.rel (%p1624) target = $region81
        $region80: #{decoder_forward.4} parent=68 // pred_region
          %v1627 = vld [vmem:[#allocation2] sm:$0xff]
          %v1628 = vld [vmem:[#allocation2 + $0x8] sm:$0xff]
          %v1629 = vld [vmem:[#allocation2 + $0x10] sm:$0xff]
          %v1630 = vld [vmem:[#allocation2 + $0x18] sm:$0xff]
          %v1631 = vld [vmem:[%s797] sm:$0x1]
          %v1633 = vlaneseq
          %v1634 = vshrl.u32 %v1633, 7
          %v1635 = vsub.s32 0, %v1634
          %v1636 = vrot.slane %v1631, %v1635
          %v1638 = vadd.f32 %v1627, %v1636
          %v1639 = vadd.f32 %v1628, %v1636
          %v1640 = vadd.f32 %v1629, %v1636
          %v1641 = vadd.f32 %v1630, %v1636
          %v1642 = vmax.f32 %v1638, 0.0
          %v1643 = vmax.f32 %v1639, 0.0
          %v1644 = vmax.f32 %v1640, 0.0
          %v1645 = vmax.f32 %v1641, 0.0
          %1646 = vst [vmem:[%s781] sm:$0xff] %v1642
          %1647 = vst [vmem:[%s781 + $0x8] sm:$0xff] %v1643
          %1648 = vst [vmem:[%s781 + $0x10] sm:$0xff] %v1644
          %1649 = vst [vmem:[%s781 + $0x18] sm:$0xff] %v1645
        $region81: #{decoder_forward.4} parent=68 // pred_fallthru
          _
        %s1650 = sand.u32 %s125, 1
        %s1651 = sand.u32 %s125, 1
        %s1652 = smul.addr %s1651, 32
        %s1653 = scalar_lea.vmem [#allocation4], %s1652
        // Predicated region
        $region82: #{decoder_forward.4} parent=68 // pred_check
          %p1654 = pneg %p135
        $region83: #{decoder_forward.4} parent=68 // pred_check_branch
          %1656 = sbr.rel (%p1654) target = $region85
        $region84: #{decoder_forward.4} parent=68 // pred_region
          %s1657 = smul.u32 4, %s19
          %s1658 = smul.addr %s1657, 2
          %s1659 = sadd.s32 %s20, %s1658
          %s1660 = smul.addr %s1659, 8
          %s1661 = scalar_lea.vmem %s3, %s1660
          // Predicated region
          $region86: #{decoder_forward.4} parent=84 // pred_check
            _
          $region87: #{decoder_forward.4} parent=84 // pred_check_branch
            %1663 = sbr.rel (0) target = $region89
          $region88: #{decoder_forward.4} parent=84 // pred_region
            // Predicated region
            $region90: #{decoder_forward.4} parent=88 // pred_check
              _
            $region91: #{decoder_forward.4} parent=88 // pred_check_branch
              %1665 = sbr.rel (0) target = $region93
            $region92: #{decoder_forward.4} parent=88 // pred_region
              // Predicated region
              $region105: #{decoder_forward.4} parent=92 // pred_check
                _
              $region106: #{decoder_forward.4} parent=92 // pred_check_branch
                %1687 = sbr.rel (0) target = $region108
              $region107: #{decoder_forward.4} parent=92 // pred_region
                loop: start=0, step=1, limit=1
                $region109: #{decoder_forward.4} parent=107 // loop_pre_header
                  _
                $region110: #{decoder_forward.4} parent=107 // loop_header
                  %s1689 = sphi 0, %s1693
                  %p1690 = scmp.ge.s32.totalorder %s1689, 1
                  %s1694 = sphi %s1653, %s1653
                  %s1695 = sphi %s1661, %s1661
                $region111: #{decoder_forward.4} parent=107 // loop_header_branch
                  %1692 = sbr.rel (%p1690) target = $region115
                $region112: #{decoder_forward.4} parent=107 // loop_body
                  %v1696 = vld [vmem:[%s1694] sm:$0xff]
                  %1697 = vst [vmem:[%s1695] sm:$0xff] %v1696
                  %v1698 = vld [vmem:[%s1694 + $0x8] sm:$0xff]
                  %1699 = vst [vmem:[%s1695 + $0x10] sm:$0xff] %v1698
                  %v1700 = vld [vmem:[%s1694 + $0x10] sm:$0xff]
                  %1701 = vst [vmem:[%s1695 + $0x20] sm:$0xff] %v1700
                  %v1702 = vld [vmem:[%s1694 + $0x18] sm:$0xff]
                  %1703 = vst [vmem:[%s1695 + $0x30] sm:$0xff] %v1702
                $region113: #{decoder_forward.4} parent=107 // loop_footer
                  %s1693 = sadd.s32 1, %s1689
                $region114: #{decoder_forward.4} parent=107 // loop_footer_branch
                  %1688 = sbr.rel target = $region110
                $region115: #{decoder_forward.4} parent=107 // loop_exit
                  _
              $region108: #{decoder_forward.4} parent=92 // pred_fallthru
                _
              // Predicated region
              $region116: #{decoder_forward.4} parent=92 // pred_check
                _
              $region117: #{decoder_forward.4} parent=92 // pred_check_branch
                %1705 = sbr.rel target = $region119
              $region118: #{decoder_forward.4} parent=92 // pred_region
                _
              $region119: #{decoder_forward.4} parent=92 // pred_fallthru
                _
            $region93: #{decoder_forward.4} parent=88 // pred_fallthru
              _
            // Predicated region
            $region94: #{decoder_forward.4} parent=88 // pred_check
              _
            $region95: #{decoder_forward.4} parent=88 // pred_check_branch
              %1667 = sbr.rel target = $region97
            $region96: #{decoder_forward.4} parent=88 // pred_region
              %s1669 = ssub.s32 256, 1
              loop: start=0, step=1, limit=1
              $region98: #{decoder_forward.4} parent=96 // loop_pre_header
                _
              $region99: #{decoder_forward.4} parent=96 // loop_header
                %s1671 = sphi 0, %s1675
                %p1672 = scmp.ge.s32.totalorder %s1671, 1
                %s1676 = sphi %s1653, %s1653
                %s1677 = sphi %s1661, %s1661
              $region100: #{decoder_forward.4} parent=96 // loop_header_branch
                %1674 = sbr.rel (%p1672) target = $region104
              $region101: #{decoder_forward.4} parent=96 // loop_body
                %v1678 = vld [vmem:[%s1676] sm:%s1669]
                %1679 = vst [vmem:[%s1677] sm:%s1669] %v1678
                %v1680 = vld [vmem:[%s1676 + $0x8] sm:%s1669]
                %1681 = vst [vmem:[%s1677 + $0x10] sm:%s1669] %v1680
                %v1682 = vld [vmem:[%s1676 + $0x10] sm:%s1669]
                %1683 = vst [vmem:[%s1677 + $0x20] sm:%s1669] %v1682
                %v1684 = vld [vmem:[%s1676 + $0x18] sm:%s1669]
                %1685 = vst [vmem:[%s1677 + $0x30] sm:%s1669] %v1684
              $region102: #{decoder_forward.4} parent=96 // loop_footer
                %s1675 = sadd.s32 1, %s1671
              $region103: #{decoder_forward.4} parent=96 // loop_footer_branch
                %1670 = sbr.rel target = $region99
              $region104: #{decoder_forward.4} parent=96 // loop_exit
                _
            $region97: #{decoder_forward.4} parent=88 // pred_fallthru
              _
          $region89: #{decoder_forward.4} parent=84 // pred_fallthru
            _
          %1706 = vnop
        $region85: #{decoder_forward.4} parent=68 // pred_fallthru
          _
      $region69: #{decoder_forward.4} parent=5 // pred_fallthru
        _
      %p1707 = scmp.le.s32.totalorder 2, %s9
      // Predicated region
      $region120: #{decoder_forward.4} parent=5 // pred_check
        %p1708 = pneg %p1707
      $region121: #{decoder_forward.4} parent=5 // pred_check_branch
        %1710 = sbr.rel (%p1708) target = $region123
      $region122: #{decoder_forward.4} parent=5 // pred_region
        %s1711 = ssub.s32 %s9, 2
        // Predicated region
        $region124: #{decoder_forward.4} parent=122 // pred_check
          %p1712 = pneg %p141
        $region125: #{decoder_forward.4} parent=122 // pred_check_branch
          %1714 = sbr.rel (%p1712) target = $region127
        $region126: #{decoder_forward.4} parent=122 // pred_region
          %s1715 = sand.u32 %s126, 1
          %s1716 = sand.u32 %s126, 1
          %s1717 = smul.addr %s1716, 32
          %s1718 = scalar_lea.vmem [#allocation4], %s1717
        $region127: #{decoder_forward.4} parent=122 // pred_fallthru
          _
      $region123: #{decoder_forward.4} parent=5 // pred_fallthru
        _
    $region6: #{decoder_forward.4} parent=1 // loop_footer
      %s13 = sadd.s32 1, %s9
    $region7: #{decoder_forward.4} parent=1 // loop_footer_branch
      %8 = sbr.rel target = $region3
    $region8: #{decoder_forward.4} parent=1 // loop_exit
      _

// kernel: decoder_forward.5
$region0: #{decoder_forward.5}
  #allocation0 [shape = 'u32[]', space=smem, size = 0x4, offset = 0x4, fixed_abs, tag = 'smem constant byte address 0x4 - core index']
  #allocation1 [shape = 'u32[144,128]{1,0:T(1,128)}', space=vmem, size = 0x12000, scoped, tag = 'internal scratch']
  #allocation2 [shape = 'f32[64,128]{1,0:T(8,128)}', space=vmem, size = 0x8000, scoped, tag = 'scratch operand']
  %s0 = inlined_call_operand.vmem [shape: bf16[128,4096], index: 0, kind: input, shape index: {}]
  %s1 = inlined_call_operand.vmem [shape: bf16[4096,128], index: 1, kind: input, shape index: {}]
  %s2 = inlined_call_operand.vmem [shape: f32[1,128], index: 2, kind: input, shape index: {}]
  %s3 = inlined_call_operand.vmem [shape: f32[128,128], index: 3, kind: output, shape index: {}]
  %s4 = sld [smem:[#allocation0]]
  $region76: #{decoder_forward.5} parent=0
    _
  %s6 = ssub.s32 1, %s4
  %s7 = scalar_select 0, %s6, %s4
  $region1: #{decoder_forward.5} parent=0
    #allocation3 [shape = 'u8[262144]{0}', space=vmem, size = 0x40000, scoped, tag = 'input window, operand 0']
    loop: start=0, step=1, limit=10
    $region2: #{decoder_forward.5} parent=1 // loop_pre_header
      _
    $region3: #{decoder_forward.5} parent=1 // loop_header
      %s9 = sphi 0, %s13
      %p10 = scmp.ge.s32.totalorder %s9, 10
      %s16 = sphi 0, %s35
      %s17 = sphi 0, %s31
      %s18 = sphi 0, %s27
      %s19 = sphi 0, %s16
      %s20 = sphi 0, %s17
      %s21 = sphi 0, %s18
      %s22 = sphi 0, %s19
      %s23 = sphi 0, %s20
      %s24 = sphi 0, %s21
      %s40 = sphi 0, %s42
      %s43 = sphi 0, %s40
      %s44 = sphi 0, %s43
      %s60 = sphi 0, %s44
      %s68 = sphi 0, %s70
      %s71 = sphi 0, %s68
      %s72 = sphi 0, %s71
      %s88 = sphi 0, %s72
      %s94 = sphi 0, %s96
      %s97 = sphi 0, %s94
      %s98 = sphi 0, %s97
      %s114 = sphi 0, %s98
      %s122 = sphi 0, %s124
      %s125 = sphi 0, %s122
      %s126 = sphi 0, %s125
      %s142 = sphi 0, %s126
    $region4: #{decoder_forward.5} parent=1 // loop_header_branch
      %12 = sbr.rel (%p10) target = $region8
    $region5: #{decoder_forward.5} parent=1 // loop_body
      %s14 = ssub.s32 %s9, 1
      %s15 = ssub.s32 %s9, 2
      %s25 = sadd.s32 1, %s18
      %p26 = scmp.ge.s32.totalorder %s25, 4
      %s27 = scalar_select %p26, 0, %s25
      %s28 = sadd.s32 1, %s17
      %s29 = scalar_select %p26, %s28, %s17
      %p30 = scmp.ge.s32.totalorder %s29, 1
      %s31 = scalar_select %p30, 0, %s29
      %s32 = sadd.s32 1, %s16
      %s33 = scalar_select %p30, %s32, %s16
      %p34 = scmp.ge.s32.totalorder %s33, 2
      %s35 = scalar_select %p34, 0, %s33
      %s36 = ssub.s32 %s16, %s35
      %s37 = ssub.s32 %s18, %s27
      %s38 = sor.u32 %s36, %s37
      %p39 = scmp.eq.s32.totalorder %s38, 0
      %s41 = sadd.s32 %s40, 1
      %s42 = scalar_select %p39, %s40, %s41
      %p45 = pneg %p39
      %p46 = scmp.eq.s32.totalorder %s9, 7
      %p47 = por %p45, %p46
      %p48 = scmp.ne.s32.totalorder %s40, %s43
      %p49 = scmp.eq.s32.totalorder %s9, 0
      %p50 = por %p48, %p49
      %p51 = scmp.ne.s32.totalorder %s40, %s43
      %p52 = scmp.eq.s32.totalorder %s14, 7
      %p53 = por %p51, %p52
      %p54 = scmp.ne.s32.totalorder %s43, %s44
      %p55 = scmp.eq.s32.totalorder %s14, 0
      %p56 = por %p54, %p55
      %p57 = scmp.ne.s32.totalorder %s43, %s44
      %p58 = scmp.eq.s32.totalorder %s15, 7
      %p59 = por %p57, %p58
      %p61 = scmp.ne.s32.totalorder %s44, %s60
      %p62 = scmp.eq.s32.totalorder %s15, 0
      %p63 = por %p61, %p62
      %s64 = ssub.s32 %s18, %s27
      %s65 = ssub.s32 %s17, %s31
      %s66 = sor.u32 %s64, %s65
      %p67 = scmp.eq.s32.totalorder %s66, 0
      %s69 = sadd.s32 %s68, 1
      %s70 = scalar_select %p67, %s68, %s69
      %p73 = pneg %p67
      %p74 = scmp.eq.s32.totalorder %s9, 7
      %p75 = por %p73, %p74
      %p76 = scmp.ne.s32.totalorder %s68, %s71
      %p77 = scmp.eq.s32.totalorder %s9, 0
      %p78 = por %p76, %p77
      %p79 = scmp.ne.s32.totalorder %s68, %s71
      %p80 = scmp.eq.s32.totalorder %s14, 7
      %p81 = por %p79, %p80
      %p82 = scmp.ne.s32.totalorder %s71, %s72
      %p83 = scmp.eq.s32.totalorder %s14, 0
      %p84 = por %p82, %p83
      %p85 = scmp.ne.s32.totalorder %s71, %s72
      %p86 = scmp.eq.s32.totalorder %s15, 7
      %p87 = por %p85, %p86
      %p89 = scmp.ne.s32.totalorder %s72, %s88
      %p90 = scmp.eq.s32.totalorder %s15, 0
      %p91 = por %p89, %p90
      %s92 = ssub.s32 %s17, %s31
      %p93 = scmp.eq.s32.totalorder %s92, 0
      %s95 = sadd.s32 %s94, 1
      %s96 = scalar_select %p93, %s94, %s95
      %p99 = pneg %p93
      %p100 = scmp.eq.s32.totalorder %s9, 7
      %p101 = por %p99, %p100
      %p102 = scmp.ne.s32.totalorder %s94, %s97
      %p103 = scmp.eq.s32.totalorder %s9, 0
      %p104 = por %p102, %p103
      %p105 = scmp.ne.s32.totalorder %s94, %s97
      %p106 = scmp.eq.s32.totalorder %s14, 7
      %p107 = por %p105, %p106
      %p108 = scmp.ne.s32.totalorder %s97, %s98
      %p109 = scmp.eq.s32.totalorder %s14, 0
      %p110 = por %p108, %p109
      %p111 = scmp.ne.s32.totalorder %s97, %s98
      %p112 = scmp.eq.s32.totalorder %s15, 7
      %p113 = por %p111, %p112
      %p115 = scmp.ne.s32.totalorder %s98, %s114
      %p116 = scmp.eq.s32.totalorder %s15, 0
      %p117 = por %p115, %p116
      %s118 = ssub.s32 %s16, %s35
      %s119 = ssub.s32 %s17, %s31
      %s120 = sor.u32 %s118, %s119
      %p121 = scmp.eq.s32.totalorder %s120, 0
      %s123 = sadd.s32 %s122, 1
      %s124 = scalar_select %p121, %s122, %s123
      %p127 = pneg %p121
      %p128 = scmp.eq.s32.totalorder %s9, 7
      %p129 = por %p127, %p128
      %p130 = scmp.ne.s32.totalorder %s122, %s125
      %p131 = scmp.eq.s32.totalorder %s9, 0
      %p132 = por %p130, %p131
      %p133 = scmp.ne.s32.totalorder %s122, %s125
      %p134 = scmp.eq.s32.totalorder %s14, 7
      %p135 = por %p133, %p134
      %p136 = scmp.ne.s32.totalorder %s125, %s126
      %p137 = scmp.eq.s32.totalorder %s14, 0
      %p138 = por %p136, %p137
      %p139 = scmp.ne.s32.totalorder %s125, %s126
      %p140 = scmp.eq.s32.totalorder %s15, 7
      %p141 = por %p139, %p140
      %p143 = scmp.ne.s32.totalorder %s126, %s142
      %p144 = scmp.eq.s32.totalorder %s15, 0
      %p145 = por %p143, %p144
      %p146 = scmp.le.s32.totalorder 1, %s9
      %p147 = scmp.lt.s32.totalorder %s9, 9
      %p148 = pnand %p146, %p147
      %p149 = pneg %p148
      // Predicated region
      $region9: #{decoder_forward.5} parent=5 // pred_check
        _
      $region10: #{decoder_forward.5} parent=5 // pred_check_branch
        %151 = sbr.rel (%p148) target = $region12
      $region11: #{decoder_forward.5} parent=5 // pred_region
        %s152 = ssub.s32 %s9, 1
        // Predicated region
        $region13: #{decoder_forward.5} parent=11 // pred_check
          %p153 = pneg %p110
        $region14: #{decoder_forward.5} parent=11 // pred_check_branch
          %155 = sbr.rel (%p153) target = $region16
        $region15: #{decoder_forward.5} parent=11 // pred_region
          %p156 = scmp.lt.s32.totalorder %s20, 0
          %s157 = scalar_select %p156, %s20, 0
          %s158 = scalar_lea.vmem %s2, %s157
        $region16: #{decoder_forward.5} parent=11 // pred_fallthru
          _
      $region12: #{decoder_forward.5} parent=5 // pred_fallthru
        _
      %p159 = scmp.lt.s32.totalorder %s9, 8
      // Predicated region
      $region17: #{decoder_forward.5} parent=5 // pred_check
        %p160 = pneg %p159
      $region18: #{decoder_forward.5} parent=5 // pred_check_branch
        %162 = sbr.rel (%p160) target = $region20
      $region19: #{decoder_forward.5} parent=5 // pred_region
        // Predicated region
        $region21: #{decoder_forward.5} parent=19 // pred_check
          %p163 = pneg %p50
        $region22: #{decoder_forward.5} parent=19 // pred_check_branch
          %165 = sbr.rel (%p163) target = $region24
        $region23: #{decoder_forward.5} parent=19 // pred_region
          %s166 = sand.u32 %s40, 1
          %s167 = sand.u32 %s40, 1
          %s168 = smul.addr %s167, 256
          %s169 = scalar_lea.vmem [#allocation3], %s168
          %s170 = smul.u32 8, %s16
          %s171 = smul.u32 8, %s18
          %s172 = smul.addr %s170, 32
          %s173 = sadd.s32 %s171, %s172
          %s174 = smul.addr %s173, 4
          %s175 = scalar_lea.vmem %s0, %s174
          // Predicated region
          $region25: #{decoder_forward.5} parent=23 // pred_check
            _
          $region26: #{decoder_forward.5} parent=23 // pred_check_branch
            %177 = sbr.rel (0) target = $region28
          $region27: #{decoder_forward.5} parent=23 // pred_region
            // Predicated region
            $region29: #{decoder_forward.5} parent=27 // pred_check
              _
            $region30: #{decoder_forward.5} parent=27 // pred_check_branch
              %179 = sbr.rel (0) target = $region32
            $region31: #{decoder_forward.5} parent=27 // pred_region
              loop: start=0, step=1, limit=1
              $region33: #{decoder_forward.5} parent=31 // loop_pre_header
                _
              $region34: #{decoder_forward.5} parent=31 // loop_header
                %s181 = sphi 0, %s185
                %p182 = scmp.ge.s32.totalorder %s181, 1
                %s186 = sphi %s175, %s175
                %s187 = sphi %s169, %s169
              $region35: #{decoder_forward.5} parent=31 // loop_header_branch
                %184 = sbr.rel (%p182) target = $region39
              $region36: #{decoder_forward.5} parent=31 // loop_body
                %v188 = vld [vmem:[%s186] sm:$0xff]
                %189 = vst [vmem:[%s187] sm:$0xff] %v188
                %v190 = vld [vmem:[%s186 + $0x8] sm:$0xff]
                %191 = vst [vmem:[%s187 + $0x8] sm:$0xff] %v190
                %v192 = vld [vmem:[%s186 + $0x10] sm:$0xff]
                %193 = vst [vmem:[%s187 + $0x10] sm:$0xff] %v192
                %v194 = vld [vmem:[%s186 + $0x18] sm:$0xff]
                %195 = vst [vmem:[%s187 + $0x18] sm:$0xff] %v194
                %v196 = vld [vmem:[%s186 + $0x80] sm:$0xff]
                %197 = vst [vmem:[%s187 + $0x20] sm:$0xff] %v196
                %v198 = vld [vmem:[%s186 + $0x88] sm:$0xff]
                %199 = vst [vmem:[%s187 + $0x28] sm:$0xff] %v198
                %v200 = vld [vmem:[%s186 + $0x90] sm:$0xff]
                %201 = vst [vmem:[%s187 + $0x30] sm:$0xff] %v200
                %v202 = vld [vmem:[%s186 + $0x98] sm:$0xff]
                %203 = vst [vmem:[%s187 + $0x38] sm:$0xff] %v202
                %v204 = vld [vmem:[%s186 + $0x100] sm:$0xff]
                %205 = vst [vmem:[%s187 + $0x40] sm:$0xff] %v204
                %v206 = vld [vmem:[%s186 + $0x108] sm:$0xff]
                %207 = vst [vmem:[%s187 + $0x48] sm:$0xff] %v206
                %v208 = vld [vmem:[%s186 + $0x110] sm:$0xff]
                %209 = vst [vmem:[%s187 + $0x50] sm:$0xff] %v208
                %v210 = vld [vmem:[%s186 + $0x118] sm:$0xff]
                %211 = vst [vmem:[%s187 + $0x58] sm:$0xff] %v210
                %v212 = vld [vmem:[%s186 + $0x180] sm:$0xff]
                %213 = vst [vmem:[%s187 + $0x60] sm:$0xff] %v212
                %v214 = vld [vmem:[%s186 + $0x188] sm:$0xff]
                %215 = vst [vmem:[%s187 + $0x68] sm:$0xff] %v214
                %v216 = vld [vmem:[%s186 + $0x190] sm:$0xff]
                %217 = vst [vmem:[%s187 + $0x70] sm:$0xff] %v216
                %v218 = vld [vmem:[%s186 + $0x198] sm:$0xff]
                %219 = vst [vmem:[%s187 + $0x78] sm:$0xff] %v218
                %v220 = vld [vmem:[%s186 + $0x200] sm:$0xff]
                %221 = vst [vmem:[%s187 + $0x80] sm:$0xff] %v220
                %v222 = vld [vmem:[%s186 + $0x208] sm:$0xff]
                %223 = vst [vmem:[%s187 + $0x88] sm:$0xff] %v222
                %v224 = vld [vmem:[%s186 + $0x210] sm:$0xff]
                %225 = vst [vmem:[%s187 + $0x90] sm:$0xff] %v224
                %v226 = vld [vmem:[%s186 + $0x218] sm:$0xff]
                %227 = vst [vmem:[%s187 + $0x98] sm:$0xff] %v226
                %v228 = vld [vmem:[%s186 + $0x280] sm:$0xff]
                %229 = vst [vmem:[%s187 + $0xa0] sm:$0xff] %v228
                %v230 = vld [vmem:[%s186 + $0x288] sm:$0xff]
                %231 = vst [vmem:[%s187 + $0xa8] sm:$0xff] %v230
                %v232 = vld [vmem:[%s186 + $0x290] sm:$0xff]
                %233 = vst [vmem:[%s187 + $0xb0] sm:$0xff] %v232
                %v234 = vld [vmem:[%s186 + $0x298] sm:$0xff]
                %235 = vst [vmem:[%s187 + $0xb8] sm:$0xff] %v234
                %v236 = vld [vmem:[%s186 + $0x300] sm:$0xff]
                %237 = vst [vmem:[%s187 + $0xc0] sm:$0xff] %v236
                %v238 = vld [vmem:[%s186 + $0x308] sm:$0xff]
                %239 = vst [vmem:[%s187 + $0xc8] sm:$0xff] %v238
                %v240 = vld [vmem:[%s186 + $0x310] sm:$0xff]
                %241 = vst [vmem:[%s187 + $0xd0] sm:$0xff] %v240
                %v242 = vld [vmem:[%s186 + $0x318] sm:$0xff]
                %243 = vst [vmem:[%s187 + $0xd8] sm:$0xff] %v242
                %v244 = vld [vmem:[%s186 + $0x380] sm:$0xff]
                %245 = vst [vmem:[%s187 + $0xe0] sm:$0xff] %v244
                %v246 = vld [vmem:[%s186 + $0x388] sm:$0xff]
                %247 = vst [vmem:[%s187 + $0xe8] sm:$0xff] %v246
                %v248 = vld [vmem:[%s186 + $0x390] sm:$0xff]
                %249 = vst [vmem:[%s187 + $0xf0] sm:$0xff] %v248
                %v250 = vld [vmem:[%s186 + $0x398] sm:$0xff]
                %251 = vst [vmem:[%s187 + $0xf8] sm:$0xff] %v250
              $region37: #{decoder_forward.5} parent=31 // loop_footer
                %s185 = sadd.s32 1, %s181
              $region38: #{decoder_forward.5} parent=31 // loop_footer_branch
                %180 = sbr.rel target = $region34
              $region39: #{decoder_forward.5} parent=31 // loop_exit
                _
            $region32: #{decoder_forward.5} parent=27 // pred_fallthru
              _
            // Predicated region
            $region40: #{decoder_forward.5} parent=27 // pred_check
              _
            $region41: #{decoder_forward.5} parent=27 // pred_check_branch
              %253 = sbr.rel target = $region43
            $region42: #{decoder_forward.5} parent=27 // pred_region
              _
            $region43: #{decoder_forward.5} parent=27 // pred_fallthru
              _
          $region28: #{decoder_forward.5} parent=23 // pred_fallthru
            _
          %254 = vnop
        $region24: #{decoder_forward.5} parent=19 // pred_fallthru
          _
        // Predicated region
        $region44: #{decoder_forward.5} parent=19 // pred_check
          %p255 = pneg %p78
        $region45: #{decoder_forward.5} parent=19 // pred_check_branch
          %257 = sbr.rel (%p255) target = $region47
        $region46: #{decoder_forward.5} parent=19 // pred_region
          %s258 = smul.u32 128, %s18
          %p259 = scmp.lt.s32.totalorder %s258, 511
          %s260 = scalar_select %p259, %s258, 511
          %p261 = scmp.lt.s32.totalorder %s17, 0
          %s262 = scalar_select %p261, %s17, 0
          %s263 = sadd.s32 %s262, %s260
          %s264 = smul.addr %s263, 4
          %s265 = scalar_lea.vmem %s1, %s264
          %s266 = smul.u32 128, %s18
        $region47: #{decoder_forward.5} parent=19 // pred_fallthru
          _
      $region20: #{decoder_forward.5} parent=5 // pred_fallthru
        _
      %p267 = scmp.le.s32.totalorder 1, %s9
      %p268 = scmp.lt.s32.totalorder %s9, 9
      %p269 = pnand %p267, %p268
      %p270 = pneg %p269
      // Predicated region
      $region48: #{decoder_forward.5} parent=5 // pred_check
        _
      $region49: #{decoder_forward.5} parent=5 // pred_check_branch
        %272 = sbr.rel (%p269) target = $region51
      $region50: #{decoder_forward.5} parent=5 // pred_region
        %s273 = ssub.s32 %s9, 1
        %s274 = sand.u32 %s43, 1
        %s275 = sand.u32 %s43, 1
        %s276 = smul.addr %s275, 256
        %s277 = scalar_lea.vmem [#allocation3], %s276
        // Predicated region
        $region52: #{decoder_forward.5} parent=50 // pred_check
          %p278 = pneg %p56
        $region53: #{decoder_forward.5} parent=50 // pred_check_branch
          %280 = sbr.rel (%p278) target = $region55
        $region54: #{decoder_forward.5} parent=50 // pred_region
          _
        $region55: #{decoder_forward.5} parent=50 // pred_fallthru
          _
        %s281 = sand.u32 %s43, 1
        %s282 = sand.u32 %s43, 1
        %s283 = smul.addr %s282, 256
        %s284 = scalar_lea.vmem [#allocation3], %s283
        %p285 = pneg %p56
        %p286 = pneg %p53
        %s287 = smul.u32 128, %s21
        %p288 = scmp.lt.s32.totalorder %s287, 511
        %s289 = scalar_select %p288, %s287, 511
        %p290 = scmp.lt.s32.totalorder %s20, 0
        %s291 = scalar_select %p290, %s20, 0
        %s292 = sadd.s32 %s291, %s289
        %s293 = smul.addr %s292, 4
        %s294 = scalar_lea.vmem %s1, %s293
        %p295 = pneg %p84
        %p296 = pneg %p81
        %p297 = scmp.lt.s32.totalorder %s20, 0
        %s298 = scalar_select %p297, %s20, 0
        %s299 = scalar_lea.vmem %s2, %s298
        %p300 = pneg %p110
        %p301 = pneg %p107
        %p302 = pneg %p138
        %p303 = pneg %p135
        %s304 = smul.u32 8, %s19
        %p305 = scmp.lt.s32.totalorder %s304, 15
        %s306 = scalar_select %p305, %s304, 15
        %p307 = scmp.lt.s32.totalorder %s20, 0
        %s308 = scalar_select %p307, %s20, 0
        %s309 = sadd.s32 %s308, %s306
        %s310 = smul.addr %s309, 8
        %s311 = scalar_lea.vmem %s3, %s310
        %s312 = smul.u32 8, %s19
        %s313 = smul.u32 8, %s21
        %s314 = smul.u32 128, %s21
        %p315 = scmp.lt.s32.totalorder %s314, 511
        %s316 = scalar_select %p315, %s314, 511
        %p317 = scmp.lt.s32.totalorder %s20, 0
        %s318 = scalar_select %p317, %s20, 0
        %s319 = sadd.s32 %s318, %s316
        %s320 = smul.addr %s319, 4
        %s321 = scalar_lea.vmem %s1, %s320
        %s322 = smul.u32 128, %s21
        %p323 = scmp.lt.s32.totalorder %s20, 0
        %s324 = scalar_select %p323, %s20, 0
        %s325 = scalar_lea.vmem %s2, %s324
        %s326 = smul.u32 8, %s19
        %p327 = scmp.lt.s32.totalorder %s326, 15
        %s328 = scalar_select %p327, %s326, 15
        %p329 = scmp.lt.s32.totalorder %s20, 0
        %s330 = scalar_select %p329, %s20, 0
        %s331 = sadd.s32 %s330, %s328
        %s332 = smul.addr %s331, 8
        %s333 = scalar_lea.vmem %s3, %s332
        %s334 = smul.u32 8, %s19
        %p336 = scmp.eq.s32.totalorder %s21, 0
        // Predicated region
        $region56: #{decoder_forward.5} parent=50 // pred_check
          %p337 = pneg %p336
        $region57: #{decoder_forward.5} parent=50 // pred_check_branch
          %339 = sbr.rel (%p337) target = $region59
        $region58: #{decoder_forward.5} parent=50 // pred_region
          %340 = vst [vmem:[#allocation2] sm:$0xff] 0.0
          %341 = vst [vmem:[#allocation2 + $0x8] sm:$0xff] 0.0
          %342 = vst [vmem:[#allocation2 + $0x10] sm:$0xff] 0.0
          %343 = vst [vmem:[#allocation2 + $0x18] sm:$0xff] 0.0
          %344 = vst [vmem:[#allocation2 + $0x20] sm:$0xff] 0.0
          %345 = vst [vmem:[#allocation2 + $0x28] sm:$0xff] 0.0
          %346 = vst [vmem:[#allocation2 + $0x30] sm:$0xff] 0.0
          %347 = vst [vmem:[#allocation2 + $0x38] sm:$0xff] 0.0
        $region59: #{decoder_forward.5} parent=50 // pred_fallthru
          _
        %v348 = vld [vmem:[#allocation2] sm:$0xff]
        %v349 = vld [vmem:[#allocation2 + $0x8] sm:$0xff]
        %v350 = vld [vmem:[#allocation2 + $0x10] sm:$0xff]
        %v351 = vld [vmem:[#allocation2 + $0x18] sm:$0xff]
        %v352 = vld [vmem:[#allocation2 + $0x20] sm:$0xff]
        %v353 = vld [vmem:[#allocation2 + $0x28] sm:$0xff]
        %v354 = vld [vmem:[#allocation2 + $0x30] sm:$0xff]
        %v355 = vld [vmem:[#allocation2 + $0x38] sm:$0xff]
        %v356 = vld [vmem:[%s277] sm:$0xff]
        %v357 = vld [vmem:[%s277 + $0x8] sm:$0xff]
        %v358 = vld [vmem:[%s277 + $0x10] sm:$0xff]
        %v359 = vld [vmem:[%s277 + $0x18] sm:$0xff]
        %v360 = vld [vmem:[%s277 + $0x20] sm:$0xff]
        %v361 = vld [vmem:[%s277 + $0x28] sm:$0xff]
        %v362 = vld [vmem:[%s277 + $0x30] sm:$0xff]
        %v363 = vld [vmem:[%s277 + $0x38] sm:$0xff]
        %v364 = vld [vmem:[%s277 + $0x40] sm:$0xff]
        %v365 = vld [vmem:[%s277 + $0x48] sm:$0xff]
        %v366 = vld [vmem:[%s277 + $0x50] sm:$0xff]
        %v367 = vld [vmem:[%s277 + $0x58] sm:$0xff]
        %v368 = vld [vmem:[%s277 + $0x60] sm:$0xff]
        %v369 = vld [vmem:[%s277 + $0x68] sm:$0xff]
        %v370 = vld [vmem:[%s277 + $0x70] sm:$0xff]
        %v371 = vld [vmem:[%s277 + $0x78] sm:$0xff]
        %v372 = vld [vmem:[%s277 + $0x80] sm:$0xff]
        %v373 = vld [vmem:[%s277 + $0x88] sm:$0xff]
        %v374 = vld [vmem:[%s277 + $0x90] sm:$0xff]
        %v375 = vld [vmem:[%s277 + $0x98] sm:$0xff]
        %v376 = vld [vmem:[%s277 + $0xa0] sm:$0xff]
        %v377 = vld [vmem:[%s277 + $0xa8] sm:$0xff]
        %v378 = vld [vmem:[%s277 + $0xb0] sm:$0xff]
        %v379 = vld [vmem:[%s277 + $0xb8] sm:$0xff]
        %v380 = vld [vmem:[%s277 + $0xc0] sm:$0xff]
        %v381 = vld [vmem:[%s277 + $0xc8] sm:$0xff]
        %v382 = vld [vmem:[%s277 + $0xd0] sm:$0xff]
        %v383 = vld [vmem:[%s277 + $0xd8] sm:$0xff]
        %v384 = vld [vmem:[%s277 + $0xe0] sm:$0xff]
        %v385 = vld [vmem:[%s277 + $0xe8] sm:$0xff]
        %v386 = vld [vmem:[%s277 + $0xf0] sm:$0xff]
        %v387 = vld [vmem:[%s277 + $0xf8] sm:$0xff]
        %v388 = vld [vmem:[%s321] sm:$0xf]
        %v389 = vld [vmem:[%s321 + $0x4] sm:$0xf]
        %v390 = vld [vmem:[%s321 + $0x8] sm:$0xf]
        %v391 = vld [vmem:[%s321 + $0xc] sm:$0xf]
        %v392 = vld [vmem:[%s321 + $0x10] sm:$0xf]
        %v393 = vld [vmem:[%s321 + $0x14] sm:$0xf]
        %v394 = vld [vmem:[%s321 + $0x18] sm:$0xf]
        %v395 = vld [vmem:[%s321 + $0x1c] sm:$0xf]
        %v396 = vld [vmem:[%s321 + $0x20] sm:$0xf]
        %v397 = vld [vmem:[%s321 + $0x24] sm:$0xf]
        %v398 = vld [vmem:[%s321 + $0x28] sm:$0xf]
        %v399 = vld [vmem:[%s321 + $0x2c] sm:$0xf]
        %v400 = vld [vmem:[%s321 + $0x30] sm:$0xf]
        %v401 = vld [vmem:[%s321 + $0x34] sm:$0xf]
        %v402 = vld [vmem:[%s321 + $0x38] sm:$0xf]
        %v403 = vld [vmem:[%s321 + $0x3c] sm:$0xf]
        %v404 = vld [vmem:[%s321 + $0x40] sm:$0xf]
        %v405 = vld [vmem:[%s321 + $0x44] sm:$0xf]
        %v406 = vld [vmem:[%s321 + $0x48] sm:$0xf]
        %v407 = vld [vmem:[%s321 + $0x4c] sm:$0xf]
        %v408 = vld [vmem:[%s321 + $0x50] sm:$0xf]
        %v409 = vld [vmem:[%s321 + $0x54] sm:$0xf]
        %v410 = vld [vmem:[%s321 + $0x58] sm:$0xf]
        %v411 = vld [vmem:[%s321 + $0x5c] sm:$0xf]
        %v412 = vld [vmem:[%s321 + $0x60] sm:$0xf]
        %v413 = vld [vmem:[%s321 + $0x64] sm:$0xf]
        %v414 = vld [vmem:[%s321 + $0x68] sm:$0xf]
        %v415 = vld [vmem:[%s321 + $0x6c] sm:$0xf]
        %v416 = vld [vmem:[%s321 + $0x70] sm:$0xf]
        %v417 = vld [vmem:[%s321 + $0x74] sm:$0xf]
        %v418 = vld [vmem:[%s321 + $0x78] sm:$0xf]
        %v419 = vld [vmem:[%s321 + $0x7c] sm:$0xf]
        %v420 = vld [vmem:[%s321 + $0x80] sm:$0xf]
        %v421 = vld [vmem:[%s321 + $0x84] sm:$0xf]
        %v422 = vld [vmem:[%s321 + $0x88] sm:$0xf]
        %v423 = vld [vmem:[%s321 + $0x8c] sm:$0xf]
        %v424 = vld [vmem:[%s321 + $0x90] sm:$0xf]
        %v425 = vld [vmem:[%s321 + $0x94] sm:$0xf]
        %v426 = vld [vmem:[%s321 + $0x98] sm:$0xf]
        %v427 = vld [vmem:[%s321 + $0x9c] sm:$0xf]
        %v428 = vld [vmem:[%s321 + $0xa0] sm:$0xf]
        %v429 = vld [vmem:[%s321 + $0xa4] sm:$0xf]
        %v430 = vld [vmem:[%s321 + $0xa8] sm:$0xf]
        %v431 = vld [vmem:[%s321 + $0xac] sm:$0xf]
        %v432 = vld [vmem:[%s321 + $0xb0] sm:$0xf]
        %v433 = vld [vmem:[%s321 + $0xb4] sm:$0xf]
        %v434 = vld [vmem:[%s321 + $0xb8] sm:$0xf]
        %v435 = vld [vmem:[%s321 + $0xbc] sm:$0xf]
        %v436 = vld [vmem:[%s321 + $0xc0] sm:$0xf]
        %v437 = vld [vmem:[%s321 + $0xc4] sm:$0xf]
        %v438 = vld [vmem:[%s321 + $0xc8] sm:$0xf]
        %v439 = vld [vmem:[%s321 + $0xcc] sm:$0xf]
        %v440 = vld [vmem:[%s321 + $0xd0] sm:$0xf]
        %v441 = vld [vmem:[%s321 + $0xd4] sm:$0xf]
        %v442 = vld [vmem:[%s321 + $0xd8] sm:$0xf]
        %v443 = vld [vmem:[%s321 + $0xdc] sm:$0xf]
        %v444 = vld [vmem:[%s321 + $0xe0] sm:$0xf]
        %v445 = vld [vmem:[%s321 + $0xe4] sm:$0xf]
        %v446 = vld [vmem:[%s321 + $0xe8] sm:$0xf]
        %v447 = vld [vmem:[%s321 + $0xec] sm:$0xf]
        %v448 = vld [vmem:[%s321 + $0xf0] sm:$0xf]
        %v449 = vld [vmem:[%s321 + $0xf4] sm:$0xf]
        %v450 = vld [vmem:[%s321 + $0xf8] sm:$0xf]
        %v451 = vld [vmem:[%s321 + $0xfc] sm:$0xf]
        %v452 = vld [vmem:[%s321 + $0x100] sm:$0xf]
        %v453 = vld [vmem:[%s321 + $0x104] sm:$0xf]
        %v454 = vld [vmem:[%s321 + $0x108] sm:$0xf]
        %v455 = vld [vmem:[%s321 + $0x10c] sm:$0xf]
        %v456 = vld [vmem:[%s321 + $0x110] sm:$0xf]
        %v457 = vld [vmem:[%s321 + $0x114] sm:$0xf]
        %v458 = vld [vmem:[%s321 + $0x118] sm:$0xf]
        %v459 = vld [vmem:[%s321 + $0x11c] sm:$0xf]
        %v460 = vld [vmem:[%s321 + $0x120] sm:$0xf]
        %v461 = vld [vmem:[%s321 + $0x124] sm:$0xf]
        %v462 = vld [vmem:[%s321 + $0x128] sm:$0xf]
        %v463 = vld [vmem:[%s321 + $0x12c] sm:$0xf]
        %v464 = vld [vmem:[%s321 + $0x130] sm:$0xf]
        %v465 = vld [vmem:[%s321 + $0x134] sm:$0xf]
        %v466 = vld [vmem:[%s321 + $0x138] sm:$0xf]
        %v467 = vld [vmem:[%s321 + $0x13c] sm:$0xf]
        %v468 = vld [vmem:[%s321 + $0x140] sm:$0xf]
        %v469 = vld [vmem:[%s321 + $0x144] sm:$0xf]
        %v470 = vld [vmem:[%s321 + $0x148] sm:$0xf]
        %v471 = vld [vmem:[%s321 + $0x14c] sm:$0xf]
        %v472 = vld [vmem:[%s321 + $0x150] sm:$0xf]
        %v473 = vld [vmem:[%s321 + $0x154] sm:$0xf]
        %v474 = vld [vmem:[%s321 + $0x158] sm:$0xf]
        %v475 = vld [vmem:[%s321 + $0x15c] sm:$0xf]
        %v476 = vld [vmem:[%s321 + $0x160] sm:$0xf]
        %v477 = vld [vmem:[%s321 + $0x164] sm:$0xf]
        %v478 = vld [vmem:[%s321 + $0x168] sm:$0xf]
        %v479 = vld [vmem:[%s321 + $0x16c] sm:$0xf]
        %v480 = vld [vmem:[%s321 + $0x170] sm:$0xf]
        %v481 = vld [vmem:[%s321 + $0x174] sm:$0xf]
        %v482 = vld [vmem:[%s321 + $0x178] sm:$0xf]
        %v483 = vld [vmem:[%s321 + $0x17c] sm:$0xf]
        %v484 = vld [vmem:[%s321 + $0x180] sm:$0xf]
        %v485 = vld [vmem:[%s321 + $0x184] sm:$0xf]
        %v486 = vld [vmem:[%s321 + $0x188] sm:$0xf]
        %v487 = vld [vmem:[%s321 + $0x18c] sm:$0xf]
        %v488 = vld [vmem:[%s321 + $0x190] sm:$0xf]
        %v489 = vld [vmem:[%s321 + $0x194] sm:$0xf]
        %v490 = vld [vmem:[%s321 + $0x198] sm:$0xf]
        %v491 = vld [vmem:[%s321 + $0x19c] sm:$0xf]
        %v492 = vld [vmem:[%s321 + $0x1a0] sm:$0xf]
        %v493 = vld [vmem:[%s321 + $0x1a4] sm:$0xf]
        %v494 = vld [vmem:[%s321 + $0x1a8] sm:$0xf]
        %v495 = vld [vmem:[%s321 + $0x1ac] sm:$0xf]
        %v496 = vld [vmem:[%s321 + $0x1b0] sm:$0xf]
        %v497 = vld [vmem:[%s321 + $0x1b4] sm:$0xf]
        %v498 = vld [vmem:[%s321 + $0x1b8] sm:$0xf]
        %v499 = vld [vmem:[%s321 + $0x1bc] sm:$0xf]
        %v500 = vld [vmem:[%s321 + $0x1c0] sm:$0xf]
        %v501 = vld [vmem:[%s321 + $0x1c4] sm:$0xf]
        %v502 = vld [vmem:[%s321 + $0x1c8] sm:$0xf]
        %v503 = vld [vmem:[%s321 + $0x1cc] sm:$0xf]
        %v504 = vld [vmem:[%s321 + $0x1d0] sm:$0xf]
        %v505 = vld [vmem:[%s321 + $0x1d4] sm:$0xf]
        %v506 = vld [vmem:[%s321 + $0x1d8] sm:$0xf]
        %v507 = vld [vmem:[%s321 + $0x1dc] sm:$0xf]
        %v508 = vld [vmem:[%s321 + $0x1e0] sm:$0xf]
        %v509 = vld [vmem:[%s321 + $0x1e4] sm:$0xf]
        %v510 = vld [vmem:[%s321 + $0x1e8] sm:$0xf]
        %v511 = vld [vmem:[%s321 + $0x1ec] sm:$0xf]
        %v512 = vld [vmem:[%s321 + $0x1f0] sm:$0xf]
        %v513 = vld [vmem:[%s321 + $0x1f4] sm:$0xf]
        %v514 = vld [vmem:[%s321 + $0x1f8] sm:$0xf]
        %v515 = vld [vmem:[%s321 + $0x1fc] sm:$0xf]
        %v548 = vunpack.c.l.b16 %v356
        %v549 = vunpack.c.h.b16 %v356
        %v550 = vunpack.c.l.b16 %v357
        %v551 = vunpack.c.h.b16 %v357
        %v552 = vunpack.c.l.b16 %v358
        %v553 = vunpack.c.h.b16 %v358
        %v554 = vunpack.c.l.b16 %v359
        %v555 = vunpack.c.h.b16 %v359
        %v556 = vunpack.c.l.b16 %v360
        %v557 = vunpack.c.h.b16 %v360
        %v558 = vunpack.c.l.b16 %v361
        %v559 = vunpack.c.h.b16 %v361
        %v560 = vunpack.c.l.b16 %v362
        %v561 = vunpack.c.h.b16 %v362
        %v562 = vunpack.c.l.b16 %v363
        %v563 = vunpack.c.h.b16 %v363
        %v564 = vunpack.c.l.b16 %v364
        %v565 = vunpack.c.h.b16 %v364
        %v566 = vunpack.c.l.b16 %v365
        %v567 = vunpack.c.h.b16 %v365
        %v568 = vunpack.c.l.b16 %v366
        %v569 = vunpack.c.h.b16 %v366
        %v570 = vunpack.c.l.b16 %v367
        %v571 = vunpack.c.h.b16 %v367
        %v572 = vunpack.c.l.b16 %v368
        %v573 = vunpack.c.h.b16 %v368
        %v574 = vunpack.c.l.b16 %v369
        %v575 = vunpack.c.h.b16 %v369
        %v576 = vunpack.c.l.b16 %v370
        %v577 = vunpack.c.h.b16 %v370
        %v578 = vunpack.c.l.b16 %v371
        %v579 = vunpack.c.h.b16 %v371
        %v580 = vunpack.c.l.b16 %v372
        %v581 = vunpack.c.h.b16 %v372
        %v582 = vunpack.c.l.b16 %v373
        %v583 = vunpack.c.h.b16 %v373
        %v584 = vunpack.c.l.b16 %v374
        %v585 = vunpack.c.h.b16 %v374
        %v586 = vunpack.c.l.b16 %v375
        %v587 = vunpack.c.h.b16 %v375
        %v588 = vunpack.c.l.b16 %v376
        %v589 = vunpack.c.h.b16 %v376
        %v590 = vunpack.c.l.b16 %v377
        %v591 = vunpack.c.h.b16 %v377
        %v592 = vunpack.c.l.b16 %v378
        %v593 = vunpack.c.h.b16 %v378
        %v594 = vunpack.c.l.b16 %v379
        %v595 = vunpack.c.h.b16 %v379
        %v596 = vunpack.c.l.b16 %v380
        %v597 = vunpack.c.h.b16 %v380
        %v598 = vunpack.c.l.b16 %v381
        %v599 = vunpack.c.h.b16 %v381
        %v600 = vunpack.c.l.b16 %v382
        %v601 = vunpack.c.h.b16 %v382
        %v602 = vunpack.c.l.b16 %v383
        %v603 = vunpack.c.h.b16 %v383
        %v604 = vunpack.c.l.b16 %v384
        %v605 = vunpack.c.h.b16 %v384
        %v606 = vunpack.c.l.b16 %v385
        %v607 = vunpack.c.h.b16 %v385
        %v608 = vunpack.c.l.b16 %v386
        %v609 = vunpack.c.h.b16 %v386
        %v610 = vunpack.c.l.b16 %v387
        %v611 = vunpack.c.h.b16 %v387
        %v612 = vpack.c.b16 %v556, %v548
        %v613 = vpack.c.b16 %v557, %v549
        %v614 = vpack.c.b16 %v558, %v550
        %v615 = vpack.c.b16 %v559, %v551
        %v616 = vpack.c.b16 %v560, %v552
        %v617 = vpack.c.b16 %v561, %v553
        %v618 = vpack.c.b16 %v562, %v554
        %v619 = vpack.c.b16 %v563, %v555
        %v620 = vpack.c.b16 %v572, %v564
        %v621 = vpack.c.b16 %v573, %v565
        %v622 = vpack.c.b16 %v574, %v566
        %v623 = vpack.c.b16 %v575, %v567
        %v624 = vpack.c.b16 %v576, %v568
        %v625 = vpack.c.b16 %v577, %v569
        %v626 = vpack.c.b16 %v578, %v570
        %v627 = vpack.c.b16 %v579, %v571
        %v628 = vpack.c.b16 %v588, %v580
        %v629 = vpack.c.b16 %v589, %v581
        %v630 = vpack.c.b16 %v590, %v582
        %v631 = vpack.c.b16 %v591, %v583
        %v632 = vpack.c.b16 %v592, %v584
        %v633 = vpack.c.b16 %v593, %v585
        %v634 = vpack.c.b16 %v594, %v586
        %v635 = vpack.c.b16 %v595, %v587
        %v636 = vpack.c.b16 %v604, %v596
        %v637 = vpack.c.b16 %v605, %v597
        %v638 = vpack.c.b16 %v606, %v598
        %v639 = vpack.c.b16 %v607, %v599
        %v640 = vpack.c.b16 %v608, %v600
        %v641 = vpack.c.b16 %v609, %v601
        %v642 = vpack.c.b16 %v610, %v602
        %v643 = vpack.c.b16 %v611, %v603
        %v804 = vunpack.c.l.b16 %v388
        %v805 = vunpack.c.l.b16 %v389
        %v806 = vunpack.c.l.b16 %v390
        %v807 = vunpack.c.l.b16 %v391
        %v808 = vunpack.c.l.b16 %v392
        %v809 = vunpack.c.l.b16 %v393
        %v810 = vunpack.c.l.b16 %v394
        %v811 = vunpack.c.l.b16 %v395
        %v812 = vunpack.c.l.b16 %v396
        %v813 = vunpack.c.l.b16 %v397
        %v814 = vunpack.c.l.b16 %v398
        %v815 = vunpack.c.l.b16 %v399
        %v816 = vunpack.c.l.b16 %v400
        %v817 = vunpack.c.l.b16 %v401
        %v818 = vunpack.c.l.b16 %v402
        %v819 = vunpack.c.l.b16 %v403
        %v820 = vunpack.c.l.b16 %v404
        %v821 = vunpack.c.l.b16 %v405
        %v822 = vunpack.c.l.b16 %v406
        %v823 = vunpack.c.l.b16 %v407
        %v824 = vunpack.c.l.b16 %v408
        %v825 = vunpack.c.l.b16 %v409
        %v826 = vunpack.c.l.b16 %v410
        %v827 = vunpack.c.l.b16 %v411
        %v828 = vunpack.c.l.b16 %v412
        %v829 = vunpack.c.l.b16 %v413
        %v830 = vunpack.c.l.b16 %v414
        %v831 = vunpack.c.l.b16 %v415
        %v832 = vunpack.c.l.b16 %v416
        %v833 = vunpack.c.l.b16 %v417
        %v834 = vunpack.c.l.b16 %v418
        %v835 = vunpack.c.l.b16 %v419
        %v836 = vunpack.c.l.b16 %v420
        %v837 = vunpack.c.l.b16 %v421
        %v838 = vunpack.c.l.b16 %v422
        %v839 = vunpack.c.l.b16 %v423
        %v840 = vunpack.c.l.b16 %v424
        %v841 = vunpack.c.l.b16 %v425
        %v842 = vunpack.c.l.b16 %v426
        %v843 = vunpack.c.l.b16 %v427
        %v844 = vunpack.c.l.b16 %v428
        %v845 = vunpack.c.l.b16 %v429
        %v846 = vunpack.c.l.b16 %v430
        %v847 = vunpack.c.l.b16 %v431
        %v848 = vunpack.c.l.b16 %v432
        %v849 = vunpack.c.l.b16 %v433
        %v850 = vunpack.c.l.b16 %v434
        %v851 = vunpack.c.l.b16 %v435
        %v852 = vunpack.c.l.b16 %v436
        %v853 = vunpack.c.l.b16 %v437
        %v854 = vunpack.c.l.b16 %v438
        %v855 = vunpack.c.l.b16 %v439
        %v856 = vunpack.c.l.b16 %v440
        %v857 = vunpack.c.l.b16 %v441
        %v858 = vunpack.c.l.b16 %v442
        %v859 = vunpack.c.l.b16 %v443
        %v860 = vunpack.c.l.b16 %v444
        %v861 = vunpack.c.l.b16 %v445
        %v862 = vunpack.c.l.b16 %v446
        %v863 = vunpack.c.l.b16 %v447
        %v864 = vunpack.c.l.b16 %v448
        %v865 = vunpack.c.l.b16 %v449
        %v866 = vunpack.c.l.b16 %v450
        %v867 = vunpack.c.l.b16 %v451
        %v868 = vunpack.c.l.b16 %v452
        %v869 = vunpack.c.l.b16 %v453
        %v870 = vunpack.c.l.b16 %v454
        %v871 = vunpack.c.l.b16 %v455
        %v872 = vunpack.c.l.b16 %v456
        %v873 = vunpack.c.l.b16 %v457
        %v874 = vunpack.c.l.b16 %v458
        %v875 = vunpack.c.l.b16 %v459
        %v876 = vunpack.c.l.b16 %v460
        %v877 = vunpack.c.l.b16 %v461
        %v878 = vunpack.c.l.b16 %v462
        %v879 = vunpack.c.l.b16 %v463
        %v880 = vunpack.c.l.b16 %v464
        %v881 = vunpack.c.l.b16 %v465
        %v882 = vunpack.c.l.b16 %v466
        %v883 = vunpack.c.l.b16 %v467
        %v884 = vunpack.c.l.b16 %v468
        %v885 = vunpack.c.l.b16 %v469
        %v886 = vunpack.c.l.b16 %v470
        %v887 = vunpack.c.l.b16 %v471
        %v888 = vunpack.c.l.b16 %v472
        %v889 = vunpack.c.l.b16 %v473
        %v890 = vunpack.c.l.b16 %v474
        %v891 = vunpack.c.l.b16 %v475
        %v892 = vunpack.c.l.b16 %v476
        %v893 = vunpack.c.l.b16 %v477
        %v894 = vunpack.c.l.b16 %v478
        %v895 = vunpack.c.l.b16 %v479
        %v896 = vunpack.c.l.b16 %v480
        %v897 = vunpack.c.l.b16 %v481
        %v898 = vunpack.c.l.b16 %v482
        %v899 = vunpack.c.l.b16 %v483
        %v900 = vunpack.c.l.b16 %v484
        %v901 = vunpack.c.l.b16 %v485
        %v902 = vunpack.c.l.b16 %v486
        %v903 = vunpack.c.l.b16 %v487
        %v904 = vunpack.c.l.b16 %v488
        %v905 = vunpack.c.l.b16 %v489
        %v906 = vunpack.c.l.b16 %v490
        %v907 = vunpack.c.l.b16 %v491
        %v908 = vunpack.c.l.b16 %v492
        %v909 = vunpack.c.l.b16 %v493
        %v910 = vunpack.c.l.b16 %v494
        %v911 = vunpack.c.l.b16 %v495
        %v912 = vunpack.c.l.b16 %v496
        %v913 = vunpack.c.l.b16 %v497
        %v914 = vunpack.c.l.b16 %v498
        %v915 = vunpack.c.l.b16 %v499
        %v916 = vunpack.c.l.b16 %v500
        %v917 = vunpack.c.l.b16 %v501
        %v918 = vunpack.c.l.b16 %v502
        %v919 = vunpack.c.l.b16 %v503
        %v920 = vunpack.c.l.b16 %v504
        %v921 = vunpack.c.l.b16 %v505
        %v922 = vunpack.c.l.b16 %v506
        %v923 = vunpack.c.l.b16 %v507
        %v924 = vunpack.c.l.b16 %v508
        %v925 = vunpack.c.l.b16 %v509
        %v926 = vunpack.c.l.b16 %v510
        %v927 = vunpack.c.l.b16 %v511
        %v928 = vunpack.c.l.b16 %v512
        %v929 = vunpack.c.l.b16 %v513
        %v930 = vunpack.c.l.b16 %v514
        %v931 = vunpack.c.l.b16 %v515
        %v932 = vpack.c.b16 %v805, %v804
        %v933 = vpack.c.b16 %v807, %v806
        %v934 = vpack.c.b16 %v809, %v808
        %v935 = vpack.c.b16 %v811, %v810
        %v936 = vpack.c.b16 %v813, %v812
        %v937 = vpack.c.b16 %v815, %v814
        %v938 = vpack.c.b16 %v817, %v816
        %v939 = vpack.c.b16 %v819, %v818
        %v940 = vpack.c.b16 %v821, %v820
        %v941 = vpack.c.b16 %v823, %v822
        %v942 = vpack.c.b16 %v825, %v824
        %v943 = vpack.c.b16 %v827, %v826
        %v944 = vpack.c.b16 %v829, %v828
        %v945 = vpack.c.b16 %v831, %v830
        %v946 = vpack.c.b16 %v833, %v832
        %v947 = vpack.c.b16 %v835, %v834
        %v948 = vpack.c.b16 %v837, %v836
        %v949 = vpack.c.b16 %v839, %v838
        %v950 = vpack.c.b16 %v841, %v840
        %v951 = vpack.c.b16 %v843, %v842
        %v952 = vpack.c.b16 %v845, %v844
        %v953 = vpack.c.b16 %v847, %v846
        %v954 = vpack.c.b16 %v849, %v848
        %v955 = vpack.c.b16 %v851, %v850
        %v956 = vpack.c.b16 %v853, %v852
        %v957 = vpack.c.b16 %v855, %v854
        %v958 = vpack.c.b16 %v857, %v856
        %v959 = vpack.c.b16 %v859, %v858
        %v960 = vpack.c.b16 %v861, %v860
        %v961 = vpack.c.b16 %v863, %v862
        %v962 = vpack.c.b16 %v865, %v864
        %v963 = vpack.c.b16 %v867, %v866
        %v964 = vpack.c.b16 %v869, %v868
        %v965 = vpack.c.b16 %v871, %v870
        %v966 = vpack.c.b16 %v873, %v872
        %v967 = vpack.c.b16 %v875, %v874
        %v968 = vpack.c.b16 %v877, %v876
        %v969 = vpack.c.b16 %v879, %v878
        %v970 = vpack.c.b16 %v881, %v880
        %v971 = vpack.c.b16 %v883, %v882
        %v972 = vpack.c.b16 %v885, %v884
        %v973 = vpack.c.b16 %v887, %v886
        %v974 = vpack.c.b16 %v889, %v888
        %v975 = vpack.c.b16 %v891, %v890
        %v976 = vpack.c.b16 %v893, %v892
        %v977 = vpack.c.b16 %v895, %v894
        %v978 = vpack.c.b16 %v897, %v896
        %v979 = vpack.c.b16 %v899, %v898
        %v980 = vpack.c.b16 %v901, %v900
        %v981 = vpack.c.b16 %v903, %v902
        %v982 = vpack.c.b16 %v905, %v904
        %v983 = vpack.c.b16 %v907, %v906
        %v984 = vpack.c.b16 %v909, %v908
        %v985 = vpack.c.b16 %v911, %v910
        %v986 = vpack.c.b16 %v913, %v912
        %v987 = vpack.c.b16 %v915, %v914
        %v988 = vpack.c.b16 %v917, %v916
        %v989 = vpack.c.b16 %v919, %v918
        %v990 = vpack.c.b16 %v921, %v920
        %v991 = vpack.c.b16 %v923, %v922
        %v992 = vpack.c.b16 %v925, %v924
        %v993 = vpack.c.b16 %v927, %v926
        %v994 = vpack.c.b16 %v929, %v928
        %v995 = vpack.c.b16 %v931, %v930
        %1060 = vmatprep.subr.bf16.mxu0 0
        %1061 = vmatpush1.bf16.msra.mxu0 %v939
        %1062 = vmatprep.subr.bf16.mxu0 0
        %1063 = vmatpush1.bf16.msra.mxu0 %v938
        %1064 = vmatprep.subr.bf16.mxu0 0
        %1065 = vmatpush1.bf16.msra.mxu0 %v937
        %1066 = vmatprep.subr.bf16.mxu0 0
        %1067 = vmatpush1.bf16.msra.mxu0 %v936
        %1068 = vmatprep.subr.bf16.mxu0 0
        %1069 = vmatpush1.bf16.msra.mxu0 %v935
        %1070 = vmatprep.subr.bf16.mxu0 0
        %1071 = vmatpush1.bf16.msra.mxu0 %v934
        %1072 = vmatprep.subr.bf16.mxu0 0
        %1073 = vmatpush1.bf16.msra.mxu0 %v933
        %1074 = vmatprep.subr.bf16.mxu0 0
        %1075 = vmatpush1.bf16.msra.mxu0 %v932
        %1076 = vmatprep.subr.bf16.mxu0 0
        %1077 = vmatpush2.bf16.msra.mxu0 %v947
        %1078 = vmatprep.subr.bf16.mxu0 0
        %1079 = vmatpush2.bf16.msra.mxu0 %v946
        %1080 = vmatprep.subr.bf16.mxu0 0
        %1081 = vmatpush2.bf16.msra.mxu0 %v945
        %1082 = vmatprep.subr.bf16.mxu0 0
        %1083 = vmatpush2.bf16.msra.mxu0 %v944
        %1084 = vmatprep.subr.bf16.mxu0 0
        %1085 = vmatpush2.bf16.msra.mxu0 %v943
        %1086 = vmatprep.subr.bf16.mxu0 0
        %1087 = vmatpush2.bf16.msra.mxu0 %v942
        %1088 = vmatprep.subr.bf16.mxu0 0
        %1089 = vmatpush2.bf16.msra.mxu0 %v941
        %1090 = vmatprep.subr.bf16.mxu0 0
        %1091 = vmatpush2.bf16.msra.mxu0 %v940
        %1092 = vmatprep.mubr.bf16.mxu0 %v613
        %1093 = vmatmul.mubr.bf16.gmra.mxu0 %v612
        %v1094 = vpop.f32.mrf.mxu0
        %v1095 = vadd.f32 0.0, %v1094
        %v1096 = vpop.f32.mrf.mxu0
        %v1097 = vpop.f32.mrf.mxu0
        %v1098 = vadd.f32 0.0, %v1097
        %v1099 = vpop.f32.mrf.mxu0
        %1100 = vmatprep.mubr.bf16.mxu0 %v621
        %1101 = vmatmul.mubr.bf16.gmra.mxu0 %v620
        %v1102 = vpop.f32.mrf.mxu0
        %v1103 = vadd.f32 0.0, %v1102
        %v1104 = vpop.f32.mrf.mxu0
        %v1105 = vpop.f32.mrf.mxu0
        %v1106 = vadd.f32 0.0, %v1105
        %v1107 = vpop.f32.mrf.mxu0
        %1108 = vmatprep.mubr.bf16.mxu0 %v629
        %1109 = vmatmul.mubr.bf16.gmra.mxu0 %v628
        %v1110 = vpop.f32.mrf.mxu0
        %v1111 = vadd.f32 0.0, %v1110
        %v1112 = vpop.f32.mrf.mxu0
        %v1113 = vpop.f32.mrf.mxu0
        %v1114 = vadd.f32 0.0, %v1113
        %v1115 = vpop.f32.mrf.mxu0
        %1116 = vmatprep.mubr.bf16.mxu0 %v637
        %1117 = vmatmul.mubr.bf16.gmra.mxu0 %v636
        %v1118 = vpop.f32.mrf.mxu0
        %v1119 = vadd.f32 0.0, %v1118
        %v1120 = vpop.f32.mrf.mxu0
        %v1121 = vpop.f32.mrf.mxu0
        %v1122 = vadd.f32 0.0, %v1121
        %v1123 = vpop.f32.mrf.mxu0
        %1124 = vdwg.mxu0
        %1125 = vmatprep.subr.bf16.mxu0 0
        %1126 = vmatpush1.bf16.msra.mxu0 %v955
        %1127 = vmatprep.subr.bf16.mxu0 0
        %1128 = vmatpush1.bf16.msra.mxu0 %v954
        %1129 = vmatprep.subr.bf16.mxu0 0
        %1130 = vmatpush1.bf16.msra.mxu0 %v953
        %1131 = vmatprep.subr.bf16.mxu0 0
        %1132 = vmatpush1.bf16.msra.mxu0 %v952
        %1133 = vmatprep.subr.bf16.mxu0 0
        %1134 = vmatpush1.bf16.msra.mxu0 %v951
        %1135 = vmatprep.subr.bf16.mxu0 0
        %1136 = vmatpush1.bf16.msra.mxu0 %v950
        %1137 = vmatprep.subr.bf16.mxu0 0
        %1138 = vmatpush1.bf16.msra.mxu0 %v949
        %1139 = vmatprep.subr.bf16.mxu0 0
        %1140 = vmatpush1.bf16.msra.mxu0 %v948
        %1141 = vmatprep.subr.bf16.mxu0 0
        %1142 = vmatpush2.bf16.msra.mxu0 %v963
        %1143 = vmatprep.subr.bf16.mxu0 0
        %1144 = vmatpush2.bf16.msra.mxu0 %v962
        %1145 = vmatprep.subr.bf16.mxu0 0
        %1146 = vmatpush2.bf16.msra.mxu0 %v961
        %1147 = vmatprep.subr.bf16.mxu0 0
        %1148 = vmatpush2.bf16.msra.mxu0 %v960
        %1149 = vmatprep.subr.bf16.mxu0 0
        %1150 = vmatpush2.bf16.msra.mxu0 %v959
        %1151 = vmatprep.subr.bf16.mxu0 0
        %1152 = vmatpush2.bf16.msra.mxu0 %v958
        %1153 = vmatprep.subr.bf16.mxu0 0
        %1154 = vmatpush2.bf16.msra.mxu0 %v957
        %1155 = vmatprep.subr.bf16.mxu0 0
        %1156 = vmatpush2.bf16.msra.mxu0 %v956
        %1157 = vmatprep.mubr.bf16.mxu0 %v615
        %1158 = vmatmul.mubr.bf16.gmra.mxu0 %v614
        %v1159 = vpop.f32.mrf.mxu0
        %v1160 = vadd.f32 %v1095, %v1159
        %v1161 = vpop.f32.mrf.mxu0
        %v1162 = vpop.f32.mrf.mxu0
        %v1163 = vadd.f32 %v1098, %v1162
        %v1164 = vpop.f32.mrf.mxu0
        %1165 = vmatprep.mubr.bf16.mxu0 %v623
        %1166 = vmatmul.mubr.bf16.gmra.mxu0 %v622
        %v1167 = vpop.f32.mrf.mxu0
        %v1168 = vadd.f32 %v1103, %v1167
        %v1169 = vpop.f32.mrf.mxu0
        %v1170 = vpop.f32.mrf.mxu0
        %v1171 = vadd.f32 %v1106, %v1170
        %v1172 = vpop.f32.mrf.mxu0
        %1173 = vmatprep.mubr.bf16.mxu0 %v631
        %1174 = vmatmul.mubr.bf16.gmra.mxu0 %v630
        %v1175 = vpop.f32.mrf.mxu0
        %v1176 = vadd.f32 %v1111, %v1175
        %v1177 = vpop.f32.mrf.mxu0
        %v1178 = vpop.f32.mrf.mxu0
        %v1179 = vadd.f32 %v1114, %v1178
        %v1180 = vpop.f32.mrf.mxu0
        %1181 = vmatprep.mubr.bf16.mxu0 %v639
        %1182 = vmatmul.mubr.bf16.gmra.mxu0 %v638
        %v1183 = vpop.f32.mrf.mxu0
        %v1184 = vadd.f32 %v1119, %v1183
        %v1185 = vpop.f32.mrf.mxu0
        %v1186 = vpop.f32.mrf.mxu0
        %v1187 = vadd.f32 %v1122, %v1186
        %v1188 = vpop.f32.mrf.mxu0
        %1189 = vdwg.mxu0
        %1190 = vmatprep.subr.bf16.mxu0 0
        %1191 = vmatpush1.bf16.msra.mxu0 %v971
        %1192 = vmatprep.subr.bf16.mxu0 0
        %1193 = vmatpush1.bf16.msra.mxu0 %v970
        %1194 = vmatprep.subr.bf16.mxu0 0
        %1195 = vmatpush1.bf16.msra.mxu0 %v969
        %1196 = vmatprep.subr.bf16.mxu0 0
        %1197 = vmatpush1.bf16.msra.mxu0 %v968
        %1198 = vmatprep.subr.bf16.mxu0 0
        %1199 = vmatpush1.bf16.msra.mxu0 %v967
        %1200 = vmatprep.subr.bf16.mxu0 0
        %1201 = vmatpush1.bf16.msra.mxu0 %v966
        %1202 = vmatprep.subr.bf16.mxu0 0
        %1203 = vmatpush1.bf16.msra.mxu0 %v965
        %1204 = vmatprep.subr.bf16.mxu0 0
        %1205 = vmatpush1.bf16.msra.mxu0 %v964
        %1206 = vmatprep.subr.bf16.mxu0 0
        %1207 = vmatpush2.bf16.msra.mxu0 %v979
        %1208 = vmatprep.subr.bf16.mxu0 0
        %1209 = vmatpush2.bf16.msra.mxu0 %v978
        %1210 = vmatprep.subr.bf16.mxu0 0
        %1211 = vmatpush2.bf16.msra.mxu0 %v977
        %1212 = vmatprep.subr.bf16.mxu0 0
        %1213 = vmatpush2.bf16.msra.mxu0 %v976
        %1214 = vmatprep.subr.bf16.mxu0 0
        %1215 = vmatpush2.bf16.msra.mxu0 %v975
        %1216 = vmatprep.subr.bf16.mxu0 0
        %1217 = vmatpush2.bf16.msra.mxu0 %v974
        %1218 = vmatprep.subr.bf16.mxu0 0
        %1219 = vmatpush2.bf16.msra.mxu0 %v973
        %1220 = vmatprep.subr.bf16.mxu0 0
        %1221 = vmatpush2.bf16.msra.mxu0 %v972
        %1222 = vmatprep.mubr.bf16.mxu0 %v617
        %1223 = vmatmul.mubr.bf16.gmra.mxu0 %v616
        %v1224 = vpop.f32.mrf.mxu0
        %v1225 = vadd.f32 %v1160, %v1224
        %v1226 = vpop.f32.mrf.mxu0
        %v1227 = vpop.f32.mrf.mxu0
        %v1228 = vadd.f32 %v1163, %v1227
        %v1229 = vpop.f32.mrf.mxu0
        %1230 = vmatprep.mubr.bf16.mxu0 %v625
        %1231 = vmatmul.mubr.bf16.gmra.mxu0 %v624
        %v1232 = vpop.f32.mrf.mxu0
        %v1233 = vadd.f32 %v1168, %v1232
        %v1234 = vpop.f32.mrf.mxu0
        %v1235 = vpop.f32.mrf.mxu0
        %v1236 = vadd.f32 %v1171, %v1235
        %v1237 = vpop.f32.mrf.mxu0
        %1238 = vmatprep.mubr.bf16.mxu0 %v633
        %1239 = vmatmul.mubr.bf16.gmra.mxu0 %v632
        %v1240 = vpop.f32.mrf.mxu0
        %v1241 = vadd.f32 %v1176, %v1240
        %v1242 = vpop.f32.mrf.mxu0
        %v1243 = vpop.f32.mrf.mxu0
        %v1244 = vadd.f32 %v1179, %v1243
        %v1245 = vpop.f32.mrf.mxu0
        %1246 = vmatprep.mubr.bf16.mxu0 %v641
        %1247 = vmatmul.mubr.bf16.gmra.mxu0 %v640
        %v1248 = vpop.f32.mrf.mxu0
        %v1249 = vadd.f32 %v1184, %v1248
        %v1250 = vpop.f32.mrf.mxu0
        %v1251 = vpop.f32.mrf.mxu0
        %v1252 = vadd.f32 %v1187, %v1251
        %v1253 = vpop.f32.mrf.mxu0
        %1254 = vdwg.mxu0
        %1255 = vmatprep.subr.bf16.mxu0 0
        %1256 = vmatpush1.bf16.msra.mxu0 %v987
        %1257 = vmatprep.subr.bf16.mxu0 0
        %1258 = vmatpush1.bf16.msra.mxu0 %v986
        %1259 = vmatprep.subr.bf16.mxu0 0
        %1260 = vmatpush1.bf16.msra.mxu0 %v985
        %1261 = vmatprep.subr.bf16.mxu0 0
        %1262 = vmatpush1.bf16.msra.mxu0 %v984
        %1263 = vmatprep.subr.bf16.mxu0 0
        %1264 = vmatpush1.bf16.msra.mxu0 %v983
        %1265 = vmatprep.subr.bf16.mxu0 0
        %1266 = vmatpush1.bf16.msra.mxu0 %v982
        %1267 = vmatprep.subr.bf16.mxu0 0
        %1268 = vmatpush1.bf16.msra.mxu0 %v981
        %1269 = vmatprep.subr.bf16.mxu0 0
        %1270 = vmatpush1.bf16.msra.mxu0 %v980
        %1271 = vmatprep.subr.bf16.mxu0 0
        %1272 = vmatpush2.bf16.msra.mxu0 %v995
        %1273 = vmatprep.subr.bf16.mxu0 0
        %1274 = vmatpush2.bf16.msra.mxu0 %v994
        %1275 = vmatprep.subr.bf16.mxu0 0
        %1276 = vmatpush2.bf16.msra.mxu0 %v993
        %1277 = vmatprep.subr.bf16.mxu0 0
        %1278 = vmatpush2.bf16.msra.mxu0 %v992
        %1279 = vmatprep.subr.bf16.mxu0 0
        %1280 = vmatpush2.bf16.msra.mxu0 %v991
        %1281 = vmatprep.subr.bf16.mxu0 0
        %1282 = vmatpush2.bf16.msra.mxu0 %v990
        %1283 = vmatprep.subr.bf16.mxu0 0
        %1284 = vmatpush2.bf16.msra.mxu0 %v989
        %1285 = vmatprep.subr.bf16.mxu0 0
        %1286 = vmatpush2.bf16.msra.mxu0 %v988
        %1287 = vmatprep.mubr.bf16.mxu0 %v619
        %1288 = vmatmul.mubr.bf16.gmra.mxu0 %v618
        %v1289 = vpop.f32.mrf.mxu0
        %v1290 = vadd.f32 %v1225, %v1289
        %v1291 = vpop.f32.mrf.mxu0
        %v1292 = vpop.f32.mrf.mxu0
        %v1293 = vadd.f32 %v1228, %v1292
        %v1294 = vpop.f32.mrf.mxu0
        %1295 = vmatprep.mubr.bf16.mxu0 %v627
        %1296 = vmatmul.mubr.bf16.gmra.mxu0 %v626
        %v1297 = vpop.f32.mrf.mxu0
        %v1298 = vadd.f32 %v1233, %v1297
        %v1299 = vpop.f32.mrf.mxu0
        %v1300 = vpop.f32.mrf.mxu0
        %v1301 = vadd.f32 %v1236, %v1300
        %v1302 = vpop.f32.mrf.mxu0
        %1303 = vmatprep.mubr.bf16.mxu0 %v635
        %1304 = vmatmul.mubr.bf16.gmra.mxu0 %v634
        %v1305 = vpop.f32.mrf.mxu0
        %v1306 = vadd.f32 %v1241, %v1305
        %v1307 = vpop.f32.mrf.mxu0
        %v1308 = vpop.f32.mrf.mxu0
        %v1309 = vadd.f32 %v1244, %v1308
        %v1310 = vpop.f32.mrf.mxu0
        %1311 = vmatprep.mubr.bf16.mxu0 %v643
        %1312 = vmatmul.mubr.bf16.gmra.mxu0 %v642
        %v1313 = vpop.f32.mrf.mxu0
        %v1314 = vadd.f32 %v1249, %v1313
        %v1315 = vpop.f32.mrf.mxu0
        %v1316 = vpop.f32.mrf.mxu0
        %v1317 = vadd.f32 %v1252, %v1316
        %v1318 = vpop.f32.mrf.mxu0
        %1319 = vdwg.mxu0
        %v1320 = vadd.f32 %v348, %v1290
        %v1321 = vadd.f32 %v349, %v1293
        %v1322 = vadd.f32 %v350, %v1298
        %v1323 = vadd.f32 %v351, %v1301
        %v1324 = vadd.f32 %v352, %v1306
        %v1325 = vadd.f32 %v353, %v1309
        %v1326 = vadd.f32 %v354, %v1314
        %v1327 = vadd.f32 %v355, %v1317
        %1328 = vst [vmem:[#allocation2] sm:$0xff] %v1320
        %1329 = vst [vmem:[#allocation2 + $0x8] sm:$0xff] %v1321
        %1330 = vst [vmem:[#allocation2 + $0x10] sm:$0xff] %v1322
        %1331 = vst [vmem:[#allocation2 + $0x18] sm:$0xff] %v1323
        %1332 = vst [vmem:[#allocation2 + $0x20] sm:$0xff] %v1324
        %1333 = vst [vmem:[#allocation2 + $0x28] sm:$0xff] %v1325
        %1334 = vst [vmem:[#allocation2 + $0x30] sm:$0xff] %v1326
        %1335 = vst [vmem:[#allocation2 + $0x38] sm:$0xff] %v1327
        %p1336 = scmp.eq.s32.totalorder %s21, 3
        // Predicated region
        $region60: #{decoder_forward.5} parent=50 // pred_check
          %p1337 = pneg %p1336
        $region61: #{decoder_forward.5} parent=50 // pred_check_branch
          %1339 = sbr.rel (%p1337) target = $region63
        $region62: #{decoder_forward.5} parent=50 // pred_region
          %v1340 = vld [vmem:[#allocation2] sm:$0xff]
          %v1341 = vld [vmem:[#allocation2 + $0x8] sm:$0xff]
          %v1342 = vld [vmem:[#allocation2 + $0x10] sm:$0xff]
          %v1343 = vld [vmem:[#allocation2 + $0x18] sm:$0xff]
          %v1344 = vld [vmem:[#allocation2 + $0x20] sm:$0xff]
          %v1345 = vld [vmem:[#allocation2 + $0x28] sm:$0xff]
          %v1346 = vld [vmem:[#allocation2 + $0x30] sm:$0xff]
          %v1347 = vld [vmem:[#allocation2 + $0x38] sm:$0xff]
          %v1348 = vld [vmem:[%s325] sm:$0x1]
          %v1350 = vlaneseq
          %v1351 = vshrl.u32 %v1350, 7
          %v1352 = vsub.s32 0, %v1351
          %v1353 = vrot.slane %v1348, %v1352
          %v1355 = vadd.f32 %v1340, %v1353
          %v1356 = vadd.f32 %v1341, %v1353
          %v1357 = vadd.f32 %v1342, %v1353
          %v1358 = vadd.f32 %v1343, %v1353
          %v1359 = vadd.f32 %v1344, %v1353
          %v1360 = vadd.f32 %v1345, %v1353
          %v1361 = vadd.f32 %v1346, %v1353
          %v1362 = vadd.f32 %v1347, %v1353
          %v1363 = vmax.f32 %v1355, 0.0
          %v1364 = vmax.f32 %v1356, 0.0
          %v1365 = vmax.f32 %v1357, 0.0
          %v1366 = vmax.f32 %v1358, 0.0
          %v1367 = vmax.f32 %v1359, 0.0
          %v1368 = vmax.f32 %v1360, 0.0
          %v1369 = vmax.f32 %v1361, 0.0
          %v1370 = vmax.f32 %v1362, 0.0
          %1371 = vst [vmem:[%s333] sm:$0xff] %v1363
          %1372 = vst [vmem:[%s333 + $0x8] sm:$0xff] %v1364
          %1373 = vst [vmem:[%s333 + $0x10] sm:$0xff] %v1365
          %1374 = vst [vmem:[%s333 + $0x18] sm:$0xff] %v1366
          %1375 = vst [vmem:[%s333 + $0x20] sm:$0xff] %v1367
          %1376 = vst [vmem:[%s333 + $0x28] sm:$0xff] %v1368
          %1377 = vst [vmem:[%s333 + $0x30] sm:$0xff] %v1369
          %1378 = vst [vmem:[%s333 + $0x38] sm:$0xff] %v1370
        $region63: #{decoder_forward.5} parent=50 // pred_fallthru
          _
        %s1379 = smul.u32 8, %s19
        %p1380 = scmp.lt.s32.totalorder %s1379, 15
        %s1381 = scalar_select %p1380, %s1379, 15
        %p1382 = scmp.lt.s32.totalorder %s20, 0
        %s1383 = scalar_select %p1382, %s20, 0
        %s1384 = sadd.s32 %s1383, %s1381
        %s1385 = smul.addr %s1384, 8
        %s1386 = scalar_lea.vmem %s3, %s1385
        // Predicated region
        $region64: #{decoder_forward.5} parent=50 // pred_check
          %p1387 = pneg %p135
        $region65: #{decoder_forward.5} parent=50 // pred_check_branch
          %1389 = sbr.rel (%p1387) target = $region67
        $region66: #{decoder_forward.5} parent=50 // pred_region
          %s1390 = smul.u32 8, %s19
        $region67: #{decoder_forward.5} parent=50 // pred_fallthru
          _
      $region51: #{decoder_forward.5} parent=5 // pred_fallthru
        _
      %p1391 = scmp.le.s32.totalorder 2, %s9
      // Predicated region
      $region68: #{decoder_forward.5} parent=5 // pred_check
        %p1392 = pneg %p1391
      $region69: #{decoder_forward.5} parent=5 // pred_check_branch
        %1394 = sbr.rel (%p1392) target = $region71
      $region70: #{decoder_forward.5} parent=5 // pred_region
        %s1395 = ssub.s32 %s9, 2
        // Predicated region
        $region72: #{decoder_forward.5} parent=70 // pred_check
          %p1396 = pneg %p141
        $region73: #{decoder_forward.5} parent=70 // pred_check_branch
          %1398 = sbr.rel (%p1396) target = $region75
        $region74: #{decoder_forward.5} parent=70 // pred_region
          %s1399 = smul.u32 8, %s22
          %p1400 = scmp.lt.s32.totalorder %s1399, 15
          %s1401 = scalar_select %p1400, %s1399, 15
          %p1402 = scmp.lt.s32.totalorder %s23, 0
          %s1403 = scalar_select %p1402, %s23, 0
          %s1404 = sadd.s32 %s1403, %s1401
          %s1405 = smul.addr %s1404, 8
          %s1406 = scalar_lea.vmem %s3, %s1405
        $region75: #{decoder_forward.5} parent=70 // pred_fallthru
          _
      $region71: #{decoder_forward.5} parent=5 // pred_fallthru
        _
    $region6: #{decoder_forward.5} parent=1 // loop_footer
      %s13 = sadd.s32 1, %s9
    $region7: #{decoder_forward.5} parent=1 // loop_footer_branch
      %8 = sbr.rel target = $region3
    $region8: #{decoder_forward.5} parent=1 // loop_exit
      _

// kernel: decoder_forward.6
$region0: #{decoder_forward.6}
  #allocation0 [shape = 'u32[]', space=smem, size = 0x4, offset = 0x4, fixed_abs, tag = 'smem constant byte address 0x4 - core index']
  #allocation1 [shape = 'u32[144,128]{1,0:T(1,128)}', space=vmem, size = 0x12000, scoped, tag = 'internal scratch']
  #allocation2 [shape = 'f32[256,128]{1,0:T(8,128)}', space=vmem, size = 0x20000, scoped, tag = 'scratch operand']
  %s0 = inlined_call_operand.vmem [shape: bf16[512,2048], index: 0, kind: input, shape index: {}]
  %s1 = inlined_call_operand.vmem [shape: bf16[2048,128], index: 1, kind: input, shape index: {}]
  %s2 = inlined_call_operand.vmem [shape: f32[1,128], index: 2, kind: input, shape index: {}]
  %s3 = inlined_call_operand.vmem [shape: f32[512,128], index: 3, kind: output, shape index: {}]
  %s4 = sld [smem:[#allocation0]]
  $region76: #{decoder_forward.6} parent=0
    _
  %s6 = ssub.s32 1, %s4
  %s7 = scalar_select 0, %s6, %s4
  $region1: #{decoder_forward.6} parent=0
    #allocation3 [shape = 'u8[1048576]{0}', space=vmem, size = 0x100000, scoped, tag = 'input window, operand 0']
    loop: start=0, step=1, limit=6
    $region2: #{decoder_forward.6} parent=1 // loop_pre_header
      _
    $region3: #{decoder_forward.6} parent=1 // loop_header
      %s9 = sphi 0, %s13
      %p10 = scmp.ge.s32.totalorder %s9, 6
      %s16 = sphi 0, %s35
      %s17 = sphi 0, %s31
      %s18 = sphi 0, %s27
      %s19 = sphi 0, %s16
      %s20 = sphi 0, %s17
      %s21 = sphi 0, %s18
      %s22 = sphi 0, %s19
      %s23 = sphi 0, %s20
      %s24 = sphi 0, %s21
      %s40 = sphi 0, %s42
      %s43 = sphi 0, %s40
      %s44 = sphi 0, %s43
      %s60 = sphi 0, %s44
      %s68 = sphi 0, %s70
      %s71 = sphi 0, %s68
      %s72 = sphi 0, %s71
      %s88 = sphi 0, %s72
      %s94 = sphi 0, %s96
      %s97 = sphi 0, %s94
      %s98 = sphi 0, %s97
      %s114 = sphi 0, %s98
      %s122 = sphi 0, %s124
      %s125 = sphi 0, %s122
      %s126 = sphi 0, %s125
      %s142 = sphi 0, %s126
    $region4: #{decoder_forward.6} parent=1 // loop_header_branch
      %12 = sbr.rel (%p10) target = $region8
    $region5: #{decoder_forward.6} parent=1 // loop_body
      %s14 = ssub.s32 %s9, 1
      %s15 = ssub.s32 %s9, 2
      %s25 = sadd.s32 1, %s18
      %p26 = scmp.ge.s32.totalorder %s25, 2
      %s27 = scalar_select %p26, 0, %s25
      %s28 = sadd.s32 1, %s17
      %s29 = scalar_select %p26, %s28, %s17
      %p30 = scmp.ge.s32.totalorder %s29, 1
      %s31 = scalar_select %p30, 0, %s29
      %s32 = sadd.s32 1, %s16
      %s33 = scalar_select %p30, %s32, %s16
      %p34 = scmp.ge.s32.totalorder %s33, 2
      %s35 = scalar_select %p34, 0, %s33
      %s36 = ssub.s32 %s16, %s35
      %s37 = ssub.s32 %s18, %s27
      %s38 = sor.u32 %s36, %s37
      %p39 = scmp.eq.s32.totalorder %s38, 0
      %s41 = sadd.s32 %s40, 1
      %s42 = scalar_select %p39, %s40, %s41
      %p45 = pneg %p39
      %p46 = scmp.eq.s32.totalorder %s9, 3
      %p47 = por %p45, %p46
      %p48 = scmp.ne.s32.totalorder %s40, %s43
      %p49 = scmp.eq.s32.totalorder %s9, 0
      %p50 = por %p48, %p49
      %p51 = scmp.ne.s32.totalorder %s40, %s43
      %p52 = scmp.eq.s32.totalorder %s14, 3
      %p53 = por %p51, %p52
      %p54 = scmp.ne.s32.totalorder %s43, %s44
      %p55 = scmp.eq.s32.totalorder %s14, 0
      %p56 = por %p54, %p55
      %p57 = scmp.ne.s32.totalorder %s43, %s44
      %p58 = scmp.eq.s32.totalorder %s15, 3
      %p59 = por %p57, %p58
      %p61 = scmp.ne.s32.totalorder %s44, %s60
      %p62 = scmp.eq.s32.totalorder %s15, 0
      %p63 = por %p61, %p62
      %s64 = ssub.s32 %s18, %s27
      %s65 = ssub.s32 %s17, %s31
      %s66 = sor.u32 %s64, %s65
      %p67 = scmp.eq.s32.totalorder %s66, 0
      %s69 = sadd.s32 %s68, 1
      %s70 = scalar_select %p67, %s68, %s69
      %p73 = pneg %p67
      %p74 = scmp.eq.s32.totalorder %s9, 3
      %p75 = por %p73, %p74
      %p76 = scmp.ne.s32.totalorder %s68, %s71
      %p77 = scmp.eq.s32.totalorder %s9, 0
      %p78 = por %p76, %p77
      %p79 = scmp.ne.s32.totalorder %s68, %s71
      %p80 = scmp.eq.s32.totalorder %s14, 3
      %p81 = por %p79, %p80
      %p82 = scmp.ne.s32.totalorder %s71, %s72
      %p83 = scmp.eq.s32.totalorder %s14, 0
      %p84 = por %p82, %p83
      %p85 = scmp.ne.s32.totalorder %s71, %s72
      %p86 = scmp.eq.s32.totalorder %s15, 3
      %p87 = por %p85, %p86
      %p89 = scmp.ne.s32.totalorder %s72, %s88
      %p90 = scmp.eq.s32.totalorder %s15, 0
      %p91 = por %p89, %p90
      %s92 = ssub.s32 %s17, %s31
      %p93 = scmp.eq.s32.totalorder %s92, 0
      %s95 = sadd.s32 %s94, 1
      %s96 = scalar_select %p93, %s94, %s95
      %p99 = pneg %p93
      %p100 = scmp.eq.s32.totalorder %s9, 3
      %p101 = por %p99, %p100
      %p102 = scmp.ne.s32.totalorder %s94, %s97
      %p103 = scmp.eq.s32.totalorder %s9, 0
      %p104 = por %p102, %p103
      %p105 = scmp.ne.s32.totalorder %s94, %s97
      %p106 = scmp.eq.s32.totalorder %s14, 3
      %p107 = por %p105, %p106
      %p108 = scmp.ne.s32.totalorder %s97, %s98
      %p109 = scmp.eq.s32.totalorder %s14, 0
      %p110 = por %p108, %p109
      %p111 = scmp.ne.s32.totalorder %s97, %s98
      %p112 = scmp.eq.s32.totalorder %s15, 3
      %p113 = por %p111, %p112
      %p115 = scmp.ne.s32.totalorder %s98, %s114
      %p116 = scmp.eq.s32.totalorder %s15, 0
      %p117 = por %p115, %p116
      %s118 = ssub.s32 %s16, %s35
      %s119 = ssub.s32 %s17, %s31
      %s120 = sor.u32 %s118, %s119
      %p121 = scmp.eq.s32.totalorder %s120, 0
      %s123 = sadd.s32 %s122, 1
      %s124 = scalar_select %p121, %s122, %s123
      %p127 = pneg %p121
      %p128 = scmp.eq.s32.totalorder %s9, 3
      %p129 = por %p127, %p128
      %p130 = scmp.ne.s32.totalorder %s122, %s125
      %p131 = scmp.eq.s32.totalorder %s9, 0
      %p132 = por %p130, %p131
      %p133 = scmp.ne.s32.totalorder %s122, %s125
      %p134 = scmp.eq.s32.totalorder %s14, 3
      %p135 = por %p133, %p134
      %p136 = scmp.ne.s32.totalorder %s125, %s126
      %p137 = scmp.eq.s32.totalorder %s14, 0
      %p138 = por %p136, %p137
      %p139 = scmp.ne.s32.totalorder %s125, %s126
      %p140 = scmp.eq.s32.totalorder %s15, 3
      %p141 = por %p139, %p140
      %p143 = scmp.ne.s32.totalorder %s126, %s142
      %p144 = scmp.eq.s32.totalorder %s15, 0
      %p145 = por %p143, %p144
      %p146 = scmp.le.s32.totalorder 1, %s9
      %p147 = scmp.lt.s32.totalorder %s9, 5
      %p148 = pnand %p146, %p147
      %p149 = pneg %p148
      // Predicated region
      $region9: #{decoder_forward.6} parent=5 // pred_check
        _
      $region10: #{decoder_forward.6} parent=5 // pred_check_branch
        %151 = sbr.rel (%p148) target = $region12
      $region11: #{decoder_forward.6} parent=5 // pred_region
        %s152 = ssub.s32 %s9, 1
        // Predicated region
        $region13: #{decoder_forward.6} parent=11 // pred_check
          %p153 = pneg %p110
        $region14: #{decoder_forward.6} parent=11 // pred_check_branch
          %155 = sbr.rel (%p153) target = $region16
        $region15: #{decoder_forward.6} parent=11 // pred_region
          %p156 = scmp.lt.s32.totalorder %s20, 0
          %s157 = scalar_select %p156, %s20, 0
          %s158 = scalar_lea.vmem %s2, %s157
        $region16: #{decoder_forward.6} parent=11 // pred_fallthru
          _
      $region12: #{decoder_forward.6} parent=5 // pred_fallthru
        _
      %p159 = scmp.lt.s32.totalorder %s9, 4
      // Predicated region
      $region17: #{decoder_forward.6} parent=5 // pred_check
        %p160 = pneg %p159
      $region18: #{decoder_forward.6} parent=5 // pred_check_branch
        %162 = sbr.rel (%p160) target = $region20
      $region19: #{decoder_forward.6} parent=5 // pred_region
        // Predicated region
        $region21: #{decoder_forward.6} parent=19 // pred_check
          %p163 = pneg %p50
        $region22: #{decoder_forward.6} parent=19 // pred_check_branch
          %165 = sbr.rel (%p163) target = $region24
        $region23: #{decoder_forward.6} parent=19 // pred_region
          %s166 = sand.u32 %s40, 1
          %s167 = sand.u32 %s40, 1
          %s168 = smul.addr %s167, 1024
          %s169 = scalar_lea.vmem [#allocation3], %s168
          %s170 = smul.u32 32, %s16
          %s171 = smul.u32 8, %s18
          %s172 = smul.addr %s170, 16
          %s173 = sadd.s32 %s171, %s172
          %s174 = smul.addr %s173, 4
          %s175 = scalar_lea.vmem %s0, %s174
          // Predicated region
          $region25: #{decoder_forward.6} parent=23 // pred_check
            _
          $region26: #{decoder_forward.6} parent=23 // pred_check_branch
            %177 = sbr.rel (0) target = $region28
          $region27: #{decoder_forward.6} parent=23 // pred_region
            // Predicated region
            $region29: #{decoder_forward.6} parent=27 // pred_check
              _
            $region30: #{decoder_forward.6} parent=27 // pred_check_branch
              %179 = sbr.rel (0) target = $region32
            $region31: #{decoder_forward.6} parent=27 // pred_region
              loop: start=0, step=1, limit=1
              $region33: #{decoder_forward.6} parent=31 // loop_pre_header
                _
              $region34: #{decoder_forward.6} parent=31 // loop_header
                %s181 = sphi 0, %s185
                %p182 = scmp.ge.s32.totalorder %s181, 1
                %s186 = sphi %s175, %s175
                %s187 = sphi %s169, %s169
              $region35: #{decoder_forward.6} parent=31 // loop_header_branch
                %184 = sbr.rel (%p182) target = $region39
              $region36: #{decoder_forward.6} parent=31 // loop_body
                %v188 = vld [vmem:[%s186] sm:$0xff]
                %189 = vst [vmem:[%s187] sm:$0xff] %v188
                %v190 = vld [vmem:[%s186 + $0x8] sm:$0xff]
                %191 = vst [vmem:[%s187 + $0x8] sm:$0xff] %v190
                %v192 = vld [vmem:[%s186 + $0x10] sm:$0xff]
                %193 = vst [vmem:[%s187 + $0x10] sm:$0xff] %v192
                %v194 = vld [vmem:[%s186 + $0x18] sm:$0xff]
                %195 = vst [vmem:[%s187 + $0x18] sm:$0xff] %v194
                %v196 = vld [vmem:[%s186 + $0x40] sm:$0xff]
                %197 = vst [vmem:[%s187 + $0x20] sm:$0xff] %v196
                %v198 = vld [vmem:[%s186 + $0x48] sm:$0xff]
                %199 = vst [vmem:[%s187 + $0x28] sm:$0xff] %v198
                %v200 = vld [vmem:[%s186 + $0x50] sm:$0xff]
                %201 = vst [vmem:[%s187 + $0x30] sm:$0xff] %v200
                %v202 = vld [vmem:[%s186 + $0x58] sm:$0xff]
                %203 = vst [vmem:[%s187 + $0x38] sm:$0xff] %v202
                %v204 = vld [vmem:[%s186 + $0x80] sm:$0xff]
                %205 = vst [vmem:[%s187 + $0x40] sm:$0xff] %v204
                %v206 = vld [vmem:[%s186 + $0x88] sm:$0xff]
                %207 = vst [vmem:[%s187 + $0x48] sm:$0xff] %v206
                %v208 = vld [vmem:[%s186 + $0x90] sm:$0xff]
                %209 = vst [vmem:[%s187 + $0x50] sm:$0xff] %v208
                %v210 = vld [vmem:[%s186 + $0x98] sm:$0xff]
                %211 = vst [vmem:[%s187 + $0x58] sm:$0xff] %v210
                %v212 = vld [vmem:[%s186 + $0xc0] sm:$0xff]
                %213 = vst [vmem:[%s187 + $0x60] sm:$0xff] %v212
                %v214 = vld [vmem:[%s186 + $0xc8] sm:$0xff]
                %215 = vst [vmem:[%s187 + $0x68] sm:$0xff] %v214
                %v216 = vld [vmem:[%s186 + $0xd0] sm:$0xff]
                %217 = vst [vmem:[%s187 + $0x70] sm:$0xff] %v216
                %v218 = vld [vmem:[%s186 + $0xd8] sm:$0xff]
                %219 = vst [vmem:[%s187 + $0x78] sm:$0xff] %v218
                %v220 = vld [vmem:[%s186 + $0x100] sm:$0xff]
                %221 = vst [vmem:[%s187 + $0x80] sm:$0xff] %v220
                %v222 = vld [vmem:[%s186 + $0x108] sm:$0xff]
                %223 = vst [vmem:[%s187 + $0x88] sm:$0xff] %v222
                %v224 = vld [vmem:[%s186 + $0x110] sm:$0xff]
                %225 = vst [vmem:[%s187 + $0x90] sm:$0xff] %v224
                %v226 = vld [vmem:[%s186 + $0x118] sm:$0xff]
                %227 = vst [vmem:[%s187 + $0x98] sm:$0xff] %v226
                %v228 = vld [vmem:[%s186 + $0x140] sm:$0xff]
                %229 = vst [vmem:[%s187 + $0xa0] sm:$0xff] %v228
                %v230 = vld [vmem:[%s186 + $0x148] sm:$0xff]
                %231 = vst [vmem:[%s187 + $0xa8] sm:$0xff] %v230
                %v232 = vld [vmem:[%s186 + $0x150] sm:$0xff]
                %233 = vst [vmem:[%s187 + $0xb0] sm:$0xff] %v232
                %v234 = vld [vmem:[%s186 + $0x158] sm:$0xff]
                %235 = vst [vmem:[%s187 + $0xb8] sm:$0xff] %v234
                %v236 = vld [vmem:[%s186 + $0x180] sm:$0xff]
                %237 = vst [vmem:[%s187 + $0xc0] sm:$0xff] %v236
                %v238 = vld [vmem:[%s186 + $0x188] sm:$0xff]
                %239 = vst [vmem:[%s187 + $0xc8] sm:$0xff] %v238
                %v240 = vld [vmem:[%s186 + $0x190] sm:$0xff]
                %241 = vst [vmem:[%s187 + $0xd0] sm:$0xff] %v240
                %v242 = vld [vmem:[%s186 + $0x198] sm:$0xff]
                %243 = vst [vmem:[%s187 + $0xd8] sm:$0xff] %v242
                %v244 = vld [vmem:[%s186 + $0x1c0] sm:$0xff]
                %245 = vst [vmem:[%s187 + $0xe0] sm:$0xff] %v244
                %v246 = vld [vmem:[%s186 + $0x1c8] sm:$0xff]
                %247 = vst [vmem:[%s187 + $0xe8] sm:$0xff] %v246
                %v248 = vld [vmem:[%s186 + $0x1d0] sm:$0xff]
                %249 = vst [vmem:[%s187 + $0xf0] sm:$0xff] %v248
                %v250 = vld [vmem:[%s186 + $0x1d8] sm:$0xff]
                %251 = vst [vmem:[%s187 + $0xf8] sm:$0xff] %v250
                %v252 = vld [vmem:[%s186 + $0x200] sm:$0xff]
                %253 = vst [vmem:[%s187 + $0x100] sm:$0xff] %v252
                %v254 = vld [vmem:[%s186 + $0x208] sm:$0xff]
                %255 = vst [vmem:[%s187 + $0x108] sm:$0xff] %v254
                %v256 = vld [vmem:[%s186 + $0x210] sm:$0xff]
                %257 = vst [vmem:[%s187 + $0x110] sm:$0xff] %v256
                %v258 = vld [vmem:[%s186 + $0x218] sm:$0xff]
                %259 = vst [vmem:[%s187 + $0x118] sm:$0xff] %v258
                %v260 = vld [vmem:[%s186 + $0x240] sm:$0xff]
                %261 = vst [vmem:[%s187 + $0x120] sm:$0xff] %v260
                %v262 = vld [vmem:[%s186 + $0x248] sm:$0xff]
                %263 = vst [vmem:[%s187 + $0x128] sm:$0xff] %v262
                %v264 = vld [vmem:[%s186 + $0x250] sm:$0xff]
                %265 = vst [vmem:[%s187 + $0x130] sm:$0xff] %v264
                %v266 = vld [vmem:[%s186 + $0x258] sm:$0xff]
                %267 = vst [vmem:[%s187 + $0x138] sm:$0xff] %v266
                %v268 = vld [vmem:[%s186 + $0x280] sm:$0xff]
                %269 = vst [vmem:[%s187 + $0x140] sm:$0xff] %v268
                %v270 = vld [vmem:[%s186 + $0x288] sm:$0xff]
                %271 = vst [vmem:[%s187 + $0x148] sm:$0xff] %v270
                %v272 = vld [vmem:[%s186 + $0x290] sm:$0xff]
                %273 = vst [vmem:[%s187 + $0x150] sm:$0xff] %v272
                %v274 = vld [vmem:[%s186 + $0x298] sm:$0xff]
                %275 = vst [vmem:[%s187 + $0x158] sm:$0xff] %v274
                %v276 = vld [vmem:[%s186 + $0x2c0] sm:$0xff]
                %277 = vst [vmem:[%s187 + $0x160] sm:$0xff] %v276
                %v278 = vld [vmem:[%s186 + $0x2c8] sm:$0xff]
                %279 = vst [vmem:[%s187 + $0x168] sm:$0xff] %v278
                %v280 = vld [vmem:[%s186 + $0x2d0] sm:$0xff]
                %281 = vst [vmem:[%s187 + $0x170] sm:$0xff] %v280
                %v282 = vld [vmem:[%s186 + $0x2d8] sm:$0xff]
                %283 = vst [vmem:[%s187 + $0x178] sm:$0xff] %v282
                %v284 = vld [vmem:[%s186 + $0x300] sm:$0xff]
                %285 = vst [vmem:[%s187 + $0x180] sm:$0xff] %v284
                %v286 = vld [vmem:[%s186 + $0x308] sm:$0xff]
                %287 = vst [vmem:[%s187 + $0x188] sm:$0xff] %v286
                %v288 = vld [vmem:[%s186 + $0x310] sm:$0xff]
                %289 = vst [vmem:[%s187 + $0x190] sm:$0xff] %v288
                %v290 = vld [vmem:[%s186 + $0x318] sm:$0xff]
                %291 = vst [vmem:[%s187 + $0x198] sm:$0xff] %v290
                %v292 = vld [vmem:[%s186 + $0x340] sm:$0xff]
                %293 = vst [vmem:[%s187 + $0x1a0] sm:$0xff] %v292
                %v294 = vld [vmem:[%s186 + $0x348] sm:$0xff]
                %295 = vst [vmem:[%s187 + $0x1a8] sm:$0xff] %v294
                %v296 = vld [vmem:[%s186 + $0x350] sm:$0xff]
                %297 = vst [vmem:[%s187 + $0x1b0] sm:$0xff] %v296
                %v298 = vld [vmem:[%s186 + $0x358] sm:$0xff]
                %299 = vst [vmem:[%s187 + $0x1b8] sm:$0xff] %v298
                %v300 = vld [vmem:[%s186 + $0x380] sm:$0xff]
                %301 = vst [vmem:[%s187 + $0x1c0] sm:$0xff] %v300
                %v302 = vld [vmem:[%s186 + $0x388] sm:$0xff]
                %303 = vst [vmem:[%s187 + $0x1c8] sm:$0xff] %v302
                %v304 = vld [vmem:[%s186 + $0x390] sm:$0xff]
                %305 = vst [vmem:[%s187 + $0x1d0] sm:$0xff] %v304
                %v306 = vld [vmem:[%s186 + $0x398] sm:$0xff]
                %307 = vst [vmem:[%s187 + $0x1d8] sm:$0xff] %v306
                %v308 = vld [vmem:[%s186 + $0x3c0] sm:$0xff]
                %309 = vst [vmem:[%s187 + $0x1e0] sm:$0xff] %v308
                %v310 = vld [vmem:[%s186 + $0x3c8] sm:$0xff]
                %311 = vst [vmem:[%s187 + $0x1e8] sm:$0xff] %v310
                %v312 = vld [vmem:[%s186 + $0x3d0] sm:$0xff]
                %313 = vst [vmem:[%s187 + $0x1f0] sm:$0xff] %v312
                %v314 = vld [vmem:[%s186 + $0x3d8] sm:$0xff]
                %315 = vst [vmem:[%s187 + $0x1f8] sm:$0xff] %v314
                %v316 = vld [vmem:[%s186 + $0x400] sm:$0xff]
                %317 = vst [vmem:[%s187 + $0x200] sm:$0xff] %v316
                %v318 = vld [vmem:[%s186 + $0x408] sm:$0xff]
                %319 = vst [vmem:[%s187 + $0x208] sm:$0xff] %v318
                %v320 = vld [vmem:[%s186 + $0x410] sm:$0xff]
                %321 = vst [vmem:[%s187 + $0x210] sm:$0xff] %v320
                %v322 = vld [vmem:[%s186 + $0x418] sm:$0xff]
                %323 = vst [vmem:[%s187 + $0x218] sm:$0xff] %v322
                %v324 = vld [vmem:[%s186 + $0x440] sm:$0xff]
                %325 = vst [vmem:[%s187 + $0x220] sm:$0xff] %v324
                %v326 = vld [vmem:[%s186 + $0x448] sm:$0xff]
                %327 = vst [vmem:[%s187 + $0x228] sm:$0xff] %v326
                %v328 = vld [vmem:[%s186 + $0x450] sm:$0xff]
                %329 = vst [vmem:[%s187 + $0x230] sm:$0xff] %v328
                %v330 = vld [vmem:[%s186 + $0x458] sm:$0xff]
                %331 = vst [vmem:[%s187 + $0x238] sm:$0xff] %v330
                %v332 = vld [vmem:[%s186 + $0x480] sm:$0xff]
                %333 = vst [vmem:[%s187 + $0x240] sm:$0xff] %v332
                %v334 = vld [vmem:[%s186 + $0x488] sm:$0xff]
                %335 = vst [vmem:[%s187 + $0x248] sm:$0xff] %v334
                %v336 = vld [vmem:[%s186 + $0x490] sm:$0xff]
                %337 = vst [vmem:[%s187 + $0x250] sm:$0xff] %v336
                %v338 = vld [vmem:[%s186 + $0x498] sm:$0xff]
                %339 = vst [vmem:[%s187 + $0x258] sm:$0xff] %v338
                %v340 = vld [vmem:[%s186 + $0x4c0] sm:$0xff]
                %341 = vst [vmem:[%s187 + $0x260] sm:$0xff] %v340
                %v342 = vld [vmem:[%s186 + $0x4c8] sm:$0xff]
                %343 = vst [vmem:[%s187 + $0x268] sm:$0xff] %v342
                %v344 = vld [vmem:[%s186 + $0x4d0] sm:$0xff]
                %345 = vst [vmem:[%s187 + $0x270] sm:$0xff] %v344
                %v346 = vld [vmem:[%s186 + $0x4d8] sm:$0xff]
                %347 = vst [vmem:[%s187 + $0x278] sm:$0xff] %v346
                %v348 = vld [vmem:[%s186 + $0x500] sm:$0xff]
                %349 = vst [vmem:[%s187 + $0x280] sm:$0xff] %v348
                %v350 = vld [vmem:[%s186 + $0x508] sm:$0xff]
                %351 = vst [vmem:[%s187 + $0x288] sm:$0xff] %v350
                %v352 = vld [vmem:[%s186 + $0x510] sm:$0xff]
                %353 = vst [vmem:[%s187 + $0x290] sm:$0xff] %v352
                %v354 = vld [vmem:[%s186 + $0x518] sm:$0xff]
                %355 = vst [vmem:[%s187 + $0x298] sm:$0xff] %v354
                %v356 = vld [vmem:[%s186 + $0x540] sm:$0xff]
                %357 = vst [vmem:[%s187 + $0x2a0] sm:$0xff] %v356
                %v358 = vld [vmem:[%s186 + $0x548] sm:$0xff]
                %359 = vst [vmem:[%s187 + $0x2a8] sm:$0xff] %v358
                %v360 = vld [vmem:[%s186 + $0x550] sm:$0xff]
                %361 = vst [vmem:[%s187 + $0x2b0] sm:$0xff] %v360
                %v362 = vld [vmem:[%s186 + $0x558] sm:$0xff]
                %363 = vst [vmem:[%s187 + $0x2b8] sm:$0xff] %v362
                %v364 = vld [vmem:[%s186 + $0x580] sm:$0xff]
                %365 = vst [vmem:[%s187 + $0x2c0] sm:$0xff] %v364
                %v366 = vld [vmem:[%s186 + $0x588] sm:$0xff]
                %367 = vst [vmem:[%s187 + $0x2c8] sm:$0xff] %v366
                %v368 = vld [vmem:[%s186 + $0x590] sm:$0xff]
                %369 = vst [vmem:[%s187 + $0x2d0] sm:$0xff] %v368
                %v370 = vld [vmem:[%s186 + $0x598] sm:$0xff]
                %371 = vst [vmem:[%s187 + $0x2d8] sm:$0xff] %v370
                %v372 = vld [vmem:[%s186 + $0x5c0] sm:$0xff]
                %373 = vst [vmem:[%s187 + $0x2e0] sm:$0xff] %v372
                %v374 = vld [vmem:[%s186 + $0x5c8] sm:$0xff]
                %375 = vst [vmem:[%s187 + $0x2e8] sm:$0xff] %v374
                %v376 = vld [vmem:[%s186 + $0x5d0] sm:$0xff]
                %377 = vst [vmem:[%s187 + $0x2f0] sm:$0xff] %v376
                %v378 = vld [vmem:[%s186 + $0x5d8] sm:$0xff]
                %379 = vst [vmem:[%s187 + $0x2f8] sm:$0xff] %v378
                %v380 = vld [vmem:[%s186 + $0x600] sm:$0xff]
                %381 = vst [vmem:[%s187 + $0x300] sm:$0xff] %v380
                %v382 = vld [vmem:[%s186 + $0x608] sm:$0xff]
                %383 = vst [vmem:[%s187 + $0x308] sm:$0xff] %v382
                %v384 = vld [vmem:[%s186 + $0x610] sm:$0xff]
                %385 = vst [vmem:[%s187 + $0x310] sm:$0xff] %v384
                %v386 = vld [vmem:[%s186 + $0x618] sm:$0xff]
                %387 = vst [vmem:[%s187 + $0x318] sm:$0xff] %v386
                %v388 = vld [vmem:[%s186 + $0x640] sm:$0xff]
                %389 = vst [vmem:[%s187 + $0x320] sm:$0xff] %v388
                %v390 = vld [vmem:[%s186 + $0x648] sm:$0xff]
                %391 = vst [vmem:[%s187 + $0x328] sm:$0xff] %v390
                %v392 = vld [vmem:[%s186 + $0x650] sm:$0xff]
                %393 = vst [vmem:[%s187 + $0x330] sm:$0xff] %v392
                %v394 = vld [vmem:[%s186 + $0x658] sm:$0xff]
                %395 = vst [vmem:[%s187 + $0x338] sm:$0xff] %v394
                %v396 = vld [vmem:[%s186 + $0x680] sm:$0xff]
                %397 = vst [vmem:[%s187 + $0x340] sm:$0xff] %v396
                %v398 = vld [vmem:[%s186 + $0x688] sm:$0xff]
                %399 = vst [vmem:[%s187 + $0x348] sm:$0xff] %v398
                %v400 = vld [vmem:[%s186 + $0x690] sm:$0xff]
                %401 = vst [vmem:[%s187 + $0x350] sm:$0xff] %v400
                %v402 = vld [vmem:[%s186 + $0x698] sm:$0xff]
                %403 = vst [vmem:[%s187 + $0x358] sm:$0xff] %v402
                %v404 = vld [vmem:[%s186 + $0x6c0] sm:$0xff]
                %405 = vst [vmem:[%s187 + $0x360] sm:$0xff] %v404
                %v406 = vld [vmem:[%s186 + $0x6c8] sm:$0xff]
                %407 = vst [vmem:[%s187 + $0x368] sm:$0xff] %v406
                %v408 = vld [vmem:[%s186 + $0x6d0] sm:$0xff]
                %409 = vst [vmem:[%s187 + $0x370] sm:$0xff] %v408
                %v410 = vld [vmem:[%s186 + $0x6d8] sm:$0xff]
                %411 = vst [vmem:[%s187 + $0x378] sm:$0xff] %v410
                %v412 = vld [vmem:[%s186 + $0x700] sm:$0xff]
                %413 = vst [vmem:[%s187 + $0x380] sm:$0xff] %v412
                %v414 = vld [vmem:[%s186 + $0x708] sm:$0xff]
                %415 = vst [vmem:[%s187 + $0x388] sm:$0xff] %v414
                %v416 = vld [vmem:[%s186 + $0x710] sm:$0xff]
                %417 = vst [vmem:[%s187 + $0x390] sm:$0xff] %v416
                %v418 = vld [vmem:[%s186 + $0x718] sm:$0xff]
                %419 = vst [vmem:[%s187 + $0x398] sm:$0xff] %v418
                %v420 = vld [vmem:[%s186 + $0x740] sm:$0xff]
                %421 = vst [vmem:[%s187 + $0x3a0] sm:$0xff] %v420
                %v422 = vld [vmem:[%s186 + $0x748] sm:$0xff]
                %423 = vst [vmem:[%s187 + $0x3a8] sm:$0xff] %v422
                %v424 = vld [vmem:[%s186 + $0x750] sm:$0xff]
                %425 = vst [vmem:[%s187 + $0x3b0] sm:$0xff] %v424
                %v426 = vld [vmem:[%s186 + $0x758] sm:$0xff]
                %427 = vst [vmem:[%s187 + $0x3b8] sm:$0xff] %v426
                %v428 = vld [vmem:[%s186 + $0x780] sm:$0xff]
                %429 = vst [vmem:[%s187 + $0x3c0] sm:$0xff] %v428
                %v430 = vld [vmem:[%s186 + $0x788] sm:$0xff]
                %431 = vst [vmem:[%s187 + $0x3c8] sm:$0xff] %v430
                %v432 = vld [vmem:[%s186 + $0x790] sm:$0xff]
                %433 = vst [vmem:[%s187 + $0x3d0] sm:$0xff] %v432
                %v434 = vld [vmem:[%s186 + $0x798] sm:$0xff]
                %435 = vst [vmem:[%s187 + $0x3d8] sm:$0xff] %v434
                %v436 = vld [vmem:[%s186 + $0x7c0] sm:$0xff]
                %437 = vst [vmem:[%s187 + $0x3e0] sm:$0xff] %v436
                %v438 = vld [vmem:[%s186 + $0x7c8] sm:$0xff]
                %439 = vst [vmem:[%s187 + $0x3e8] sm:$0xff] %v438
                %v440 = vld [vmem:[%s186 + $0x7d0] sm:$0xff]
                %441 = vst [vmem:[%s187 + $0x3f0] sm:$0xff] %v440
                %v442 = vld [vmem:[%s186 + $0x7d8] sm:$0xff]
                %443 = vst [vmem:[%s187 + $0x3f8] sm:$0xff] %v442
              $region37: #{decoder_forward.6} parent=31 // loop_footer
                %s185 = sadd.s32 1, %s181
              $region38: #{decoder_forward.6} parent=31 // loop_footer_branch
                %180 = sbr.rel target = $region34
              $region39: #{decoder_forward.6} parent=31 // loop_exit
                _
            $region32: #{decoder_forward.6} parent=27 // pred_fallthru
              _
            // Predicated region
            $region40: #{decoder_forward.6} parent=27 // pred_check
              _
            $region41: #{decoder_forward.6} parent=27 // pred_check_branch
              %445 = sbr.rel target = $region43
            $region42: #{decoder_forward.6} parent=27 // pred_region
              _
            $region43: #{decoder_forward.6} parent=27 // pred_fallthru
              _
          $region28: #{decoder_forward.6} parent=23 // pred_fallthru
            _
          %446 = vnop
        $region24: #{decoder_forward.6} parent=19 // pred_fallthru
          _
        // Predicated region
        $region44: #{decoder_forward.6} parent=19 // pred_check
          %p447 = pneg %p78
        $region45: #{decoder_forward.6} parent=19 // pred_check_branch
          %449 = sbr.rel (%p447) target = $region47
        $region46: #{decoder_forward.6} parent=19 // pred_region
          %s450 = smul.u32 128, %s18
          %p451 = scmp.lt.s32.totalorder %s450, 255
          %s452 = scalar_select %p451, %s450, 255
          %p453 = scmp.lt.s32.totalorder %s17, 0
          %s454 = scalar_select %p453, %s17, 0
          %s455 = sadd.s32 %s454, %s452
          %s456 = smul.addr %s455, 4
          %s457 = scalar_lea.vmem %s1, %s456
          %s458 = smul.u32 128, %s18
        $region47: #{decoder_forward.6} parent=19 // pred_fallthru
          _
      $region20: #{decoder_forward.6} parent=5 // pred_fallthru
        _
      %p459 = scmp.le.s32.totalorder 1, %s9
      %p460 = scmp.lt.s32.totalorder %s9, 5
      %p461 = pnand %p459, %p460
      %p462 = pneg %p461
      // Predicated region
      $region48: #{decoder_forward.6} parent=5 // pred_check
        _
      $region49: #{decoder_forward.6} parent=5 // pred_check_branch
        %464 = sbr.rel (%p461) target = $region51
      $region50: #{decoder_forward.6} parent=5 // pred_region
        %s465 = ssub.s32 %s9, 1
        %s466 = sand.u32 %s43, 1
        %s467 = sand.u32 %s43, 1
        %s468 = smul.addr %s467, 1024
        %s469 = scalar_lea.vmem [#allocation3], %s468
        // Predicated region
        $region52: #{decoder_forward.6} parent=50 // pred_check
          %p470 = pneg %p56
        $region53: #{decoder_forward.6} parent=50 // pred_check_branch
          %472 = sbr.rel (%p470) target = $region55
        $region54: #{decoder_forward.6} parent=50 // pred_region
          _
        $region55: #{decoder_forward.6} parent=50 // pred_fallthru
          _
        %s473 = sand.u32 %s43, 1
        %s474 = sand.u32 %s43, 1
        %s475 = smul.addr %s474, 1024
        %s476 = scalar_lea.vmem [#allocation3], %s475
        %p477 = pneg %p56
        %p478 = pneg %p53
        %s479 = smul.u32 128, %s21
        %p480 = scmp.lt.s32.totalorder %s479, 255
        %s481 = scalar_select %p480, %s479, 255
        %p482 = scmp.lt.s32.totalorder %s20, 0
        %s483 = scalar_select %p482, %s20, 0
        %s484 = sadd.s32 %s483, %s481
        %s485 = smul.addr %s484, 4
        %s486 = scalar_lea.vmem %s1, %s485
        %p487 = pneg %p84
        %p488 = pneg %p81
        %p489 = scmp.lt.s32.totalorder %s20, 0
        %s490 = scalar_select %p489, %s20, 0
        %s491 = scalar_lea.vmem %s2, %s490
        %p492 = pneg %p110
        %p493 = pneg %p107
        %p494 = pneg %p138
        %p495 = pneg %p135
        %s496 = smul.u32 32, %s19
        %p497 = scmp.lt.s32.totalorder %s496, 63
        %s498 = scalar_select %p497, %s496, 63
        %p499 = scmp.lt.s32.totalorder %s20, 0
        %s500 = scalar_select %p499, %s20, 0
        %s501 = sadd.s32 %s500, %s498
        %s502 = smul.addr %s501, 8
        %s503 = scalar_lea.vmem %s3, %s502
        %s504 = smul.u32 32, %s19
        %s505 = smul.u32 8, %s21
        %s506 = smul.u32 128, %s21
        %p507 = scmp.lt.s32.totalorder %s506, 255
        %s508 = scalar_select %p507, %s506, 255
        %p509 = scmp.lt.s32.totalorder %s20, 0
        %s510 = scalar_select %p509, %s20, 0
        %s511 = sadd.s32 %s510, %s508
        %s512 = smul.addr %s511, 4
        %s513 = scalar_lea.vmem %s1, %s512
        %s514 = smul.u32 128, %s21
        %p515 = scmp.lt.s32.totalorder %s20, 0
        %s516 = scalar_select %p515, %s20, 0
        %s517 = scalar_lea.vmem %s2, %s516
        %s518 = smul.u32 32, %s19
        %p519 = scmp.lt.s32.totalorder %s518, 63
        %s520 = scalar_select %p519, %s518, 63
        %p521 = scmp.lt.s32.totalorder %s20, 0
        %s522 = scalar_select %p521, %s20, 0
        %s523 = sadd.s32 %s522, %s520
        %s524 = smul.addr %s523, 8
        %s525 = scalar_lea.vmem %s3, %s524
        %s526 = smul.u32 32, %s19
        %p528 = scmp.eq.s32.totalorder %s21, 0
        // Predicated region
        $region56: #{decoder_forward.6} parent=50 // pred_check
          %p529 = pneg %p528
        $region57: #{decoder_forward.6} parent=50 // pred_check_branch
          %531 = sbr.rel (%p529) target = $region59
        $region58: #{decoder_forward.6} parent=50 // pred_region
          %532 = vst [vmem:[#allocation2] sm:$0xff] 0.0
          %533 = vst [vmem:[#allocation2 + $0x8] sm:$0xff] 0.0
          %534 = vst [vmem:[#allocation2 + $0x10] sm:$0xff] 0.0
          %535 = vst [vmem:[#allocation2 + $0x18] sm:$0xff] 0.0
          %536 = vst [vmem:[#allocation2 + $0x20] sm:$0xff] 0.0
          %537 = vst [vmem:[#allocation2 + $0x28] sm:$0xff] 0.0
          %538 = vst [vmem:[#allocation2 + $0x30] sm:$0xff] 0.0
          %539 = vst [vmem:[#allocation2 + $0x38] sm:$0xff] 0.0
          %540 = vst [vmem:[#allocation2 + $0x40] sm:$0xff] 0.0
          %541 = vst [vmem:[#allocation2 + $0x48] sm:$0xff] 0.0
          %542 = vst [vmem:[#allocation2 + $0x50] sm:$0xff] 0.0
          %543 = vst [vmem:[#allocation2 + $0x58] sm:$0xff] 0.0
          %544 = vst [vmem:[#allocation2 + $0x60] sm:$0xff] 0.0
          %545 = vst [vmem:[#allocation2 + $0x68] sm:$0xff] 0.0
          %546 = vst [vmem:[#allocation2 + $0x70] sm:$0xff] 0.0
          %547 = vst [vmem:[#allocation2 + $0x78] sm:$0xff] 0.0
          %548 = vst [vmem:[#allocation2 + $0x80] sm:$0xff] 0.0
          %549 = vst [vmem:[#allocation2 + $0x88] sm:$0xff] 0.0
          %550 = vst [vmem:[#allocation2 + $0x90] sm:$0xff] 0.0
          %551 = vst [vmem:[#allocation2 + $0x98] sm:$0xff] 0.0
          %552 = vst [vmem:[#allocation2 + $0xa0] sm:$0xff] 0.0
          %553 = vst [vmem:[#allocation2 + $0xa8] sm:$0xff] 0.0
          %554 = vst [vmem:[#allocation2 + $0xb0] sm:$0xff] 0.0
          %555 = vst [vmem:[#allocation2 + $0xb8] sm:$0xff] 0.0
          %556 = vst [vmem:[#allocation2 + $0xc0] sm:$0xff] 0.0
          %557 = vst [vmem:[#allocation2 + $0xc8] sm:$0xff] 0.0
          %558 = vst [vmem:[#allocation2 + $0xd0] sm:$0xff] 0.0
          %559 = vst [vmem:[#allocation2 + $0xd8] sm:$0xff] 0.0
          %560 = vst [vmem:[#allocation2 + $0xe0] sm:$0xff] 0.0
          %561 = vst [vmem:[#allocation2 + $0xe8] sm:$0xff] 0.0
          %562 = vst [vmem:[#allocation2 + $0xf0] sm:$0xff] 0.0
          %563 = vst [vmem:[#allocation2 + $0xf8] sm:$0xff] 0.0
        $region59: #{decoder_forward.6} parent=50 // pred_fallthru
          _
        %v564 = vld [vmem:[#allocation2] sm:$0xff]
        %v565 = vld [vmem:[#allocation2 + $0x8] sm:$0xff]
        %v566 = vld [vmem:[#allocation2 + $0x10] sm:$0xff]
        %v567 = vld [vmem:[#allocation2 + $0x18] sm:$0xff]
        %v568 = vld [vmem:[#allocation2 + $0x20] sm:$0xff]
        %v569 = vld [vmem:[#allocation2 + $0x28] sm:$0xff]
        %v570 = vld [vmem:[#allocation2 + $0x30] sm:$0xff]
        %v571 = vld [vmem:[#allocation2 + $0x38] sm:$0xff]
        %v572 = vld [vmem:[#allocation2 + $0x40] sm:$0xff]
        %v573 = vld [vmem:[#allocation2 + $0x48] sm:$0xff]
        %v574 = vld [vmem:[#allocation2 + $0x50] sm:$0xff]
        %v575 = vld [vmem:[#allocation2 + $0x58] sm:$0xff]
        %v576 = vld [vmem:[#allocation2 + $0x60] sm:$0xff]
        %v577 = vld [vmem:[#allocation2 + $0x68] sm:$0xff]
        %v578 = vld [vmem:[#allocation2 + $0x70] sm:$0xff]
        %v579 = vld [vmem:[#allocation2 + $0x78] sm:$0xff]
        %v580 = vld [vmem:[#allocation2 + $0x80] sm:$0xff]
        %v581 = vld [vmem:[#allocation2 + $0x88] sm:$0xff]
        %v582 = vld [vmem:[#allocation2 + $0x90] sm:$0xff]
        %v583 = vld [vmem:[#allocation2 + $0x98] sm:$0xff]
        %v584 = vld [vmem:[#allocation2 + $0xa0] sm:$0xff]
        %v585 = vld [vmem:[#allocation2 + $0xa8] sm:$0xff]
        %v586 = vld [vmem:[#allocation2 + $0xb0] sm:$0xff]
        %v587 = vld [vmem:[#allocation2 + $0xb8] sm:$0xff]
        %v588 = vld [vmem:[#allocation2 + $0xc0] sm:$0xff]
        %v589 = vld [vmem:[#allocation2 + $0xc8] sm:$0xff]
        %v590 = vld [vmem:[#allocation2 + $0xd0] sm:$0xff]
        %v591 = vld [vmem:[#allocation2 + $0xd8] sm:$0xff]
        %v592 = vld [vmem:[#allocation2 + $0xe0] sm:$0xff]
        %v593 = vld [vmem:[#allocation2 + $0xe8] sm:$0xff]
        %v594 = vld [vmem:[#allocation2 + $0xf0] sm:$0xff]
        %v595 = vld [vmem:[#allocation2 + $0xf8] sm:$0xff]
        %v596 = vld [vmem:[%s469] sm:$0xff]
        %v597 = vld [vmem:[%s469 + $0x8] sm:$0xff]
        %v598 = vld [vmem:[%s469 + $0x10] sm:$0xff]
        %v599 = vld [vmem:[%s469 + $0x18] sm:$0xff]
        %v600 = vld [vmem:[%s469 + $0x20] sm:$0xff]
        %v601 = vld [vmem:[%s469 + $0x28] sm:$0xff]
        %v602 = vld [vmem:[%s469 + $0x30] sm:$0xff]
        %v603 = vld [vmem:[%s469 + $0x38] sm:$0xff]
        %v604 = vld [vmem:[%s469 + $0x40] sm:$0xff]
        %v605 = vld [vmem:[%s469 + $0x48] sm:$0xff]
        %v606 = vld [vmem:[%s469 + $0x50] sm:$0xff]
        %v607 = vld [vmem:[%s469 + $0x58] sm:$0xff]
        %v608 = vld [vmem:[%s469 + $0x60] sm:$0xff]
        %v609 = vld [vmem:[%s469 + $0x68] sm:$0xff]
        %v610 = vld [vmem:[%s469 + $0x70] sm:$0xff]
        %v611 = vld [vmem:[%s469 + $0x78] sm:$0xff]
        %v612 = vld [vmem:[%s469 + $0x80] sm:$0xff]
        %v613 = vld [vmem:[%s469 + $0x88] sm:$0xff]
        %v614 = vld [vmem:[%s469 + $0x90] sm:$0xff]
        %v615 = vld [vmem:[%s469 + $0x98] sm:$0xff]
        %v616 = vld [vmem:[%s469 + $0xa0] sm:$0xff]
        %v617 = vld [vmem:[%s469 + $0xa8] sm:$0xff]
        %v618 = vld [vmem:[%s469 + $0xb0] sm:$0xff]
        %v619 = vld [vmem:[%s469 + $0xb8] sm:$0xff]
        %v620 = vld [vmem:[%s469 + $0xc0] sm:$0xff]
        %v621 = vld [vmem:[%s469 + $0xc8] sm:$0xff]
        %v622 = vld [vmem:[%s469 + $0xd0] sm:$0xff]
        %v623 = vld [vmem:[%s469 + $0xd8] sm:$0xff]
        %v624 = vld [vmem:[%s469 + $0xe0] sm:$0xff]
        %v625 = vld [vmem:[%s469 + $0xe8] sm:$0xff]
        %v626 = vld [vmem:[%s469 + $0xf0] sm:$0xff]
        %v627 = vld [vmem:[%s469 + $0xf8] sm:$0xff]
        %v628 = vld [vmem:[%s469 + $0x100] sm:$0xff]
        %v629 = vld [vmem:[%s469 + $0x108] sm:$0xff]
        %v630 = vld [vmem:[%s469 + $0x110] sm:$0xff]
        %v631 = vld [vmem:[%s469 + $0x118] sm:$0xff]
        %v632 = vld [vmem:[%s469 + $0x120] sm:$0xff]
        %v633 = vld [vmem:[%s469 + $0x128] sm:$0xff]
        %v634 = vld [vmem:[%s469 + $0x130] sm:$0xff]
        %v635 = vld [vmem:[%s469 + $0x138] sm:$0xff]
        %v636 = vld [vmem:[%s469 + $0x140] sm:$0xff]
        %v637 = vld [vmem:[%s469 + $0x148] sm:$0xff]
        %v638 = vld [vmem:[%s469 + $0x150] sm:$0xff]
        %v639 = vld [vmem:[%s469 + $0x158] sm:$0xff]
        %v640 = vld [vmem:[%s469 + $0x160] sm:$0xff]
        %v641 = vld [vmem:[%s469 + $0x168] sm:$0xff]
        %v642 = vld [vmem:[%s469 + $0x170] sm:$0xff]
        %v643 = vld [vmem:[%s469 + $0x178] sm:$0xff]
        %v644 = vld [vmem:[%s469 + $0x180] sm:$0xff]
        %v645 = vld [vmem:[%s469 + $0x188] sm:$0xff]
        %v646 = vld [vmem:[%s469 + $0x190] sm:$0xff]
        %v647 = vld [vmem:[%s469 + $0x198] sm:$0xff]
        %v648 = vld [vmem:[%s469 + $0x1a0] sm:$0xff]
        %v649 = vld [vmem:[%s469 + $0x1a8] sm:$0xff]
        %v650 = vld [vmem:[%s469 + $0x1b0] sm:$0xff]
        %v651 = vld [vmem:[%s469 + $0x1b8] sm:$0xff]
        %v652 = vld [vmem:[%s469 + $0x1c0] sm:$0xff]
        %v653 = vld [vmem:[%s469 + $0x1c8] sm:$0xff]
        %v654 = vld [vmem:[%s469 + $0x1d0] sm:$0xff]
        %v655 = vld [vmem:[%s469 + $0x1d8] sm:$0xff]
        %v656 = vld [vmem:[%s469 + $0x1e0] sm:$0xff]
        %v657 = vld [vmem:[%s469 + $0x1e8] sm:$0xff]
        %v658 = vld [vmem:[%s469 + $0x1f0] sm:$0xff]
        %v659 = vld [vmem:[%s469 + $0x1f8] sm:$0xff]
        %v660 = vld [vmem:[%s469 + $0x200] sm:$0xff]
        %v661 = vld [vmem:[%s469 + $0x208] sm:$0xff]
        %v662 = vld [vmem:[%s469 + $0x210] sm:$0xff]
        %v663 = vld [vmem:[%s469 + $0x218] sm:$0xff]
        %v664 = vld [vmem:[%s469 + $0x220] sm:$0xff]
        %v665 = vld [vmem:[%s469 + $0x228] sm:$0xff]
        %v666 = vld [vmem:[%s469 + $0x230] sm:$0xff]
        %v667 = vld [vmem:[%s469 + $0x238] sm:$0xff]
        %v668 = vld [vmem:[%s469 + $0x240] sm:$0xff]
        %v669 = vld [vmem:[%s469 + $0x248] sm:$0xff]
        %v670 = vld [vmem:[%s469 + $0x250] sm:$0xff]
        %v671 = vld [vmem:[%s469 + $0x258] sm:$0xff]
        %v672 = vld [vmem:[%s469 + $0x260] sm:$0xff]
        %v673 = vld [vmem:[%s469 + $0x268] sm:$0xff]
        %v674 = vld [vmem:[%s469 + $0x270] sm:$0xff]
        %v675 = vld [vmem:[%s469 + $0x278] sm:$0xff]
        %v676 = vld [vmem:[%s469 + $0x280] sm:$0xff]
        %v677 = vld [vmem:[%s469 + $0x288] sm:$0xff]
        %v678 = vld [vmem:[%s469 + $0x290] sm:$0xff]
        %v679 = vld [vmem:[%s469 + $0x298] sm:$0xff]
        %v680 = vld [vmem:[%s469 + $0x2a0] sm:$0xff]
        %v681 = vld [vmem:[%s469 + $0x2a8] sm:$0xff]
        %v682 = vld [vmem:[%s469 + $0x2b0] sm:$0xff]
        %v683 = vld [vmem:[%s469 + $0x2b8] sm:$0xff]
        %v684 = vld [vmem:[%s469 + $0x2c0] sm:$0xff]
        %v685 = vld [vmem:[%s469 + $0x2c8] sm:$0xff]
        %v686 = vld [vmem:[%s469 + $0x2d0] sm:$0xff]
        %v687 = vld [vmem:[%s469 + $0x2d8] sm:$0xff]
        %v688 = vld [vmem:[%s469 + $0x2e0] sm:$0xff]
        %v689 = vld [vmem:[%s469 + $0x2e8] sm:$0xff]
        %v690 = vld [vmem:[%s469 + $0x2f0] sm:$0xff]
        %v691 = vld [vmem:[%s469 + $0x2f8] sm:$0xff]
        %v692 = vld [vmem:[%s469 + $0x300] sm:$0xff]
        %v693 = vld [vmem:[%s469 + $0x308] sm:$0xff]
        %v694 = vld [vmem:[%s469 + $0x310] sm:$0xff]
        %v695 = vld [vmem:[%s469 + $0x318] sm:$0xff]
        %v696 = vld [vmem:[%s469 + $0x320] sm:$0xff]
        %v697 = vld [vmem:[%s469 + $0x328] sm:$0xff]
        %v698 = vld [vmem:[%s469 + $0x330] sm:$0xff]
        %v699 = vld [vmem:[%s469 + $0x338] sm:$0xff]
        %v700 = vld [vmem:[%s469 + $0x340] sm:$0xff]
        %v701 = vld [vmem:[%s469 + $0x348] sm:$0xff]
        %v702 = vld [vmem:[%s469 + $0x350] sm:$0xff]
        %v703 = vld [vmem:[%s469 + $0x358] sm:$0xff]
        %v704 = vld [vmem:[%s469 + $0x360] sm:$0xff]
        %v705 = vld [vmem:[%s469 + $0x368] sm:$0xff]
        %v706 = vld [vmem:[%s469 + $0x370] sm:$0xff]
        %v707 = vld [vmem:[%s469 + $0x378] sm:$0xff]
        %v708 = vld [vmem:[%s469 + $0x380] sm:$0xff]
        %v709 = vld [vmem:[%s469 + $0x388] sm:$0xff]
        %v710 = vld [vmem:[%s469 + $0x390] sm:$0xff]
        %v711 = vld [vmem:[%s469 + $0x398] sm:$0xff]
        %v712 = vld [vmem:[%s469 + $0x3a0] sm:$0xff]
        %v713 = vld [vmem:[%s469 + $0x3a8] sm:$0xff]
        %v714 = vld [vmem:[%s469 + $0x3b0] sm:$0xff]
        %v715 = vld [vmem:[%s469 + $0x3b8] sm:$0xff]
        %v716 = vld [vmem:[%s469 + $0x3c0] sm:$0xff]
        %v717 = vld [vmem:[%s469 + $0x3c8] sm:$0xff]
        %v718 = vld [vmem:[%s469 + $0x3d0] sm:$0xff]
        %v719 = vld [vmem:[%s469 + $0x3d8] sm:$0xff]
        %v720 = vld [vmem:[%s469 + $0x3e0] sm:$0xff]
        %v721 = vld [vmem:[%s469 + $0x3e8] sm:$0xff]
        %v722 = vld [vmem:[%s469 + $0x3f0] sm:$0xff]
        %v723 = vld [vmem:[%s469 + $0x3f8] sm:$0xff]
        %v724 = vld [vmem:[%s513] sm:$0xf]
        %v725 = vld [vmem:[%s513 + $0x4] sm:$0xf]
        %v726 = vld [vmem:[%s513 + $0x8] sm:$0xf]
        %v727 = vld [vmem:[%s513 + $0xc] sm:$0xf]
        %v728 = vld [vmem:[%s513 + $0x10] sm:$0xf]
        %v729 = vld [vmem:[%s513 + $0x14] sm:$0xf]
        %v730 = vld [vmem:[%s513 + $0x18] sm:$0xf]
        %v731 = vld [vmem:[%s513 + $0x1c] sm:$0xf]
        %v732 = vld [vmem:[%s513 + $0x20] sm:$0xf]
        %v733 = vld [vmem:[%s513 + $0x24] sm:$0xf]
        %v734 = vld [vmem:[%s513 + $0x28] sm:$0xf]
        %v735 = vld [vmem:[%s513 + $0x2c] sm:$0xf]
        %v736 = vld [vmem:[%s513 + $0x30] sm:$0xf]
        %v737 = vld [vmem:[%s513 + $0x34] sm:$0xf]
        %v738 = vld [vmem:[%s513 + $0x38] sm:$0xf]
        %v739 = vld [vmem:[%s513 + $0x3c] sm:$0xf]
        %v740 = vld [vmem:[%s513 + $0x40] sm:$0xf]
        %v741 = vld [vmem:[%s513 + $0x44] sm:$0xf]
        %v742 = vld [vmem:[%s513 + $0x48] sm:$0xf]
        %v743 = vld [vmem:[%s513 + $0x4c] sm:$0xf]
        %v744 = vld [vmem:[%s513 + $0x50] sm:$0xf]
        %v745 = vld [vmem:[%s513 + $0x54] sm:$0xf]
        %v746 = vld [vmem:[%s513 + $0x58] sm:$0xf]
        %v747 = vld [vmem:[%s513 + $0x5c] sm:$0xf]
        %v748 = vld [vmem:[%s513 + $0x60] sm:$0xf]
        %v749 = vld [vmem:[%s513 + $0x64] sm:$0xf]
        %v750 = vld [vmem:[%s513 + $0x68] sm:$0xf]
        %v751 = vld [vmem:[%s513 + $0x6c] sm:$0xf]
        %v752 = vld [vmem:[%s513 + $0x70] sm:$0xf]
        %v753 = vld [vmem:[%s513 + $0x74] sm:$0xf]
        %v754 = vld [vmem:[%s513 + $0x78] sm:$0xf]
        %v755 = vld [vmem:[%s513 + $0x7c] sm:$0xf]
        %v756 = vld [vmem:[%s513 + $0x80] sm:$0xf]
        %v757 = vld [vmem:[%s513 + $0x84] sm:$0xf]
        %v758 = vld [vmem:[%s513 + $0x88] sm:$0xf]
        %v759 = vld [vmem:[%s513 + $0x8c] sm:$0xf]
        %v760 = vld [vmem:[%s513 + $0x90] sm:$0xf]
        %v761 = vld [vmem:[%s513 + $0x94] sm:$0xf]
        %v762 = vld [vmem:[%s513 + $0x98] sm:$0xf]
        %v763 = vld [vmem:[%s513 + $0x9c] sm:$0xf]
        %v764 = vld [vmem:[%s513 + $0xa0] sm:$0xf]
        %v765 = vld [vmem:[%s513 + $0xa4] sm:$0xf]
        %v766 = vld [vmem:[%s513 + $0xa8] sm:$0xf]
        %v767 = vld [vmem:[%s513 + $0xac] sm:$0xf]
        %v768 = vld [vmem:[%s513 + $0xb0] sm:$0xf]
        %v769 = vld [vmem:[%s513 + $0xb4] sm:$0xf]
        %v770 = vld [vmem:[%s513 + $0xb8] sm:$0xf]
        %v771 = vld [vmem:[%s513 + $0xbc] sm:$0xf]
        %v772 = vld [vmem:[%s513 + $0xc0] sm:$0xf]
        %v773 = vld [vmem:[%s513 + $0xc4] sm:$0xf]
        %v774 = vld [vmem:[%s513 + $0xc8] sm:$0xf]
        %v775 = vld [vmem:[%s513 + $0xcc] sm:$0xf]
        %v776 = vld [vmem:[%s513 + $0xd0] sm:$0xf]
        %v777 = vld [vmem:[%s513 + $0xd4] sm:$0xf]
        %v778 = vld [vmem:[%s513 + $0xd8] sm:$0xf]
        %v779 = vld [vmem:[%s513 + $0xdc] sm:$0xf]
        %v780 = vld [vmem:[%s513 + $0xe0] sm:$0xf]
        %v781 = vld [vmem:[%s513 + $0xe4] sm:$0xf]
        %v782 = vld [vmem:[%s513 + $0xe8] sm:$0xf]
        %v783 = vld [vmem:[%s513 + $0xec] sm:$0xf]
        %v784 = vld [vmem:[%s513 + $0xf0] sm:$0xf]
        %v785 = vld [vmem:[%s513 + $0xf4] sm:$0xf]
        %v786 = vld [vmem:[%s513 + $0xf8] sm:$0xf]
        %v787 = vld [vmem:[%s513 + $0xfc] sm:$0xf]
        %v788 = vld [vmem:[%s513 + $0x100] sm:$0xf]
        %v789 = vld [vmem:[%s513 + $0x104] sm:$0xf]
        %v790 = vld [vmem:[%s513 + $0x108] sm:$0xf]
        %v791 = vld [vmem:[%s513 + $0x10c] sm:$0xf]
        %v792 = vld [vmem:[%s513 + $0x110] sm:$0xf]
        %v793 = vld [vmem:[%s513 + $0x114] sm:$0xf]
        %v794 = vld [vmem:[%s513 + $0x118] sm:$0xf]
        %v795 = vld [vmem:[%s513 + $0x11c] sm:$0xf]
        %v796 = vld [vmem:[%s513 + $0x120] sm:$0xf]
        %v797 = vld [vmem:[%s513 + $0x124] sm:$0xf]
        %v798 = vld [vmem:[%s513 + $0x128] sm:$0xf]
        %v799 = vld [vmem:[%s513 + $0x12c] sm:$0xf]
        %v800 = vld [vmem:[%s513 + $0x130] sm:$0xf]
        %v801 = vld [vmem:[%s513 + $0x134] sm:$0xf]
        %v802 = vld [vmem:[%s513 + $0x138] sm:$0xf]
        %v803 = vld [vmem:[%s513 + $0x13c] sm:$0xf]
        %v804 = vld [vmem:[%s513 + $0x140] sm:$0xf]
        %v805 = vld [vmem:[%s513 + $0x144] sm:$0xf]
        %v806 = vld [vmem:[%s513 + $0x148] sm:$0xf]
        %v807 = vld [vmem:[%s513 + $0x14c] sm:$0xf]
        %v808 = vld [vmem:[%s513 + $0x150] sm:$0xf]
        %v809 = vld [vmem:[%s513 + $0x154] sm:$0xf]
        %v810 = vld [vmem:[%s513 + $0x158] sm:$0xf]
        %v811 = vld [vmem:[%s513 + $0x15c] sm:$0xf]
        %v812 = vld [vmem:[%s513 + $0x160] sm:$0xf]
        %v813 = vld [vmem:[%s513 + $0x164] sm:$0xf]
        %v814 = vld [vmem:[%s513 + $0x168] sm:$0xf]
        %v815 = vld [vmem:[%s513 + $0x16c] sm:$0xf]
        %v816 = vld [vmem:[%s513 + $0x170] sm:$0xf]
        %v817 = vld [vmem:[%s513 + $0x174] sm:$0xf]
        %v818 = vld [vmem:[%s513 + $0x178] sm:$0xf]
        %v819 = vld [vmem:[%s513 + $0x17c] sm:$0xf]
        %v820 = vld [vmem:[%s513 + $0x180] sm:$0xf]
        %v821 = vld [vmem:[%s513 + $0x184] sm:$0xf]
        %v822 = vld [vmem:[%s513 + $0x188] sm:$0xf]
        %v823 = vld [vmem:[%s513 + $0x18c] sm:$0xf]
        %v824 = vld [vmem:[%s513 + $0x190] sm:$0xf]
        %v825 = vld [vmem:[%s513 + $0x194] sm:$0xf]
        %v826 = vld [vmem:[%s513 + $0x198] sm:$0xf]
        %v827 = vld [vmem:[%s513 + $0x19c] sm:$0xf]
        %v828 = vld [vmem:[%s513 + $0x1a0] sm:$0xf]
        %v829 = vld [vmem:[%s513 + $0x1a4] sm:$0xf]
        %v830 = vld [vmem:[%s513 + $0x1a8] sm:$0xf]
        %v831 = vld [vmem:[%s513 + $0x1ac] sm:$0xf]
        %v832 = vld [vmem:[%s513 + $0x1b0] sm:$0xf]
        %v833 = vld [vmem:[%s513 + $0x1b4] sm:$0xf]
        %v834 = vld [vmem:[%s513 + $0x1b8] sm:$0xf]
        %v835 = vld [vmem:[%s513 + $0x1bc] sm:$0xf]
        %v836 = vld [vmem:[%s513 + $0x1c0] sm:$0xf]
        %v837 = vld [vmem:[%s513 + $0x1c4] sm:$0xf]
        %v838 = vld [vmem:[%s513 + $0x1c8] sm:$0xf]
        %v839 = vld [vmem:[%s513 + $0x1cc] sm:$0xf]
        %v840 = vld [vmem:[%s513 + $0x1d0] sm:$0xf]
        %v841 = vld [vmem:[%s513 + $0x1d4] sm:$0xf]
        %v842 = vld [vmem:[%s513 + $0x1d8] sm:$0xf]
        %v843 = vld [vmem:[%s513 + $0x1dc] sm:$0xf]
        %v844 = vld [vmem:[%s513 + $0x1e0] sm:$0xf]
        %v845 = vld [vmem:[%s513 + $0x1e4] sm:$0xf]
        %v846 = vld [vmem:[%s513 + $0x1e8] sm:$0xf]
        %v847 = vld [vmem:[%s513 + $0x1ec] sm:$0xf]
        %v848 = vld [vmem:[%s513 + $0x1f0] sm:$0xf]
        %v849 = vld [vmem:[%s513 + $0x1f4] sm:$0xf]
        %v850 = vld [vmem:[%s513 + $0x1f8] sm:$0xf]
        %v851 = vld [vmem:[%s513 + $0x1fc] sm:$0xf]
        %v980 = vunpack.c.l.b16 %v596
        %v981 = vunpack.c.h.b16 %v596
        %v982 = vunpack.c.l.b16 %v597
        %v983 = vunpack.c.h.b16 %v597
        %v984 = vunpack.c.l.b16 %v598
        %v985 = vunpack.c.h.b16 %v598
        %v986 = vunpack.c.l.b16 %v599
        %v987 = vunpack.c.h.b16 %v599
        %v988 = vunpack.c.l.b16 %v600
        %v989 = vunpack.c.h.b16 %v600
        %v990 = vunpack.c.l.b16 %v601
        %v991 = vunpack.c.h.b16 %v601
        %v992 = vunpack.c.l.b16 %v602
        %v993 = vunpack.c.h.b16 %v602
        %v994 = vunpack.c.l.b16 %v603
        %v995 = vunpack.c.h.b16 %v603
        %v996 = vunpack.c.l.b16 %v604
        %v997 = vunpack.c.h.b16 %v604
        %v998 = vunpack.c.l.b16 %v605
        %v999 = vunpack.c.h.b16 %v605
        %v1000 = vunpack.c.l.b16 %v606
        %v1001 = vunpack.c.h.b16 %v606
        %v1002 = vunpack.c.l.b16 %v607
        %v1003 = vunpack.c.h.b16 %v607
        %v1004 = vunpack.c.l.b16 %v608
        %v1005 = vunpack.c.h.b16 %v608
        %v1006 = vunpack.c.l.b16 %v609
        %v1007 = vunpack.c.h.b16 %v609
        %v1008 = vunpack.c.l.b16 %v610
        %v1009 = vunpack.c.h.b16 %v610
        %v1010 = vunpack.c.l.b16 %v611
        %v1011 = vunpack.c.h.b16 %v611
        %v1012 = vunpack.c.l.b16 %v612
        %v1013 = vunpack.c.h.b16 %v612
        %v1014 = vunpack.c.l.b16 %v613
        %v1015 = vunpack.c.h.b16 %v613
        %v1016 = vunpack.c.l.b16 %v614
        %v1017 = vunpack.c.h.b16 %v614
        %v1018 = vunpack.c.l.b16 %v615
        %v1019 = vunpack.c.h.b16 %v615
        %v1020 = vunpack.c.l.b16 %v616
        %v1021 = vunpack.c.h.b16 %v616
        %v1022 = vunpack.c.l.b16 %v617
        %v1023 = vunpack.c.h.b16 %v617
        %v1024 = vunpack.c.l.b16 %v618
        %v1025 = vunpack.c.h.b16 %v618
        %v1026 = vunpack.c.l.b16 %v619
        %v1027 = vunpack.c.h.b16 %v619
        %v1028 = vunpack.c.l.b16 %v620
        %v1029 = vunpack.c.h.b16 %v620
        %v1030 = vunpack.c.l.b16 %v621
        %v1031 = vunpack.c.h.b16 %v621
        %v1032 = vunpack.c.l.b16 %v622
        %v1033 = vunpack.c.h.b16 %v622
        %v1034 = vunpack.c.l.b16 %v623
        %v1035 = vunpack.c.h.b16 %v623
        %v1036 = vunpack.c.l.b16 %v624
        %v1037 = vunpack.c.h.b16 %v624
        %v1038 = vunpack.c.l.b16 %v625
        %v1039 = vunpack.c.h.b16 %v625
        %v1040 = vunpack.c.l.b16 %v626
        %v1041 = vunpack.c.h.b16 %v626
        %v1042 = vunpack.c.l.b16 %v627
        %v1043 = vunpack.c.h.b16 %v627
        %v1044 = vunpack.c.l.b16 %v628
        %v1045 = vunpack.c.h.b16 %v628
        %v1046 = vunpack.c.l.b16 %v629
        %v1047 = vunpack.c.h.b16 %v629
        %v1048 = vunpack.c.l.b16 %v630
        %v1049 = vunpack.c.h.b16 %v630
        %v1050 = vunpack.c.l.b16 %v631
        %v1051 = vunpack.c.h.b16 %v631
        %v1052 = vunpack.c.l.b16 %v632
        %v1053 = vunpack.c.h.b16 %v632
        %v1054 = vunpack.c.l.b16 %v633
        %v1055 = vunpack.c.h.b16 %v633
        %v1056 = vunpack.c.l.b16 %v634
        %v1057 = vunpack.c.h.b16 %v634
        %v1058 = vunpack.c.l.b16 %v635
        %v1059 = vunpack.c.h.b16 %v635
        %v1060 = vunpack.c.l.b16 %v636
        %v1061 = vunpack.c.h.b16 %v636
        %v1062 = vunpack.c.l.b16 %v637
        %v1063 = vunpack.c.h.b16 %v637
        %v1064 = vunpack.c.l.b16 %v638
        %v1065 = vunpack.c.h.b16 %v638
        %v1066 = vunpack.c.l.b16 %v639
        %v1067 = vunpack.c.h.b16 %v639
        %v1068 = vunpack.c.l.b16 %v640
        %v1069 = vunpack.c.h.b16 %v640
        %v1070 = vunpack.c.l.b16 %v641
        %v1071 = vunpack.c.h.b16 %v641
        %v1072 = vunpack.c.l.b16 %v642
        %v1073 = vunpack.c.h.b16 %v642
        %v1074 = vunpack.c.l.b16 %v643
        %v1075 = vunpack.c.h.b16 %v643
        %v1076 = vunpack.c.l.b16 %v644
        %v1077 = vunpack.c.h.b16 %v644
        %v1078 = vunpack.c.l.b16 %v645
        %v1079 = vunpack.c.h.b16 %v645
        %v1080 = vunpack.c.l.b16 %v646
        %v1081 = vunpack.c.h.b16 %v646
        %v1082 = vunpack.c.l.b16 %v647
        %v1083 = vunpack.c.h.b16 %v647
        %v1084 = vunpack.c.l.b16 %v648
        %v1085 = vunpack.c.h.b16 %v648
        %v1086 = vunpack.c.l.b16 %v649
        %v1087 = vunpack.c.h.b16 %v649
        %v1088 = vunpack.c.l.b16 %v650
        %v1089 = vunpack.c.h.b16 %v650
        %v1090 = vunpack.c.l.b16 %v651
        %v1091 = vunpack.c.h.b16 %v651
        %v1092 = vunpack.c.l.b16 %v652
        %v1093 = vunpack.c.h.b16 %v652
        %v1094 = vunpack.c.l.b16 %v653
        %v1095 = vunpack.c.h.b16 %v653
        %v1096 = vunpack.c.l.b16 %v654
        %v1097 = vunpack.c.h.b16 %v654
        %v1098 = vunpack.c.l.b16 %v655
        %v1099 = vunpack.c.h.b16 %v655
        %v1100 = vunpack.c.l.b16 %v656
        %v1101 = vunpack.c.h.b16 %v656
        %v1102 = vunpack.c.l.b16 %v657
        %v1103 = vunpack.c.h.b16 %v657
        %v1104 = vunpack.c.l.b16 %v658
        %v1105 = vunpack.c.h.b16 %v658
        %v1106 = vunpack.c.l.b16 %v659
        %v1107 = vunpack.c.h.b16 %v659
        %v1108 = vunpack.c.l.b16 %v660
        %v1109 = vunpack.c.h.b16 %v660
        %v1110 = vunpack.c.l.b16 %v661
        %v1111 = vunpack.c.h.b16 %v661
        %v1112 = vunpack.c.l.b16 %v662
        %v1113 = vunpack.c.h.b16 %v662
        %v1114 = vunpack.c.l.b16 %v663
        %v1115 = vunpack.c.h.b16 %v663
        %v1116 = vunpack.c.l.b16 %v664
        %v1117 = vunpack.c.h.b16 %v664
        %v1118 = vunpack.c.l.b16 %v665
        %v1119 = vunpack.c.h.b16 %v665
        %v1120 = vunpack.c.l.b16 %v666
        %v1121 = vunpack.c.h.b16 %v666
        %v1122 = vunpack.c.l.b16 %v667
        %v1123 = vunpack.c.h.b16 %v667
        %v1124 = vunpack.c.l.b16 %v668
        %v1125 = vunpack.c.h.b16 %v668
        %v1126 = vunpack.c.l.b16 %v669
        %v1127 = vunpack.c.h.b16 %v669
        %v1128 = vunpack.c.l.b16 %v670
        %v1129 = vunpack.c.h.b16 %v670
        %v1130 = vunpack.c.l.b16 %v671
        %v1131 = vunpack.c.h.b16 %v671
        %v1132 = vunpack.c.l.b16 %v672
        %v1133 = vunpack.c.h.b16 %v672
        %v1134 = vunpack.c.l.b16 %v673
        %v1135 = vunpack.c.h.b16 %v673
        %v1136 = vunpack.c.l.b16 %v674
        %v1137 = vunpack.c.h.b16 %v674
        %v1138 = vunpack.c.l.b16 %v675
        %v1139 = vunpack.c.h.b16 %v675
        %v1140 = vunpack.c.l.b16 %v676
        %v1141 = vunpack.c.h.b16 %v676
        %v1142 = vunpack.c.l.b16 %v677
        %v1143 = vunpack.c.h.b16 %v677
        %v1144 = vunpack.c.l.b16 %v678
        %v1145 = vunpack.c.h.b16 %v678
        %v1146 = vunpack.c.l.b16 %v679
        %v1147 = vunpack.c.h.b16 %v679
        %v1148 = vunpack.c.l.b16 %v680
        %v1149 = vunpack.c.h.b16 %v680
        %v1150 = vunpack.c.l.b16 %v681
        %v1151 = vunpack.c.h.b16 %v681
        %v1152 = vunpack.c.l.b16 %v682
        %v1153 = vunpack.c.h.b16 %v682
        %v1154 = vunpack.c.l.b16 %v683
        %v1155 = vunpack.c.h.b16 %v683
        %v1156 = vunpack.c.l.b16 %v684
        %v1157 = vunpack.c.h.b16 %v684
        %v1158 = vunpack.c.l.b16 %v685
        %v1159 = vunpack.c.h.b16 %v685
        %v1160 = vunpack.c.l.b16 %v686
        %v1161 = vunpack.c.h.b16 %v686
        %v1162 = vunpack.c.l.b16 %v687
        %v1163 = vunpack.c.h.b16 %v687
        %v1164 = vunpack.c.l.b16 %v688
        %v1165 = vunpack.c.h.b16 %v688
        %v1166 = vunpack.c.l.b16 %v689
        %v1167 = vunpack.c.h.b16 %v689
        %v1168 = vunpack.c.l.b16 %v690
        %v1169 = vunpack.c.h.b16 %v690
        %v1170 = vunpack.c.l.b16 %v691
        %v1171 = vunpack.c.h.b16 %v691
        %v1172 = vunpack.c.l.b16 %v692
        %v1173 = vunpack.c.h.b16 %v692
        %v1174 = vunpack.c.l.b16 %v693
        %v1175 = vunpack.c.h.b16 %v693
        %v1176 = vunpack.c.l.b16 %v694
        %v1177 = vunpack.c.h.b16 %v694
        %v1178 = vunpack.c.l.b16 %v695
        %v1179 = vunpack.c.h.b16 %v695
        %v1180 = vunpack.c.l.b16 %v696
        %v1181 = vunpack.c.h.b16 %v696
        %v1182 = vunpack.c.l.b16 %v697
        %v1183 = vunpack.c.h.b16 %v697
        %v1184 = vunpack.c.l.b16 %v698
        %v1185 = vunpack.c.h.b16 %v698
        %v1186 = vunpack.c.l.b16 %v699
        %v1187 = vunpack.c.h.b16 %v699
        %v1188 = vunpack.c.l.b16 %v700
        %v1189 = vunpack.c.h.b16 %v700
        %v1190 = vunpack.c.l.b16 %v701
        %v1191 = vunpack.c.h.b16 %v701
        %v1192 = vunpack.c.l.b16 %v702
        %v1193 = vunpack.c.h.b16 %v702
        %v1194 = vunpack.c.l.b16 %v703
        %v1195 = vunpack.c.h.b16 %v703
        %v1196 = vunpack.c.l.b16 %v704
        %v1197 = vunpack.c.h.b16 %v704
        %v1198 = vunpack.c.l.b16 %v705
        %v1199 = vunpack.c.h.b16 %v705
        %v1200 = vunpack.c.l.b16 %v706
        %v1201 = vunpack.c.h.b16 %v706
        %v1202 = vunpack.c.l.b16 %v707
        %v1203 = vunpack.c.h.b16 %v707
        %v1204 = vunpack.c.l.b16 %v708
        %v1205 = vunpack.c.h.b16 %v708
        %v1206 = vunpack.c.l.b16 %v709
        %v1207 = vunpack.c.h.b16 %v709
        %v1208 = vunpack.c.l.b16 %v710
        %v1209 = vunpack.c.h.b16 %v710
        %v1210 = vunpack.c.l.b16 %v711
        %v1211 = vunpack.c.h.b16 %v711
        %v1212 = vunpack.c.l.b16 %v712
        %v1213 = vunpack.c.h.b16 %v712
        %v1214 = vunpack.c.l.b16 %v713
        %v1215 = vunpack.c.h.b16 %v713
        %v1216 = vunpack.c.l.b16 %v714
        %v1217 = vunpack.c.h.b16 %v714
        %v1218 = vunpack.c.l.b16 %v715
        %v1219 = vunpack.c.h.b16 %v715
        %v1220 = vunpack.c.l.b16 %v716
        %v1221 = vunpack.c.h.b16 %v716
        %v1222 = vunpack.c.l.b16 %v717
        %v1223 = vunpack.c.h.b16 %v717
        %v1224 = vunpack.c.l.b16 %v718
        %v1225 = vunpack.c.h.b16 %v718
        %v1226 = vunpack.c.l.b16 %v719
        %v1227 = vunpack.c.h.b16 %v719
        %v1228 = vunpack.c.l.b16 %v720
        %v1229 = vunpack.c.h.b16 %v720
        %v1230 = vunpack.c.l.b16 %v721
        %v1231 = vunpack.c.h.b16 %v721
        %v1232 = vunpack.c.l.b16 %v722
        %v1233 = vunpack.c.h.b16 %v722
        %v1234 = vunpack.c.l.b16 %v723
        %v1235 = vunpack.c.h.b16 %v723
        %v1236 = vpack.c.b16 %v988, %v980
        %v1237 = vpack.c.b16 %v989, %v981
        %v1238 = vpack.c.b16 %v990, %v982
        %v1239 = vpack.c.b16 %v991, %v983
        %v1240 = vpack.c.b16 %v992, %v984
        %v1241 = vpack.c.b16 %v993, %v985
        %v1242 = vpack.c.b16 %v994, %v986
        %v1243 = vpack.c.b16 %v995, %v987
        %v1244 = vpack.c.b16 %v1004, %v996
        %v1245 = vpack.c.b16 %v1005, %v997
        %v1246 = vpack.c.b16 %v1006, %v998
        %v1247 = vpack.c.b16 %v1007, %v999
        %v1248 = vpack.c.b16 %v1008, %v1000
        %v1249 = vpack.c.b16 %v1009, %v1001
        %v1250 = vpack.c.b16 %v1010, %v1002
        %v1251 = vpack.c.b16 %v1011, %v1003
        %v1252 = vpack.c.b16 %v1020, %v1012
        %v1253 = vpack.c.b16 %v1021, %v1013
        %v1254 = vpack.c.b16 %v1022, %v1014
        %v1255 = vpack.c.b16 %v1023, %v1015
        %v1256 = vpack.c.b16 %v1024, %v1016
        %v1257 = vpack.c.b16 %v1025, %v1017
        %v1258 = vpack.c.b16 %v1026, %v1018
        %v1259 = vpack.c.b16 %v1027, %v1019
        %v1260 = vpack.c.b16 %v1036, %v1028
        %v1261 = vpack.c.b16 %v1037, %v1029
        %v1262 = vpack.c.b16 %v1038, %v1030
        %v1263 = vpack.c.b16 %v1039, %v1031
        %v1264 = vpack.c.b16 %v1040, %v1032
        %v1265 = vpack.c.b16 %v1041, %v1033
        %v1266 = vpack.c.b16 %v1042, %v1034
        %v1267 = vpack.c.b16 %v1043, %v1035
        %v1268 = vpack.c.b16 %v1052, %v1044
        %v1269 = vpack.c.b16 %v1053, %v1045
        %v1270 = vpack.c.b16 %v1054, %v1046
        %v1271 = vpack.c.b16 %v1055, %v1047
        %v1272 = vpack.c.b16 %v1056, %v1048
        %v1273 = vpack.c.b16 %v1057, %v1049
        %v1274 = vpack.c.b16 %v1058, %v1050
        %v1275 = vpack.c.b16 %v1059, %v1051
        %v1276 = vpack.c.b16 %v1068, %v1060
        %v1277 = vpack.c.b16 %v1069, %v1061
        %v1278 = vpack.c.b16 %v1070, %v1062
        %v1279 = vpack.c.b16 %v1071, %v1063
        %v1280 = vpack.c.b16 %v1072, %v1064
        %v1281 = vpack.c.b16 %v1073, %v1065
        %v1282 = vpack.c.b16 %v1074, %v1066
        %v1283 = vpack.c.b16 %v1075, %v1067
        %v1284 = vpack.c.b16 %v1084, %v1076
        %v1285 = vpack.c.b16 %v1085, %v1077
        %v1286 = vpack.c.b16 %v1086, %v1078
        %v1287 = vpack.c.b16 %v1087, %v1079
        %v1288 = vpack.c.b16 %v1088, %v1080
        %v1289 = vpack.c.b16 %v1089, %v1081
        %v1290 = vpack.c.b16 %v1090, %v1082
        %v1291 = vpack.c.b16 %v1091, %v1083
        %v1292 = vpack.c.b16 %v1100, %v1092
        %v1293 = vpack.c.b16 %v1101, %v1093
        %v1294 = vpack.c.b16 %v1102, %v1094
        %v1295 = vpack.c.b16 %v1103, %v1095
        %v1296 = vpack.c.b16 %v1104, %v1096
        %v1297 = vpack.c.b16 %v1105, %v1097
        %v1298 = vpack.c.b16 %v1106, %v1098
        %v1299 = vpack.c.b16 %v1107, %v1099
        %v1300 = vpack.c.b16 %v1116, %v1108
        %v1301 = vpack.c.b16 %v1117, %v1109
        %v1302 = vpack.c.b16 %v1118, %v1110
        %v1303 = vpack.c.b16 %v1119, %v1111
        %v1304 = vpack.c.b16 %v1120, %v1112
        %v1305 = vpack.c.b16 %v1121, %v1113
        %v1306 = vpack.c.b16 %v1122, %v1114
        %v1307 = vpack.c.b16 %v1123, %v1115
        %v1308 = vpack.c.b16 %v1132, %v1124
        %v1309 = vpack.c.b16 %v1133, %v1125
        %v1310 = vpack.c.b16 %v1134, %v1126
        %v1311 = vpack.c.b16 %v1135, %v1127
        %v1312 = vpack.c.b16 %v1136, %v1128
        %v1313 = vpack.c.b16 %v1137, %v1129
        %v1314 = vpack.c.b16 %v1138, %v1130
        %v1315 = vpack.c.b16 %v1139, %v1131
        %v1316 = vpack.c.b16 %v1148, %v1140
        %v1317 = vpack.c.b16 %v1149, %v1141
        %v1318 = vpack.c.b16 %v1150, %v1142
        %v1319 = vpack.c.b16 %v1151, %v1143
        %v1320 = vpack.c.b16 %v1152, %v1144
        %v1321 = vpack.c.b16 %v1153, %v1145
        %v1322 = vpack.c.b16 %v1154, %v1146
        %v1323 = vpack.c.b16 %v1155, %v1147
        %v1324 = vpack.c.b16 %v1164, %v1156
        %v1325 = vpack.c.b16 %v1165, %v1157
        %v1326 = vpack.c.b16 %v1166, %v1158
        %v1327 = vpack.c.b16 %v1167, %v1159
        %v1328 = vpack.c.b16 %v1168, %v1160
        %v1329 = vpack.c.b16 %v1169, %v1161
        %v1330 = vpack.c.b16 %v1170, %v1162
        %v1331 = vpack.c.b16 %v1171, %v1163
        %v1332 = vpack.c.b16 %v1180, %v1172
        %v1333 = vpack.c.b16 %v1181, %v1173
        %v1334 = vpack.c.b16 %v1182, %v1174
        %v1335 = vpack.c.b16 %v1183, %v1175
        %v1336 = vpack.c.b16 %v1184, %v1176
        %v1337 = vpack.c.b16 %v1185, %v1177
        %v1338 = vpack.c.b16 %v1186, %v1178
        %v1339 = vpack.c.b16 %v1187, %v1179
        %v1340 = vpack.c.b16 %v1196, %v1188
        %v1341 = vpack.c.b16 %v1197, %v1189
        %v1342 = vpack.c.b16 %v1198, %v1190
        %v1343 = vpack.c.b16 %v1199, %v1191
        %v1344 = vpack.c.b16 %v1200, %v1192
        %v1345 = vpack.c.b16 %v1201, %v1193
        %v1346 = vpack.c.b16 %v1202, %v1194
        %v1347 = vpack.c.b16 %v1203, %v1195
        %v1348 = vpack.c.b16 %v1212, %v1204
        %v1349 = vpack.c.b16 %v1213, %v1205
        %v1350 = vpack.c.b16 %v1214, %v1206
        %v1351 = vpack.c.b16 %v1215, %v1207
        %v1352 = vpack.c.b16 %v1216, %v1208
        %v1353 = vpack.c.b16 %v1217, %v1209
        %v1354 = vpack.c.b16 %v1218, %v1210
        %v1355 = vpack.c.b16 %v1219, %v1211
        %v1356 = vpack.c.b16 %v1228, %v1220
        %v1357 = vpack.c.b16 %v1229, %v1221
        %v1358 = vpack.c.b16 %v1230, %v1222
        %v1359 = vpack.c.b16 %v1231, %v1223
        %v1360 = vpack.c.b16 %v1232, %v1224
        %v1361 = vpack.c.b16 %v1233, %v1225
        %v1362 = vpack.c.b16 %v1234, %v1226
        %v1363 = vpack.c.b16 %v1235, %v1227
        %v1620 = vunpack.c.l.b16 %v724
        %v1621 = vunpack.c.l.b16 %v725
        %v1622 = vunpack.c.l.b16 %v726
        %v1623 = vunpack.c.l.b16 %v727
        %v1624 = vunpack.c.l.b16 %v728
        %v1625 = vunpack.c.l.b16 %v729
        %v1626 = vunpack.c.l.b16 %v730
        %v1627 = vunpack.c.l.b16 %v731
        %v1628 = vunpack.c.l.b16 %v732
        %v1629 = vunpack.c.l.b16 %v733
        %v1630 = vunpack.c.l.b16 %v734
        %v1631 = vunpack.c.l.b16 %v735
        %v1632 = vunpack.c.l.b16 %v736
        %v1633 = vunpack.c.l.b16 %v737
        %v1634 = vunpack.c.l.b16 %v738
        %v1635 = vunpack.c.l.b16 %v739
        %v1636 = vunpack.c.l.b16 %v740
        %v1637 = vunpack.c.l.b16 %v741
        %v1638 = vunpack.c.l.b16 %v742
        %v1639 = vunpack.c.l.b16 %v743
        %v1640 = vunpack.c.l.b16 %v744
        %v1641 = vunpack.c.l.b16 %v745
        %v1642 = vunpack.c.l.b16 %v746
        %v1643 = vunpack.c.l.b16 %v747
        %v1644 = vunpack.c.l.b16 %v748
        %v1645 = vunpack.c.l.b16 %v749
        %v1646 = vunpack.c.l.b16 %v750
        %v1647 = vunpack.c.l.b16 %v751
        %v1648 = vunpack.c.l.b16 %v752
        %v1649 = vunpack.c.l.b16 %v753
        %v1650 = vunpack.c.l.b16 %v754
        %v1651 = vunpack.c.l.b16 %v755
        %v1652 = vunpack.c.l.b16 %v756
        %v1653 = vunpack.c.l.b16 %v757
        %v1654 = vunpack.c.l.b16 %v758
        %v1655 = vunpack.c.l.b16 %v759
        %v1656 = vunpack.c.l.b16 %v760
        %v1657 = vunpack.c.l.b16 %v761
        %v1658 = vunpack.c.l.b16 %v762
        %v1659 = vunpack.c.l.b16 %v763
        %v1660 = vunpack.c.l.b16 %v764
        %v1661 = vunpack.c.l.b16 %v765
        %v1662 = vunpack.c.l.b16 %v766
        %v1663 = vunpack.c.l.b16 %v767
        %v1664 = vunpack.c.l.b16 %v768
        %v1665 = vunpack.c.l.b16 %v769
        %v1666 = vunpack.c.l.b16 %v770
        %v1667 = vunpack.c.l.b16 %v771
        %v1668 = vunpack.c.l.b16 %v772
        %v1669 = vunpack.c.l.b16 %v773
        %v1670 = vunpack.c.l.b16 %v774
        %v1671 = vunpack.c.l.b16 %v775
        %v1672 = vunpack.c.l.b16 %v776
        %v1673 = vunpack.c.l.b16 %v777
        %v1674 = vunpack.c.l.b16 %v778
        %v1675 = vunpack.c.l.b16 %v779
        %v1676 = vunpack.c.l.b16 %v780
        %v1677 = vunpack.c.l.b16 %v781
        %v1678 = vunpack.c.l.b16 %v782
        %v1679 = vunpack.c.l.b16 %v783
        %v1680 = vunpack.c.l.b16 %v784
        %v1681 = vunpack.c.l.b16 %v785
        %v1682 = vunpack.c.l.b16 %v786
        %v1683 = vunpack.c.l.b16 %v787
        %v1684 = vunpack.c.l.b16 %v788
        %v1685 = vunpack.c.l.b16 %v789
        %v1686 = vunpack.c.l.b16 %v790
        %v1687 = vunpack.c.l.b16 %v791
        %v1688 = vunpack.c.l.b16 %v792
        %v1689 = vunpack.c.l.b16 %v793
        %v1690 = vunpack.c.l.b16 %v794
        %v1691 = vunpack.c.l.b16 %v795
        %v1692 = vunpack.c.l.b16 %v796
        %v1693 = vunpack.c.l.b16 %v797
        %v1694 = vunpack.c.l.b16 %v798
        %v1695 = vunpack.c.l.b16 %v799
        %v1696 = vunpack.c.l.b16 %v800
        %v1697 = vunpack.c.l.b16 %v801
        %v1698 = vunpack.c.l.b16 %v802
        %v1699 = vunpack.c.l.b16 %v803
        %v1700 = vunpack.c.l.b16 %v804
        %v1701 = vunpack.c.l.b16 %v805
        %v1702 = vunpack.c.l.b16 %v806
        %v1703 = vunpack.c.l.b16 %v807
        %v1704 = vunpack.c.l.b16 %v808
        %v1705 = vunpack.c.l.b16 %v809
        %v1706 = vunpack.c.l.b16 %v810
        %v1707 = vunpack.c.l.b16 %v811
        %v1708 = vunpack.c.l.b16 %v812
        %v1709 = vunpack.c.l.b16 %v813
        %v1710 = vunpack.c.l.b16 %v814
        %v1711 = vunpack.c.l.b16 %v815
        %v1712 = vunpack.c.l.b16 %v816
        %v1713 = vunpack.c.l.b16 %v817
        %v1714 = vunpack.c.l.b16 %v818
        %v1715 = vunpack.c.l.b16 %v819
        %v1716 = vunpack.c.l.b16 %v820
        %v1717 = vunpack.c.l.b16 %v821
        %v1718 = vunpack.c.l.b16 %v822
        %v1719 = vunpack.c.l.b16 %v823
        %v1720 = vunpack.c.l.b16 %v824
        %v1721 = vunpack.c.l.b16 %v825
        %v1722 = vunpack.c.l.b16 %v826
        %v1723 = vunpack.c.l.b16 %v827
        %v1724 = vunpack.c.l.b16 %v828
        %v1725 = vunpack.c.l.b16 %v829
        %v1726 = vunpack.c.l.b16 %v830
        %v1727 = vunpack.c.l.b16 %v831
        %v1728 = vunpack.c.l.b16 %v832
        %v1729 = vunpack.c.l.b16 %v833
        %v1730 = vunpack.c.l.b16 %v834
        %v1731 = vunpack.c.l.b16 %v835
        %v1732 = vunpack.c.l.b16 %v836
        %v1733 = vunpack.c.l.b16 %v837
        %v1734 = vunpack.c.l.b16 %v838
        %v1735 = vunpack.c.l.b16 %v839
        %v1736 = vunpack.c.l.b16 %v840
        %v1737 = vunpack.c.l.b16 %v841
        %v1738 = vunpack.c.l.b16 %v842
        %v1739 = vunpack.c.l.b16 %v843
        %v1740 = vunpack.c.l.b16 %v844
        %v1741 = vunpack.c.l.b16 %v845
        %v1742 = vunpack.c.l.b16 %v846
        %v1743 = vunpack.c.l.b16 %v847
        %v1744 = vunpack.c.l.b16 %v848
        %v1745 = vunpack.c.l.b16 %v849
        %v1746 = vunpack.c.l.b16 %v850
        %v1747 = vunpack.c.l.b16 %v851
        %v1748 = vpack.c.b16 %v1621, %v1620
        %v1749 = vpack.c.b16 %v1623, %v1622
        %v1750 = vpack.c.b16 %v1625, %v1624
        %v1751 = vpack.c.b16 %v1627, %v1626
        %v1752 = vpack.c.b16 %v1629, %v1628
        %v1753 = vpack.c.b16 %v1631, %v1630
        %v1754 = vpack.c.b16 %v1633, %v1632
        %v1755 = vpack.c.b16 %v1635, %v1634
        %v1756 = vpack.c.b16 %v1637, %v1636
        %v1757 = vpack.c.b16 %v1639, %v1638
        %v1758 = vpack.c.b16 %v1641, %v1640
        %v1759 = vpack.c.b16 %v1643, %v1642
        %v1760 = vpack.c.b16 %v1645, %v1644
        %v1761 = vpack.c.b16 %v1647, %v1646
        %v1762 = vpack.c.b16 %v1649, %v1648
        %v1763 = vpack.c.b16 %v1651, %v1650
        %v1764 = vpack.c.b16 %v1653, %v1652
        %v1765 = vpack.c.b16 %v1655, %v1654
        %v1766 = vpack.c.b16 %v1657, %v1656
        %v1767 = vpack.c.b16 %v1659, %v1658
        %v1768 = vpack.c.b16 %v1661, %v1660
        %v1769 = vpack.c.b16 %v1663, %v1662
        %v1770 = vpack.c.b16 %v1665, %v1664
        %v1771 = vpack.c.b16 %v1667, %v1666
        %v1772 = vpack.c.b16 %v1669, %v1668
        %v1773 = vpack.c.b16 %v1671, %v1670
        %v1774 = vpack.c.b16 %v1673, %v1672
        %v1775 = vpack.c.b16 %v1675, %v1674
        %v1776 = vpack.c.b16 %v1677, %v1676
        %v1777 = vpack.c.b16 %v1679, %v1678
        %v1778 = vpack.c.b16 %v1681, %v1680
        %v1779 = vpack.c.b16 %v1683, %v1682
        %v1780 = vpack.c.b16 %v1685, %v1684
        %v1781 = vpack.c.b16 %v1687, %v1686
        %v1782 = vpack.c.b16 %v1689, %v1688
        %v1783 = vpack.c.b16 %v1691, %v1690
        %v1784 = vpack.c.b16 %v1693, %v1692
        %v1785 = vpack.c.b16 %v1695, %v1694
        %v1786 = vpack.c.b16 %v1697, %v1696
        %v1787 = vpack.c.b16 %v1699, %v1698
        %v1788 = vpack.c.b16 %v1701, %v1700
        %v1789 = vpack.c.b16 %v1703, %v1702
        %v1790 = vpack.c.b16 %v1705, %v1704
        %v1791 = vpack.c.b16 %v1707, %v1706
        %v1792 = vpack.c.b16 %v1709, %v1708
        %v1793 = vpack.c.b16 %v1711, %v1710
        %v1794 = vpack.c.b16 %v1713, %v1712
        %v1795 = vpack.c.b16 %v1715, %v1714
        %v1796 = vpack.c.b16 %v1717, %v1716
        %v1797 = vpack.c.b16 %v1719, %v1718
        %v1798 = vpack.c.b16 %v1721, %v1720
        %v1799 = vpack.c.b16 %v1723, %v1722
        %v1800 = vpack.c.b16 %v1725, %v1724
        %v1801 = vpack.c.b16 %v1727, %v1726
        %v1802 = vpack.c.b16 %v1729, %v1728
        %v1803 = vpack.c.b16 %v1731, %v1730
        %v1804 = vpack.c.b16 %v1733, %v1732
        %v1805 = vpack.c.b16 %v1735, %v1734
        %v1806 = vpack.c.b16 %v1737, %v1736
        %v1807 = vpack.c.b16 %v1739, %v1738
        %v1808 = vpack.c.b16 %v1741, %v1740
        %v1809 = vpack.c.b16 %v1743, %v1742
        %v1810 = vpack.c.b16 %v1745, %v1744
        %v1811 = vpack.c.b16 %v1747, %v1746
        %1876 = vmatprep.subr.bf16.mxu0 0
        %1877 = vmatpush1.bf16.msra.mxu0 %v1755
        %1878 = vmatprep.subr.bf16.mxu0 0
        %1879 = vmatpush1.bf16.msra.mxu0 %v1754
        %1880 = vmatprep.subr.bf16.mxu0 0
        %1881 = vmatpush1.bf16.msra.mxu0 %v1753
        %1882 = vmatprep.subr.bf16.mxu0 0
        %1883 = vmatpush1.bf16.msra.mxu0 %v1752
        %1884 = vmatprep.subr.bf16.mxu0 0
        %1885 = vmatpush1.bf16.msra.mxu0 %v1751
        %1886 = vmatprep.subr.bf16.mxu0 0
        %1887 = vmatpush1.bf16.msra.mxu0 %v1750
        %1888 = vmatprep.subr.bf16.mxu0 0
        %1889 = vmatpush1.bf16.msra.mxu0 %v1749
        %1890 = vmatprep.subr.bf16.mxu0 0
        %1891 = vmatpush1.bf16.msra.mxu0 %v1748
        %1892 = vmatprep.subr.bf16.mxu0 0
        %1893 = vmatpush2.bf16.msra.mxu0 %v1763
        %1894 = vmatprep.subr.bf16.mxu0 0
        %1895 = vmatpush2.bf16.msra.mxu0 %v1762
        %1896 = vmatprep.subr.bf16.mxu0 0
        %1897 = vmatpush2.bf16.msra.mxu0 %v1761
        %1898 = vmatprep.subr.bf16.mxu0 0
        %1899 = vmatpush2.bf16.msra.mxu0 %v1760
        %1900 = vmatprep.subr.bf16.mxu0 0
        %1901 = vmatpush2.bf16.msra.mxu0 %v1759
        %1902 = vmatprep.subr.bf16.mxu0 0
        %1903 = vmatpush2.bf16.msra.mxu0 %v1758
        %1904 = vmatprep.subr.bf16.mxu0 0
        %1905 = vmatpush2.bf16.msra.mxu0 %v1757
        %1906 = vmatprep.subr.bf16.mxu0 0
        %1907 = vmatpush2.bf16.msra.mxu0 %v1756
        %1908 = vmatprep.mubr.bf16.mxu0 %v1237
        %1909 = vmatmul.mubr.bf16.gmra.mxu0 %v1236
        %v1910 = vpop.f32.mrf.mxu0
        %v1911 = vadd.f32 0.0, %v1910
        %v1912 = vpop.f32.mrf.mxu0
        %v1913 = vpop.f32.mrf.mxu0
        %v1914 = vadd.f32 0.0, %v1913
        %v1915 = vpop.f32.mrf.mxu0
        %1916 = vmatprep.mubr.bf16.mxu0 %v1245
        %1917 = vmatmul.mubr.bf16.gmra.mxu0 %v1244
        %v1918 = vpop.f32.mrf.mxu0
        %v1919 = vadd.f32 0.0, %v1918
        %v1920 = vpop.f32.mrf.mxu0
        %v1921 = vpop.f32.mrf.mxu0
        %v1922 = vadd.f32 0.0, %v1921
        %v1923 = vpop.f32.mrf.mxu0
        %1924 = vmatprep.mubr.bf16.mxu0 %v1253
        %1925 = vmatmul.mubr.bf16.gmra.mxu0 %v1252
        %v1926 = vpop.f32.mrf.mxu0
        %v1927 = vadd.f32 0.0, %v1926
        %v1928 = vpop.f32.mrf.mxu0
        %v1929 = vpop.f32.mrf.mxu0
        %v1930 = vadd.f32 0.0, %v1929
        %v1931 = vpop.f32.mrf.mxu0
        %1932 = vmatprep.mubr.bf16.mxu0 %v1261
        %1933 = vmatmul.mubr.bf16.gmra.mxu0 %v1260
        %v1934 = vpop.f32.mrf.mxu0
        %v1935 = vadd.f32 0.0, %v1934
        %v1936 = vpop.f32.mrf.mxu0
        %v1937 = vpop.f32.mrf.mxu0
        %v1938 = vadd.f32 0.0, %v1937
        %v1939 = vpop.f32.mrf.mxu0
        %1940 = vmatprep.mubr.bf16.mxu0 %v1269
        %1941 = vmatmul.mubr.bf16.gmra.mxu0 %v1268
        %v1942 = vpop.f32.mrf.mxu0
        %v1943 = vadd.f32 0.0, %v1942
        %v1944 = vpop.f32.mrf.mxu0
        %v1945 = vpop.f32.mrf.mxu0
        %v1946 = vadd.f32 0.0, %v1945
        %v1947 = vpop.f32.mrf.mxu0
        %1948 = vmatprep.mubr.bf16.mxu0 %v1277
        %1949 = vmatmul.mubr.bf16.gmra.mxu0 %v1276
        %v1950 = vpop.f32.mrf.mxu0
        %v1951 = vadd.f32 0.0, %v1950
        %v1952 = vpop.f32.mrf.mxu0
        %v1953 = vpop.f32.mrf.mxu0
        %v1954 = vadd.f32 0.0, %v1953
        %v1955 = vpop.f32.mrf.mxu0
        %1956 = vmatprep.mubr.bf16.mxu0 %v1285
        %1957 = vmatmul.mubr.bf16.gmra.mxu0 %v1284
        %v1958 = vpop.f32.mrf.mxu0
        %v1959 = vadd.f32 0.0, %v1958
        %v1960 = vpop.f32.mrf.mxu0
        %v1961 = vpop.f32.mrf.mxu0
        %v1962 = vadd.f32 0.0, %v1961
        %v1963 = vpop.f32.mrf.mxu0
        %1964 = vmatprep.mubr.bf16.mxu0 %v1293
        %1965 = vmatmul.mubr.bf16.gmra.mxu0 %v1292
        %v1966 = vpop.f32.mrf.mxu0
        %v1967 = vadd.f32 0.0, %v1966
        %v1968 = vpop.f32.mrf.mxu0
        %v1969 = vpop.f32.mrf.mxu0
        %v1970 = vadd.f32 0.0, %v1969
        %v1971 = vpop.f32.mrf.mxu0
        %1972 = vmatprep.mubr.bf16.mxu0 %v1301
        %1973 = vmatmul.mubr.bf16.gmra.mxu0 %v1300
        %v1974 = vpop.f32.mrf.mxu0
        %v1975 = vadd.f32 0.0, %v1974
        %v1976 = vpop.f32.mrf.mxu0
        %v1977 = vpop.f32.mrf.mxu0
        %v1978 = vadd.f32 0.0, %v1977
        %v1979 = vpop.f32.mrf.mxu0
        %1980 = vmatprep.mubr.bf16.mxu0 %v1309
        %1981 = vmatmul.mubr.bf16.gmra.mxu0 %v1308
        %v1982 = vpop.f32.mrf.mxu0
        %v1983 = vadd.f32 0.0, %v1982
        %v1984 = vpop.f32.mrf.mxu0
        %v1985 = vpop.f32.mrf.mxu0
        %v1986 = vadd.f32 0.0, %v1985
        %v1987 = vpop.f32.mrf.mxu0
        %1988 = vmatprep.mubr.bf16.mxu0 %v1317
        %1989 = vmatmul.mubr.bf16.gmra.mxu0 %v1316
        %v1990 = vpop.f32.mrf.mxu0
        %v1991 = vadd.f32 0.0, %v1990
        %v1992 = vpop.f32.mrf.mxu0
        %v1993 = vpop.f32.mrf.mxu0
        %v1994 = vadd.f32 0.0, %v1993
        %v1995 = vpop.f32.mrf.mxu0
        %1996 = vmatprep.mubr.bf16.mxu0 %v1325
        %1997 = vmatmul.mubr.bf16.gmra.mxu0 %v1324
        %v1998 = vpop.f32.mrf.mxu0
        %v1999 = vadd.f32 0.0, %v1998
        %v2000 = vpop.f32.mrf.mxu0
        %v2001 = vpop.f32.mrf.mxu0
        %v2002 = vadd.f32 0.0, %v2001
        %v2003 = vpop.f32.mrf.mxu0
        %2004 = vmatprep.mubr.bf16.mxu0 %v1333
        %2005 = vmatmul.mubr.bf16.gmra.mxu0 %v1332
        %v2006 = vpop.f32.mrf.mxu0
        %v2007 = vadd.f32 0.0, %v2006
        %v2008 = vpop.f32.mrf.mxu0
        %v2009 = vpop.f32.mrf.mxu0
        %v2010 = vadd.f32 0.0, %v2009
        %v2011 = vpop.f32.mrf.mxu0
        %2012 = vmatprep.mubr.bf16.mxu0 %v1341
        %2013 = vmatmul.mubr.bf16.gmra.mxu0 %v1340
        %v2014 = vpop.f32.mrf.mxu0
        %v2015 = vadd.f32 0.0, %v2014
        %v2016 = vpop.f32.mrf.mxu0
        %v2017 = vpop.f32.mrf.mxu0
        %v2018 = vadd.f32 0.0, %v2017
        %v2019 = vpop.f32.mrf.mxu0
        %2020 = vmatprep.mubr.bf16.mxu0 %v1349
        %2021 = vmatmul.mubr.bf16.gmra.mxu0 %v1348
        %v2022 = vpop.f32.mrf.mxu0
        %v2023 = vadd.f32 0.0, %v2022
        %v2024 = vpop.f32.mrf.mxu0
        %v2025 = vpop.f32.mrf.mxu0
        %v2026 = vadd.f32 0.0, %v2025
        %v2027 = vpop.f32.mrf.mxu0
        %2028 = vmatprep.mubr.bf16.mxu0 %v1357
        %2029 = vmatmul.mubr.bf16.gmra.mxu0 %v1356
        %v2030 = vpop.f32.mrf.mxu0
        %v2031 = vadd.f32 0.0, %v2030
        %v2032 = vpop.f32.mrf.mxu0
        %v2033 = vpop.f32.mrf.mxu0
        %v2034 = vadd.f32 0.0, %v2033
        %v2035 = vpop.f32.mrf.mxu0
        %2036 = vdwg.mxu0
        %2037 = vmatprep.subr.bf16.mxu0 0
        %2038 = vmatpush1.bf16.msra.mxu0 %v1771
        %2039 = vmatprep.subr.bf16.mxu0 0
        %2040 = vmatpush1.bf16.msra.mxu0 %v1770
        %2041 = vmatprep.subr.bf16.mxu0 0
        %2042 = vmatpush1.bf16.msra.mxu0 %v1769
        %2043 = vmatprep.subr.bf16.mxu0 0
        %2044 = vmatpush1.bf16.msra.mxu0 %v1768
        %2045 = vmatprep.subr.bf16.mxu0 0
        %2046 = vmatpush1.bf16.msra.mxu0 %v1767
        %2047 = vmatprep.subr.bf16.mxu0 0
        %2048 = vmatpush1.bf16.msra.mxu0 %v1766
        %2049 = vmatprep.subr.bf16.mxu0 0
        %2050 = vmatpush1.bf16.msra.mxu0 %v1765
        %2051 = vmatprep.subr.bf16.mxu0 0
        %2052 = vmatpush1.bf16.msra.mxu0 %v1764
        %2053 = vmatprep.subr.bf16.mxu0 0
        %2054 = vmatpush2.bf16.msra.mxu0 %v1779
        %2055 = vmatprep.subr.bf16.mxu0 0
        %2056 = vmatpush2.bf16.msra.mxu0 %v1778
        %2057 = vmatprep.subr.bf16.mxu0 0
        %2058 = vmatpush2.bf16.msra.mxu0 %v1777
        %2059 = vmatprep.subr.bf16.mxu0 0
        %2060 = vmatpush2.bf16.msra.mxu0 %v1776
        %2061 = vmatprep.subr.bf16.mxu0 0
        %2062 = vmatpush2.bf16.msra.mxu0 %v1775
        %2063 = vmatprep.subr.bf16.mxu0 0
        %2064 = vmatpush2.bf16.msra.mxu0 %v1774
        %2065 = vmatprep.subr.bf16.mxu0 0
        %2066 = vmatpush2.bf16.msra.mxu0 %v1773
        %2067 = vmatprep.subr.bf16.mxu0 0
        %2068 = vmatpush2.bf16.msra.mxu0 %v1772
        %2069 = vmatprep.mubr.bf16.mxu0 %v1239
        %2070 = vmatmul.mubr.bf16.gmra.mxu0 %v1238
        %v2071 = vpop.f32.mrf.mxu0
        %v2072 = vadd.f32 %v1911, %v2071
        %v2073 = vpop.f32.mrf.mxu0
        %v2074 = vpop.f32.mrf.mxu0
        %v2075 = vadd.f32 %v1914, %v2074
        %v2076 = vpop.f32.mrf.mxu0
        %2077 = vmatprep.mubr.bf16.mxu0 %v1247
        %2078 = vmatmul.mubr.bf16.gmra.mxu0 %v1246
        %v2079 = vpop.f32.mrf.mxu0
        %v2080 = vadd.f32 %v1919, %v2079
        %v2081 = vpop.f32.mrf.mxu0
        %v2082 = vpop.f32.mrf.mxu0
        %v2083 = vadd.f32 %v1922, %v2082
        %v2084 = vpop.f32.mrf.mxu0
        %2085 = vmatprep.mubr.bf16.mxu0 %v1255
        %2086 = vmatmul.mubr.bf16.gmra.mxu0 %v1254
        %v2087 = vpop.f32.mrf.mxu0
        %v2088 = vadd.f32 %v1927, %v2087
        %v2089 = vpop.f32.mrf.mxu0
        %v2090 = vpop.f32.mrf.mxu0
        %v2091 = vadd.f32 %v1930, %v2090
        %v2092 = vpop.f32.mrf.mxu0
        %2093 = vmatprep.mubr.bf16.mxu0 %v1263
        %2094 = vmatmul.mubr.bf16.gmra.mxu0 %v1262
        %v2095 = vpop.f32.mrf.mxu0
        %v2096 = vadd.f32 %v1935, %v2095
        %v2097 = vpop.f32.mrf.mxu0
        %v2098 = vpop.f32.mrf.mxu0
        %v2099 = vadd.f32 %v1938, %v2098
        %v2100 = vpop.f32.mrf.mxu0
        %2101 = vmatprep.mubr.bf16.mxu0 %v1271
        %2102 = vmatmul.mubr.bf16.gmra.mxu0 %v1270
        %v2103 = vpop.f32.mrf.mxu0
        %v2104 = vadd.f32 %v1943, %v2103
        %v2105 = vpop.f32.mrf.mxu0
        %v2106 = vpop.f32.mrf.mxu0
        %v2107 = vadd.f32 %v1946, %v2106
        %v2108 = vpop.f32.mrf.mxu0
        %2109 = vmatprep.mubr.bf16.mxu0 %v1279
        %2110 = vmatmul.mubr.bf16.gmra.mxu0 %v1278
        %v2111 = vpop.f32.mrf.mxu0
        %v2112 = vadd.f32 %v1951, %v2111
        %v2113 = vpop.f32.mrf.mxu0
        %v2114 = vpop.f32.mrf.mxu0
        %v2115 = vadd.f32 %v1954, %v2114
        %v2116 = vpop.f32.mrf.mxu0
        %2117 = vmatprep.mubr.bf16.mxu0 %v1287
        %2118 = vmatmul.mubr.bf16.gmra.mxu0 %v1286
        %v2119 = vpop.f32.mrf.mxu0
        %v2120 = vadd.f32 %v1959, %v2119
        %v2121 = vpop.f32.mrf.mxu0
        %v2122 = vpop.f32.mrf.mxu0
        %v2123 = vadd.f32 %v1962, %v2122
        %v2124 = vpop.f32.mrf.mxu0
        %2125 = vmatprep.mubr.bf16.mxu0 %v1295
        %2126 = vmatmul.mubr.bf16.gmra.mxu0 %v1294
        %v2127 = vpop.f32.mrf.mxu0
        %v2128 = vadd.f32 %v1967, %v2127
        %v2129 = vpop.f32.mrf.mxu0
        %v2130 = vpop.f32.mrf.mxu0
        %v2131 = vadd.f32 %v1970, %v2130
        %v2132 = vpop.f32.mrf.mxu0
        %2133 = vmatprep.mubr.bf16.mxu0 %v1303
        %2134 = vmatmul.mubr.bf16.gmra.mxu0 %v1302
        %v2135 = vpop.f32.mrf.mxu0
        %v2136 = vadd.f32 %v1975, %v2135
        %v2137 = vpop.f32.mrf.mxu0
        %v2138 = vpop.f32.mrf.mxu0
        %v2139 = vadd.f32 %v1978, %v2138
        %v2140 = vpop.f32.mrf.mxu0
        %2141 = vmatprep.mubr.bf16.mxu0 %v1311
        %2142 = vmatmul.mubr.bf16.gmra.mxu0 %v1310
        %v2143 = vpop.f32.mrf.mxu0
        %v2144 = vadd.f32 %v1983, %v2143
        %v2145 = vpop.f32.mrf.mxu0
        %v2146 = vpop.f32.mrf.mxu0
        %v2147 = vadd.f32 %v1986, %v2146
        %v2148 = vpop.f32.mrf.mxu0
        %2149 = vmatprep.mubr.bf16.mxu0 %v1319
        %2150 = vmatmul.mubr.bf16.gmra.mxu0 %v1318
        %v2151 = vpop.f32.mrf.mxu0
        %v2152 = vadd.f32 %v1991, %v2151
        %v2153 = vpop.f32.mrf.mxu0
        %v2154 = vpop.f32.mrf.mxu0
        %v2155 = vadd.f32 %v1994, %v2154
        %v2156 = vpop.f32.mrf.mxu0
        %2157 = vmatprep.mubr.bf16.mxu0 %v1327
        %2158 = vmatmul.mubr.bf16.gmra.mxu0 %v1326
        %v2159 = vpop.f32.mrf.mxu0
        %v2160 = vadd.f32 %v1999, %v2159
        %v2161 = vpop.f32.mrf.mxu0
        %v2162 = vpop.f32.mrf.mxu0
        %v2163 = vadd.f32 %v2002, %v2162
        %v2164 = vpop.f32.mrf.mxu0
        %2165 = vmatprep.mubr.bf16.mxu0 %v1335
        %2166 = vmatmul.mubr.bf16.gmra.mxu0 %v1334
        %v2167 = vpop.f32.mrf.mxu0
        %v2168 = vadd.f32 %v2007, %v2167
        %v2169 = vpop.f32.mrf.mxu0
        %v2170 = vpop.f32.mrf.mxu0
        %v2171 = vadd.f32 %v2010, %v2170
        %v2172 = vpop.f32.mrf.mxu0
        %2173 = vmatprep.mubr.bf16.mxu0 %v1343
        %2174 = vmatmul.mubr.bf16.gmra.mxu0 %v1342
        %v2175 = vpop.f32.mrf.mxu0
        %v2176 = vadd.f32 %v2015, %v2175
        %v2177 = vpop.f32.mrf.mxu0
        %v2178 = vpop.f32.mrf.mxu0
        %v2179 = vadd.f32 %v2018, %v2178
        %v2180 = vpop.f32.mrf.mxu0
        %2181 = vmatprep.mubr.bf16.mxu0 %v1351
        %2182 = vmatmul.mubr.bf16.gmra.mxu0 %v1350
        %v2183 = vpop.f32.mrf.mxu0
        %v2184 = vadd.f32 %v2023, %v2183
        %v2185 = vpop.f32.mrf.mxu0
        %v2186 = vpop.f32.mrf.mxu0
        %v2187 = vadd.f32 %v2026, %v2186
        %v2188 = vpop.f32.mrf.mxu0
        %2189 = vmatprep.mubr.bf16.mxu0 %v1359
        %2190 = vmatmul.mubr.bf16.gmra.mxu0 %v1358
        %v2191 = vpop.f32.mrf.mxu0
        %v2192 = vadd.f32 %v2031, %v2191
        %v2193 = vpop.f32.mrf.mxu0
        %v2194 = vpop.f32.mrf.mxu0
        %v2195 = vadd.f32 %v2034, %v2194
        %v2196 = vpop.f32.mrf.mxu0
        %2197 = vdwg.mxu0
        %2198 = vmatprep.subr.bf16.mxu0 0
        %2199 = vmatpush1.bf16.msra.mxu0 %v1787
        %2200 = vmatprep.subr.bf16.mxu0 0
        %2201 = vmatpush1.bf16.msra.mxu0 %v1786
        %2202 = vmatprep.subr.bf16.mxu0 0
        %2203 = vmatpush1.bf16.msra.mxu0 %v1785
        %2204 = vmatprep.subr.bf16.mxu0 0
        %2205 = vmatpush1.bf16.msra.mxu0 %v1784
        %2206 = vmatprep.subr.bf16.mxu0 0
        %2207 = vmatpush1.bf16.msra.mxu0 %v1783
        %2208 = vmatprep.subr.bf16.mxu0 0
        %2209 = vmatpush1.bf16.msra.mxu0 %v1782
        %2210 = vmatprep.subr.bf16.mxu0 0
        %2211 = vmatpush1.bf16.msra.mxu0 %v1781
        %2212 = vmatprep.subr.bf16.mxu0 0
        %2213 = vmatpush1.bf16.msra.mxu0 %v1780
        %2214 = vmatprep.subr.bf16.mxu0 0
        %2215 = vmatpush2.bf16.msra.mxu0 %v1795
        %2216 = vmatprep.subr.bf16.mxu0 0
        %2217 = vmatpush2.bf16.msra.mxu0 %v1794
        %2218 = vmatprep.subr.bf16.mxu0 0
        %2219 = vmatpush2.bf16.msra.mxu0 %v1793
        %2220 = vmatprep.subr.bf16.mxu0 0
        %2221 = vmatpush2.bf16.msra.mxu0 %v1792
        %2222 = vmatprep.subr.bf16.mxu0 0
        %2223 = vmatpush2.bf16.msra.mxu0 %v1791
        %2224 = vmatprep.subr.bf16.mxu0 0
        %2225 = vmatpush2.bf16.msra.mxu0 %v1790
        %2226 = vmatprep.subr.bf16.mxu0 0
        %2227 = vmatpush2.bf16.msra.mxu0 %v1789
        %2228 = vmatprep.subr.bf16.mxu0 0
        %2229 = vmatpush2.bf16.msra.mxu0 %v1788
        %2230 = vmatprep.mubr.bf16.mxu0 %v1241
        %2231 = vmatmul.mubr.bf16.gmra.mxu0 %v1240
        %v2232 = vpop.f32.mrf.mxu0
        %v2233 = vadd.f32 %v2072, %v2232
        %v2234 = vpop.f32.mrf.mxu0
        %v2235 = vpop.f32.mrf.mxu0
        %v2236 = vadd.f32 %v2075, %v2235
        %v2237 = vpop.f32.mrf.mxu0
        %2238 = vmatprep.mubr.bf16.mxu0 %v1249
        %2239 = vmatmul.mubr.bf16.gmra.mxu0 %v1248
        %v2240 = vpop.f32.mrf.mxu0
        %v2241 = vadd.f32 %v2080, %v2240
        %v2242 = vpop.f32.mrf.mxu0
        %v2243 = vpop.f32.mrf.mxu0
        %v2244 = vadd.f32 %v2083, %v2243
        %v2245 = vpop.f32.mrf.mxu0
        %2246 = vmatprep.mubr.bf16.mxu0 %v1257
        %2247 = vmatmul.mubr.bf16.gmra.mxu0 %v1256
        %v2248 = vpop.f32.mrf.mxu0
        %v2249 = vadd.f32 %v2088, %v2248
        %v2250 = vpop.f32.mrf.mxu0
        %v2251 = vpop.f32.mrf.mxu0
        %v2252 = vadd.f32 %v2091, %v2251
        %v2253 = vpop.f32.mrf.mxu0
        %2254 = vmatprep.mubr.bf16.mxu0 %v1265
        %2255 = vmatmul.mubr.bf16.gmra.mxu0 %v1264
        %v2256 = vpop.f32.mrf.mxu0
        %v2257 = vadd.f32 %v2096, %v2256
        %v2258 = vpop.f32.mrf.mxu0
        %v2259 = vpop.f32.mrf.mxu0
        %v2260 = vadd.f32 %v2099, %v2259
        %v2261 = vpop.f32.mrf.mxu0
        %2262 = vmatprep.mubr.bf16.mxu0 %v1273
        %2263 = vmatmul.mubr.bf16.gmra.mxu0 %v1272
        %v2264 = vpop.f32.mrf.mxu0
        %v2265 = vadd.f32 %v2104, %v2264
        %v2266 = vpop.f32.mrf.mxu0
        %v2267 = vpop.f32.mrf.mxu0
        %v2268 = vadd.f32 %v2107, %v2267
        %v2269 = vpop.f32.mrf.mxu0
        %2270 = vmatprep.mubr.bf16.mxu0 %v1281
        %2271 = vmatmul.mubr.bf16.gmra.mxu0 %v1280
        %v2272 = vpop.f32.mrf.mxu0
        %v2273 = vadd.f32 %v2112, %v2272
        %v2274 = vpop.f32.mrf.mxu0
        %v2275 = vpop.f32.mrf.mxu0
        %v2276 = vadd.f32 %v2115, %v2275
        %v2277 = vpop.f32.mrf.mxu0
        %2278 = vmatprep.mubr.bf16.mxu0 %v1289
        %2279 = vmatmul.mubr.bf16.gmra.mxu0 %v1288
        %v2280 = vpop.f32.mrf.mxu0
        %v2281 = vadd.f32 %v2120, %v2280
        %v2282 = vpop.f32.mrf.mxu0
        %v2283 = vpop.f32.mrf.mxu0
        %v2284 = vadd.f32 %v2123, %v2283
        %v2285 = vpop.f32.mrf.mxu0
        %2286 = vmatprep.mubr.bf16.mxu0 %v1297
        %2287 = vmatmul.mubr.bf16.gmra.mxu0 %v1296
        %v2288 = vpop.f32.mrf.mxu0
        %v2289 = vadd.f32 %v2128, %v2288
        %v2290 = vpop.f32.mrf.mxu0
        %v2291 = vpop.f32.mrf.mxu0
        %v2292 = vadd.f32 %v2131, %v2291
        %v2293 = vpop.f32.mrf.mxu0
        %2294 = vmatprep.mubr.bf16.mxu0 %v1305
        %2295 = vmatmul.mubr.bf16.gmra.mxu0 %v1304
        %v2296 = vpop.f32.mrf.mxu0
        %v2297 = vadd.f32 %v2136, %v2296
        %v2298 = vpop.f32.mrf.mxu0
        %v2299 = vpop.f32.mrf.mxu0
        %v2300 = vadd.f32 %v2139, %v2299
        %v2301 = vpop.f32.mrf.mxu0
        %2302 = vmatprep.mubr.bf16.mxu0 %v1313
        %2303 = vmatmul.mubr.bf16.gmra.mxu0 %v1312
        %v2304 = vpop.f32.mrf.mxu0
        %v2305 = vadd.f32 %v2144, %v2304
        %v2306 = vpop.f32.mrf.mxu0
        %v2307 = vpop.f32.mrf.mxu0
        %v2308 = vadd.f32 %v2147, %v2307
        %v2309 = vpop.f32.mrf.mxu0
        %2310 = vmatprep.mubr.bf16.mxu0 %v1321
        %2311 = vmatmul.mubr.bf16.gmra.mxu0 %v1320
        %v2312 = vpop.f32.mrf.mxu0
        %v2313 = vadd.f32 %v2152, %v2312
        %v2314 = vpop.f32.mrf.mxu0
        %v2315 = vpop.f32.mrf.mxu0
        %v2316 = vadd.f32 %v2155, %v2315
        %v2317 = vpop.f32.mrf.mxu0
        %2318 = vmatprep.mubr.bf16.mxu0 %v1329
        %2319 = vmatmul.mubr.bf16.gmra.mxu0 %v1328
        %v2320 = vpop.f32.mrf.mxu0
        %v2321 = vadd.f32 %v2160, %v2320
        %v2322 = vpop.f32.mrf.mxu0
        %v2323 = vpop.f32.mrf.mxu0
        %v2324 = vadd.f32 %v2163, %v2323
        %v2325 = vpop.f32.mrf.mxu0
        %2326 = vmatprep.mubr.bf16.mxu0 %v1337
        %2327 = vmatmul.mubr.bf16.gmra.mxu0 %v1336
        %v2328 = vpop.f32.mrf.mxu0
        %v2329 = vadd.f32 %v2168, %v2328
        %v2330 = vpop.f32.mrf.mxu0
        %v2331 = vpop.f32.mrf.mxu0
        %v2332 = vadd.f32 %v2171, %v2331
        %v2333 = vpop.f32.mrf.mxu0
        %2334 = vmatprep.mubr.bf16.mxu0 %v1345
        %2335 = vmatmul.mubr.bf16.gmra.mxu0 %v1344
        %v2336 = vpop.f32.mrf.mxu0
        %v2337 = vadd.f32 %v2176, %v2336
        %v2338 = vpop.f32.mrf.mxu0
        %v2339 = vpop.f32.mrf.mxu0
        %v2340 = vadd.f32 %v2179, %v2339
        %v2341 = vpop.f32.mrf.mxu0
        %2342 = vmatprep.mubr.bf16.mxu0 %v1353
        %2343 = vmatmul.mubr.bf16.gmra.mxu0 %v1352
        %v2344 = vpop.f32.mrf.mxu0
        %v2345 = vadd.f32 %v2184, %v2344
        %v2346 = vpop.f32.mrf.mxu0
        %v2347 = vpop.f32.mrf.mxu0
        %v2348 = vadd.f32 %v2187, %v2347
        %v2349 = vpop.f32.mrf.mxu0
        %2350 = vmatprep.mubr.bf16.mxu0 %v1361
        %2351 = vmatmul.mubr.bf16.gmra.mxu0 %v1360
        %v2352 = vpop.f32.mrf.mxu0
        %v2353 = vadd.f32 %v2192, %v2352
        %v2354 = vpop.f32.mrf.mxu0
        %v2355 = vpop.f32.mrf.mxu0
        %v2356 = vadd.f32 %v2195, %v2355
        %v2357 = vpop.f32.mrf.mxu0
        %2358 = vdwg.mxu0
        %2359 = vmatprep.subr.bf16.mxu0 0
        %2360 = vmatpush1.bf16.msra.mxu0 %v1803
        %2361 = vmatprep.subr.bf16.mxu0 0
        %2362 = vmatpush1.bf16.msra.mxu0 %v1802
        %2363 = vmatprep.subr.bf16.mxu0 0
        %2364 = vmatpush1.bf16.msra.mxu0 %v1801
        %2365 = vmatprep.subr.bf16.mxu0 0
        %2366 = vmatpush1.bf16.msra.mxu0 %v1800
        %2367 = vmatprep.subr.bf16.mxu0 0
        %2368 = vmatpush1.bf16.msra.mxu0 %v1799
        %2369 = vmatprep.subr.bf16.mxu0 0
        %2370 = vmatpush1.bf16.msra.mxu0 %v1798
        %2371 = vmatprep.subr.bf16.mxu0 0
        %2372 = vmatpush1.bf16.msra.mxu0 %v1797
        %2373 = vmatprep.subr.bf16.mxu0 0
        %2374 = vmatpush1.bf16.msra.mxu0 %v1796
        %2375 = vmatprep.subr.bf16.mxu0 0
        %2376 = vmatpush2.bf16.msra.mxu0 %v1811
        %2377 = vmatprep.subr.bf16.mxu0 0
        %2378 = vmatpush2.bf16.msra.mxu0 %v1810
        %2379 = vmatprep.subr.bf16.mxu0 0
        %2380 = vmatpush2.bf16.msra.mxu0 %v1809
        %2381 = vmatprep.subr.bf16.mxu0 0
        %2382 = vmatpush2.bf16.msra.mxu0 %v1808
        %2383 = vmatprep.subr.bf16.mxu0 0
        %2384 = vmatpush2.bf16.msra.mxu0 %v1807
        %2385 = vmatprep.subr.bf16.mxu0 0
        %2386 = vmatpush2.bf16.msra.mxu0 %v1806
        %2387 = vmatprep.subr.bf16.mxu0 0
        %2388 = vmatpush2.bf16.msra.mxu0 %v1805
        %2389 = vmatprep.subr.bf16.mxu0 0
        %2390 = vmatpush2.bf16.msra.mxu0 %v1804
        %2391 = vmatprep.mubr.bf16.mxu0 %v1243
        %2392 = vmatmul.mubr.bf16.gmra.mxu0 %v1242
        %v2393 = vpop.f32.mrf.mxu0
        %v2394 = vadd.f32 %v2233, %v2393
        %v2395 = vpop.f32.mrf.mxu0
        %v2396 = vpop.f32.mrf.mxu0
        %v2397 = vadd.f32 %v2236, %v2396
        %v2398 = vpop.f32.mrf.mxu0
        %2399 = vmatprep.mubr.bf16.mxu0 %v1251
        %2400 = vmatmul.mubr.bf16.gmra.mxu0 %v1250
        %v2401 = vpop.f32.mrf.mxu0
        %v2402 = vadd.f32 %v2241, %v2401
        %v2403 = vpop.f32.mrf.mxu0
        %v2404 = vpop.f32.mrf.mxu0
        %v2405 = vadd.f32 %v2244, %v2404
        %v2406 = vpop.f32.mrf.mxu0
        %2407 = vmatprep.mubr.bf16.mxu0 %v1259
        %2408 = vmatmul.mubr.bf16.gmra.mxu0 %v1258
        %v2409 = vpop.f32.mrf.mxu0
        %v2410 = vadd.f32 %v2249, %v2409
        %v2411 = vpop.f32.mrf.mxu0
        %v2412 = vpop.f32.mrf.mxu0
        %v2413 = vadd.f32 %v2252, %v2412
        %v2414 = vpop.f32.mrf.mxu0
        %2415 = vmatprep.mubr.bf16.mxu0 %v1267
        %2416 = vmatmul.mubr.bf16.gmra.mxu0 %v1266
        %v2417 = vpop.f32.mrf.mxu0
        %v2418 = vadd.f32 %v2257, %v2417
        %v2419 = vpop.f32.mrf.mxu0
        %v2420 = vpop.f32.mrf.mxu0
        %v2421 = vadd.f32 %v2260, %v2420
        %v2422 = vpop.f32.mrf.mxu0
        %2423 = vmatprep.mubr.bf16.mxu0 %v1275
        %2424 = vmatmul.mubr.bf16.gmra.mxu0 %v1274
        %v2425 = vpop.f32.mrf.mxu0
        %v2426 = vadd.f32 %v2265, %v2425
        %v2427 = vpop.f32.mrf.mxu0
        %v2428 = vpop.f32.mrf.mxu0
        %v2429 = vadd.f32 %v2268, %v2428
        %v2430 = vpop.f32.mrf.mxu0
        %2431 = vmatprep.mubr.bf16.mxu0 %v1283
        %2432 = vmatmul.mubr.bf16.gmra.mxu0 %v1282
        %v2433 = vpop.f32.mrf.mxu0
        %v2434 = vadd.f32 %v2273, %v2433
        %v2435 = vpop.f32.mrf.mxu0
        %v2436 = vpop.f32.mrf.mxu0
        %v2437 = vadd.f32 %v2276, %v2436
        %v2438 = vpop.f32.mrf.mxu0
        %2439 = vmatprep.mubr.bf16.mxu0 %v1291
        %2440 = vmatmul.mubr.bf16.gmra.mxu0 %v1290
        %v2441 = vpop.f32.mrf.mxu0
        %v2442 = vadd.f32 %v2281, %v2441
        %v2443 = vpop.f32.mrf.mxu0
        %v2444 = vpop.f32.mrf.mxu0
        %v2445 = vadd.f32 %v2284, %v2444
        %v2446 = vpop.f32.mrf.mxu0
        %2447 = vmatprep.mubr.bf16.mxu0 %v1299
        %2448 = vmatmul.mubr.bf16.gmra.mxu0 %v1298
        %v2449 = vpop.f32.mrf.mxu0
        %v2450 = vadd.f32 %v2289, %v2449
        %v2451 = vpop.f32.mrf.mxu0
        %v2452 = vpop.f32.mrf.mxu0
        %v2453 = vadd.f32 %v2292, %v2452
        %v2454 = vpop.f32.mrf.mxu0
        %2455 = vmatprep.mubr.bf16.mxu0 %v1307
        %2456 = vmatmul.mubr.bf16.gmra.mxu0 %v1306
        %v2457 = vpop.f32.mrf.mxu0
        %v2458 = vadd.f32 %v2297, %v2457
        %v2459 = vpop.f32.mrf.mxu0
        %v2460 = vpop.f32.mrf.mxu0
        %v2461 = vadd.f32 %v2300, %v2460
        %v2462 = vpop.f32.mrf.mxu0
        %2463 = vmatprep.mubr.bf16.mxu0 %v1315
        %2464 = vmatmul.mubr.bf16.gmra.mxu0 %v1314
        %v2465 = vpop.f32.mrf.mxu0
        %v2466 = vadd.f32 %v2305, %v2465
        %v2467 = vpop.f32.mrf.mxu0
        %v2468 = vpop.f32.mrf.mxu0
        %v2469 = vadd.f32 %v2308, %v2468
        %v2470 = vpop.f32.mrf.mxu0
        %2471 = vmatprep.mubr.bf16.mxu0 %v1323
        %2472 = vmatmul.mubr.bf16.gmra.mxu0 %v1322
        %v2473 = vpop.f32.mrf.mxu0
        %v2474 = vadd.f32 %v2313, %v2473
        %v2475 = vpop.f32.mrf.mxu0
        %v2476 = vpop.f32.mrf.mxu0
        %v2477 = vadd.f32 %v2316, %v2476
        %v2478 = vpop.f32.mrf.mxu0
        %2479 = vmatprep.mubr.bf16.mxu0 %v1331
        %2480 = vmatmul.mubr.bf16.gmra.mxu0 %v1330
        %v2481 = vpop.f32.mrf.mxu0
        %v2482 = vadd.f32 %v2321, %v2481
        %v2483 = vpop.f32.mrf.mxu0
        %v2484 = vpop.f32.mrf.mxu0
        %v2485 = vadd.f32 %v2324, %v2484
        %v2486 = vpop.f32.mrf.mxu0
        %2487 = vmatprep.mubr.bf16.mxu0 %v1339
        %2488 = vmatmul.mubr.bf16.gmra.mxu0 %v1338
        %v2489 = vpop.f32.mrf.mxu0
        %v2490 = vadd.f32 %v2329, %v2489
        %v2491 = vpop.f32.mrf.mxu0
        %v2492 = vpop.f32.mrf.mxu0
        %v2493 = vadd.f32 %v2332, %v2492
        %v2494 = vpop.f32.mrf.mxu0
        %2495 = vmatprep.mubr.bf16.mxu0 %v1347
        %2496 = vmatmul.mubr.bf16.gmra.mxu0 %v1346
        %v2497 = vpop.f32.mrf.mxu0
        %v2498 = vadd.f32 %v2337, %v2497
        %v2499 = vpop.f32.mrf.mxu0
        %v2500 = vpop.f32.mrf.mxu0
        %v2501 = vadd.f32 %v2340, %v2500
        %v2502 = vpop.f32.mrf.mxu0
        %2503 = vmatprep.mubr.bf16.mxu0 %v1355
        %2504 = vmatmul.mubr.bf16.gmra.mxu0 %v1354
        %v2505 = vpop.f32.mrf.mxu0
        %v2506 = vadd.f32 %v2345, %v2505
        %v2507 = vpop.f32.mrf.mxu0
        %v2508 = vpop.f32.mrf.mxu0
        %v2509 = vadd.f32 %v2348, %v2508
        %v2510 = vpop.f32.mrf.mxu0
        %2511 = vmatprep.mubr.bf16.mxu0 %v1363
        %2512 = vmatmul.mubr.bf16.gmra.mxu0 %v1362
        %v2513 = vpop.f32.mrf.mxu0
        %v2514 = vadd.f32 %v2353, %v2513
        %v2515 = vpop.f32.mrf.mxu0
        %v2516 = vpop.f32.mrf.mxu0
        %v2517 = vadd.f32 %v2356, %v2516
        %v2518 = vpop.f32.mrf.mxu0
        %2519 = vdwg.mxu0
        %v2520 = vadd.f32 %v564, %v2394
        %v2521 = vadd.f32 %v565, %v2397
        %v2522 = vadd.f32 %v566, %v2402
        %v2523 = vadd.f32 %v567, %v2405
        %v2524 = vadd.f32 %v568, %v2410
        %v2525 = vadd.f32 %v569, %v2413
        %v2526 = vadd.f32 %v570, %v2418
        %v2527 = vadd.f32 %v571, %v2421
        %v2528 = vadd.f32 %v572, %v2426
        %v2529 = vadd.f32 %v573, %v2429
        %v2530 = vadd.f32 %v574, %v2434
        %v2531 = vadd.f32 %v575, %v2437
        %v2532 = vadd.f32 %v576, %v2442
        %v2533 = vadd.f32 %v577, %v2445
        %v2534 = vadd.f32 %v578, %v2450
        %v2535 = vadd.f32 %v579, %v2453
        %v2536 = vadd.f32 %v580, %v2458
        %v2537 = vadd.f32 %v581, %v2461
        %v2538 = vadd.f32 %v582, %v2466
        %v2539 = vadd.f32 %v583, %v2469
        %v2540 = vadd.f32 %v584, %v2474
        %v2541 = vadd.f32 %v585, %v2477
        %v2542 = vadd.f32 %v586, %v2482
        %v2543 = vadd.f32 %v587, %v2485
        %v2544 = vadd.f32 %v588, %v2490
        %v2545 = vadd.f32 %v589, %v2493
        %v2546 = vadd.f32 %v590, %v2498
        %v2547 = vadd.f32 %v591, %v2501
        %v2548 = vadd.f32 %v592, %v2506
        %v2549 = vadd.f32 %v593, %v2509
        %v2550 = vadd.f32 %v594, %v2514
        %v2551 = vadd.f32 %v595, %v2517
        %2552 = vst [vmem:[#allocation2] sm:$0xff] %v2520
        %2553 = vst [vmem:[#allocation2 + $0x8] sm:$0xff] %v2521
        %2554 = vst [vmem:[#allocation2 + $0x10] sm:$0xff] %v2522
        %2555 = vst [vmem:[#allocation2 + $0x18] sm:$0xff] %v2523
        %2556 = vst [vmem:[#allocation2 + $0x20] sm:$0xff] %v2524
        %2557 = vst [vmem:[#allocation2 + $0x28] sm:$0xff] %v2525
        %2558 = vst [vmem:[#allocation2 + $0x30] sm:$0xff] %v2526
        %2559 = vst [vmem:[#allocation2 + $0x38] sm:$0xff] %v2527
        %2560 = vst [vmem:[#allocation2 + $0x40] sm:$0xff] %v2528
        %2561 = vst [vmem:[#allocation2 + $0x48] sm:$0xff] %v2529
        %2562 = vst [vmem:[#allocation2 + $0x50] sm:$0xff] %v2530
        %2563 = vst [vmem:[#allocation2 + $0x58] sm:$0xff] %v2531
        %2564 = vst [vmem:[#allocation2 + $0x60] sm:$0xff] %v2532
        %2565 = vst [vmem:[#allocation2 + $0x68] sm:$0xff] %v2533
        %2566 = vst [vmem:[#allocation2 + $0x70] sm:$0xff] %v2534
        %2567 = vst [vmem:[#allocation2 + $0x78] sm:$0xff] %v2535
        %2568 = vst [vmem:[#allocation2 + $0x80] sm:$0xff] %v2536
        %2569 = vst [vmem:[#allocation2 + $0x88] sm:$0xff] %v2537
        %2570 = vst [vmem:[#allocation2 + $0x90] sm:$0xff] %v2538
        %2571 = vst [vmem:[#allocation2 + $0x98] sm:$0xff] %v2539
        %2572 = vst [vmem:[#allocation2 + $0xa0] sm:$0xff] %v2540
        %2573 = vst [vmem:[#allocation2 + $0xa8] sm:$0xff] %v2541
        %2574 = vst [vmem:[#allocation2 + $0xb0] sm:$0xff] %v2542
        %2575 = vst [vmem:[#allocation2 + $0xb8] sm:$0xff] %v2543
        %2576 = vst [vmem:[#allocation2 + $0xc0] sm:$0xff] %v2544
        %2577 = vst [vmem:[#allocation2 + $0xc8] sm:$0xff] %v2545
        %2578 = vst [vmem:[#allocation2 + $0xd0] sm:$0xff] %v2546
        %2579 = vst [vmem:[#allocation2 + $0xd8] sm:$0xff] %v2547
        %2580 = vst [vmem:[#allocation2 + $0xe0] sm:$0xff] %v2548
        %2581 = vst [vmem:[#allocation2 + $0xe8] sm:$0xff] %v2549
        %2582 = vst [vmem:[#allocation2 + $0xf0] sm:$0xff] %v2550
        %2583 = vst [vmem:[#allocation2 + $0xf8] sm:$0xff] %v2551
        %p2584 = scmp.eq.s32.totalorder %s21, 1
        // Predicated region
        $region60: #{decoder_forward.6} parent=50 // pred_check
          %p2585 = pneg %p2584
        $region61: #{decoder_forward.6} parent=50 // pred_check_branch
          %2587 = sbr.rel (%p2585) target = $region63
        $region62: #{decoder_forward.6} parent=50 // pred_region
          %v2588 = vld [vmem:[#allocation2] sm:$0xff]
          %v2589 = vld [vmem:[#allocation2 + $0x8] sm:$0xff]
          %v2590 = vld [vmem:[#allocation2 + $0x10] sm:$0xff]
          %v2591 = vld [vmem:[#allocation2 + $0x18] sm:$0xff]
          %v2592 = vld [vmem:[#allocation2 + $0x20] sm:$0xff]
          %v2593 = vld [vmem:[#allocation2 + $0x28] sm:$0xff]
          %v2594 = vld [vmem:[#allocation2 + $0x30] sm:$0xff]
          %v2595 = vld [vmem:[#allocation2 + $0x38] sm:$0xff]
          %v2596 = vld [vmem:[#allocation2 + $0x40] sm:$0xff]
          %v2597 = vld [vmem:[#allocation2 + $0x48] sm:$0xff]
          %v2598 = vld [vmem:[#allocation2 + $0x50] sm:$0xff]
          %v2599 = vld [vmem:[#allocation2 + $0x58] sm:$0xff]
          %v2600 = vld [vmem:[#allocation2 + $0x60] sm:$0xff]
          %v2601 = vld [vmem:[#allocation2 + $0x68] sm:$0xff]
          %v2602 = vld [vmem:[#allocation2 + $0x70] sm:$0xff]
          %v2603 = vld [vmem:[#allocation2 + $0x78] sm:$0xff]
          %v2604 = vld [vmem:[#allocation2 + $0x80] sm:$0xff]
          %v2605 = vld [vmem:[#allocation2 + $0x88] sm:$0xff]
          %v2606 = vld [vmem:[#allocation2 + $0x90] sm:$0xff]
          %v2607 = vld [vmem:[#allocation2 + $0x98] sm:$0xff]
          %v2608 = vld [vmem:[#allocation2 + $0xa0] sm:$0xff]
          %v2609 = vld [vmem:[#allocation2 + $0xa8] sm:$0xff]
          %v2610 = vld [vmem:[#allocation2 + $0xb0] sm:$0xff]
          %v2611 = vld [vmem:[#allocation2 + $0xb8] sm:$0xff]
          %v2612 = vld [vmem:[#allocation2 + $0xc0] sm:$0xff]
          %v2613 = vld [vmem:[#allocation2 + $0xc8] sm:$0xff]
          %v2614 = vld [vmem:[#allocation2 + $0xd0] sm:$0xff]
          %v2615 = vld [vmem:[#allocation2 + $0xd8] sm:$0xff]
          %v2616 = vld [vmem:[#allocation2 + $0xe0] sm:$0xff]
          %v2617 = vld [vmem:[#allocation2 + $0xe8] sm:$0xff]
          %v2618 = vld [vmem:[#allocation2 + $0xf0] sm:$0xff]
          %v2619 = vld [vmem:[#allocation2 + $0xf8] sm:$0xff]
          %v2620 = vld [vmem:[%s517] sm:$0x1]
          %v2622 = vlaneseq
          %v2623 = vshrl.u32 %v2622, 7
          %v2624 = vsub.s32 0, %v2623
          %v2625 = vrot.slane %v2620, %v2624
          %v2627 = vadd.f32 %v2588, %v2625
          %v2628 = vadd.f32 %v2589, %v2625
          %v2629 = vadd.f32 %v2590, %v2625
          %v2630 = vadd.f32 %v2591, %v2625
          %v2631 = vadd.f32 %v2592, %v2625
          %v2632 = vadd.f32 %v2593, %v2625
          %v2633 = vadd.f32 %v2594, %v2625
          %v2634 = vadd.f32 %v2595, %v2625
          %v2635 = vadd.f32 %v2596, %v2625
          %v2636 = vadd.f32 %v2597, %v2625
          %v2637 = vadd.f32 %v2598, %v2625
          %v2638 = vadd.f32 %v2599, %v2625
          %v2639 = vadd.f32 %v2600, %v2625
          %v2640 = vadd.f32 %v2601, %v2625
          %v2641 = vadd.f32 %v2602, %v2625
          %v2642 = vadd.f32 %v2603, %v2625
          %v2643 = vadd.f32 %v2604, %v2625
          %v2644 = vadd.f32 %v2605, %v2625
          %v2645 = vadd.f32 %v2606, %v2625
          %v2646 = vadd.f32 %v2607, %v2625
          %v2647 = vadd.f32 %v2608, %v2625
          %v2648 = vadd.f32 %v2609, %v2625
          %v2649 = vadd.f32 %v2610, %v2625
          %v2650 = vadd.f32 %v2611, %v2625
          %v2651 = vadd.f32 %v2612, %v2625
          %v2652 = vadd.f32 %v2613, %v2625
          %v2653 = vadd.f32 %v2614, %v2625
          %v2654 = vadd.f32 %v2615, %v2625
          %v2655 = vadd.f32 %v2616, %v2625
          %v2656 = vadd.f32 %v2617, %v2625
          %v2657 = vadd.f32 %v2618, %v2625
          %v2658 = vadd.f32 %v2619, %v2625
          %v2659 = vmax.f32 %v2627, 0.0
          %v2660 = vmax.f32 %v2628, 0.0
          %v2661 = vmax.f32 %v2629, 0.0
          %v2662 = vmax.f32 %v2630, 0.0
          %v2663 = vmax.f32 %v2631, 0.0
          %v2664 = vmax.f32 %v2632, 0.0
          %v2665 = vmax.f32 %v2633, 0.0
          %v2666 = vmax.f32 %v2634, 0.0
          %v2667 = vmax.f32 %v2635, 0.0
          %v2668 = vmax.f32 %v2636, 0.0
          %v2669 = vmax.f32 %v2637, 0.0
          %v2670 = vmax.f32 %v2638, 0.0
          %v2671 = vmax.f32 %v2639, 0.0
          %v2672 = vmax.f32 %v2640, 0.0
          %v2673 = vmax.f32 %v2641, 0.0
          %v2674 = vmax.f32 %v2642, 0.0
          %v2675 = vmax.f32 %v2643, 0.0
          %v2676 = vmax.f32 %v2644, 0.0
          %v2677 = vmax.f32 %v2645, 0.0
          %v2678 = vmax.f32 %v2646, 0.0
          %v2679 = vmax.f32 %v2647, 0.0
          %v2680 = vmax.f32 %v2648, 0.0
          %v2681 = vmax.f32 %v2649, 0.0
          %v2682 = vmax.f32 %v2650, 0.0
          %v2683 = vmax.f32 %v2651, 0.0
          %v2684 = vmax.f32 %v2652, 0.0
          %v2685 = vmax.f32 %v2653, 0.0
          %v2686 = vmax.f32 %v2654, 0.0
          %v2687 = vmax.f32 %v2655, 0.0
          %v2688 = vmax.f32 %v2656, 0.0
          %v2689 = vmax.f32 %v2657, 0.0
          %v2690 = vmax.f32 %v2658, 0.0
          %2691 = vst [vmem:[%s525] sm:$0xff] %v2659
          %2692 = vst [vmem:[%s525 + $0x8] sm:$0xff] %v2660
          %2693 = vst [vmem:[%s525 + $0x10] sm:$0xff] %v2661
          %2694 = vst [vmem:[%s525 + $0x18] sm:$0xff] %v2662
          %2695 = vst [vmem:[%s525 + $0x20] sm:$0xff] %v2663
          %2696 = vst [vmem:[%s525 + $0x28] sm:$0xff] %v2664
          %2697 = vst [vmem:[%s525 + $0x30] sm:$0xff] %v2665
          %2698 = vst [vmem:[%s525 + $0x38] sm:$0xff] %v2666
          %2699 = vst [vmem:[%s525 + $0x40] sm:$0xff] %v2667
          %2700 = vst [vmem:[%s525 + $0x48] sm:$0xff] %v2668
          %2701 = vst [vmem:[%s525 + $0x50] sm:$0xff] %v2669
          %2702 = vst [vmem:[%s525 + $0x58] sm:$0xff] %v2670
          %2703 = vst [vmem:[%s525 + $0x60] sm:$0xff] %v2671
          %2704 = vst [vmem:[%s525 + $0x68] sm:$0xff] %v2672
          %2705 = vst [vmem:[%s525 + $0x70] sm:$0xff] %v2673
          %2706 = vst [vmem:[%s525 + $0x78] sm:$0xff] %v2674
          %2707 = vst [vmem:[%s525 + $0x80] sm:$0xff] %v2675
          %2708 = vst [vmem:[%s525 + $0x88] sm:$0xff] %v2676
          %2709 = vst [vmem:[%s525 + $0x90] sm:$0xff] %v2677
          %2710 = vst [vmem:[%s525 + $0x98] sm:$0xff] %v2678
          %2711 = vst [vmem:[%s525 + $0xa0] sm:$0xff] %v2679
          %2712 = vst [vmem:[%s525 + $0xa8] sm:$0xff] %v2680
          %2713 = vst [vmem:[%s525 + $0xb0] sm:$0xff] %v2681
          %2714 = vst [vmem:[%s525 + $0xb8] sm:$0xff] %v2682
          %2715 = vst [vmem:[%s525 + $0xc0] sm:$0xff] %v2683
          %2716 = vst [vmem:[%s525 + $0xc8] sm:$0xff] %v2684
          %2717 = vst [vmem:[%s525 + $0xd0] sm:$0xff] %v2685
          %2718 = vst [vmem:[%s525 + $0xd8] sm:$0xff] %v2686
          %2719 = vst [vmem:[%s525 + $0xe0] sm:$0xff] %v2687
          %2720 = vst [vmem:[%s525 + $0xe8] sm:$0xff] %v2688
          %2721 = vst [vmem:[%s525 + $0xf0] sm:$0xff] %v2689
          %2722 = vst [vmem:[%s525 + $0xf8] sm:$0xff] %v2690
        $region63: #{decoder_forward.6} parent=50 // pred_fallthru
          _
        %s2723 = smul.u32 32, %s19
        %p2724 = scmp.lt.s32.totalorder %s2723, 63
        %s2725 = scalar_select %p2724, %s2723, 63
        %p2726 = scmp.lt.s32.totalorder %s20, 0
        %s2727 = scalar_select %p2726, %s20, 0
        %s2728 = sadd.s32 %s2727, %s2725
        %s2729 = smul.addr %s2728, 8
        %s2730 = scalar_lea.vmem %s3, %s2729
        // Predicated region
        $region64: #{decoder_forward.6} parent=50 // pred_check
          %p2731 = pneg %p135
        $region65: #{decoder_forward.6} parent=50 // pred_check_branch
          %2733 = sbr.rel (%p2731) target = $region67
        $region66: #{decoder_forward.6} parent=50 // pred_region
          %s2734 = smul.u32 32, %s19
        $region67: #{decoder_forward.6} parent=50 // pred_fallthru
          _
      $region51: #{decoder_forward.6} parent=5 // pred_fallthru
        _
      %p2735 = scmp.le.s32.totalorder 2, %s9
      // Predicated region
      $region68: #{decoder_forward.6} parent=5 // pred_check
        %p2736 = pneg %p2735
      $region69: #{decoder_forward.6} parent=5 // pred_check_branch
        %2738 = sbr.rel (%p2736) target = $region71
      $region70: #{decoder_forward.6} parent=5 // pred_region
        %s2739 = ssub.s32 %s9, 2
        // Predicated region
        $region72: #{decoder_forward.6} parent=70 // pred_check
          %p2740 = pneg %p141
        $region73: #{decoder_forward.6} parent=70 // pred_check_branch
          %2742 = sbr.rel (%p2740) target = $region75
        $region74: #{decoder_forward.6} parent=70 // pred_region
          %s2743 = smul.u32 32, %s22
          %p2744 = scmp.lt.s32.totalorder %s2743, 63
          %s2745 = scalar_select %p2744, %s2743, 63
          %p2746 = scmp.lt.s32.totalorder %s23, 0
          %s2747 = scalar_select %p2746, %s23, 0
          %s2748 = sadd.s32 %s2747, %s2745
          %s2749 = smul.addr %s2748, 8
          %s2750 = scalar_lea.vmem %s3, %s2749
        $region75: #{decoder_forward.6} parent=70 // pred_fallthru
          _
      $region71: #{decoder_forward.6} parent=5 // pred_fallthru
        _
    $region6: #{decoder_forward.6} parent=1 // loop_footer
      %s13 = sadd.s32 1, %s9
    $region7: #{decoder_forward.6} parent=1 // loop_footer_branch
      %8 = sbr.rel target = $region3
    $region8: #{decoder_forward.6} parent=1 // loop_exit
      _

// kernel: decoder_forward.7
$region0: #{decoder_forward.7}
  #allocation0 [shape = 'u32[]', space=smem, size = 0x4, offset = 0x4, fixed_abs, tag = 'smem constant byte address 0x4 - core index']
  #allocation1 [shape = 'u32[144,128]{1,0:T(1,128)}', space=vmem, size = 0x12000, scoped, tag = 'internal scratch']
  #allocation2 [shape = 'f32[512,128]{1,0:T(8,128)}', space=vmem, size = 0x40000, scoped, tag = 'scratch operand']
  %s0 = inlined_call_operand.vmem [shape: bf16[2048,1024], index: 0, kind: input, shape index: {}]
  %s1 = inlined_call_operand.vmem [shape: bf16[1024,128], index: 1, kind: input, shape index: {}]
  %s2 = inlined_call_operand.vmem [shape: f32[1,128], index: 2, kind: input, shape index: {}]
  %s3 = inlined_call_operand.vmem [shape: f32[2048,128], index: 3, kind: output, shape index: {}]
  %s4 = sld [smem:[#allocation0]]
  $region53: #{decoder_forward.7} parent=0
    _
  %s6 = ssub.s32 1, %s4
  %s7 = scalar_select 0, %s6, %s4
  loop: start=0, step=1, limit=6
  $region2: #{decoder_forward.7} parent=0 // loop_pre_header
    _
  $region3: #{decoder_forward.7} parent=0 // loop_header
    %s9 = sphi 0, %s13
    %p10 = scmp.ge.s32.totalorder %s9, 6
    %s16 = sphi 0, %s35
    %s17 = sphi 0, %s31
    %s18 = sphi 0, %s27
    %s19 = sphi 0, %s16
    %s20 = sphi 0, %s17
    %s21 = sphi 0, %s18
    %s22 = sphi 0, %s19
    %s23 = sphi 0, %s20
    %s24 = sphi 0, %s21
    %s40 = sphi 0, %s42
    %s43 = sphi 0, %s40
    %s44 = sphi 0, %s43
    %s60 = sphi 0, %s44
    %s68 = sphi 0, %s70
    %s71 = sphi 0, %s68
    %s72 = sphi 0, %s71
    %s88 = sphi 0, %s72
    %s94 = sphi 0, %s96
    %s97 = sphi 0, %s94
    %s98 = sphi 0, %s97
    %s114 = sphi 0, %s98
    %s122 = sphi 0, %s124
    %s125 = sphi 0, %s122
    %s126 = sphi 0, %s125
    %s142 = sphi 0, %s126
  $region4: #{decoder_forward.7} parent=0 // loop_header_branch
    %12 = sbr.rel (%p10) target = $region8
  $region5: #{decoder_forward.7} parent=0 // loop_body
    %s14 = ssub.s32 %s9, 1
    %s15 = ssub.s32 %s9, 2
    %s25 = sadd.s32 1, %s18
    %p26 = scmp.ge.s32.totalorder %s25, 1
    %s27 = scalar_select %p26, 0, %s25
    %s28 = sadd.s32 1, %s17
    %s29 = scalar_select %p26, %s28, %s17
    %p30 = scmp.ge.s32.totalorder %s29, 1
    %s31 = scalar_select %p30, 0, %s29
    %s32 = sadd.s32 1, %s16
    %s33 = scalar_select %p30, %s32, %s16
    %p34 = scmp.ge.s32.totalorder %s33, 4
    %s35 = scalar_select %p34, 0, %s33
    %s36 = ssub.s32 %s16, %s35
    %s37 = ssub.s32 %s18, %s27
    %s38 = sor.u32 %s36, %s37
    %p39 = scmp.eq.s32.totalorder %s38, 0
    %s41 = sadd.s32 %s40, 1
    %s42 = scalar_select %p39, %s40, %s41
    %p45 = pneg %p39
    %p46 = scmp.eq.s32.totalorder %s9, 3
    %p47 = por %p45, %p46
    %p48 = scmp.ne.s32.totalorder %s40, %s43
    %p49 = scmp.eq.s32.totalorder %s9, 0
    %p50 = por %p48, %p49
    %p51 = scmp.ne.s32.totalorder %s40, %s43
    %p52 = scmp.eq.s32.totalorder %s14, 3
    %p53 = por %p51, %p52
    %p54 = scmp.ne.s32.totalorder %s43, %s44
    %p55 = scmp.eq.s32.totalorder %s14, 0
    %p56 = por %p54, %p55
    %p57 = scmp.ne.s32.totalorder %s43, %s44
    %p58 = scmp.eq.s32.totalorder %s15, 3
    %p59 = por %p57, %p58
    %p61 = scmp.ne.s32.totalorder %s44, %s60
    %p62 = scmp.eq.s32.totalorder %s15, 0
    %p63 = por %p61, %p62
    %s64 = ssub.s32 %s18, %s27
    %s65 = ssub.s32 %s17, %s31
    %s66 = sor.u32 %s64, %s65
    %p67 = scmp.eq.s32.totalorder %s66, 0
    %s69 = sadd.s32 %s68, 1
    %s70 = scalar_select %p67, %s68, %s69
    %p73 = pneg %p67
    %p74 = scmp.eq.s32.totalorder %s9, 3
    %p75 = por %p73, %p74
    %p76 = scmp.ne.s32.totalorder %s68, %s71
    %p77 = scmp.eq.s32.totalorder %s9, 0
    %p78 = por %p76, %p77
    %p79 = scmp.ne.s32.totalorder %s68, %s71
    %p80 = scmp.eq.s32.totalorder %s14, 3
    %p81 = por %p79, %p80
    %p82 = scmp.ne.s32.totalorder %s71, %s72
    %p83 = scmp.eq.s32.totalorder %s14, 0
    %p84 = por %p82, %p83
    %p85 = scmp.ne.s32.totalorder %s71, %s72
    %p86 = scmp.eq.s32.totalorder %s15, 3
    %p87 = por %p85, %p86
    %p89 = scmp.ne.s32.totalorder %s72, %s88
    %p90 = scmp.eq.s32.totalorder %s15, 0
    %p91 = por %p89, %p90
    %s92 = ssub.s32 %s17, %s31
    %p93 = scmp.eq.s32.totalorder %s92, 0
    %s95 = sadd.s32 %s94, 1
    %s96 = scalar_select %p93, %s94, %s95
    %p99 = pneg %p93
    %p100 = scmp.eq.s32.totalorder %s9, 3
    %p101 = por %p99, %p100
    %p102 = scmp.ne.s32.totalorder %s94, %s97
    %p103 = scmp.eq.s32.totalorder %s9, 0
    %p104 = por %p102, %p103
    %p105 = scmp.ne.s32.totalorder %s94, %s97
    %p106 = scmp.eq.s32.totalorder %s14, 3
    %p107 = por %p105, %p106
    %p108 = scmp.ne.s32.totalorder %s97, %s98
    %p109 = scmp.eq.s32.totalorder %s14, 0
    %p110 = por %p108, %p109
    %p111 = scmp.ne.s32.totalorder %s97, %s98
    %p112 = scmp.eq.s32.totalorder %s15, 3
    %p113 = por %p111, %p112
    %p115 = scmp.ne.s32.totalorder %s98, %s114
    %p116 = scmp.eq.s32.totalorder %s15, 0
    %p117 = por %p115, %p116
    %s118 = ssub.s32 %s16, %s35
    %s119 = ssub.s32 %s17, %s31
    %s120 = sor.u32 %s118, %s119
    %p121 = scmp.eq.s32.totalorder %s120, 0
    %s123 = sadd.s32 %s122, 1
    %s124 = scalar_select %p121, %s122, %s123
    %p127 = pneg %p121
    %p128 = scmp.eq.s32.totalorder %s9, 3
    %p129 = por %p127, %p128
    %p130 = scmp.ne.s32.totalorder %s122, %s125
    %p131 = scmp.eq.s32.totalorder %s9, 0
    %p132 = por %p130, %p131
    %p133 = scmp.ne.s32.totalorder %s122, %s125
    %p134 = scmp.eq.s32.totalorder %s14, 3
    %p135 = por %p133, %p134
    %p136 = scmp.ne.s32.totalorder %s125, %s126
    %p137 = scmp.eq.s32.totalorder %s14, 0
    %p138 = por %p136, %p137
    %p139 = scmp.ne.s32.totalorder %s125, %s126
    %p140 = scmp.eq.s32.totalorder %s15, 3
    %p141 = por %p139, %p140
    %p143 = scmp.ne.s32.totalorder %s126, %s142
    %p144 = scmp.eq.s32.totalorder %s15, 0
    %p145 = por %p143, %p144
    %p146 = scmp.le.s32.totalorder 1, %s9
    %p147 = scmp.lt.s32.totalorder %s9, 5
    %p148 = pnand %p146, %p147
    %p149 = pneg %p148
    // Predicated region
    $region9: #{decoder_forward.7} parent=5 // pred_check
      _
    $region10: #{decoder_forward.7} parent=5 // pred_check_branch
      %151 = sbr.rel (%p148) target = $region12
    $region11: #{decoder_forward.7} parent=5 // pred_region
      %s152 = ssub.s32 %s9, 1
      // Predicated region
      $region13: #{decoder_forward.7} parent=11 // pred_check
        %p153 = pneg %p84
      $region14: #{decoder_forward.7} parent=11 // pred_check_branch
        %155 = sbr.rel (%p153) target = $region16
      $region15: #{decoder_forward.7} parent=11 // pred_region
        %s156 = smul.u32 128, %s21
        %p157 = scmp.lt.s32.totalorder %s156, 127
        %s158 = scalar_select %p157, %s156, 127
        %p159 = scmp.lt.s32.totalorder %s20, 0
        %s160 = scalar_select %p159, %s20, 0
        %s161 = sadd.s32 %s160, %s158
        %s162 = smul.addr %s161, 4
        %s163 = scalar_lea.vmem %s1, %s162
        %s164 = smul.u32 128, %s21
      $region16: #{decoder_forward.7} parent=11 // pred_fallthru
        _
      // Predicated region
      $region17: #{decoder_forward.7} parent=11 // pred_check
        %p165 = pneg %p110
      $region18: #{decoder_forward.7} parent=11 // pred_check_branch
        %167 = sbr.rel (%p165) target = $region20
      $region19: #{decoder_forward.7} parent=11 // pred_region
        %p168 = scmp.lt.s32.totalorder %s20, 0
        %s169 = scalar_select %p168, %s20, 0
        %s170 = scalar_lea.vmem %s2, %s169
      $region20: #{decoder_forward.7} parent=11 // pred_fallthru
        _
    $region12: #{decoder_forward.7} parent=5 // pred_fallthru
      _
    %p171 = scmp.lt.s32.totalorder %s9, 4
    // Predicated region
    $region21: #{decoder_forward.7} parent=5 // pred_check
      %p172 = pneg %p171
    $region22: #{decoder_forward.7} parent=5 // pred_check_branch
      %174 = sbr.rel (%p172) target = $region24
    $region23: #{decoder_forward.7} parent=5 // pred_region
      // Predicated region
      $region25: #{decoder_forward.7} parent=23 // pred_check
        %p175 = pneg %p50
      $region26: #{decoder_forward.7} parent=23 // pred_check_branch
        %177 = sbr.rel (%p175) target = $region28
      $region27: #{decoder_forward.7} parent=23 // pred_region
        %s178 = smul.u32 64, %s16
        %s179 = smul.u32 8, %s18
        %p180 = scmp.lt.s32.totalorder %s178, 255
        %s181 = scalar_select %p180, %s178, 255
        %p182 = scmp.lt.s32.totalorder %s179, 7
        %s183 = scalar_select %p182, %s179, 7
        %s184 = smul.addr %s181, 8
        %s185 = sadd.s32 %s183, %s184
        %s186 = smul.addr %s185, 4
        %s187 = scalar_lea.vmem %s0, %s186
        %s188 = smul.u32 64, %s16
        %s189 = smul.u32 8, %s18
      $region28: #{decoder_forward.7} parent=23 // pred_fallthru
        _
    $region24: #{decoder_forward.7} parent=5 // pred_fallthru
      _
    %p190 = scmp.le.s32.totalorder 1, %s9
    %p191 = scmp.lt.s32.totalorder %s9, 5
    %p192 = pnand %p190, %p191
    %p193 = pneg %p192
    // Predicated region
    $region29: #{decoder_forward.7} parent=5 // pred_check
      _
    $region30: #{decoder_forward.7} parent=5 // pred_check_branch
      %195 = sbr.rel (%p192) target = $region32
    $region31: #{decoder_forward.7} parent=5 // pred_region
      %s196 = ssub.s32 %s9, 1
      %s197 = smul.u32 64, %s19
      %s198 = smul.u32 8, %s21
      %p199 = scmp.lt.s32.totalorder %s197, 255
      %s200 = scalar_select %p199, %s197, 255
      %p201 = scmp.lt.s32.totalorder %s198, 7
      %s202 = scalar_select %p201, %s198, 7
      %s203 = smul.addr %s200, 8
      %s204 = sadd.s32 %s202, %s203
      %s205 = smul.addr %s204, 4
      %s206 = scalar_lea.vmem %s0, %s205
      %p207 = pneg %p56
      %p208 = pneg %p53
      %s209 = smul.u32 128, %s21
      %p210 = scmp.lt.s32.totalorder %s209, 127
      %s211 = scalar_select %p210, %s209, 127
      %p212 = scmp.lt.s32.totalorder %s20, 0
      %s213 = scalar_select %p212, %s20, 0
      %s214 = sadd.s32 %s213, %s211
      %s215 = smul.addr %s214, 4
      %s216 = scalar_lea.vmem %s1, %s215
      %p217 = pneg %p84
      %p218 = pneg %p81
      %p219 = scmp.lt.s32.totalorder %s20, 0
      %s220 = scalar_select %p219, %s20, 0
      %s221 = scalar_lea.vmem %s2, %s220
      %p222 = pneg %p110
      %p223 = pneg %p107
      %p224 = pneg %p138
      %p225 = pneg %p135
      %s226 = smul.u32 64, %s19
      %p227 = scmp.lt.s32.totalorder %s226, 255
      %s228 = scalar_select %p227, %s226, 255
      %p229 = scmp.lt.s32.totalorder %s20, 0
      %s230 = scalar_select %p229, %s20, 0
      %s231 = sadd.s32 %s230, %s228
      %s232 = smul.addr %s231, 8
      %s233 = scalar_lea.vmem %s3, %s232
      %s234 = smul.u32 64, %s19
      %s235 = smul.u32 8, %s21
      %p236 = scmp.lt.s32.totalorder %s234, 255
      %s237 = scalar_select %p236, %s234, 255
      %p238 = scmp.lt.s32.totalorder %s235, 7
      %s239 = scalar_select %p238, %s235, 7
      %s240 = smul.addr %s237, 8
      %s241 = sadd.s32 %s239, %s240
      %s242 = smul.addr %s241, 4
      %s243 = scalar_lea.vmem %s0, %s242
      %s244 = smul.u32 64, %s19
      %s245 = smul.u32 8, %s21
      %s246 = smul.u32 128, %s21
      %p247 = scmp.lt.s32.totalorder %s246, 127
      %s248 = scalar_select %p247, %s246, 127
      %p249 = scmp.lt.s32.totalorder %s20, 0
      %s250 = scalar_select %p249, %s20, 0
      %s251 = sadd.s32 %s250, %s248
      %s252 = smul.addr %s251, 4
      %s253 = scalar_lea.vmem %s1, %s252
      %s254 = smul.u32 128, %s21
      %p255 = scmp.lt.s32.totalorder %s20, 0
      %s256 = scalar_select %p255, %s20, 0
      %s257 = scalar_lea.vmem %s2, %s256
      %s258 = smul.u32 64, %s19
      %p259 = scmp.lt.s32.totalorder %s258, 255
      %s260 = scalar_select %p259, %s258, 255
      %p261 = scmp.lt.s32.totalorder %s20, 0
      %s262 = scalar_select %p261, %s20, 0
      %s263 = sadd.s32 %s262, %s260
      %s264 = smul.addr %s263, 8
      %s265 = scalar_lea.vmem %s3, %s264
      %s266 = smul.u32 64, %s19
      %p268 = scmp.eq.s32.totalorder %s21, 0
      // Predicated region
      $region33: #{decoder_forward.7} parent=31 // pred_check
        %p269 = pneg %p268
      $region34: #{decoder_forward.7} parent=31 // pred_check_branch
        %271 = sbr.rel (%p269) target = $region36
      $region35: #{decoder_forward.7} parent=31 // pred_region
        %272 = vst [vmem:[#allocation2] sm:$0xff] 0.0
        %273 = vst [vmem:[#allocation2 + $0x8] sm:$0xff] 0.0
        %274 = vst [vmem:[#allocation2 + $0x10] sm:$0xff] 0.0
        %275 = vst [vmem:[#allocation2 + $0x18] sm:$0xff] 0.0
        %276 = vst [vmem:[#allocation2 + $0x20] sm:$0xff] 0.0
        %277 = vst [vmem:[#allocation2 + $0x28] sm:$0xff] 0.0
        %278 = vst [vmem:[#allocation2 + $0x30] sm:$0xff] 0.0
        %279 = vst [vmem:[#allocation2 + $0x38] sm:$0xff] 0.0
        %280 = vst [vmem:[#allocation2 + $0x40] sm:$0xff] 0.0
        %281 = vst [vmem:[#allocation2 + $0x48] sm:$0xff] 0.0
        %282 = vst [vmem:[#allocation2 + $0x50] sm:$0xff] 0.0
        %283 = vst [vmem:[#allocation2 + $0x58] sm:$0xff] 0.0
        %284 = vst [vmem:[#allocation2 + $0x60] sm:$0xff] 0.0
        %285 = vst [vmem:[#allocation2 + $0x68] sm:$0xff] 0.0
        %286 = vst [vmem:[#allocation2 + $0x70] sm:$0xff] 0.0
        %287 = vst [vmem:[#allocation2 + $0x78] sm:$0xff] 0.0
        %288 = vst [vmem:[#allocation2 + $0x80] sm:$0xff] 0.0
        %289 = vst [vmem:[#allocation2 + $0x88] sm:$0xff] 0.0
        %290 = vst [vmem:[#allocation2 + $0x90] sm:$0xff] 0.0
        %291 = vst [vmem:[#allocation2 + $0x98] sm:$0xff] 0.0
        %292 = vst [vmem:[#allocation2 + $0xa0] sm:$0xff] 0.0
        %293 = vst [vmem:[#allocation2 + $0xa8] sm:$0xff] 0.0
        %294 = vst [vmem:[#allocation2 + $0xb0] sm:$0xff] 0.0
        %295 = vst [vmem:[#allocation2 + $0xb8] sm:$0xff] 0.0
        %296 = vst [vmem:[#allocation2 + $0xc0] sm:$0xff] 0.0
        %297 = vst [vmem:[#allocation2 + $0xc8] sm:$0xff] 0.0
        %298 = vst [vmem:[#allocation2 + $0xd0] sm:$0xff] 0.0
        %299 = vst [vmem:[#allocation2 + $0xd8] sm:$0xff] 0.0
        %300 = vst [vmem:[#allocation2 + $0xe0] sm:$0xff] 0.0
        %301 = vst [vmem:[#allocation2 + $0xe8] sm:$0xff] 0.0
        %302 = vst [vmem:[#allocation2 + $0xf0] sm:$0xff] 0.0
        %303 = vst [vmem:[#allocation2 + $0xf8] sm:$0xff] 0.0
        %304 = vst [vmem:[#allocation2 + $0x100] sm:$0xff] 0.0
        %305 = vst [vmem:[#allocation2 + $0x108] sm:$0xff] 0.0
        %306 = vst [vmem:[#allocation2 + $0x110] sm:$0xff] 0.0
        %307 = vst [vmem:[#allocation2 + $0x118] sm:$0xff] 0.0
        %308 = vst [vmem:[#allocation2 + $0x120] sm:$0xff] 0.0
        %309 = vst [vmem:[#allocation2 + $0x128] sm:$0xff] 0.0
        %310 = vst [vmem:[#allocation2 + $0x130] sm:$0xff] 0.0
        %311 = vst [vmem:[#allocation2 + $0x138] sm:$0xff] 0.0
        %312 = vst [vmem:[#allocation2 + $0x140] sm:$0xff] 0.0
        %313 = vst [vmem:[#allocation2 + $0x148] sm:$0xff] 0.0
        %314 = vst [vmem:[#allocation2 + $0x150] sm:$0xff] 0.0
        %315 = vst [vmem:[#allocation2 + $0x158] sm:$0xff] 0.0
        %316 = vst [vmem:[#allocation2 + $0x160] sm:$0xff] 0.0
        %317 = vst [vmem:[#allocation2 + $0x168] sm:$0xff] 0.0
        %318 = vst [vmem:[#allocation2 + $0x170] sm:$0xff] 0.0
        %319 = vst [vmem:[#allocation2 + $0x178] sm:$0xff] 0.0
        %320 = vst [vmem:[#allocation2 + $0x180] sm:$0xff] 0.0
        %321 = vst [vmem:[#allocation2 + $0x188] sm:$0xff] 0.0
        %322 = vst [vmem:[#allocation2 + $0x190] sm:$0xff] 0.0
        %323 = vst [vmem:[#allocation2 + $0x198] sm:$0xff] 0.0
        %324 = vst [vmem:[#allocation2 + $0x1a0] sm:$0xff] 0.0
        %325 = vst [vmem:[#allocation2 + $0x1a8] sm:$0xff] 0.0
        %326 = vst [vmem:[#allocation2 + $0x1b0] sm:$0xff] 0.0
        %327 = vst [vmem:[#allocation2 + $0x1b8] sm:$0xff] 0.0
        %328 = vst [vmem:[#allocation2 + $0x1c0] sm:$0xff] 0.0
        %329 = vst [vmem:[#allocation2 + $0x1c8] sm:$0xff] 0.0
        %330 = vst [vmem:[#allocation2 + $0x1d0] sm:$0xff] 0.0
        %331 = vst [vmem:[#allocation2 + $0x1d8] sm:$0xff] 0.0
        %332 = vst [vmem:[#allocation2 + $0x1e0] sm:$0xff] 0.0
        %333 = vst [vmem:[#allocation2 + $0x1e8] sm:$0xff] 0.0
        %334 = vst [vmem:[#allocation2 + $0x1f0] sm:$0xff] 0.0
        %335 = vst [vmem:[#allocation2 + $0x1f8] sm:$0xff] 0.0
      $region36: #{decoder_forward.7} parent=31 // pred_fallthru
        _
      %v336 = vld [vmem:[#allocation2] sm:$0xff]
      %v337 = vld [vmem:[#allocation2 + $0x8] sm:$0xff]
      %v338 = vld [vmem:[#allocation2 + $0x10] sm:$0xff]
      %v339 = vld [vmem:[#allocation2 + $0x18] sm:$0xff]
      %v340 = vld [vmem:[#allocation2 + $0x20] sm:$0xff]
      %v341 = vld [vmem:[#allocation2 + $0x28] sm:$0xff]
      %v342 = vld [vmem:[#allocation2 + $0x30] sm:$0xff]
      %v343 = vld [vmem:[#allocation2 + $0x38] sm:$0xff]
      %v344 = vld [vmem:[#allocation2 + $0x40] sm:$0xff]
      %v345 = vld [vmem:[#allocation2 + $0x48] sm:$0xff]
      %v346 = vld [vmem:[#allocation2 + $0x50] sm:$0xff]
      %v347 = vld [vmem:[#allocation2 + $0x58] sm:$0xff]
      %v348 = vld [vmem:[#allocation2 + $0x60] sm:$0xff]
      %v349 = vld [vmem:[#allocation2 + $0x68] sm:$0xff]
      %v350 = vld [vmem:[#allocation2 + $0x70] sm:$0xff]
      %v351 = vld [vmem:[#allocation2 + $0x78] sm:$0xff]
      %v352 = vld [vmem:[#allocation2 + $0x80] sm:$0xff]
      %v353 = vld [vmem:[#allocation2 + $0x88] sm:$0xff]
      %v354 = vld [vmem:[#allocation2 + $0x90] sm:$0xff]
      %v355 = vld [vmem:[#allocation2 + $0x98] sm:$0xff]
      %v356 = vld [vmem:[#allocation2 + $0xa0] sm:$0xff]
      %v357 = vld [vmem:[#allocation2 + $0xa8] sm:$0xff]
      %v358 = vld [vmem:[#allocation2 + $0xb0] sm:$0xff]
      %v359 = vld [vmem:[#allocation2 + $0xb8] sm:$0xff]
      %v360 = vld [vmem:[#allocation2 + $0xc0] sm:$0xff]
      %v361 = vld [vmem:[#allocation2 + $0xc8] sm:$0xff]
      %v362 = vld [vmem:[#allocation2 + $0xd0] sm:$0xff]
      %v363 = vld [vmem:[#allocation2 + $0xd8] sm:$0xff]
      %v364 = vld [vmem:[#allocation2 + $0xe0] sm:$0xff]
      %v365 = vld [vmem:[#allocation2 + $0xe8] sm:$0xff]
      %v366 = vld [vmem:[#allocation2 + $0xf0] sm:$0xff]
      %v367 = vld [vmem:[#allocation2 + $0xf8] sm:$0xff]
      %v368 = vld [vmem:[#allocation2 + $0x100] sm:$0xff]
      %v369 = vld [vmem:[#allocation2 + $0x108] sm:$0xff]
      %v370 = vld [vmem:[#allocation2 + $0x110] sm:$0xff]
      %v371 = vld [vmem:[#allocation2 + $0x118] sm:$0xff]
      %v372 = vld [vmem:[#allocation2 + $0x120] sm:$0xff]
      %v373 = vld [vmem:[#allocation2 + $0x128] sm:$0xff]
      %v374 = vld [vmem:[#allocation2 + $0x130] sm:$0xff]
      %v375 = vld [vmem:[#allocation2 + $0x138] sm:$0xff]
      %v376 = vld [vmem:[#allocation2 + $0x140] sm:$0xff]
      %v377 = vld [vmem:[#allocation2 + $0x148] sm:$0xff]
      %v378 = vld [vmem:[#allocation2 + $0x150] sm:$0xff]
      %v379 = vld [vmem:[#allocation2 + $0x158] sm:$0xff]
      %v380 = vld [vmem:[#allocation2 + $0x160] sm:$0xff]
      %v381 = vld [vmem:[#allocation2 + $0x168] sm:$0xff]
      %v382 = vld [vmem:[#allocation2 + $0x170] sm:$0xff]
      %v383 = vld [vmem:[#allocation2 + $0x178] sm:$0xff]
      %v384 = vld [vmem:[#allocation2 + $0x180] sm:$0xff]
      %v385 = vld [vmem:[#allocation2 + $0x188] sm:$0xff]
      %v386 = vld [vmem:[#allocation2 + $0x190] sm:$0xff]
      %v387 = vld [vmem:[#allocation2 + $0x198] sm:$0xff]
      %v388 = vld [vmem:[#allocation2 + $0x1a0] sm:$0xff]
      %v389 = vld [vmem:[#allocation2 + $0x1a8] sm:$0xff]
      %v390 = vld [vmem:[#allocation2 + $0x1b0] sm:$0xff]
      %v391 = vld [vmem:[#allocation2 + $0x1b8] sm:$0xff]
      %v392 = vld [vmem:[#allocation2 + $0x1c0] sm:$0xff]
      %v393 = vld [vmem:[#allocation2 + $0x1c8] sm:$0xff]
      %v394 = vld [vmem:[#allocation2 + $0x1d0] sm:$0xff]
      %v395 = vld [vmem:[#allocation2 + $0x1d8] sm:$0xff]
      %v396 = vld [vmem:[#allocation2 + $0x1e0] sm:$0xff]
      %v397 = vld [vmem:[#allocation2 + $0x1e8] sm:$0xff]
      %v398 = vld [vmem:[#allocation2 + $0x1f0] sm:$0xff]
      %v399 = vld [vmem:[#allocation2 + $0x1f8] sm:$0xff]
      %v400 = vld [vmem:[%s243] sm:$0xff]
      %v401 = vld [vmem:[%s243 + $0x8] sm:$0xff]
      %v402 = vld [vmem:[%s243 + $0x10] sm:$0xff]
      %v403 = vld [vmem:[%s243 + $0x18] sm:$0xff]
      %v404 = vld [vmem:[%s243 + $0x20] sm:$0xff]
      %v405 = vld [vmem:[%s243 + $0x28] sm:$0xff]
      %v406 = vld [vmem:[%s243 + $0x30] sm:$0xff]
      %v407 = vld [vmem:[%s243 + $0x38] sm:$0xff]
      %v408 = vld [vmem:[%s243 + $0x40] sm:$0xff]
      %v409 = vld [vmem:[%s243 + $0x48] sm:$0xff]
      %v410 = vld [vmem:[%s243 + $0x50] sm:$0xff]
      %v411 = vld [vmem:[%s243 + $0x58] sm:$0xff]
      %v412 = vld [vmem:[%s243 + $0x60] sm:$0xff]
      %v413 = vld [vmem:[%s243 + $0x68] sm:$0xff]
      %v414 = vld [vmem:[%s243 + $0x70] sm:$0xff]
      %v415 = vld [vmem:[%s243 + $0x78] sm:$0xff]
      %v416 = vld [vmem:[%s243 + $0x80] sm:$0xff]
      %v417 = vld [vmem:[%s243 + $0x88] sm:$0xff]
      %v418 = vld [vmem:[%s243 + $0x90] sm:$0xff]
      %v419 = vld [vmem:[%s243 + $0x98] sm:$0xff]
      %v420 = vld [vmem:[%s243 + $0xa0] sm:$0xff]
      %v421 = vld [vmem:[%s243 + $0xa8] sm:$0xff]
      %v422 = vld [vmem:[%s243 + $0xb0] sm:$0xff]
      %v423 = vld [vmem:[%s243 + $0xb8] sm:$0xff]
      %v424 = vld [vmem:[%s243 + $0xc0] sm:$0xff]
      %v425 = vld [vmem:[%s243 + $0xc8] sm:$0xff]
      %v426 = vld [vmem:[%s243 + $0xd0] sm:$0xff]
      %v427 = vld [vmem:[%s243 + $0xd8] sm:$0xff]
      %v428 = vld [vmem:[%s243 + $0xe0] sm:$0xff]
      %v429 = vld [vmem:[%s243 + $0xe8] sm:$0xff]
      %v430 = vld [vmem:[%s243 + $0xf0] sm:$0xff]
      %v431 = vld [vmem:[%s243 + $0xf8] sm:$0xff]
      %v432 = vld [vmem:[%s243 + $0x100] sm:$0xff]
      %v433 = vld [vmem:[%s243 + $0x108] sm:$0xff]
      %v434 = vld [vmem:[%s243 + $0x110] sm:$0xff]
      %v435 = vld [vmem:[%s243 + $0x118] sm:$0xff]
      %v436 = vld [vmem:[%s243 + $0x120] sm:$0xff]
      %v437 = vld [vmem:[%s243 + $0x128] sm:$0xff]
      %v438 = vld [vmem:[%s243 + $0x130] sm:$0xff]
      %v439 = vld [vmem:[%s243 + $0x138] sm:$0xff]
      %v440 = vld [vmem:[%s243 + $0x140] sm:$0xff]
      %v441 = vld [vmem:[%s243 + $0x148] sm:$0xff]
      %v442 = vld [vmem:[%s243 + $0x150] sm:$0xff]
      %v443 = vld [vmem:[%s243 + $0x158] sm:$0xff]
      %v444 = vld [vmem:[%s243 + $0x160] sm:$0xff]
      %v445 = vld [vmem:[%s243 + $0x168] sm:$0xff]
      %v446 = vld [vmem:[%s243 + $0x170] sm:$0xff]
      %v447 = vld [vmem:[%s243 + $0x178] sm:$0xff]
      %v448 = vld [vmem:[%s243 + $0x180] sm:$0xff]
      %v449 = vld [vmem:[%s243 + $0x188] sm:$0xff]
      %v450 = vld [vmem:[%s243 + $0x190] sm:$0xff]
      %v451 = vld [vmem:[%s243 + $0x198] sm:$0xff]
      %v452 = vld [vmem:[%s243 + $0x1a0] sm:$0xff]
      %v453 = vld [vmem:[%s243 + $0x1a8] sm:$0xff]
      %v454 = vld [vmem:[%s243 + $0x1b0] sm:$0xff]
      %v455 = vld [vmem:[%s243 + $0x1b8] sm:$0xff]
      %v456 = vld [vmem:[%s243 + $0x1c0] sm:$0xff]
      %v457 = vld [vmem:[%s243 + $0x1c8] sm:$0xff]
      %v458 = vld [vmem:[%s243 + $0x1d0] sm:$0xff]
      %v459 = vld [vmem:[%s243 + $0x1d8] sm:$0xff]
      %v460 = vld [vmem:[%s243 + $0x1e0] sm:$0xff]
      %v461 = vld [vmem:[%s243 + $0x1e8] sm:$0xff]
      %v462 = vld [vmem:[%s243 + $0x1f0] sm:$0xff]
      %v463 = vld [vmem:[%s243 + $0x1f8] sm:$0xff]
      %v464 = vld [vmem:[%s243 + $0x200] sm:$0xff]
      %v465 = vld [vmem:[%s243 + $0x208] sm:$0xff]
      %v466 = vld [vmem:[%s243 + $0x210] sm:$0xff]
      %v467 = vld [vmem:[%s243 + $0x218] sm:$0xff]
      %v468 = vld [vmem:[%s243 + $0x220] sm:$0xff]
      %v469 = vld [vmem:[%s243 + $0x228] sm:$0xff]
      %v470 = vld [vmem:[%s243 + $0x230] sm:$0xff]
      %v471 = vld [vmem:[%s243 + $0x238] sm:$0xff]
      %v472 = vld [vmem:[%s243 + $0x240] sm:$0xff]
      %v473 = vld [vmem:[%s243 + $0x248] sm:$0xff]
      %v474 = vld [vmem:[%s243 + $0x250] sm:$0xff]
      %v475 = vld [vmem:[%s243 + $0x258] sm:$0xff]
      %v476 = vld [vmem:[%s243 + $0x260] sm:$0xff]
      %v477 = vld [vmem:[%s243 + $0x268] sm:$0xff]
      %v478 = vld [vmem:[%s243 + $0x270] sm:$0xff]
      %v479 = vld [vmem:[%s243 + $0x278] sm:$0xff]
      %v480 = vld [vmem:[%s243 + $0x280] sm:$0xff]
      %v481 = vld [vmem:[%s243 + $0x288] sm:$0xff]
      %v482 = vld [vmem:[%s243 + $0x290] sm:$0xff]
      %v483 = vld [vmem:[%s243 + $0x298] sm:$0xff]
      %v484 = vld [vmem:[%s243 + $0x2a0] sm:$0xff]
      %v485 = vld [vmem:[%s243 + $0x2a8] sm:$0xff]
      %v486 = vld [vmem:[%s243 + $0x2b0] sm:$0xff]
      %v487 = vld [vmem:[%s243 + $0x2b8] sm:$0xff]
      %v488 = vld [vmem:[%s243 + $0x2c0] sm:$0xff]
      %v489 = vld [vmem:[%s243 + $0x2c8] sm:$0xff]
      %v490 = vld [vmem:[%s243 + $0x2d0] sm:$0xff]
      %v491 = vld [vmem:[%s243 + $0x2d8] sm:$0xff]
      %v492 = vld [vmem:[%s243 + $0x2e0] sm:$0xff]
      %v493 = vld [vmem:[%s243 + $0x2e8] sm:$0xff]
      %v494 = vld [vmem:[%s243 + $0x2f0] sm:$0xff]
      %v495 = vld [vmem:[%s243 + $0x2f8] sm:$0xff]
      %v496 = vld [vmem:[%s243 + $0x300] sm:$0xff]
      %v497 = vld [vmem:[%s243 + $0x308] sm:$0xff]
      %v498 = vld [vmem:[%s243 + $0x310] sm:$0xff]
      %v499 = vld [vmem:[%s243 + $0x318] sm:$0xff]
      %v500 = vld [vmem:[%s243 + $0x320] sm:$0xff]
      %v501 = vld [vmem:[%s243 + $0x328] sm:$0xff]
      %v502 = vld [vmem:[%s243 + $0x330] sm:$0xff]
      %v503 = vld [vmem:[%s243 + $0x338] sm:$0xff]
      %v504 = vld [vmem:[%s243 + $0x340] sm:$0xff]
      %v505 = vld [vmem:[%s243 + $0x348] sm:$0xff]
      %v506 = vld [vmem:[%s243 + $0x350] sm:$0xff]
      %v507 = vld [vmem:[%s243 + $0x358] sm:$0xff]
      %v508 = vld [vmem:[%s243 + $0x360] sm:$0xff]
      %v509 = vld [vmem:[%s243 + $0x368] sm:$0xff]
      %v510 = vld [vmem:[%s243 + $0x370] sm:$0xff]
      %v511 = vld [vmem:[%s243 + $0x378] sm:$0xff]
      %v512 = vld [vmem:[%s243 + $0x380] sm:$0xff]
      %v513 = vld [vmem:[%s243 + $0x388] sm:$0xff]
      %v514 = vld [vmem:[%s243 + $0x390] sm:$0xff]
      %v515 = vld [vmem:[%s243 + $0x398] sm:$0xff]
      %v516 = vld [vmem:[%s243 + $0x3a0] sm:$0xff]
      %v517 = vld [vmem:[%s243 + $0x3a8] sm:$0xff]
      %v518 = vld [vmem:[%s243 + $0x3b0] sm:$0xff]
      %v519 = vld [vmem:[%s243 + $0x3b8] sm:$0xff]
      %v520 = vld [vmem:[%s243 + $0x3c0] sm:$0xff]
      %v521 = vld [vmem:[%s243 + $0x3c8] sm:$0xff]
      %v522 = vld [vmem:[%s243 + $0x3d0] sm:$0xff]
      %v523 = vld [vmem:[%s243 + $0x3d8] sm:$0xff]
      %v524 = vld [vmem:[%s243 + $0x3e0] sm:$0xff]
      %v525 = vld [vmem:[%s243 + $0x3e8] sm:$0xff]
      %v526 = vld [vmem:[%s243 + $0x3f0] sm:$0xff]
      %v527 = vld [vmem:[%s243 + $0x3f8] sm:$0xff]
      %v528 = vld [vmem:[%s243 + $0x400] sm:$0xff]
      %v529 = vld [vmem:[%s243 + $0x408] sm:$0xff]
      %v530 = vld [vmem:[%s243 + $0x410] sm:$0xff]
      %v531 = vld [vmem:[%s243 + $0x418] sm:$0xff]
      %v532 = vld [vmem:[%s243 + $0x420] sm:$0xff]
      %v533 = vld [vmem:[%s243 + $0x428] sm:$0xff]
      %v534 = vld [vmem:[%s243 + $0x430] sm:$0xff]
      %v535 = vld [vmem:[%s243 + $0x438] sm:$0xff]
      %v536 = vld [vmem:[%s243 + $0x440] sm:$0xff]
      %v537 = vld [vmem:[%s243 + $0x448] sm:$0xff]
      %v538 = vld [vmem:[%s243 + $0x450] sm:$0xff]
      %v539 = vld [vmem:[%s243 + $0x458] sm:$0xff]
      %v540 = vld [vmem:[%s243 + $0x460] sm:$0xff]
      %v541 = vld [vmem:[%s243 + $0x468] sm:$0xff]
      %v542 = vld [vmem:[%s243 + $0x470] sm:$0xff]
      %v543 = vld [vmem:[%s243 + $0x478] sm:$0xff]
      %v544 = vld [vmem:[%s243 + $0x480] sm:$0xff]
      %v545 = vld [vmem:[%s243 + $0x488] sm:$0xff]
      %v546 = vld [vmem:[%s243 + $0x490] sm:$0xff]
      %v547 = vld [vmem:[%s243 + $0x498] sm:$0xff]
      %v548 = vld [vmem:[%s243 + $0x4a0] sm:$0xff]
      %v549 = vld [vmem:[%s243 + $0x4a8] sm:$0xff]
      %v550 = vld [vmem:[%s243 + $0x4b0] sm:$0xff]
      %v551 = vld [vmem:[%s243 + $0x4b8] sm:$0xff]
      %v552 = vld [vmem:[%s243 + $0x4c0] sm:$0xff]
      %v553 = vld [vmem:[%s243 + $0x4c8] sm:$0xff]
      %v554 = vld [vmem:[%s243 + $0x4d0] sm:$0xff]
      %v555 = vld [vmem:[%s243 + $0x4d8] sm:$0xff]
      %v556 = vld [vmem:[%s243 + $0x4e0] sm:$0xff]
      %v557 = vld [vmem:[%s243 + $0x4e8] sm:$0xff]
      %v558 = vld [vmem:[%s243 + $0x4f0] sm:$0xff]
      %v559 = vld [vmem:[%s243 + $0x4f8] sm:$0xff]
      %v560 = vld [vmem:[%s243 + $0x500] sm:$0xff]
      %v561 = vld [vmem:[%s243 + $0x508] sm:$0xff]
      %v562 = vld [vmem:[%s243 + $0x510] sm:$0xff]
      %v563 = vld [vmem:[%s243 + $0x518] sm:$0xff]
      %v564 = vld [vmem:[%s243 + $0x520] sm:$0xff]
      %v565 = vld [vmem:[%s243 + $0x528] sm:$0xff]
      %v566 = vld [vmem:[%s243 + $0x530] sm:$0xff]
      %v567 = vld [vmem:[%s243 + $0x538] sm:$0xff]
      %v568 = vld [vmem:[%s243 + $0x540] sm:$0xff]
      %v569 = vld [vmem:[%s243 + $0x548] sm:$0xff]
      %v570 = vld [vmem:[%s243 + $0x550] sm:$0xff]
      %v571 = vld [vmem:[%s243 + $0x558] sm:$0xff]
      %v572 = vld [vmem:[%s243 + $0x560] sm:$0xff]
      %v573 = vld [vmem:[%s243 + $0x568] sm:$0xff]
      %v574 = vld [vmem:[%s243 + $0x570] sm:$0xff]
      %v575 = vld [vmem:[%s243 + $0x578] sm:$0xff]
      %v576 = vld [vmem:[%s243 + $0x580] sm:$0xff]
      %v577 = vld [vmem:[%s243 + $0x588] sm:$0xff]
      %v578 = vld [vmem:[%s243 + $0x590] sm:$0xff]
      %v579 = vld [vmem:[%s243 + $0x598] sm:$0xff]
      %v580 = vld [vmem:[%s243 + $0x5a0] sm:$0xff]
      %v581 = vld [vmem:[%s243 + $0x5a8] sm:$0xff]
      %v582 = vld [vmem:[%s243 + $0x5b0] sm:$0xff]
      %v583 = vld [vmem:[%s243 + $0x5b8] sm:$0xff]
      %v584 = vld [vmem:[%s243 + $0x5c0] sm:$0xff]
      %v585 = vld [vmem:[%s243 + $0x5c8] sm:$0xff]
      %v586 = vld [vmem:[%s243 + $0x5d0] sm:$0xff]
      %v587 = vld [vmem:[%s243 + $0x5d8] sm:$0xff]
      %v588 = vld [vmem:[%s243 + $0x5e0] sm:$0xff]
      %v589 = vld [vmem:[%s243 + $0x5e8] sm:$0xff]
      %v590 = vld [vmem:[%s243 + $0x5f0] sm:$0xff]
      %v591 = vld [vmem:[%s243 + $0x5f8] sm:$0xff]
      %v592 = vld [vmem:[%s243 + $0x600] sm:$0xff]
      %v593 = vld [vmem:[%s243 + $0x608] sm:$0xff]
      %v594 = vld [vmem:[%s243 + $0x610] sm:$0xff]
      %v595 = vld [vmem:[%s243 + $0x618] sm:$0xff]
      %v596 = vld [vmem:[%s243 + $0x620] sm:$0xff]
      %v597 = vld [vmem:[%s243 + $0x628] sm:$0xff]
      %v598 = vld [vmem:[%s243 + $0x630] sm:$0xff]
      %v599 = vld [vmem:[%s243 + $0x638] sm:$0xff]
      %v600 = vld [vmem:[%s243 + $0x640] sm:$0xff]
      %v601 = vld [vmem:[%s243 + $0x648] sm:$0xff]
      %v602 = vld [vmem:[%s243 + $0x650] sm:$0xff]
      %v603 = vld [vmem:[%s243 + $0x658] sm:$0xff]
      %v604 = vld [vmem:[%s243 + $0x660] sm:$0xff]
      %v605 = vld [vmem:[%s243 + $0x668] sm:$0xff]
      %v606 = vld [vmem:[%s243 + $0x670] sm:$0xff]
      %v607 = vld [vmem:[%s243 + $0x678] sm:$0xff]
      %v608 = vld [vmem:[%s243 + $0x680] sm:$0xff]
      %v609 = vld [vmem:[%s243 + $0x688] sm:$0xff]
      %v610 = vld [vmem:[%s243 + $0x690] sm:$0xff]
      %v611 = vld [vmem:[%s243 + $0x698] sm:$0xff]
      %v612 = vld [vmem:[%s243 + $0x6a0] sm:$0xff]
      %v613 = vld [vmem:[%s243 + $0x6a8] sm:$0xff]
      %v614 = vld [vmem:[%s243 + $0x6b0] sm:$0xff]
      %v615 = vld [vmem:[%s243 + $0x6b8] sm:$0xff]
      %v616 = vld [vmem:[%s243 + $0x6c0] sm:$0xff]
      %v617 = vld [vmem:[%s243 + $0x6c8] sm:$0xff]
      %v618 = vld [vmem:[%s243 + $0x6d0] sm:$0xff]
      %v619 = vld [vmem:[%s243 + $0x6d8] sm:$0xff]
      %v620 = vld [vmem:[%s243 + $0x6e0] sm:$0xff]
      %v621 = vld [vmem:[%s243 + $0x6e8] sm:$0xff]
      %v622 = vld [vmem:[%s243 + $0x6f0] sm:$0xff]
      %v623 = vld [vmem:[%s243 + $0x6f8] sm:$0xff]
      %v624 = vld [vmem:[%s243 + $0x700] sm:$0xff]
      %v625 = vld [vmem:[%s243 + $0x708] sm:$0xff]
      %v626 = vld [vmem:[%s243 + $0x710] sm:$0xff]
      %v627 = vld [vmem:[%s243 + $0x718] sm:$0xff]
      %v628 = vld [vmem:[%s243 + $0x720] sm:$0xff]
      %v629 = vld [vmem:[%s243 + $0x728] sm:$0xff]
      %v630 = vld [vmem:[%s243 + $0x730] sm:$0xff]
      %v631 = vld [vmem:[%s243 + $0x738] sm:$0xff]
      %v632 = vld [vmem:[%s243 + $0x740] sm:$0xff]
      %v633 = vld [vmem:[%s243 + $0x748] sm:$0xff]
      %v634 = vld [vmem:[%s243 + $0x750] sm:$0xff]
      %v635 = vld [vmem:[%s243 + $0x758] sm:$0xff]
      %v636 = vld [vmem:[%s243 + $0x760] sm:$0xff]
      %v637 = vld [vmem:[%s243 + $0x768] sm:$0xff]
      %v638 = vld [vmem:[%s243 + $0x770] sm:$0xff]
      %v639 = vld [vmem:[%s243 + $0x778] sm:$0xff]
      %v640 = vld [vmem:[%s243 + $0x780] sm:$0xff]
      %v641 = vld [vmem:[%s243 + $0x788] sm:$0xff]
      %v642 = vld [vmem:[%s243 + $0x790] sm:$0xff]
      %v643 = vld [vmem:[%s243 + $0x798] sm:$0xff]
      %v644 = vld [vmem:[%s243 + $0x7a0] sm:$0xff]
      %v645 = vld [vmem:[%s243 + $0x7a8] sm:$0xff]
      %v646 = vld [vmem:[%s243 + $0x7b0] sm:$0xff]
      %v647 = vld [vmem:[%s243 + $0x7b8] sm:$0xff]
      %v648 = vld [vmem:[%s243 + $0x7c0] sm:$0xff]
      %v649 = vld [vmem:[%s243 + $0x7c8] sm:$0xff]
      %v650 = vld [vmem:[%s243 + $0x7d0] sm:$0xff]
      %v651 = vld [vmem:[%s243 + $0x7d8] sm:$0xff]
      %v652 = vld [vmem:[%s243 + $0x7e0] sm:$0xff]
      %v653 = vld [vmem:[%s243 + $0x7e8] sm:$0xff]
      %v654 = vld [vmem:[%s243 + $0x7f0] sm:$0xff]
      %v655 = vld [vmem:[%s243 + $0x7f8] sm:$0xff]
      %v656 = vld [vmem:[%s253] sm:$0xf]
      %v657 = vld [vmem:[%s253 + $0x4] sm:$0xf]
      %v658 = vld [vmem:[%s253 + $0x8] sm:$0xf]
      %v659 = vld [vmem:[%s253 + $0xc] sm:$0xf]
      %v660 = vld [vmem:[%s253 + $0x10] sm:$0xf]
      %v661 = vld [vmem:[%s253 + $0x14] sm:$0xf]
      %v662 = vld [vmem:[%s253 + $0x18] sm:$0xf]
      %v663 = vld [vmem:[%s253 + $0x1c] sm:$0xf]
      %v664 = vld [vmem:[%s253 + $0x20] sm:$0xf]
      %v665 = vld [vmem:[%s253 + $0x24] sm:$0xf]
      %v666 = vld [vmem:[%s253 + $0x28] sm:$0xf]
      %v667 = vld [vmem:[%s253 + $0x2c] sm:$0xf]
      %v668 = vld [vmem:[%s253 + $0x30] sm:$0xf]
      %v669 = vld [vmem:[%s253 + $0x34] sm:$0xf]
      %v670 = vld [vmem:[%s253 + $0x38] sm:$0xf]
      %v671 = vld [vmem:[%s253 + $0x3c] sm:$0xf]
      %v672 = vld [vmem:[%s253 + $0x40] sm:$0xf]
      %v673 = vld [vmem:[%s253 + $0x44] sm:$0xf]
      %v674 = vld [vmem:[%s253 + $0x48] sm:$0xf]
      %v675 = vld [vmem:[%s253 + $0x4c] sm:$0xf]
      %v676 = vld [vmem:[%s253 + $0x50] sm:$0xf]
      %v677 = vld [vmem:[%s253 + $0x54] sm:$0xf]
      %v678 = vld [vmem:[%s253 + $0x58] sm:$0xf]
      %v679 = vld [vmem:[%s253 + $0x5c] sm:$0xf]
      %v680 = vld [vmem:[%s253 + $0x60] sm:$0xf]
      %v681 = vld [vmem:[%s253 + $0x64] sm:$0xf]
      %v682 = vld [vmem:[%s253 + $0x68] sm:$0xf]
      %v683 = vld [vmem:[%s253 + $0x6c] sm:$0xf]
      %v684 = vld [vmem:[%s253 + $0x70] sm:$0xf]
      %v685 = vld [vmem:[%s253 + $0x74] sm:$0xf]
      %v686 = vld [vmem:[%s253 + $0x78] sm:$0xf]
      %v687 = vld [vmem:[%s253 + $0x7c] sm:$0xf]
      %v688 = vld [vmem:[%s253 + $0x80] sm:$0xf]
      %v689 = vld [vmem:[%s253 + $0x84] sm:$0xf]
      %v690 = vld [vmem:[%s253 + $0x88] sm:$0xf]
      %v691 = vld [vmem:[%s253 + $0x8c] sm:$0xf]
      %v692 = vld [vmem:[%s253 + $0x90] sm:$0xf]
      %v693 = vld [vmem:[%s253 + $0x94] sm:$0xf]
      %v694 = vld [vmem:[%s253 + $0x98] sm:$0xf]
      %v695 = vld [vmem:[%s253 + $0x9c] sm:$0xf]
      %v696 = vld [vmem:[%s253 + $0xa0] sm:$0xf]
      %v697 = vld [vmem:[%s253 + $0xa4] sm:$0xf]
      %v698 = vld [vmem:[%s253 + $0xa8] sm:$0xf]
      %v699 = vld [vmem:[%s253 + $0xac] sm:$0xf]
      %v700 = vld [vmem:[%s253 + $0xb0] sm:$0xf]
      %v701 = vld [vmem:[%s253 + $0xb4] sm:$0xf]
      %v702 = vld [vmem:[%s253 + $0xb8] sm:$0xf]
      %v703 = vld [vmem:[%s253 + $0xbc] sm:$0xf]
      %v704 = vld [vmem:[%s253 + $0xc0] sm:$0xf]
      %v705 = vld [vmem:[%s253 + $0xc4] sm:$0xf]
      %v706 = vld [vmem:[%s253 + $0xc8] sm:$0xf]
      %v707 = vld [vmem:[%s253 + $0xcc] sm:$0xf]
      %v708 = vld [vmem:[%s253 + $0xd0] sm:$0xf]
      %v709 = vld [vmem:[%s253 + $0xd4] sm:$0xf]
      %v710 = vld [vmem:[%s253 + $0xd8] sm:$0xf]
      %v711 = vld [vmem:[%s253 + $0xdc] sm:$0xf]
      %v712 = vld [vmem:[%s253 + $0xe0] sm:$0xf]
      %v713 = vld [vmem:[%s253 + $0xe4] sm:$0xf]
      %v714 = vld [vmem:[%s253 + $0xe8] sm:$0xf]
      %v715 = vld [vmem:[%s253 + $0xec] sm:$0xf]
      %v716 = vld [vmem:[%s253 + $0xf0] sm:$0xf]
      %v717 = vld [vmem:[%s253 + $0xf4] sm:$0xf]
      %v718 = vld [vmem:[%s253 + $0xf8] sm:$0xf]
      %v719 = vld [vmem:[%s253 + $0xfc] sm:$0xf]
      %v720 = vld [vmem:[%s253 + $0x100] sm:$0xf]
      %v721 = vld [vmem:[%s253 + $0x104] sm:$0xf]
      %v722 = vld [vmem:[%s253 + $0x108] sm:$0xf]
      %v723 = vld [vmem:[%s253 + $0x10c] sm:$0xf]
      %v724 = vld [vmem:[%s253 + $0x110] sm:$0xf]
      %v725 = vld [vmem:[%s253 + $0x114] sm:$0xf]
      %v726 = vld [vmem:[%s253 + $0x118] sm:$0xf]
      %v727 = vld [vmem:[%s253 + $0x11c] sm:$0xf]
      %v728 = vld [vmem:[%s253 + $0x120] sm:$0xf]
      %v729 = vld [vmem:[%s253 + $0x124] sm:$0xf]
      %v730 = vld [vmem:[%s253 + $0x128] sm:$0xf]
      %v731 = vld [vmem:[%s253 + $0x12c] sm:$0xf]
      %v732 = vld [vmem:[%s253 + $0x130] sm:$0xf]
      %v733 = vld [vmem:[%s253 + $0x134] sm:$0xf]
      %v734 = vld [vmem:[%s253 + $0x138] sm:$0xf]
      %v735 = vld [vmem:[%s253 + $0x13c] sm:$0xf]
      %v736 = vld [vmem:[%s253 + $0x140] sm:$0xf]
      %v737 = vld [vmem:[%s253 + $0x144] sm:$0xf]
      %v738 = vld [vmem:[%s253 + $0x148] sm:$0xf]
      %v739 = vld [vmem:[%s253 + $0x14c] sm:$0xf]
      %v740 = vld [vmem:[%s253 + $0x150] sm:$0xf]
      %v741 = vld [vmem:[%s253 + $0x154] sm:$0xf]
      %v742 = vld [vmem:[%s253 + $0x158] sm:$0xf]
      %v743 = vld [vmem:[%s253 + $0x15c] sm:$0xf]
      %v744 = vld [vmem:[%s253 + $0x160] sm:$0xf]
      %v745 = vld [vmem:[%s253 + $0x164] sm:$0xf]
      %v746 = vld [vmem:[%s253 + $0x168] sm:$0xf]
      %v747 = vld [vmem:[%s253 + $0x16c] sm:$0xf]
      %v748 = vld [vmem:[%s253 + $0x170] sm:$0xf]
      %v749 = vld [vmem:[%s253 + $0x174] sm:$0xf]
      %v750 = vld [vmem:[%s253 + $0x178] sm:$0xf]
      %v751 = vld [vmem:[%s253 + $0x17c] sm:$0xf]
      %v752 = vld [vmem:[%s253 + $0x180] sm:$0xf]
      %v753 = vld [vmem:[%s253 + $0x184] sm:$0xf]
      %v754 = vld [vmem:[%s253 + $0x188] sm:$0xf]
      %v755 = vld [vmem:[%s253 + $0x18c] sm:$0xf]
      %v756 = vld [vmem:[%s253 + $0x190] sm:$0xf]
      %v757 = vld [vmem:[%s253 + $0x194] sm:$0xf]
      %v758 = vld [vmem:[%s253 + $0x198] sm:$0xf]
      %v759 = vld [vmem:[%s253 + $0x19c] sm:$0xf]
      %v760 = vld [vmem:[%s253 + $0x1a0] sm:$0xf]
      %v761 = vld [vmem:[%s253 + $0x1a4] sm:$0xf]
      %v762 = vld [vmem:[%s253 + $0x1a8] sm:$0xf]
      %v763 = vld [vmem:[%s253 + $0x1ac] sm:$0xf]
      %v764 = vld [vmem:[%s253 + $0x1b0] sm:$0xf]
      %v765 = vld [vmem:[%s253 + $0x1b4] sm:$0xf]
      %v766 = vld [vmem:[%s253 + $0x1b8] sm:$0xf]
      %v767 = vld [vmem:[%s253 + $0x1bc] sm:$0xf]
      %v768 = vld [vmem:[%s253 + $0x1c0] sm:$0xf]
      %v769 = vld [vmem:[%s253 + $0x1c4] sm:$0xf]
      %v770 = vld [vmem:[%s253 + $0x1c8] sm:$0xf]
      %v771 = vld [vmem:[%s253 + $0x1cc] sm:$0xf]
      %v772 = vld [vmem:[%s253 + $0x1d0] sm:$0xf]
      %v773 = vld [vmem:[%s253 + $0x1d4] sm:$0xf]
      %v774 = vld [vmem:[%s253 + $0x1d8] sm:$0xf]
      %v775 = vld [vmem:[%s253 + $0x1dc] sm:$0xf]
      %v776 = vld [vmem:[%s253 + $0x1e0] sm:$0xf]
      %v777 = vld [vmem:[%s253 + $0x1e4] sm:$0xf]
      %v778 = vld [vmem:[%s253 + $0x1e8] sm:$0xf]
      %v779 = vld [vmem:[%s253 + $0x1ec] sm:$0xf]
      %v780 = vld [vmem:[%s253 + $0x1f0] sm:$0xf]
      %v781 = vld [vmem:[%s253 + $0x1f4] sm:$0xf]
      %v782 = vld [vmem:[%s253 + $0x1f8] sm:$0xf]
      %v783 = vld [vmem:[%s253 + $0x1fc] sm:$0xf]
      %v1040 = vunpack.c.l.b16 %v400
      %v1041 = vunpack.c.h.b16 %v400
      %v1042 = vunpack.c.l.b16 %v401
      %v1043 = vunpack.c.h.b16 %v401
      %v1044 = vunpack.c.l.b16 %v402
      %v1045 = vunpack.c.h.b16 %v402
      %v1046 = vunpack.c.l.b16 %v403
      %v1047 = vunpack.c.h.b16 %v403
      %v1048 = vunpack.c.l.b16 %v404
      %v1049 = vunpack.c.h.b16 %v404
      %v1050 = vunpack.c.l.b16 %v405
      %v1051 = vunpack.c.h.b16 %v405
      %v1052 = vunpack.c.l.b16 %v406
      %v1053 = vunpack.c.h.b16 %v406
      %v1054 = vunpack.c.l.b16 %v407
      %v1055 = vunpack.c.h.b16 %v407
      %v1056 = vunpack.c.l.b16 %v408
      %v1057 = vunpack.c.h.b16 %v408
      %v1058 = vunpack.c.l.b16 %v409
      %v1059 = vunpack.c.h.b16 %v409
      %v1060 = vunpack.c.l.b16 %v410
      %v1061 = vunpack.c.h.b16 %v410
      %v1062 = vunpack.c.l.b16 %v411
      %v1063 = vunpack.c.h.b16 %v411
      %v1064 = vunpack.c.l.b16 %v412
      %v1065 = vunpack.c.h.b16 %v412
      %v1066 = vunpack.c.l.b16 %v413
      %v1067 = vunpack.c.h.b16 %v413
      %v1068 = vunpack.c.l.b16 %v414
      %v1069 = vunpack.c.h.b16 %v414
      %v1070 = vunpack.c.l.b16 %v415
      %v1071 = vunpack.c.h.b16 %v415
      %v1072 = vunpack.c.l.b16 %v416
      %v1073 = vunpack.c.h.b16 %v416
      %v1074 = vunpack.c.l.b16 %v417
      %v1075 = vunpack.c.h.b16 %v417
      %v1076 = vunpack.c.l.b16 %v418
      %v1077 = vunpack.c.h.b16 %v418
      %v1078 = vunpack.c.l.b16 %v419
      %v1079 = vunpack.c.h.b16 %v419
      %v1080 = vunpack.c.l.b16 %v420
      %v1081 = vunpack.c.h.b16 %v420
      %v1082 = vunpack.c.l.b16 %v421
      %v1083 = vunpack.c.h.b16 %v421
      %v1084 = vunpack.c.l.b16 %v422
      %v1085 = vunpack.c.h.b16 %v422
      %v1086 = vunpack.c.l.b16 %v423
      %v1087 = vunpack.c.h.b16 %v423
      %v1088 = vunpack.c.l.b16 %v424
      %v1089 = vunpack.c.h.b16 %v424
      %v1090 = vunpack.c.l.b16 %v425
      %v1091 = vunpack.c.h.b16 %v425
      %v1092 = vunpack.c.l.b16 %v426
      %v1093 = vunpack.c.h.b16 %v426
      %v1094 = vunpack.c.l.b16 %v427
      %v1095 = vunpack.c.h.b16 %v427
      %v1096 = vunpack.c.l.b16 %v428
      %v1097 = vunpack.c.h.b16 %v428
      %v1098 = vunpack.c.l.b16 %v429
      %v1099 = vunpack.c.h.b16 %v429
      %v1100 = vunpack.c.l.b16 %v430
      %v1101 = vunpack.c.h.b16 %v430
      %v1102 = vunpack.c.l.b16 %v431
      %v1103 = vunpack.c.h.b16 %v431
      %v1104 = vunpack.c.l.b16 %v432
      %v1105 = vunpack.c.h.b16 %v432
      %v1106 = vunpack.c.l.b16 %v433
      %v1107 = vunpack.c.h.b16 %v433
      %v1108 = vunpack.c.l.b16 %v434
      %v1109 = vunpack.c.h.b16 %v434
      %v1110 = vunpack.c.l.b16 %v435
      %v1111 = vunpack.c.h.b16 %v435
      %v1112 = vunpack.c.l.b16 %v436
      %v1113 = vunpack.c.h.b16 %v436
      %v1114 = vunpack.c.l.b16 %v437
      %v1115 = vunpack.c.h.b16 %v437
      %v1116 = vunpack.c.l.b16 %v438
      %v1117 = vunpack.c.h.b16 %v438
      %v1118 = vunpack.c.l.b16 %v439
      %v1119 = vunpack.c.h.b16 %v439
      %v1120 = vunpack.c.l.b16 %v440
      %v1121 = vunpack.c.h.b16 %v440
      %v1122 = vunpack.c.l.b16 %v441
      %v1123 = vunpack.c.h.b16 %v441
      %v1124 = vunpack.c.l.b16 %v442
      %v1125 = vunpack.c.h.b16 %v442
      %v1126 = vunpack.c.l.b16 %v443
      %v1127 = vunpack.c.h.b16 %v443
      %v1128 = vunpack.c.l.b16 %v444
      %v1129 = vunpack.c.h.b16 %v444
      %v1130 = vunpack.c.l.b16 %v445
      %v1131 = vunpack.c.h.b16 %v445
      %v1132 = vunpack.c.l.b16 %v446
      %v1133 = vunpack.c.h.b16 %v446
      %v1134 = vunpack.c.l.b16 %v447
      %v1135 = vunpack.c.h.b16 %v447
      %v1136 = vunpack.c.l.b16 %v448
      %v1137 = vunpack.c.h.b16 %v448
      %v1138 = vunpack.c.l.b16 %v449
      %v1139 = vunpack.c.h.b16 %v449
      %v1140 = vunpack.c.l.b16 %v450
      %v1141 = vunpack.c.h.b16 %v450
      %v1142 = vunpack.c.l.b16 %v451
      %v1143 = vunpack.c.h.b16 %v451
      %v1144 = vunpack.c.l.b16 %v452
      %v1145 = vunpack.c.h.b16 %v452
      %v1146 = vunpack.c.l.b16 %v453
      %v1147 = vunpack.c.h.b16 %v453
      %v1148 = vunpack.c.l.b16 %v454
      %v1149 = vunpack.c.h.b16 %v454
      %v1150 = vunpack.c.l.b16 %v455
      %v1151 = vunpack.c.h.b16 %v455
      %v1152 = vunpack.c.l.b16 %v456
      %v1153 = vunpack.c.h.b16 %v456
      %v1154 = vunpack.c.l.b16 %v457
      %v1155 = vunpack.c.h.b16 %v457
      %v1156 = vunpack.c.l.b16 %v458
      %v1157 = vunpack.c.h.b16 %v458
      %v1158 = vunpack.c.l.b16 %v459
      %v1159 = vunpack.c.h.b16 %v459
      %v1160 = vunpack.c.l.b16 %v460
      %v1161 = vunpack.c.h.b16 %v460
      %v1162 = vunpack.c.l.b16 %v461
      %v1163 = vunpack.c.h.b16 %v461
      %v1164 = vunpack.c.l.b16 %v462
      %v1165 = vunpack.c.h.b16 %v462
      %v1166 = vunpack.c.l.b16 %v463
      %v1167 = vunpack.c.h.b16 %v463
      %v1168 = vunpack.c.l.b16 %v464
      %v1169 = vunpack.c.h.b16 %v464
      %v1170 = vunpack.c.l.b16 %v465
      %v1171 = vunpack.c.h.b16 %v465
      %v1172 = vunpack.c.l.b16 %v466
      %v1173 = vunpack.c.h.b16 %v466
      %v1174 = vunpack.c.l.b16 %v467
      %v1175 = vunpack.c.h.b16 %v467
      %v1176 = vunpack.c.l.b16 %v468
      %v1177 = vunpack.c.h.b16 %v468
      %v1178 = vunpack.c.l.b16 %v469
      %v1179 = vunpack.c.h.b16 %v469
      %v1180 = vunpack.c.l.b16 %v470
      %v1181 = vunpack.c.h.b16 %v470
      %v1182 = vunpack.c.l.b16 %v471
      %v1183 = vunpack.c.h.b16 %v471
      %v1184 = vunpack.c.l.b16 %v472
      %v1185 = vunpack.c.h.b16 %v472
      %v1186 = vunpack.c.l.b16 %v473
      %v1187 = vunpack.c.h.b16 %v473
      %v1188 = vunpack.c.l.b16 %v474
      %v1189 = vunpack.c.h.b16 %v474
      %v1190 = vunpack.c.l.b16 %v475
      %v1191 = vunpack.c.h.b16 %v475
      %v1192 = vunpack.c.l.b16 %v476
      %v1193 = vunpack.c.h.b16 %v476
      %v1194 = vunpack.c.l.b16 %v477
      %v1195 = vunpack.c.h.b16 %v477
      %v1196 = vunpack.c.l.b16 %v478
      %v1197 = vunpack.c.h.b16 %v478
      %v1198 = vunpack.c.l.b16 %v479
      %v1199 = vunpack.c.h.b16 %v479
      %v1200 = vunpack.c.l.b16 %v480
      %v1201 = vunpack.c.h.b16 %v480
      %v1202 = vunpack.c.l.b16 %v481
      %v1203 = vunpack.c.h.b16 %v481
      %v1204 = vunpack.c.l.b16 %v482
      %v1205 = vunpack.c.h.b16 %v482
      %v1206 = vunpack.c.l.b16 %v483
      %v1207 = vunpack.c.h.b16 %v483
      %v1208 = vunpack.c.l.b16 %v484
      %v1209 = vunpack.c.h.b16 %v484
      %v1210 = vunpack.c.l.b16 %v485
      %v1211 = vunpack.c.h.b16 %v485
      %v1212 = vunpack.c.l.b16 %v486
      %v1213 = vunpack.c.h.b16 %v486
      %v1214 = vunpack.c.l.b16 %v487
      %v1215 = vunpack.c.h.b16 %v487
      %v1216 = vunpack.c.l.b16 %v488
      %v1217 = vunpack.c.h.b16 %v488
      %v1218 = vunpack.c.l.b16 %v489
      %v1219 = vunpack.c.h.b16 %v489
      %v1220 = vunpack.c.l.b16 %v490
      %v1221 = vunpack.c.h.b16 %v490
      %v1222 = vunpack.c.l.b16 %v491
      %v1223 = vunpack.c.h.b16 %v491
      %v1224 = vunpack.c.l.b16 %v492
      %v1225 = vunpack.c.h.b16 %v492
      %v1226 = vunpack.c.l.b16 %v493
      %v1227 = vunpack.c.h.b16 %v493
      %v1228 = vunpack.c.l.b16 %v494
      %v1229 = vunpack.c.h.b16 %v494
      %v1230 = vunpack.c.l.b16 %v495
      %v1231 = vunpack.c.h.b16 %v495
      %v1232 = vunpack.c.l.b16 %v496
      %v1233 = vunpack.c.h.b16 %v496
      %v1234 = vunpack.c.l.b16 %v497
      %v1235 = vunpack.c.h.b16 %v497
      %v1236 = vunpack.c.l.b16 %v498
      %v1237 = vunpack.c.h.b16 %v498
      %v1238 = vunpack.c.l.b16 %v499
      %v1239 = vunpack.c.h.b16 %v499
      %v1240 = vunpack.c.l.b16 %v500
      %v1241 = vunpack.c.h.b16 %v500
      %v1242 = vunpack.c.l.b16 %v501
      %v1243 = vunpack.c.h.b16 %v501
      %v1244 = vunpack.c.l.b16 %v502
      %v1245 = vunpack.c.h.b16 %v502
      %v1246 = vunpack.c.l.b16 %v503
      %v1247 = vunpack.c.h.b16 %v503
      %v1248 = vunpack.c.l.b16 %v504
      %v1249 = vunpack.c.h.b16 %v504
      %v1250 = vunpack.c.l.b16 %v505
      %v1251 = vunpack.c.h.b16 %v505
      %v1252 = vunpack.c.l.b16 %v506
      %v1253 = vunpack.c.h.b16 %v506
      %v1254 = vunpack.c.l.b16 %v507
      %v1255 = vunpack.c.h.b16 %v507
      %v1256 = vunpack.c.l.b16 %v508
      %v1257 = vunpack.c.h.b16 %v508
      %v1258 = vunpack.c.l.b16 %v509
      %v1259 = vunpack.c.h.b16 %v509
      %v1260 = vunpack.c.l.b16 %v510
      %v1261 = vunpack.c.h.b16 %v510
      %v1262 = vunpack.c.l.b16 %v511
      %v1263 = vunpack.c.h.b16 %v511
      %v1264 = vunpack.c.l.b16 %v512
      %v1265 = vunpack.c.h.b16 %v512
      %v1266 = vunpack.c.l.b16 %v513
      %v1267 = vunpack.c.h.b16 %v513
      %v1268 = vunpack.c.l.b16 %v514
      %v1269 = vunpack.c.h.b16 %v514
      %v1270 = vunpack.c.l.b16 %v515
      %v1271 = vunpack.c.h.b16 %v515
      %v1272 = vunpack.c.l.b16 %v516
      %v1273 = vunpack.c.h.b16 %v516
      %v1274 = vunpack.c.l.b16 %v517
      %v1275 = vunpack.c.h.b16 %v517
      %v1276 = vunpack.c.l.b16 %v518
      %v1277 = vunpack.c.h.b16 %v518
      %v1278 = vunpack.c.l.b16 %v519
      %v1279 = vunpack.c.h.b16 %v519
      %v1280 = vunpack.c.l.b16 %v520
      %v1281 = vunpack.c.h.b16 %v520
      %v1282 = vunpack.c.l.b16 %v521
      %v1283 = vunpack.c.h.b16 %v521
      %v1284 = vunpack.c.l.b16 %v522
      %v1285 = vunpack.c.h.b16 %v522
      %v1286 = vunpack.c.l.b16 %v523
      %v1287 = vunpack.c.h.b16 %v523
      %v1288 = vunpack.c.l.b16 %v524
      %v1289 = vunpack.c.h.b16 %v524
      %v1290 = vunpack.c.l.b16 %v525
      %v1291 = vunpack.c.h.b16 %v525
      %v1292 = vunpack.c.l.b16 %v526
      %v1293 = vunpack.c.h.b16 %v526
      %v1294 = vunpack.c.l.b16 %v527
      %v1295 = vunpack.c.h.b16 %v527
      %v1296 = vunpack.c.l.b16 %v528
      %v1297 = vunpack.c.h.b16 %v528
      %v1298 = vunpack.c.l.b16 %v529
      %v1299 = vunpack.c.h.b16 %v529
      %v1300 = vunpack.c.l.b16 %v530
      %v1301 = vunpack.c.h.b16 %v530
      %v1302 = vunpack.c.l.b16 %v531
      %v1303 = vunpack.c.h.b16 %v531
      %v1304 = vunpack.c.l.b16 %v532
      %v1305 = vunpack.c.h.b16 %v532
      %v1306 = vunpack.c.l.b16 %v533
      %v1307 = vunpack.c.h.b16 %v533
      %v1308 = vunpack.c.l.b16 %v534
      %v1309 = vunpack.c.h.b16 %v534
      %v1310 = vunpack.c.l.b16 %v535
      %v1311 = vunpack.c.h.b16 %v535
      %v1312 = vunpack.c.l.b16 %v536
      %v1313 = vunpack.c.h.b16 %v536
      %v1314 = vunpack.c.l.b16 %v537
      %v1315 = vunpack.c.h.b16 %v537
      %v1316 = vunpack.c.l.b16 %v538
      %v1317 = vunpack.c.h.b16 %v538
      %v1318 = vunpack.c.l.b16 %v539
      %v1319 = vunpack.c.h.b16 %v539
      %v1320 = vunpack.c.l.b16 %v540
      %v1321 = vunpack.c.h.b16 %v540
      %v1322 = vunpack.c.l.b16 %v541
      %v1323 = vunpack.c.h.b16 %v541
      %v1324 = vunpack.c.l.b16 %v542
      %v1325 = vunpack.c.h.b16 %v542
      %v1326 = vunpack.c.l.b16 %v543
      %v1327 = vunpack.c.h.b16 %v543
      %v1328 = vunpack.c.l.b16 %v544
      %v1329 = vunpack.c.h.b16 %v544
      %v1330 = vunpack.c.l.b16 %v545
      %v1331 = vunpack.c.h.b16 %v545
      %v1332 = vunpack.c.l.b16 %v546
      %v1333 = vunpack.c.h.b16 %v546
      %v1334 = vunpack.c.l.b16 %v547
      %v1335 = vunpack.c.h.b16 %v547
      %v1336 = vunpack.c.l.b16 %v548
      %v1337 = vunpack.c.h.b16 %v548
      %v1338 = vunpack.c.l.b16 %v549
      %v1339 = vunpack.c.h.b16 %v549
      %v1340 = vunpack.c.l.b16 %v550
      %v1341 = vunpack.c.h.b16 %v550
      %v1342 = vunpack.c.l.b16 %v551
      %v1343 = vunpack.c.h.b16 %v551
      %v1344 = vunpack.c.l.b16 %v552
      %v1345 = vunpack.c.h.b16 %v552
      %v1346 = vunpack.c.l.b16 %v553
      %v1347 = vunpack.c.h.b16 %v553
      %v1348 = vunpack.c.l.b16 %v554
      %v1349 = vunpack.c.h.b16 %v554
      %v1350 = vunpack.c.l.b16 %v555
      %v1351 = vunpack.c.h.b16 %v555
      %v1352 = vunpack.c.l.b16 %v556
      %v1353 = vunpack.c.h.b16 %v556
      %v1354 = vunpack.c.l.b16 %v557
      %v1355 = vunpack.c.h.b16 %v557
      %v1356 = vunpack.c.l.b16 %v558
      %v1357 = vunpack.c.h.b16 %v558
      %v1358 = vunpack.c.l.b16 %v559
      %v1359 = vunpack.c.h.b16 %v559
      %v1360 = vunpack.c.l.b16 %v560
      %v1361 = vunpack.c.h.b16 %v560
      %v1362 = vunpack.c.l.b16 %v561
      %v1363 = vunpack.c.h.b16 %v561
      %v1364 = vunpack.c.l.b16 %v562
      %v1365 = vunpack.c.h.b16 %v562
      %v1366 = vunpack.c.l.b16 %v563
      %v1367 = vunpack.c.h.b16 %v563
      %v1368 = vunpack.c.l.b16 %v564
      %v1369 = vunpack.c.h.b16 %v564
      %v1370 = vunpack.c.l.b16 %v565
      %v1371 = vunpack.c.h.b16 %v565
      %v1372 = vunpack.c.l.b16 %v566
      %v1373 = vunpack.c.h.b16 %v566
      %v1374 = vunpack.c.l.b16 %v567
      %v1375 = vunpack.c.h.b16 %v567
      %v1376 = vunpack.c.l.b16 %v568
      %v1377 = vunpack.c.h.b16 %v568
      %v1378 = vunpack.c.l.b16 %v569
      %v1379 = vunpack.c.h.b16 %v569
      %v1380 = vunpack.c.l.b16 %v570
      %v1381 = vunpack.c.h.b16 %v570
      %v1382 = vunpack.c.l.b16 %v571
      %v1383 = vunpack.c.h.b16 %v571
      %v1384 = vunpack.c.l.b16 %v572
      %v1385 = vunpack.c.h.b16 %v572
      %v1386 = vunpack.c.l.b16 %v573
      %v1387 = vunpack.c.h.b16 %v573
      %v1388 = vunpack.c.l.b16 %v574
      %v1389 = vunpack.c.h.b16 %v574
      %v1390 = vunpack.c.l.b16 %v575
      %v1391 = vunpack.c.h.b16 %v575
      %v1392 = vunpack.c.l.b16 %v576
      %v1393 = vunpack.c.h.b16 %v576
      %v1394 = vunpack.c.l.b16 %v577
      %v1395 = vunpack.c.h.b16 %v577
      %v1396 = vunpack.c.l.b16 %v578
      %v1397 = vunpack.c.h.b16 %v578
      %v1398 = vunpack.c.l.b16 %v579
      %v1399 = vunpack.c.h.b16 %v579
      %v1400 = vunpack.c.l.b16 %v580
      %v1401 = vunpack.c.h.b16 %v580
      %v1402 = vunpack.c.l.b16 %v581
      %v1403 = vunpack.c.h.b16 %v581
      %v1404 = vunpack.c.l.b16 %v582
      %v1405 = vunpack.c.h.b16 %v582
      %v1406 = vunpack.c.l.b16 %v583
      %v1407 = vunpack.c.h.b16 %v583
      %v1408 = vunpack.c.l.b16 %v584
      %v1409 = vunpack.c.h.b16 %v584
      %v1410 = vunpack.c.l.b16 %v585
      %v1411 = vunpack.c.h.b16 %v585
      %v1412 = vunpack.c.l.b16 %v586
      %v1413 = vunpack.c.h.b16 %v586
      %v1414 = vunpack.c.l.b16 %v587
      %v1415 = vunpack.c.h.b16 %v587
      %v1416 = vunpack.c.l.b16 %v588
      %v1417 = vunpack.c.h.b16 %v588
      %v1418 = vunpack.c.l.b16 %v589
      %v1419 = vunpack.c.h.b16 %v589
      %v1420 = vunpack.c.l.b16 %v590
      %v1421 = vunpack.c.h.b16 %v590
      %v1422 = vunpack.c.l.b16 %v591
      %v1423 = vunpack.c.h.b16 %v591
      %v1424 = vunpack.c.l.b16 %v592
      %v1425 = vunpack.c.h.b16 %v592
      %v1426 = vunpack.c.l.b16 %v593
      %v1427 = vunpack.c.h.b16 %v593
      %v1428 = vunpack.c.l.b16 %v594
      %v1429 = vunpack.c.h.b16 %v594
      %v1430 = vunpack.c.l.b16 %v595
      %v1431 = vunpack.c.h.b16 %v595
      %v1432 = vunpack.c.l.b16 %v596
      %v1433 = vunpack.c.h.b16 %v596
      %v1434 = vunpack.c.l.b16 %v597
      %v1435 = vunpack.c.h.b16 %v597
      %v1436 = vunpack.c.l.b16 %v598
      %v1437 = vunpack.c.h.b16 %v598
      %v1438 = vunpack.c.l.b16 %v599
      %v1439 = vunpack.c.h.b16 %v599
      %v1440 = vunpack.c.l.b16 %v600
      %v1441 = vunpack.c.h.b16 %v600
      %v1442 = vunpack.c.l.b16 %v601
      %v1443 = vunpack.c.h.b16 %v601
      %v1444 = vunpack.c.l.b16 %v602
      %v1445 = vunpack.c.h.b16 %v602
      %v1446 = vunpack.c.l.b16 %v603
      %v1447 = vunpack.c.h.b16 %v603
      %v1448 = vunpack.c.l.b16 %v604
      %v1449 = vunpack.c.h.b16 %v604
      %v1450 = vunpack.c.l.b16 %v605
      %v1451 = vunpack.c.h.b16 %v605
      %v1452 = vunpack.c.l.b16 %v606
      %v1453 = vunpack.c.h.b16 %v606
      %v1454 = vunpack.c.l.b16 %v607
      %v1455 = vunpack.c.h.b16 %v607
      %v1456 = vunpack.c.l.b16 %v608
      %v1457 = vunpack.c.h.b16 %v608
      %v1458 = vunpack.c.l.b16 %v609
      %v1459 = vunpack.c.h.b16 %v609
      %v1460 = vunpack.c.l.b16 %v610
      %v1461 = vunpack.c.h.b16 %v610
      %v1462 = vunpack.c.l.b16 %v611
      %v1463 = vunpack.c.h.b16 %v611
      %v1464 = vunpack.c.l.b16 %v612
      %v1465 = vunpack.c.h.b16 %v612
      %v1466 = vunpack.c.l.b16 %v613
      %v1467 = vunpack.c.h.b16 %v613
      %v1468 = vunpack.c.l.b16 %v614
      %v1469 = vunpack.c.h.b16 %v614
      %v1470 = vunpack.c.l.b16 %v615
      %v1471 = vunpack.c.h.b16 %v615
      %v1472 = vunpack.c.l.b16 %v616
      %v1473 = vunpack.c.h.b16 %v616
      %v1474 = vunpack.c.l.b16 %v617
      %v1475 = vunpack.c.h.b16 %v617
      %v1476 = vunpack.c.l.b16 %v618
      %v1477 = vunpack.c.h.b16 %v618
      %v1478 = vunpack.c.l.b16 %v619
      %v1479 = vunpack.c.h.b16 %v619
      %v1480 = vunpack.c.l.b16 %v620
      %v1481 = vunpack.c.h.b16 %v620
      %v1482 = vunpack.c.l.b16 %v621
      %v1483 = vunpack.c.h.b16 %v621
      %v1484 = vunpack.c.l.b16 %v622
      %v1485 = vunpack.c.h.b16 %v622
      %v1486 = vunpack.c.l.b16 %v623
      %v1487 = vunpack.c.h.b16 %v623
      %v1488 = vunpack.c.l.b16 %v624
      %v1489 = vunpack.c.h.b16 %v624
      %v1490 = vunpack.c.l.b16 %v625
      %v1491 = vunpack.c.h.b16 %v625
      %v1492 = vunpack.c.l.b16 %v626
      %v1493 = vunpack.c.h.b16 %v626
      %v1494 = vunpack.c.l.b16 %v627
      %v1495 = vunpack.c.h.b16 %v627
      %v1496 = vunpack.c.l.b16 %v628
      %v1497 = vunpack.c.h.b16 %v628
      %v1498 = vunpack.c.l.b16 %v629
      %v1499 = vunpack.c.h.b16 %v629
      %v1500 = vunpack.c.l.b16 %v630
      %v1501 = vunpack.c.h.b16 %v630
      %v1502 = vunpack.c.l.b16 %v631
      %v1503 = vunpack.c.h.b16 %v631
      %v1504 = vunpack.c.l.b16 %v632
      %v1505 = vunpack.c.h.b16 %v632
      %v1506 = vunpack.c.l.b16 %v633
      %v1507 = vunpack.c.h.b16 %v633
      %v1508 = vunpack.c.l.b16 %v634
      %v1509 = vunpack.c.h.b16 %v634
      %v1510 = vunpack.c.l.b16 %v635
      %v1511 = vunpack.c.h.b16 %v635
      %v1512 = vunpack.c.l.b16 %v636
      %v1513 = vunpack.c.h.b16 %v636
      %v1514 = vunpack.c.l.b16 %v637
      %v1515 = vunpack.c.h.b16 %v637
      %v1516 = vunpack.c.l.b16 %v638
      %v1517 = vunpack.c.h.b16 %v638
      %v1518 = vunpack.c.l.b16 %v639
      %v1519 = vunpack.c.h.b16 %v639
      %v1520 = vunpack.c.l.b16 %v640
      %v1521 = vunpack.c.h.b16 %v640
      %v1522 = vunpack.c.l.b16 %v641
      %v1523 = vunpack.c.h.b16 %v641
      %v1524 = vunpack.c.l.b16 %v642
      %v1525 = vunpack.c.h.b16 %v642
      %v1526 = vunpack.c.l.b16 %v643
      %v1527 = vunpack.c.h.b16 %v643
      %v1528 = vunpack.c.l.b16 %v644
      %v1529 = vunpack.c.h.b16 %v644
      %v1530 = vunpack.c.l.b16 %v645
      %v1531 = vunpack.c.h.b16 %v645
      %v1532 = vunpack.c.l.b16 %v646
      %v1533 = vunpack.c.h.b16 %v646
      %v1534 = vunpack.c.l.b16 %v647
      %v1535 = vunpack.c.h.b16 %v647
      %v1536 = vunpack.c.l.b16 %v648
      %v1537 = vunpack.c.h.b16 %v648
      %v1538 = vunpack.c.l.b16 %v649
      %v1539 = vunpack.c.h.b16 %v649
      %v1540 = vunpack.c.l.b16 %v650
      %v1541 = vunpack.c.h.b16 %v650
      %v1542 = vunpack.c.l.b16 %v651
      %v1543 = vunpack.c.h.b16 %v651
      %v1544 = vunpack.c.l.b16 %v652
      %v1545 = vunpack.c.h.b16 %v652
      %v1546 = vunpack.c.l.b16 %v653
      %v1547 = vunpack.c.h.b16 %v653
      %v1548 = vunpack.c.l.b16 %v654
      %v1549 = vunpack.c.h.b16 %v654
      %v1550 = vunpack.c.l.b16 %v655
      %v1551 = vunpack.c.h.b16 %v655
      %v1552 = vpack.c.b16 %v1048, %v1040
      %v1553 = vpack.c.b16 %v1049, %v1041
      %v1554 = vpack.c.b16 %v1050, %v1042
      %v1555 = vpack.c.b16 %v1051, %v1043
      %v1556 = vpack.c.b16 %v1052, %v1044
      %v1557 = vpack.c.b16 %v1053, %v1045
      %v1558 = vpack.c.b16 %v1054, %v1046
      %v1559 = vpack.c.b16 %v1055, %v1047
      %v1560 = vpack.c.b16 %v1064, %v1056
      %v1561 = vpack.c.b16 %v1065, %v1057
      %v1562 = vpack.c.b16 %v1066, %v1058
      %v1563 = vpack.c.b16 %v1067, %v1059
      %v1564 = vpack.c.b16 %v1068, %v1060
      %v1565 = vpack.c.b16 %v1069, %v1061
      %v1566 = vpack.c.b16 %v1070, %v1062
      %v1567 = vpack.c.b16 %v1071, %v1063
      %v1568 = vpack.c.b16 %v1080, %v1072
      %v1569 = vpack.c.b16 %v1081, %v1073
      %v1570 = vpack.c.b16 %v1082, %v1074
      %v1571 = vpack.c.b16 %v1083, %v1075
      %v1572 = vpack.c.b16 %v1084, %v1076
      %v1573 = vpack.c.b16 %v1085, %v1077
      %v1574 = vpack.c.b16 %v1086, %v1078
      %v1575 = vpack.c.b16 %v1087, %v1079
      %v1576 = vpack.c.b16 %v1096, %v1088
      %v1577 = vpack.c.b16 %v1097, %v1089
      %v1578 = vpack.c.b16 %v1098, %v1090
      %v1579 = vpack.c.b16 %v1099, %v1091
      %v1580 = vpack.c.b16 %v1100, %v1092
      %v1581 = vpack.c.b16 %v1101, %v1093
      %v1582 = vpack.c.b16 %v1102, %v1094
      %v1583 = vpack.c.b16 %v1103, %v1095
      %v1584 = vpack.c.b16 %v1112, %v1104
      %v1585 = vpack.c.b16 %v1113, %v1105
      %v1586 = vpack.c.b16 %v1114, %v1106
      %v1587 = vpack.c.b16 %v1115, %v1107
      %v1588 = vpack.c.b16 %v1116, %v1108
      %v1589 = vpack.c.b16 %v1117, %v1109
      %v1590 = vpack.c.b16 %v1118, %v1110
      %v1591 = vpack.c.b16 %v1119, %v1111
      %v1592 = vpack.c.b16 %v1128, %v1120
      %v1593 = vpack.c.b16 %v1129, %v1121
      %v1594 = vpack.c.b16 %v1130, %v1122
      %v1595 = vpack.c.b16 %v1131, %v1123
      %v1596 = vpack.c.b16 %v1132, %v1124
      %v1597 = vpack.c.b16 %v1133, %v1125
      %v1598 = vpack.c.b16 %v1134, %v1126
      %v1599 = vpack.c.b16 %v1135, %v1127
      %v1600 = vpack.c.b16 %v1144, %v1136
      %v1601 = vpack.c.b16 %v1145, %v1137
      %v1602 = vpack.c.b16 %v1146, %v1138
      %v1603 = vpack.c.b16 %v1147, %v1139
      %v1604 = vpack.c.b16 %v1148, %v1140
      %v1605 = vpack.c.b16 %v1149, %v1141
      %v1606 = vpack.c.b16 %v1150, %v1142
      %v1607 = vpack.c.b16 %v1151, %v1143
      %v1608 = vpack.c.b16 %v1160, %v1152
      %v1609 = vpack.c.b16 %v1161, %v1153
      %v1610 = vpack.c.b16 %v1162, %v1154
      %v1611 = vpack.c.b16 %v1163, %v1155
      %v1612 = vpack.c.b16 %v1164, %v1156
      %v1613 = vpack.c.b16 %v1165, %v1157
      %v1614 = vpack.c.b16 %v1166, %v1158
      %v1615 = vpack.c.b16 %v1167, %v1159
      %v1616 = vpack.c.b16 %v1176, %v1168
      %v1617 = vpack.c.b16 %v1177, %v1169
      %v1618 = vpack.c.b16 %v1178, %v1170
      %v1619 = vpack.c.b16 %v1179, %v1171
      %v1620 = vpack.c.b16 %v1180, %v1172
      %v1621 = vpack.c.b16 %v1181, %v1173
      %v1622 = vpack.c.b16 %v1182, %v1174
      %v1623 = vpack.c.b16 %v1183, %v1175
      %v1624 = vpack.c.b16 %v1192, %v1184
      %v1625 = vpack.c.b16 %v1193, %v1185
      %v1626 = vpack.c.b16 %v1194, %v1186
      %v1627 = vpack.c.b16 %v1195, %v1187
      %v1628 = vpack.c.b16 %v1196, %v1188
      %v1629 = vpack.c.b16 %v1197, %v1189
      %v1630 = vpack.c.b16 %v1198, %v1190
      %v1631 = vpack.c.b16 %v1199, %v1191
      %v1632 = vpack.c.b16 %v1208, %v1200
      %v1633 = vpack.c.b16 %v1209, %v1201
      %v1634 = vpack.c.b16 %v1210, %v1202
      %v1635 = vpack.c.b16 %v1211, %v1203
      %v1636 = vpack.c.b16 %v1212, %v1204
      %v1637 = vpack.c.b16 %v1213, %v1205
      %v1638 = vpack.c.b16 %v1214, %v1206
      %v1639 = vpack.c.b16 %v1215, %v1207
      %v1640 = vpack.c.b16 %v1224, %v1216
      %v1641 = vpack.c.b16 %v1225, %v1217
      %v1642 = vpack.c.b16 %v1226, %v1218
      %v1643 = vpack.c.b16 %v1227, %v1219
      %v1644 = vpack.c.b16 %v1228, %v1220
      %v1645 = vpack.c.b16 %v1229, %v1221
      %v1646 = vpack.c.b16 %v1230, %v1222
      %v1647 = vpack.c.b16 %v1231, %v1223
      %v1648 = vpack.c.b16 %v1240, %v1232
      %v1649 = vpack.c.b16 %v1241, %v1233
      %v1650 = vpack.c.b16 %v1242, %v1234
      %v1651 = vpack.c.b16 %v1243, %v1235
      %v1652 = vpack.c.b16 %v1244, %v1236
      %v1653 = vpack.c.b16 %v1245, %v1237
      %v1654 = vpack.c.b16 %v1246, %v1238
      %v1655 = vpack.c.b16 %v1247, %v1239
      %v1656 = vpack.c.b16 %v1256, %v1248
      %v1657 = vpack.c.b16 %v1257, %v1249
      %v1658 = vpack.c.b16 %v1258, %v1250
      %v1659 = vpack.c.b16 %v1259, %v1251
      %v1660 = vpack.c.b16 %v1260, %v1252
      %v1661 = vpack.c.b16 %v1261, %v1253
      %v1662 = vpack.c.b16 %v1262, %v1254
      %v1663 = vpack.c.b16 %v1263, %v1255
      %v1664 = vpack.c.b16 %v1272, %v1264
      %v1665 = vpack.c.b16 %v1273, %v1265
      %v1666 = vpack.c.b16 %v1274, %v1266
      %v1667 = vpack.c.b16 %v1275, %v1267
      %v1668 = vpack.c.b16 %v1276, %v1268
      %v1669 = vpack.c.b16 %v1277, %v1269
      %v1670 = vpack.c.b16 %v1278, %v1270
      %v1671 = vpack.c.b16 %v1279, %v1271
      %v1672 = vpack.c.b16 %v1288, %v1280
      %v1673 = vpack.c.b16 %v1289, %v1281
      %v1674 = vpack.c.b16 %v1290, %v1282
      %v1675 = vpack.c.b16 %v1291, %v1283
      %v1676 = vpack.c.b16 %v1292, %v1284
      %v1677 = vpack.c.b16 %v1293, %v1285
      %v1678 = vpack.c.b16 %v1294, %v1286
      %v1679 = vpack.c.b16 %v1295, %v1287
      %v1680 = vpack.c.b16 %v1304, %v1296
      %v1681 = vpack.c.b16 %v1305, %v1297
      %v1682 = vpack.c.b16 %v1306, %v1298
      %v1683 = vpack.c.b16 %v1307, %v1299
      %v1684 = vpack.c.b16 %v1308, %v1300
      %v1685 = vpack.c.b16 %v1309, %v1301
      %v1686 = vpack.c.b16 %v1310, %v1302
      %v1687 = vpack.c.b16 %v1311, %v1303
      %v1688 = vpack.c.b16 %v1320, %v1312
      %v1689 = vpack.c.b16 %v1321, %v1313
      %v1690 = vpack.c.b16 %v1322, %v1314
      %v1691 = vpack.c.b16 %v1323, %v1315
      %v1692 = vpack.c.b16 %v1324, %v1316
      %v1693 = vpack.c.b16 %v1325, %v1317
      %v1694 = vpack.c.b16 %v1326, %v1318
      %v1695 = vpack.c.b16 %v1327, %v1319
      %v1696 = vpack.c.b16 %v1336, %v1328
      %v1697 = vpack.c.b16 %v1337, %v1329
      %v1698 = vpack.c.b16 %v1338, %v1330
      %v1699 = vpack.c.b16 %v1339, %v1331
      %v1700 = vpack.c.b16 %v1340, %v1332
      %v1701 = vpack.c.b16 %v1341, %v1333
      %v1702 = vpack.c.b16 %v1342, %v1334
      %v1703 = vpack.c.b16 %v1343, %v1335
      %v1704 = vpack.c.b16 %v1352, %v1344
      %v1705 = vpack.c.b16 %v1353, %v1345
      %v1706 = vpack.c.b16 %v1354, %v1346
      %v1707 = vpack.c.b16 %v1355, %v1347
      %v1708 = vpack.c.b16 %v1356, %v1348
      %v1709 = vpack.c.b16 %v1357, %v1349
      %v1710 = vpack.c.b16 %v1358, %v1350
      %v1711 = vpack.c.b16 %v1359, %v1351
      %v1712 = vpack.c.b16 %v1368, %v1360
      %v1713 = vpack.c.b16 %v1369, %v1361
      %v1714 = vpack.c.b16 %v1370, %v1362
      %v1715 = vpack.c.b16 %v1371, %v1363
      %v1716 = vpack.c.b16 %v1372, %v1364
      %v1717 = vpack.c.b16 %v1373, %v1365
      %v1718 = vpack.c.b16 %v1374, %v1366
      %v1719 = vpack.c.b16 %v1375, %v1367
      %v1720 = vpack.c.b16 %v1384, %v1376
      %v1721 = vpack.c.b16 %v1385, %v1377
      %v1722 = vpack.c.b16 %v1386, %v1378
      %v1723 = vpack.c.b16 %v1387, %v1379
      %v1724 = vpack.c.b16 %v1388, %v1380
      %v1725 = vpack.c.b16 %v1389, %v1381
      %v1726 = vpack.c.b16 %v1390, %v1382
      %v1727 = vpack.c.b16 %v1391, %v1383
      %v1728 = vpack.c.b16 %v1400, %v1392
      %v1729 = vpack.c.b16 %v1401, %v1393
      %v1730 = vpack.c.b16 %v1402, %v1394
      %v1731 = vpack.c.b16 %v1403, %v1395
      %v1732 = vpack.c.b16 %v1404, %v1396
      %v1733 = vpack.c.b16 %v1405, %v1397
      %v1734 = vpack.c.b16 %v1406, %v1398
      %v1735 = vpack.c.b16 %v1407, %v1399
      %v1736 = vpack.c.b16 %v1416, %v1408
      %v1737 = vpack.c.b16 %v1417, %v1409
      %v1738 = vpack.c.b16 %v1418, %v1410
      %v1739 = vpack.c.b16 %v1419, %v1411
      %v1740 = vpack.c.b16 %v1420, %v1412
      %v1741 = vpack.c.b16 %v1421, %v1413
      %v1742 = vpack.c.b16 %v1422, %v1414
      %v1743 = vpack.c.b16 %v1423, %v1415
      %v1744 = vpack.c.b16 %v1432, %v1424
      %v1745 = vpack.c.b16 %v1433, %v1425
      %v1746 = vpack.c.b16 %v1434, %v1426
      %v1747 = vpack.c.b16 %v1435, %v1427
      %v1748 = vpack.c.b16 %v1436, %v1428
      %v1749 = vpack.c.b16 %v1437, %v1429
      %v1750 = vpack.c.b16 %v1438, %v1430
      %v1751 = vpack.c.b16 %v1439, %v1431
      %v1752 = vpack.c.b16 %v1448, %v1440
      %v1753 = vpack.c.b16 %v1449, %v1441
      %v1754 = vpack.c.b16 %v1450, %v1442
      %v1755 = vpack.c.b16 %v1451, %v1443
      %v1756 = vpack.c.b16 %v1452, %v1444
      %v1757 = vpack.c.b16 %v1453, %v1445
      %v1758 = vpack.c.b16 %v1454, %v1446
      %v1759 = vpack.c.b16 %v1455, %v1447
      %v1760 = vpack.c.b16 %v1464, %v1456
      %v1761 = vpack.c.b16 %v1465, %v1457
      %v1762 = vpack.c.b16 %v1466, %v1458
      %v1763 = vpack.c.b16 %v1467, %v1459
      %v1764 = vpack.c.b16 %v1468, %v1460
      %v1765 = vpack.c.b16 %v1469, %v1461
      %v1766 = vpack.c.b16 %v1470, %v1462
      %v1767 = vpack.c.b16 %v1471, %v1463
      %v1768 = vpack.c.b16 %v1480, %v1472
      %v1769 = vpack.c.b16 %v1481, %v1473
      %v1770 = vpack.c.b16 %v1482, %v1474
      %v1771 = vpack.c.b16 %v1483, %v1475
      %v1772 = vpack.c.b16 %v1484, %v1476
      %v1773 = vpack.c.b16 %v1485, %v1477
      %v1774 = vpack.c.b16 %v1486, %v1478
      %v1775 = vpack.c.b16 %v1487, %v1479
      %v1776 = vpack.c.b16 %v1496, %v1488
      %v1777 = vpack.c.b16 %v1497, %v1489
      %v1778 = vpack.c.b16 %v1498, %v1490
      %v1779 = vpack.c.b16 %v1499, %v1491
      %v1780 = vpack.c.b16 %v1500, %v1492
      %v1781 = vpack.c.b16 %v1501, %v1493
      %v1782 = vpack.c.b16 %v1502, %v1494
      %v1783 = vpack.c.b16 %v1503, %v1495
      %v1784 = vpack.c.b16 %v1512, %v1504
      %v1785 = vpack.c.b16 %v1513, %v1505
      %v1786 = vpack.c.b16 %v1514, %v1506
      %v1787 = vpack.c.b16 %v1515, %v1507
      %v1788 = vpack.c.b16 %v1516, %v1508
      %v1789 = vpack.c.b16 %v1517, %v1509
      %v1790 = vpack.c.b16 %v1518, %v1510
      %v1791 = vpack.c.b16 %v1519, %v1511
      %v1792 = vpack.c.b16 %v1528, %v1520
      %v1793 = vpack.c.b16 %v1529, %v1521
      %v1794 = vpack.c.b16 %v1530, %v1522
      %v1795 = vpack.c.b16 %v1531, %v1523
      %v1796 = vpack.c.b16 %v1532, %v1524
      %v1797 = vpack.c.b16 %v1533, %v1525
      %v1798 = vpack.c.b16 %v1534, %v1526
      %v1799 = vpack.c.b16 %v1535, %v1527
      %v1800 = vpack.c.b16 %v1544, %v1536
      %v1801 = vpack.c.b16 %v1545, %v1537
      %v1802 = vpack.c.b16 %v1546, %v1538
      %v1803 = vpack.c.b16 %v1547, %v1539
      %v1804 = vpack.c.b16 %v1548, %v1540
      %v1805 = vpack.c.b16 %v1549, %v1541
      %v1806 = vpack.c.b16 %v1550, %v1542
      %v1807 = vpack.c.b16 %v1551, %v1543
      %v2192 = vunpack.c.l.b16 %v656
      %v2193 = vunpack.c.l.b16 %v657
      %v2194 = vunpack.c.l.b16 %v658
      %v2195 = vunpack.c.l.b16 %v659
      %v2196 = vunpack.c.l.b16 %v660
      %v2197 = vunpack.c.l.b16 %v661
      %v2198 = vunpack.c.l.b16 %v662
      %v2199 = vunpack.c.l.b16 %v663
      %v2200 = vunpack.c.l.b16 %v664
      %v2201 = vunpack.c.l.b16 %v665
      %v2202 = vunpack.c.l.b16 %v666
      %v2203 = vunpack.c.l.b16 %v667
      %v2204 = vunpack.c.l.b16 %v668
      %v2205 = vunpack.c.l.b16 %v669
      %v2206 = vunpack.c.l.b16 %v670
      %v2207 = vunpack.c.l.b16 %v671
      %v2208 = vunpack.c.l.b16 %v672
      %v2209 = vunpack.c.l.b16 %v673
      %v2210 = vunpack.c.l.b16 %v674
      %v2211 = vunpack.c.l.b16 %v675
      %v2212 = vunpack.c.l.b16 %v676
      %v2213 = vunpack.c.l.b16 %v677
      %v2214 = vunpack.c.l.b16 %v678
      %v2215 = vunpack.c.l.b16 %v679
      %v2216 = vunpack.c.l.b16 %v680
      %v2217 = vunpack.c.l.b16 %v681
      %v2218 = vunpack.c.l.b16 %v682
      %v2219 = vunpack.c.l.b16 %v683
      %v2220 = vunpack.c.l.b16 %v684
      %v2221 = vunpack.c.l.b16 %v685
      %v2222 = vunpack.c.l.b16 %v686
      %v2223 = vunpack.c.l.b16 %v687
      %v2224 = vunpack.c.l.b16 %v688
      %v2225 = vunpack.c.l.b16 %v689
      %v2226 = vunpack.c.l.b16 %v690
      %v2227 = vunpack.c.l.b16 %v691
      %v2228 = vunpack.c.l.b16 %v692
      %v2229 = vunpack.c.l.b16 %v693
      %v2230 = vunpack.c.l.b16 %v694
      %v2231 = vunpack.c.l.b16 %v695
      %v2232 = vunpack.c.l.b16 %v696
      %v2233 = vunpack.c.l.b16 %v697
      %v2234 = vunpack.c.l.b16 %v698
      %v2235 = vunpack.c.l.b16 %v699
      %v2236 = vunpack.c.l.b16 %v700
      %v2237 = vunpack.c.l.b16 %v701
      %v2238 = vunpack.c.l.b16 %v702
      %v2239 = vunpack.c.l.b16 %v703
      %v2240 = vunpack.c.l.b16 %v704
      %v2241 = vunpack.c.l.b16 %v705
      %v2242 = vunpack.c.l.b16 %v706
      %v2243 = vunpack.c.l.b16 %v707
      %v2244 = vunpack.c.l.b16 %v708
      %v2245 = vunpack.c.l.b16 %v709
      %v2246 = vunpack.c.l.b16 %v710
      %v2247 = vunpack.c.l.b16 %v711
      %v2248 = vunpack.c.l.b16 %v712
      %v2249 = vunpack.c.l.b16 %v713
      %v2250 = vunpack.c.l.b16 %v714
      %v2251 = vunpack.c.l.b16 %v715
      %v2252 = vunpack.c.l.b16 %v716
      %v2253 = vunpack.c.l.b16 %v717
      %v2254 = vunpack.c.l.b16 %v718
      %v2255 = vunpack.c.l.b16 %v719
      %v2256 = vunpack.c.l.b16 %v720
      %v2257 = vunpack.c.l.b16 %v721
      %v2258 = vunpack.c.l.b16 %v722
      %v2259 = vunpack.c.l.b16 %v723
      %v2260 = vunpack.c.l.b16 %v724
      %v2261 = vunpack.c.l.b16 %v725
      %v2262 = vunpack.c.l.b16 %v726
      %v2263 = vunpack.c.l.b16 %v727
      %v2264 = vunpack.c.l.b16 %v728
      %v2265 = vunpack.c.l.b16 %v729
      %v2266 = vunpack.c.l.b16 %v730
      %v2267 = vunpack.c.l.b16 %v731
      %v2268 = vunpack.c.l.b16 %v732
      %v2269 = vunpack.c.l.b16 %v733
      %v2270 = vunpack.c.l.b16 %v734
      %v2271 = vunpack.c.l.b16 %v735
      %v2272 = vunpack.c.l.b16 %v736
      %v2273 = vunpack.c.l.b16 %v737
      %v2274 = vunpack.c.l.b16 %v738
      %v2275 = vunpack.c.l.b16 %v739
      %v2276 = vunpack.c.l.b16 %v740
      %v2277 = vunpack.c.l.b16 %v741
      %v2278 = vunpack.c.l.b16 %v742
      %v2279 = vunpack.c.l.b16 %v743
      %v2280 = vunpack.c.l.b16 %v744
      %v2281 = vunpack.c.l.b16 %v745
      %v2282 = vunpack.c.l.b16 %v746
      %v2283 = vunpack.c.l.b16 %v747
      %v2284 = vunpack.c.l.b16 %v748
      %v2285 = vunpack.c.l.b16 %v749
      %v2286 = vunpack.c.l.b16 %v750
      %v2287 = vunpack.c.l.b16 %v751
      %v2288 = vunpack.c.l.b16 %v752
      %v2289 = vunpack.c.l.b16 %v753
      %v2290 = vunpack.c.l.b16 %v754
      %v2291 = vunpack.c.l.b16 %v755
      %v2292 = vunpack.c.l.b16 %v756
      %v2293 = vunpack.c.l.b16 %v757
      %v2294 = vunpack.c.l.b16 %v758
      %v2295 = vunpack.c.l.b16 %v759
      %v2296 = vunpack.c.l.b16 %v760
      %v2297 = vunpack.c.l.b16 %v761
      %v2298 = vunpack.c.l.b16 %v762
      %v2299 = vunpack.c.l.b16 %v763
      %v2300 = vunpack.c.l.b16 %v764
      %v2301 = vunpack.c.l.b16 %v765
      %v2302 = vunpack.c.l.b16 %v766
      %v2303 = vunpack.c.l.b16 %v767
      %v2304 = vunpack.c.l.b16 %v768
      %v2305 = vunpack.c.l.b16 %v769
      %v2306 = vunpack.c.l.b16 %v770
      %v2307 = vunpack.c.l.b16 %v771
      %v2308 = vunpack.c.l.b16 %v772
      %v2309 = vunpack.c.l.b16 %v773
      %v2310 = vunpack.c.l.b16 %v774
      %v2311 = vunpack.c.l.b16 %v775
      %v2312 = vunpack.c.l.b16 %v776
      %v2313 = vunpack.c.l.b16 %v777
      %v2314 = vunpack.c.l.b16 %v778
      %v2315 = vunpack.c.l.b16 %v779
      %v2316 = vunpack.c.l.b16 %v780
      %v2317 = vunpack.c.l.b16 %v781
      %v2318 = vunpack.c.l.b16 %v782
      %v2319 = vunpack.c.l.b16 %v783
      %v2320 = vpack.c.b16 %v2193, %v2192
      %v2321 = vpack.c.b16 %v2195, %v2194
      %v2322 = vpack.c.b16 %v2197, %v2196
      %v2323 = vpack.c.b16 %v2199, %v2198
      %v2324 = vpack.c.b16 %v2201, %v2200
      %v2325 = vpack.c.b16 %v2203, %v2202
      %v2326 = vpack.c.b16 %v2205, %v2204
      %v2327 = vpack.c.b16 %v2207, %v2206
      %v2328 = vpack.c.b16 %v2209, %v2208
      %v2329 = vpack.c.b16 %v2211, %v2210
      %v2330 = vpack.c.b16 %v2213, %v2212
      %v2331 = vpack.c.b16 %v2215, %v2214
      %v2332 = vpack.c.b16 %v2217, %v2216
      %v2333 = vpack.c.b16 %v2219, %v2218
      %v2334 = vpack.c.b16 %v2221, %v2220
      %v2335 = vpack.c.b16 %v2223, %v2222
      %v2336 = vpack.c.b16 %v2225, %v2224
      %v2337 = vpack.c.b16 %v2227, %v2226
      %v2338 = vpack.c.b16 %v2229, %v2228
      %v2339 = vpack.c.b16 %v2231, %v2230
      %v2340 = vpack.c.b16 %v2233, %v2232
      %v2341 = vpack.c.b16 %v2235, %v2234
      %v2342 = vpack.c.b16 %v2237, %v2236
      %v2343 = vpack.c.b16 %v2239, %v2238
      %v2344 = vpack.c.b16 %v2241, %v2240
      %v2345 = vpack.c.b16 %v2243, %v2242
      %v2346 = vpack.c.b16 %v2245, %v2244
      %v2347 = vpack.c.b16 %v2247, %v2246
      %v2348 = vpack.c.b16 %v2249, %v2248
      %v2349 = vpack.c.b16 %v2251, %v2250
      %v2350 = vpack.c.b16 %v2253, %v2252
      %v2351 = vpack.c.b16 %v2255, %v2254
      %v2352 = vpack.c.b16 %v2257, %v2256
      %v2353 = vpack.c.b16 %v2259, %v2258
      %v2354 = vpack.c.b16 %v2261, %v2260
      %v2355 = vpack.c.b16 %v2263, %v2262
      %v2356 = vpack.c.b16 %v2265, %v2264
      %v2357 = vpack.c.b16 %v2267, %v2266
      %v2358 = vpack.c.b16 %v2269, %v2268
      %v2359 = vpack.c.b16 %v2271, %v2270
      %v2360 = vpack.c.b16 %v2273, %v2272
      %v2361 = vpack.c.b16 %v2275, %v2274
      %v2362 = vpack.c.b16 %v2277, %v2276
      %v2363 = vpack.c.b16 %v2279, %v2278
      %v2364 = vpack.c.b16 %v2281, %v2280
      %v2365 = vpack.c.b16 %v2283, %v2282
      %v2366 = vpack.c.b16 %v2285, %v2284
      %v2367 = vpack.c.b16 %v2287, %v2286
      %v2368 = vpack.c.b16 %v2289, %v2288
      %v2369 = vpack.c.b16 %v2291, %v2290
      %v2370 = vpack.c.b16 %v2293, %v2292
      %v2371 = vpack.c.b16 %v2295, %v2294
      %v2372 = vpack.c.b16 %v2297, %v2296
      %v2373 = vpack.c.b16 %v2299, %v2298
      %v2374 = vpack.c.b16 %v2301, %v2300
      %v2375 = vpack.c.b16 %v2303, %v2302
      %v2376 = vpack.c.b16 %v2305, %v2304
      %v2377 = vpack.c.b16 %v2307, %v2306
      %v2378 = vpack.c.b16 %v2309, %v2308
      %v2379 = vpack.c.b16 %v2311, %v2310
      %v2380 = vpack.c.b16 %v2313, %v2312
      %v2381 = vpack.c.b16 %v2315, %v2314
      %v2382 = vpack.c.b16 %v2317, %v2316
      %v2383 = vpack.c.b16 %v2319, %v2318
      %2448 = vmatprep.subr.bf16.mxu0 0
      %2449 = vmatpush1.bf16.msra.mxu0 %v2327
      %2450 = vmatprep.subr.bf16.mxu0 0
      %2451 = vmatpush1.bf16.msra.mxu0 %v2326
      %2452 = vmatprep.subr.bf16.mxu0 0
      %2453 = vmatpush1.bf16.msra.mxu0 %v2325
      %2454 = vmatprep.subr.bf16.mxu0 0
      %2455 = vmatpush1.bf16.msra.mxu0 %v2324
      %2456 = vmatprep.subr.bf16.mxu0 0
      %2457 = vmatpush1.bf16.msra.mxu0 %v2323
      %2458 = vmatprep.subr.bf16.mxu0 0
      %2459 = vmatpush1.bf16.msra.mxu0 %v2322
      %2460 = vmatprep.subr.bf16.mxu0 0
      %2461 = vmatpush1.bf16.msra.mxu0 %v2321
      %2462 = vmatprep.subr.bf16.mxu0 0
      %2463 = vmatpush1.bf16.msra.mxu0 %v2320
      %2464 = vmatprep.subr.bf16.mxu0 0
      %2465 = vmatpush2.bf16.msra.mxu0 %v2335
      %2466 = vmatprep.subr.bf16.mxu0 0
      %2467 = vmatpush2.bf16.msra.mxu0 %v2334
      %2468 = vmatprep.subr.bf16.mxu0 0
      %2469 = vmatpush2.bf16.msra.mxu0 %v2333
      %2470 = vmatprep.subr.bf16.mxu0 0
      %2471 = vmatpush2.bf16.msra.mxu0 %v2332
      %2472 = vmatprep.subr.bf16.mxu0 0
      %2473 = vmatpush2.bf16.msra.mxu0 %v2331
      %2474 = vmatprep.subr.bf16.mxu0 0
      %2475 = vmatpush2.bf16.msra.mxu0 %v2330
      %2476 = vmatprep.subr.bf16.mxu0 0
      %2477 = vmatpush2.bf16.msra.mxu0 %v2329
      %2478 = vmatprep.subr.bf16.mxu0 0
      %2479 = vmatpush2.bf16.msra.mxu0 %v2328
      %2480 = vmatprep.mubr.bf16.mxu0 %v1553
      %2481 = vmatmul.mubr.bf16.gmra.mxu0 %v1552
      %v2482 = vpop.f32.mrf.mxu0
      %v2483 = vadd.f32 0.0, %v2482
      %v2484 = vpop.f32.mrf.mxu0
      %v2485 = vpop.f32.mrf.mxu0
      %v2486 = vadd.f32 0.0, %v2485
      %v2487 = vpop.f32.mrf.mxu0
      %2488 = vmatprep.mubr.bf16.mxu0 %v1561
      %2489 = vmatmul.mubr.bf16.gmra.mxu0 %v1560
      %v2490 = vpop.f32.mrf.mxu0
      %v2491 = vadd.f32 0.0, %v2490
      %v2492 = vpop.f32.mrf.mxu0
      %v2493 = vpop.f32.mrf.mxu0
      %v2494 = vadd.f32 0.0, %v2493
      %v2495 = vpop.f32.mrf.mxu0
      %2496 = vmatprep.mubr.bf16.mxu0 %v1569
      %2497 = vmatmul.mubr.bf16.gmra.mxu0 %v1568
      %v2498 = vpop.f32.mrf.mxu0
      %v2499 = vadd.f32 0.0, %v2498
      %v2500 = vpop.f32.mrf.mxu0
      %v2501 = vpop.f32.mrf.mxu0
      %v2502 = vadd.f32 0.0, %v2501
      %v2503 = vpop.f32.mrf.mxu0
      %2504 = vmatprep.mubr.bf16.mxu0 %v1577
      %2505 = vmatmul.mubr.bf16.gmra.mxu0 %v1576
      %v2506 = vpop.f32.mrf.mxu0
      %v2507 = vadd.f32 0.0, %v2506
      %v2508 = vpop.f32.mrf.mxu0
      %v2509 = vpop.f32.mrf.mxu0
      %v2510 = vadd.f32 0.0, %v2509
      %v2511 = vpop.f32.mrf.mxu0
      %2512 = vmatprep.mubr.bf16.mxu0 %v1585
      %2513 = vmatmul.mubr.bf16.gmra.mxu0 %v1584
      %v2514 = vpop.f32.mrf.mxu0
      %v2515 = vadd.f32 0.0, %v2514
      %v2516 = vpop.f32.mrf.mxu0
      %v2517 = vpop.f32.mrf.mxu0
      %v2518 = vadd.f32 0.0, %v2517
      %v2519 = vpop.f32.mrf.mxu0
      %2520 = vmatprep.mubr.bf16.mxu0 %v1593
      %2521 = vmatmul.mubr.bf16.gmra.mxu0 %v1592
      %v2522 = vpop.f32.mrf.mxu0
      %v2523 = vadd.f32 0.0, %v2522
      %v2524 = vpop.f32.mrf.mxu0
      %v2525 = vpop.f32.mrf.mxu0
      %v2526 = vadd.f32 0.0, %v2525
      %v2527 = vpop.f32.mrf.mxu0
      %2528 = vmatprep.mubr.bf16.mxu0 %v1601
      %2529 = vmatmul.mubr.bf16.gmra.mxu0 %v1600
      %v2530 = vpop.f32.mrf.mxu0
      %v2531 = vadd.f32 0.0, %v2530
      %v2532 = vpop.f32.mrf.mxu0
      %v2533 = vpop.f32.mrf.mxu0
      %v2534 = vadd.f32 0.0, %v2533
      %v2535 = vpop.f32.mrf.mxu0
      %2536 = vmatprep.mubr.bf16.mxu0 %v1609
      %2537 = vmatmul.mubr.bf16.gmra.mxu0 %v1608
      %v2538 = vpop.f32.mrf.mxu0
      %v2539 = vadd.f32 0.0, %v2538
      %v2540 = vpop.f32.mrf.mxu0
      %v2541 = vpop.f32.mrf.mxu0
      %v2542 = vadd.f32 0.0, %v2541
      %v2543 = vpop.f32.mrf.mxu0
      %2544 = vmatprep.mubr.bf16.mxu0 %v1617
      %2545 = vmatmul.mubr.bf16.gmra.mxu0 %v1616
      %v2546 = vpop.f32.mrf.mxu0
      %v2547 = vadd.f32 0.0, %v2546
      %v2548 = vpop.f32.mrf.mxu0
      %v2549 = vpop.f32.mrf.mxu0
      %v2550 = vadd.f32 0.0, %v2549
      %v2551 = vpop.f32.mrf.mxu0
      %2552 = vmatprep.mubr.bf16.mxu0 %v1625
      %2553 = vmatmul.mubr.bf16.gmra.mxu0 %v1624
      %v2554 = vpop.f32.mrf.mxu0
      %v2555 = vadd.f32 0.0, %v2554
      %v2556 = vpop.f32.mrf.mxu0
      %v2557 = vpop.f32.mrf.mxu0
      %v2558 = vadd.f32 0.0, %v2557
      %v2559 = vpop.f32.mrf.mxu0
      %2560 = vmatprep.mubr.bf16.mxu0 %v1633
      %2561 = vmatmul.mubr.bf16.gmra.mxu0 %v1632
      %v2562 = vpop.f32.mrf.mxu0
      %v2563 = vadd.f32 0.0, %v2562
      %v2564 = vpop.f32.mrf.mxu0
      %v2565 = vpop.f32.mrf.mxu0
      %v2566 = vadd.f32 0.0, %v2565
      %v2567 = vpop.f32.mrf.mxu0
      %2568 = vmatprep.mubr.bf16.mxu0 %v1641
      %2569 = vmatmul.mubr.bf16.gmra.mxu0 %v1640
      %v2570 = vpop.f32.mrf.mxu0
      %v2571 = vadd.f32 0.0, %v2570
      %v2572 = vpop.f32.mrf.mxu0
      %v2573 = vpop.f32.mrf.mxu0
      %v2574 = vadd.f32 0.0, %v2573
      %v2575 = vpop.f32.mrf.mxu0
      %2576 = vmatprep.mubr.bf16.mxu0 %v1649
      %2577 = vmatmul.mubr.bf16.gmra.mxu0 %v1648
      %v2578 = vpop.f32.mrf.mxu0
      %v2579 = vadd.f32 0.0, %v2578
      %v2580 = vpop.f32.mrf.mxu0
      %v2581 = vpop.f32.mrf.mxu0
      %v2582 = vadd.f32 0.0, %v2581
      %v2583 = vpop.f32.mrf.mxu0
      %2584 = vmatprep.mubr.bf16.mxu0 %v1657
      %2585 = vmatmul.mubr.bf16.gmra.mxu0 %v1656
      %v2586 = vpop.f32.mrf.mxu0
      %v2587 = vadd.f32 0.0, %v2586
      %v2588 = vpop.f32.mrf.mxu0
      %v2589 = vpop.f32.mrf.mxu0
      %v2590 = vadd.f32 0.0, %v2589
      %v2591 = vpop.f32.mrf.mxu0
      %2592 = vmatprep.mubr.bf16.mxu0 %v1665
      %2593 = vmatmul.mubr.bf16.gmra.mxu0 %v1664
      %v2594 = vpop.f32.mrf.mxu0
      %v2595 = vadd.f32 0.0, %v2594
      %v2596 = vpop.f32.mrf.mxu0
      %v2597 = vpop.f32.mrf.mxu0
      %v2598 = vadd.f32 0.0, %v2597
      %v2599 = vpop.f32.mrf.mxu0
      %2600 = vmatprep.mubr.bf16.mxu0 %v1673
      %2601 = vmatmul.mubr.bf16.gmra.mxu0 %v1672
      %v2602 = vpop.f32.mrf.mxu0
      %v2603 = vadd.f32 0.0, %v2602
      %v2604 = vpop.f32.mrf.mxu0
      %v2605 = vpop.f32.mrf.mxu0
      %v2606 = vadd.f32 0.0, %v2605
      %v2607 = vpop.f32.mrf.mxu0
      %2608 = vmatprep.mubr.bf16.mxu0 %v1681
      %2609 = vmatmul.mubr.bf16.gmra.mxu0 %v1680
      %v2610 = vpop.f32.mrf.mxu0
      %v2611 = vadd.f32 0.0, %v2610
      %v2612 = vpop.f32.mrf.mxu0
      %v2613 = vpop.f32.mrf.mxu0
      %v2614 = vadd.f32 0.0, %v2613
      %v2615 = vpop.f32.mrf.mxu0
      %2616 = vmatprep.mubr.bf16.mxu0 %v1689
      %2617 = vmatmul.mubr.bf16.gmra.mxu0 %v1688
      %v2618 = vpop.f32.mrf.mxu0
      %v2619 = vadd.f32 0.0, %v2618
      %v2620 = vpop.f32.mrf.mxu0
      %v2621 = vpop.f32.mrf.mxu0
      %v2622 = vadd.f32 0.0, %v2621
      %v2623 = vpop.f32.mrf.mxu0
      %2624 = vmatprep.mubr.bf16.mxu0 %v1697
      %2625 = vmatmul.mubr.bf16.gmra.mxu0 %v1696
      %v2626 = vpop.f32.mrf.mxu0
      %v2627 = vadd.f32 0.0, %v2626
      %v2628 = vpop.f32.mrf.mxu0
      %v2629 = vpop.f32.mrf.mxu0
      %v2630 = vadd.f32 0.0, %v2629
      %v2631 = vpop.f32.mrf.mxu0
      %2632 = vmatprep.mubr.bf16.mxu0 %v1705
      %2633 = vmatmul.mubr.bf16.gmra.mxu0 %v1704
      %v2634 = vpop.f32.mrf.mxu0
      %v2635 = vadd.f32 0.0, %v2634
      %v2636 = vpop.f32.mrf.mxu0
      %v2637 = vpop.f32.mrf.mxu0
      %v2638 = vadd.f32 0.0, %v2637
      %v2639 = vpop.f32.mrf.mxu0
      %2640 = vmatprep.mubr.bf16.mxu0 %v1713
      %2641 = vmatmul.mubr.bf16.gmra.mxu0 %v1712
      %v2642 = vpop.f32.mrf.mxu0
      %v2643 = vadd.f32 0.0, %v2642
      %v2644 = vpop.f32.mrf.mxu0
      %v2645 = vpop.f32.mrf.mxu0
      %v2646 = vadd.f32 0.0, %v2645
      %v2647 = vpop.f32.mrf.mxu0
      %2648 = vmatprep.mubr.bf16.mxu0 %v1721
      %2649 = vmatmul.mubr.bf16.gmra.mxu0 %v1720
      %v2650 = vpop.f32.mrf.mxu0
      %v2651 = vadd.f32 0.0, %v2650
      %v2652 = vpop.f32.mrf.mxu0
      %v2653 = vpop.f32.mrf.mxu0
      %v2654 = vadd.f32 0.0, %v2653
      %v2655 = vpop.f32.mrf.mxu0
      %2656 = vmatprep.mubr.bf16.mxu0 %v1729
      %2657 = vmatmul.mubr.bf16.gmra.mxu0 %v1728
      %v2658 = vpop.f32.mrf.mxu0
      %v2659 = vadd.f32 0.0, %v2658
      %v2660 = vpop.f32.mrf.mxu0
      %v2661 = vpop.f32.mrf.mxu0
      %v2662 = vadd.f32 0.0, %v2661
      %v2663 = vpop.f32.mrf.mxu0
      %2664 = vmatprep.mubr.bf16.mxu0 %v1737
      %2665 = vmatmul.mubr.bf16.gmra.mxu0 %v1736
      %v2666 = vpop.f32.mrf.mxu0
      %v2667 = vadd.f32 0.0, %v2666
      %v2668 = vpop.f32.mrf.mxu0
      %v2669 = vpop.f32.mrf.mxu0
      %v2670 = vadd.f32 0.0, %v2669
      %v2671 = vpop.f32.mrf.mxu0
      %2672 = vmatprep.mubr.bf16.mxu0 %v1745
      %2673 = vmatmul.mubr.bf16.gmra.mxu0 %v1744
      %v2674 = vpop.f32.mrf.mxu0
      %v2675 = vadd.f32 0.0, %v2674
      %v2676 = vpop.f32.mrf.mxu0
      %v2677 = vpop.f32.mrf.mxu0
      %v2678 = vadd.f32 0.0, %v2677
      %v2679 = vpop.f32.mrf.mxu0
      %2680 = vmatprep.mubr.bf16.mxu0 %v1753
      %2681 = vmatmul.mubr.bf16.gmra.mxu0 %v1752
      %v2682 = vpop.f32.mrf.mxu0
      %v2683 = vadd.f32 0.0, %v2682
      %v2684 = vpop.f32.mrf.mxu0
      %v2685 = vpop.f32.mrf.mxu0
      %v2686 = vadd.f32 0.0, %v2685
      %v2687 = vpop.f32.mrf.mxu0
      %2688 = vmatprep.mubr.bf16.mxu0 %v1761
      %2689 = vmatmul.mubr.bf16.gmra.mxu0 %v1760
      %v2690 = vpop.f32.mrf.mxu0
      %v2691 = vadd.f32 0.0, %v2690
      %v2692 = vpop.f32.mrf.mxu0
      %v2693 = vpop.f32.mrf.mxu0
      %v2694 = vadd.f32 0.0, %v2693
      %v2695 = vpop.f32.mrf.mxu0
      %2696 = vmatprep.mubr.bf16.mxu0 %v1769
      %2697 = vmatmul.mubr.bf16.gmra.mxu0 %v1768
      %v2698 = vpop.f32.mrf.mxu0
      %v2699 = vadd.f32 0.0, %v2698
      %v2700 = vpop.f32.mrf.mxu0
      %v2701 = vpop.f32.mrf.mxu0
      %v2702 = vadd.f32 0.0, %v2701
      %v2703 = vpop.f32.mrf.mxu0
      %2704 = vmatprep.mubr.bf16.mxu0 %v1777
      %2705 = vmatmul.mubr.bf16.gmra.mxu0 %v1776
      %v2706 = vpop.f32.mrf.mxu0
      %v2707 = vadd.f32 0.0, %v2706
      %v2708 = vpop.f32.mrf.mxu0
      %v2709 = vpop.f32.mrf.mxu0
      %v2710 = vadd.f32 0.0, %v2709
      %v2711 = vpop.f32.mrf.mxu0
      %2712 = vmatprep.mubr.bf16.mxu0 %v1785
      %2713 = vmatmul.mubr.bf16.gmra.mxu0 %v1784
      %v2714 = vpop.f32.mrf.mxu0
      %v2715 = vadd.f32 0.0, %v2714
      %v2716 = vpop.f32.mrf.mxu0
      %v2717 = vpop.f32.mrf.mxu0
      %v2718 = vadd.f32 0.0, %v2717
      %v2719 = vpop.f32.mrf.mxu0
      %2720 = vmatprep.mubr.bf16.mxu0 %v1793
      %2721 = vmatmul.mubr.bf16.gmra.mxu0 %v1792
      %v2722 = vpop.f32.mrf.mxu0
      %v2723 = vadd.f32 0.0, %v2722
      %v2724 = vpop.f32.mrf.mxu0
      %v2725 = vpop.f32.mrf.mxu0
      %v2726 = vadd.f32 0.0, %v2725
      %v2727 = vpop.f32.mrf.mxu0
      %2728 = vmatprep.mubr.bf16.mxu0 %v1801
      %2729 = vmatmul.mubr.bf16.gmra.mxu0 %v1800
      %v2730 = vpop.f32.mrf.mxu0
      %v2731 = vadd.f32 0.0, %v2730
      %v2732 = vpop.f32.mrf.mxu0
      %v2733 = vpop.f32.mrf.mxu0
      %v2734 = vadd.f32 0.0, %v2733
      %v2735 = vpop.f32.mrf.mxu0
      %2736 = vdwg.mxu0
      %2737 = vmatprep.subr.bf16.mxu0 0
      %2738 = vmatpush1.bf16.msra.mxu0 %v2343
      %2739 = vmatprep.subr.bf16.mxu0 0
      %2740 = vmatpush1.bf16.msra.mxu0 %v2342
      %2741 = vmatprep.subr.bf16.mxu0 0
      %2742 = vmatpush1.bf16.msra.mxu0 %v2341
      %2743 = vmatprep.subr.bf16.mxu0 0
      %2744 = vmatpush1.bf16.msra.mxu0 %v2340
      %2745 = vmatprep.subr.bf16.mxu0 0
      %2746 = vmatpush1.bf16.msra.mxu0 %v2339
      %2747 = vmatprep.subr.bf16.mxu0 0
      %2748 = vmatpush1.bf16.msra.mxu0 %v2338
      %2749 = vmatprep.subr.bf16.mxu0 0
      %2750 = vmatpush1.bf16.msra.mxu0 %v2337
      %2751 = vmatprep.subr.bf16.mxu0 0
      %2752 = vmatpush1.bf16.msra.mxu0 %v2336
      %2753 = vmatprep.subr.bf16.mxu0 0
      %2754 = vmatpush2.bf16.msra.mxu0 %v2351
      %2755 = vmatprep.subr.bf16.mxu0 0
      %2756 = vmatpush2.bf16.msra.mxu0 %v2350
      %2757 = vmatprep.subr.bf16.mxu0 0
      %2758 = vmatpush2.bf16.msra.mxu0 %v2349
      %2759 = vmatprep.subr.bf16.mxu0 0
      %2760 = vmatpush2.bf16.msra.mxu0 %v2348
      %2761 = vmatprep.subr.bf16.mxu0 0
      %2762 = vmatpush2.bf16.msra.mxu0 %v2347
      %2763 = vmatprep.subr.bf16.mxu0 0
      %2764 = vmatpush2.bf16.msra.mxu0 %v2346
      %2765 = vmatprep.subr.bf16.mxu0 0
      %2766 = vmatpush2.bf16.msra.mxu0 %v2345
      %2767 = vmatprep.subr.bf16.mxu0 0
      %2768 = vmatpush2.bf16.msra.mxu0 %v2344
      %2769 = vmatprep.mubr.bf16.mxu0 %v1555
      %2770 = vmatmul.mubr.bf16.gmra.mxu0 %v1554
      %v2771 = vpop.f32.mrf.mxu0
      %v2772 = vadd.f32 %v2483, %v2771
      %v2773 = vpop.f32.mrf.mxu0
      %v2774 = vpop.f32.mrf.mxu0
      %v2775 = vadd.f32 %v2486, %v2774
      %v2776 = vpop.f32.mrf.mxu0
      %2777 = vmatprep.mubr.bf16.mxu0 %v1563
      %2778 = vmatmul.mubr.bf16.gmra.mxu0 %v1562
      %v2779 = vpop.f32.mrf.mxu0
      %v2780 = vadd.f32 %v2491, %v2779
      %v2781 = vpop.f32.mrf.mxu0
      %v2782 = vpop.f32.mrf.mxu0
      %v2783 = vadd.f32 %v2494, %v2782
      %v2784 = vpop.f32.mrf.mxu0
      %2785 = vmatprep.mubr.bf16.mxu0 %v1571
      %2786 = vmatmul.mubr.bf16.gmra.mxu0 %v1570
      %v2787 = vpop.f32.mrf.mxu0
      %v2788 = vadd.f32 %v2499, %v2787
      %v2789 = vpop.f32.mrf.mxu0
      %v2790 = vpop.f32.mrf.mxu0
      %v2791 = vadd.f32 %v2502, %v2790
      %v2792 = vpop.f32.mrf.mxu0
      %2793 = vmatprep.mubr.bf16.mxu0 %v1579
      %2794 = vmatmul.mubr.bf16.gmra.mxu0 %v1578
      %v2795 = vpop.f32.mrf.mxu0
      %v2796 = vadd.f32 %v2507, %v2795
      %v2797 = vpop.f32.mrf.mxu0
      %v2798 = vpop.f32.mrf.mxu0
      %v2799 = vadd.f32 %v2510, %v2798
      %v2800 = vpop.f32.mrf.mxu0
      %2801 = vmatprep.mubr.bf16.mxu0 %v1587
      %2802 = vmatmul.mubr.bf16.gmra.mxu0 %v1586
      %v2803 = vpop.f32.mrf.mxu0
      %v2804 = vadd.f32 %v2515, %v2803
      %v2805 = vpop.f32.mrf.mxu0
      %v2806 = vpop.f32.mrf.mxu0
      %v2807 = vadd.f32 %v2518, %v2806
      %v2808 = vpop.f32.mrf.mxu0
      %2809 = vmatprep.mubr.bf16.mxu0 %v1595
      %2810 = vmatmul.mubr.bf16.gmra.mxu0 %v1594
      %v2811 = vpop.f32.mrf.mxu0
      %v2812 = vadd.f32 %v2523, %v2811
      %v2813 = vpop.f32.mrf.mxu0
      %v2814 = vpop.f32.mrf.mxu0
      %v2815 = vadd.f32 %v2526, %v2814
      %v2816 = vpop.f32.mrf.mxu0
      %2817 = vmatprep.mubr.bf16.mxu0 %v1603
      %2818 = vmatmul.mubr.bf16.gmra.mxu0 %v1602
      %v2819 = vpop.f32.mrf.mxu0
      %v2820 = vadd.f32 %v2531, %v2819
      %v2821 = vpop.f32.mrf.mxu0
      %v2822 = vpop.f32.mrf.mxu0
      %v2823 = vadd.f32 %v2534, %v2822
      %v2824 = vpop.f32.mrf.mxu0
      %2825 = vmatprep.mubr.bf16.mxu0 %v1611
      %2826 = vmatmul.mubr.bf16.gmra.mxu0 %v1610
      %v2827 = vpop.f32.mrf.mxu0
      %v2828 = vadd.f32 %v2539, %v2827
      %v2829 = vpop.f32.mrf.mxu0
      %v2830 = vpop.f32.mrf.mxu0
      %v2831 = vadd.f32 %v2542, %v2830
      %v2832 = vpop.f32.mrf.mxu0
      %2833 = vmatprep.mubr.bf16.mxu0 %v1619
      %2834 = vmatmul.mubr.bf16.gmra.mxu0 %v1618
      %v2835 = vpop.f32.mrf.mxu0
      %v2836 = vadd.f32 %v2547, %v2835
      %v2837 = vpop.f32.mrf.mxu0
      %v2838 = vpop.f32.mrf.mxu0
      %v2839 = vadd.f32 %v2550, %v2838
      %v2840 = vpop.f32.mrf.mxu0
      %2841 = vmatprep.mubr.bf16.mxu0 %v1627
      %2842 = vmatmul.mubr.bf16.gmra.mxu0 %v1626
      %v2843 = vpop.f32.mrf.mxu0
      %v2844 = vadd.f32 %v2555, %v2843
      %v2845 = vpop.f32.mrf.mxu0
      %v2846 = vpop.f32.mrf.mxu0
      %v2847 = vadd.f32 %v2558, %v2846
      %v2848 = vpop.f32.mrf.mxu0
      %2849 = vmatprep.mubr.bf16.mxu0 %v1635
      %2850 = vmatmul.mubr.bf16.gmra.mxu0 %v1634
      %v2851 = vpop.f32.mrf.mxu0
      %v2852 = vadd.f32 %v2563, %v2851
      %v2853 = vpop.f32.mrf.mxu0
      %v2854 = vpop.f32.mrf.mxu0
      %v2855 = vadd.f32 %v2566, %v2854
      %v2856 = vpop.f32.mrf.mxu0
      %2857 = vmatprep.mubr.bf16.mxu0 %v1643
      %2858 = vmatmul.mubr.bf16.gmra.mxu0 %v1642
      %v2859 = vpop.f32.mrf.mxu0
      %v2860 = vadd.f32 %v2571, %v2859
      %v2861 = vpop.f32.mrf.mxu0
      %v2862 = vpop.f32.mrf.mxu0
      %v2863 = vadd.f32 %v2574, %v2862
      %v2864 = vpop.f32.mrf.mxu0
      %2865 = vmatprep.mubr.bf16.mxu0 %v1651
      %2866 = vmatmul.mubr.bf16.gmra.mxu0 %v1650
      %v2867 = vpop.f32.mrf.mxu0
      %v2868 = vadd.f32 %v2579, %v2867
      %v2869 = vpop.f32.mrf.mxu0
      %v2870 = vpop.f32.mrf.mxu0
      %v2871 = vadd.f32 %v2582, %v2870
      %v2872 = vpop.f32.mrf.mxu0
      %2873 = vmatprep.mubr.bf16.mxu0 %v1659
      %2874 = vmatmul.mubr.bf16.gmra.mxu0 %v1658
      %v2875 = vpop.f32.mrf.mxu0
      %v2876 = vadd.f32 %v2587, %v2875
      %v2877 = vpop.f32.mrf.mxu0
      %v2878 = vpop.f32.mrf.mxu0
      %v2879 = vadd.f32 %v2590, %v2878
      %v2880 = vpop.f32.mrf.mxu0
      %2881 = vmatprep.mubr.bf16.mxu0 %v1667
      %2882 = vmatmul.mubr.bf16.gmra.mxu0 %v1666
      %v2883 = vpop.f32.mrf.mxu0
      %v2884 = vadd.f32 %v2595, %v2883
      %v2885 = vpop.f32.mrf.mxu0
      %v2886 = vpop.f32.mrf.mxu0
      %v2887 = vadd.f32 %v2598, %v2886
      %v2888 = vpop.f32.mrf.mxu0
      %2889 = vmatprep.mubr.bf16.mxu0 %v1675
      %2890 = vmatmul.mubr.bf16.gmra.mxu0 %v1674
      %v2891 = vpop.f32.mrf.mxu0
      %v2892 = vadd.f32 %v2603, %v2891
      %v2893 = vpop.f32.mrf.mxu0
      %v2894 = vpop.f32.mrf.mxu0
      %v2895 = vadd.f32 %v2606, %v2894
      %v2896 = vpop.f32.mrf.mxu0
      %2897 = vmatprep.mubr.bf16.mxu0 %v1683
      %2898 = vmatmul.mubr.bf16.gmra.mxu0 %v1682
      %v2899 = vpop.f32.mrf.mxu0
      %v2900 = vadd.f32 %v2611, %v2899
      %v2901 = vpop.f32.mrf.mxu0
      %v2902 = vpop.f32.mrf.mxu0
      %v2903 = vadd.f32 %v2614, %v2902
      %v2904 = vpop.f32.mrf.mxu0
      %2905 = vmatprep.mubr.bf16.mxu0 %v1691
      %2906 = vmatmul.mubr.bf16.gmra.mxu0 %v1690
      %v2907 = vpop.f32.mrf.mxu0
      %v2908 = vadd.f32 %v2619, %v2907
      %v2909 = vpop.f32.mrf.mxu0
      %v2910 = vpop.f32.mrf.mxu0
      %v2911 = vadd.f32 %v2622, %v2910
      %v2912 = vpop.f32.mrf.mxu0
      %2913 = vmatprep.mubr.bf16.mxu0 %v1699
      %2914 = vmatmul.mubr.bf16.gmra.mxu0 %v1698
      %v2915 = vpop.f32.mrf.mxu0
      %v2916 = vadd.f32 %v2627, %v2915
      %v2917 = vpop.f32.mrf.mxu0
      %v2918 = vpop.f32.mrf.mxu0
      %v2919 = vadd.f32 %v2630, %v2918
      %v2920 = vpop.f32.mrf.mxu0
      %2921 = vmatprep.mubr.bf16.mxu0 %v1707
      %2922 = vmatmul.mubr.bf16.gmra.mxu0 %v1706
      %v2923 = vpop.f32.mrf.mxu0
      %v2924 = vadd.f32 %v2635, %v2923
      %v2925 = vpop.f32.mrf.mxu0
      %v2926 = vpop.f32.mrf.mxu0
      %v2927 = vadd.f32 %v2638, %v2926
      %v2928 = vpop.f32.mrf.mxu0
      %2929 = vmatprep.mubr.bf16.mxu0 %v1715
      %2930 = vmatmul.mubr.bf16.gmra.mxu0 %v1714
      %v2931 = vpop.f32.mrf.mxu0
      %v2932 = vadd.f32 %v2643, %v2931
      %v2933 = vpop.f32.mrf.mxu0
      %v2934 = vpop.f32.mrf.mxu0
      %v2935 = vadd.f32 %v2646, %v2934
      %v2936 = vpop.f32.mrf.mxu0
      %2937 = vmatprep.mubr.bf16.mxu0 %v1723
      %2938 = vmatmul.mubr.bf16.gmra.mxu0 %v1722
      %v2939 = vpop.f32.mrf.mxu0
      %v2940 = vadd.f32 %v2651, %v2939
      %v2941 = vpop.f32.mrf.mxu0
      %v2942 = vpop.f32.mrf.mxu0
      %v2943 = vadd.f32 %v2654, %v2942
      %v2944 = vpop.f32.mrf.mxu0
      %2945 = vmatprep.mubr.bf16.mxu0 %v1731
      %2946 = vmatmul.mubr.bf16.gmra.mxu0 %v1730
      %v2947 = vpop.f32.mrf.mxu0
      %v2948 = vadd.f32 %v2659, %v2947
      %v2949 = vpop.f32.mrf.mxu0
      %v2950 = vpop.f32.mrf.mxu0
      %v2951 = vadd.f32 %v2662, %v2950
      %v2952 = vpop.f32.mrf.mxu0
      %2953 = vmatprep.mubr.bf16.mxu0 %v1739
      %2954 = vmatmul.mubr.bf16.gmra.mxu0 %v1738
      %v2955 = vpop.f32.mrf.mxu0
      %v2956 = vadd.f32 %v2667, %v2955
      %v2957 = vpop.f32.mrf.mxu0
      %v2958 = vpop.f32.mrf.mxu0
      %v2959 = vadd.f32 %v2670, %v2958
      %v2960 = vpop.f32.mrf.mxu0
      %2961 = vmatprep.mubr.bf16.mxu0 %v1747
      %2962 = vmatmul.mubr.bf16.gmra.mxu0 %v1746
      %v2963 = vpop.f32.mrf.mxu0
      %v2964 = vadd.f32 %v2675, %v2963
      %v2965 = vpop.f32.mrf.mxu0
      %v2966 = vpop.f32.mrf.mxu0
      %v2967 = vadd.f32 %v2678, %v2966
      %v2968 = vpop.f32.mrf.mxu0
      %2969 = vmatprep.mubr.bf16.mxu0 %v1755
      %2970 = vmatmul.mubr.bf16.gmra.mxu0 %v1754
      %v2971 = vpop.f32.mrf.mxu0
      %v2972 = vadd.f32 %v2683, %v2971
      %v2973 = vpop.f32.mrf.mxu0
      %v2974 = vpop.f32.mrf.mxu0
      %v2975 = vadd.f32 %v2686, %v2974
      %v2976 = vpop.f32.mrf.mxu0
      %2977 = vmatprep.mubr.bf16.mxu0 %v1763
      %2978 = vmatmul.mubr.bf16.gmra.mxu0 %v1762
      %v2979 = vpop.f32.mrf.mxu0
      %v2980 = vadd.f32 %v2691, %v2979
      %v2981 = vpop.f32.mrf.mxu0
      %v2982 = vpop.f32.mrf.mxu0
      %v2983 = vadd.f32 %v2694, %v2982
      %v2984 = vpop.f32.mrf.mxu0
      %2985 = vmatprep.mubr.bf16.mxu0 %v1771
      %2986 = vmatmul.mubr.bf16.gmra.mxu0 %v1770
      %v2987 = vpop.f32.mrf.mxu0
      %v2988 = vadd.f32 %v2699, %v2987
      %v2989 = vpop.f32.mrf.mxu0
      %v2990 = vpop.f32.mrf.mxu0
      %v2991 = vadd.f32 %v2702, %v2990
      %v2992 = vpop.f32.mrf.mxu0
      %2993 = vmatprep.mubr.bf16.mxu0 %v1779
      %2994 = vmatmul.mubr.bf16.gmra.mxu0 %v1778
      %v2995 = vpop.f32.mrf.mxu0
      %v2996 = vadd.f32 %v2707, %v2995
      %v2997 = vpop.f32.mrf.mxu0
      %v2998 = vpop.f32.mrf.mxu0
      %v2999 = vadd.f32 %v2710, %v2998
      %v3000 = vpop.f32.mrf.mxu0
      %3001 = vmatprep.mubr.bf16.mxu0 %v1787
      %3002 = vmatmul.mubr.bf16.gmra.mxu0 %v1786
      %v3003 = vpop.f32.mrf.mxu0
      %v3004 = vadd.f32 %v2715, %v3003
      %v3005 = vpop.f32.mrf.mxu0
      %v3006 = vpop.f32.mrf.mxu0
      %v3007 = vadd.f32 %v2718, %v3006
      %v3008 = vpop.f32.mrf.mxu0
      %3009 = vmatprep.mubr.bf16.mxu0 %v1795
      %3010 = vmatmul.mubr.bf16.gmra.mxu0 %v1794
      %v3011 = vpop.f32.mrf.mxu0
      %v3012 = vadd.f32 %v2723, %v3011
      %v3013 = vpop.f32.mrf.mxu0
      %v3014 = vpop.f32.mrf.mxu0
      %v3015 = vadd.f32 %v2726, %v3014
      %v3016 = vpop.f32.mrf.mxu0
      %3017 = vmatprep.mubr.bf16.mxu0 %v1803
      %3018 = vmatmul.mubr.bf16.gmra.mxu0 %v1802
      %v3019 = vpop.f32.mrf.mxu0
      %v3020 = vadd.f32 %v2731, %v3019
      %v3021 = vpop.f32.mrf.mxu0
      %v3022 = vpop.f32.mrf.mxu0
      %v3023 = vadd.f32 %v2734, %v3022
      %v3024 = vpop.f32.mrf.mxu0
      %3025 = vdwg.mxu0
      %3026 = vmatprep.subr.bf16.mxu0 0
      %3027 = vmatpush1.bf16.msra.mxu0 %v2359
      %3028 = vmatprep.subr.bf16.mxu0 0
      %3029 = vmatpush1.bf16.msra.mxu0 %v2358
      %3030 = vmatprep.subr.bf16.mxu0 0
      %3031 = vmatpush1.bf16.msra.mxu0 %v2357
      %3032 = vmatprep.subr.bf16.mxu0 0
      %3033 = vmatpush1.bf16.msra.mxu0 %v2356
      %3034 = vmatprep.subr.bf16.mxu0 0
      %3035 = vmatpush1.bf16.msra.mxu0 %v2355
      %3036 = vmatprep.subr.bf16.mxu0 0
      %3037 = vmatpush1.bf16.msra.mxu0 %v2354
      %3038 = vmatprep.subr.bf16.mxu0 0
      %3039 = vmatpush1.bf16.msra.mxu0 %v2353
      %3040 = vmatprep.subr.bf16.mxu0 0
      %3041 = vmatpush1.bf16.msra.mxu0 %v2352
      %3042 = vmatprep.subr.bf16.mxu0 0
      %3043 = vmatpush2.bf16.msra.mxu0 %v2367
      %3044 = vmatprep.subr.bf16.mxu0 0
      %3045 = vmatpush2.bf16.msra.mxu0 %v2366
      %3046 = vmatprep.subr.bf16.mxu0 0
      %3047 = vmatpush2.bf16.msra.mxu0 %v2365
      %3048 = vmatprep.subr.bf16.mxu0 0
      %3049 = vmatpush2.bf16.msra.mxu0 %v2364
      %3050 = vmatprep.subr.bf16.mxu0 0
      %3051 = vmatpush2.bf16.msra.mxu0 %v2363
      %3052 = vmatprep.subr.bf16.mxu0 0
      %3053 = vmatpush2.bf16.msra.mxu0 %v2362
      %3054 = vmatprep.subr.bf16.mxu0 0
      %3055 = vmatpush2.bf16.msra.mxu0 %v2361
      %3056 = vmatprep.subr.bf16.mxu0 0
      %3057 = vmatpush2.bf16.msra.mxu0 %v2360
      %3058 = vmatprep.mubr.bf16.mxu0 %v1557
      %3059 = vmatmul.mubr.bf16.gmra.mxu0 %v1556
      %v3060 = vpop.f32.mrf.mxu0
      %v3061 = vadd.f32 %v2772, %v3060
      %v3062 = vpop.f32.mrf.mxu0
      %v3063 = vpop.f32.mrf.mxu0
      %v3064 = vadd.f32 %v2775, %v3063
      %v3065 = vpop.f32.mrf.mxu0
      %3066 = vmatprep.mubr.bf16.mxu0 %v1565
      %3067 = vmatmul.mubr.bf16.gmra.mxu0 %v1564
      %v3068 = vpop.f32.mrf.mxu0
      %v3069 = vadd.f32 %v2780, %v3068
      %v3070 = vpop.f32.mrf.mxu0
      %v3071 = vpop.f32.mrf.mxu0
      %v3072 = vadd.f32 %v2783, %v3071
      %v3073 = vpop.f32.mrf.mxu0
      %3074 = vmatprep.mubr.bf16.mxu0 %v1573
      %3075 = vmatmul.mubr.bf16.gmra.mxu0 %v1572
      %v3076 = vpop.f32.mrf.mxu0
      %v3077 = vadd.f32 %v2788, %v3076
      %v3078 = vpop.f32.mrf.mxu0
      %v3079 = vpop.f32.mrf.mxu0
      %v3080 = vadd.f32 %v2791, %v3079
      %v3081 = vpop.f32.mrf.mxu0
      %3082 = vmatprep.mubr.bf16.mxu0 %v1581
      %3083 = vmatmul.mubr.bf16.gmra.mxu0 %v1580
      %v3084 = vpop.f32.mrf.mxu0
      %v3085 = vadd.f32 %v2796, %v3084
      %v3086 = vpop.f32.mrf.mxu0
      %v3087 = vpop.f32.mrf.mxu0
      %v3088 = vadd.f32 %v2799, %v3087
      %v3089 = vpop.f32.mrf.mxu0
      %3090 = vmatprep.mubr.bf16.mxu0 %v1589
      %3091 = vmatmul.mubr.bf16.gmra.mxu0 %v1588
      %v3092 = vpop.f32.mrf.mxu0
      %v3093 = vadd.f32 %v2804, %v3092
      %v3094 = vpop.f32.mrf.mxu0
      %v3095 = vpop.f32.mrf.mxu0
      %v3096 = vadd.f32 %v2807, %v3095
      %v3097 = vpop.f32.mrf.mxu0
      %3098 = vmatprep.mubr.bf16.mxu0 %v1597
      %3099 = vmatmul.mubr.bf16.gmra.mxu0 %v1596
      %v3100 = vpop.f32.mrf.mxu0
      %v3101 = vadd.f32 %v2812, %v3100
      %v3102 = vpop.f32.mrf.mxu0
      %v3103 = vpop.f32.mrf.mxu0
      %v3104 = vadd.f32 %v2815, %v3103
      %v3105 = vpop.f32.mrf.mxu0
      %3106 = vmatprep.mubr.bf16.mxu0 %v1605
      %3107 = vmatmul.mubr.bf16.gmra.mxu0 %v1604
      %v3108 = vpop.f32.mrf.mxu0
      %v3109 = vadd.f32 %v2820, %v3108
      %v3110 = vpop.f32.mrf.mxu0
      %v3111 = vpop.f32.mrf.mxu0
      %v3112 = vadd.f32 %v2823, %v3111
      %v3113 = vpop.f32.mrf.mxu0
      %3114 = vmatprep.mubr.bf16.mxu0 %v1613
      %3115 = vmatmul.mubr.bf16.gmra.mxu0 %v1612
      %v3116 = vpop.f32.mrf.mxu0
      %v3117 = vadd.f32 %v2828, %v3116
      %v3118 = vpop.f32.mrf.mxu0
      %v3119 = vpop.f32.mrf.mxu0
      %v3120 = vadd.f32 %v2831, %v3119
      %v3121 = vpop.f32.mrf.mxu0
      %3122 = vmatprep.mubr.bf16.mxu0 %v1621
      %3123 = vmatmul.mubr.bf16.gmra.mxu0 %v1620
      %v3124 = vpop.f32.mrf.mxu0
      %v3125 = vadd.f32 %v2836, %v3124
      %v3126 = vpop.f32.mrf.mxu0
      %v3127 = vpop.f32.mrf.mxu0
      %v3128 = vadd.f32 %v2839, %v3127
      %v3129 = vpop.f32.mrf.mxu0
      %3130 = vmatprep.mubr.bf16.mxu0 %v1629
      %3131 = vmatmul.mubr.bf16.gmra.mxu0 %v1628
      %v3132 = vpop.f32.mrf.mxu0
      %v3133 = vadd.f32 %v2844, %v3132
      %v3134 = vpop.f32.mrf.mxu0
      %v3135 = vpop.f32.mrf.mxu0
      %v3136 = vadd.f32 %v2847, %v3135
      %v3137 = vpop.f32.mrf.mxu0
      %3138 = vmatprep.mubr.bf16.mxu0 %v1637
      %3139 = vmatmul.mubr.bf16.gmra.mxu0 %v1636
      %v3140 = vpop.f32.mrf.mxu0
      %v3141 = vadd.f32 %v2852, %v3140
      %v3142 = vpop.f32.mrf.mxu0
      %v3143 = vpop.f32.mrf.mxu0
      %v3144 = vadd.f32 %v2855, %v3143
      %v3145 = vpop.f32.mrf.mxu0
      %3146 = vmatprep.mubr.bf16.mxu0 %v1645
      %3147 = vmatmul.mubr.bf16.gmra.mxu0 %v1644
      %v3148 = vpop.f32.mrf.mxu0
      %v3149 = vadd.f32 %v2860, %v3148
      %v3150 = vpop.f32.mrf.mxu0
      %v3151 = vpop.f32.mrf.mxu0
      %v3152 = vadd.f32 %v2863, %v3151
      %v3153 = vpop.f32.mrf.mxu0
      %3154 = vmatprep.mubr.bf16.mxu0 %v1653
      %3155 = vmatmul.mubr.bf16.gmra.mxu0 %v1652
      %v3156 = vpop.f32.mrf.mxu0
      %v3157 = vadd.f32 %v2868, %v3156
      %v3158 = vpop.f32.mrf.mxu0
      %v3159 = vpop.f32.mrf.mxu0
      %v3160 = vadd.f32 %v2871, %v3159
      %v3161 = vpop.f32.mrf.mxu0
      %3162 = vmatprep.mubr.bf16.mxu0 %v1661
      %3163 = vmatmul.mubr.bf16.gmra.mxu0 %v1660
      %v3164 = vpop.f32.mrf.mxu0
      %v3165 = vadd.f32 %v2876, %v3164
      %v3166 = vpop.f32.mrf.mxu0
      %v3167 = vpop.f32.mrf.mxu0
      %v3168 = vadd.f32 %v2879, %v3167
      %v3169 = vpop.f32.mrf.mxu0
      %3170 = vmatprep.mubr.bf16.mxu0 %v1669
      %3171 = vmatmul.mubr.bf16.gmra.mxu0 %v1668
      %v3172 = vpop.f32.mrf.mxu0
      %v3173 = vadd.f32 %v2884, %v3172
      %v3174 = vpop.f32.mrf.mxu0
      %v3175 = vpop.f32.mrf.mxu0
      %v3176 = vadd.f32 %v2887, %v3175
      %v3177 = vpop.f32.mrf.mxu0
      %3178 = vmatprep.mubr.bf16.mxu0 %v1677
      %3179 = vmatmul.mubr.bf16.gmra.mxu0 %v1676
      %v3180 = vpop.f32.mrf.mxu0
      %v3181 = vadd.f32 %v2892, %v3180
      %v3182 = vpop.f32.mrf.mxu0
      %v3183 = vpop.f32.mrf.mxu0
      %v3184 = vadd.f32 %v2895, %v3183
      %v3185 = vpop.f32.mrf.mxu0
      %3186 = vmatprep.mubr.bf16.mxu0 %v1685
      %3187 = vmatmul.mubr.bf16.gmra.mxu0 %v1684
      %v3188 = vpop.f32.mrf.mxu0
      %v3189 = vadd.f32 %v2900, %v3188
      %v3190 = vpop.f32.mrf.mxu0
      %v3191 = vpop.f32.mrf.mxu0
      %v3192 = vadd.f32 %v2903, %v3191
      %v3193 = vpop.f32.mrf.mxu0
      %3194 = vmatprep.mubr.bf16.mxu0 %v1693
      %3195 = vmatmul.mubr.bf16.gmra.mxu0 %v1692
      %v3196 = vpop.f32.mrf.mxu0
      %v3197 = vadd.f32 %v2908, %v3196
      %v3198 = vpop.f32.mrf.mxu0
      %v3199 = vpop.f32.mrf.mxu0
      %v3200 = vadd.f32 %v2911, %v3199
      %v3201 = vpop.f32.mrf.mxu0
      %3202 = vmatprep.mubr.bf16.mxu0 %v1701
      %3203 = vmatmul.mubr.bf16.gmra.mxu0 %v1700
      %v3204 = vpop.f32.mrf.mxu0
      %v3205 = vadd.f32 %v2916, %v3204
      %v3206 = vpop.f32.mrf.mxu0
      %v3207 = vpop.f32.mrf.mxu0
      %v3208 = vadd.f32 %v2919, %v3207
      %v3209 = vpop.f32.mrf.mxu0
      %3210 = vmatprep.mubr.bf16.mxu0 %v1709
      %3211 = vmatmul.mubr.bf16.gmra.mxu0 %v1708
      %v3212 = vpop.f32.mrf.mxu0
      %v3213 = vadd.f32 %v2924, %v3212
      %v3214 = vpop.f32.mrf.mxu0
      %v3215 = vpop.f32.mrf.mxu0
      %v3216 = vadd.f32 %v2927, %v3215
      %v3217 = vpop.f32.mrf.mxu0
      %3218 = vmatprep.mubr.bf16.mxu0 %v1717
      %3219 = vmatmul.mubr.bf16.gmra.mxu0 %v1716
      %v3220 = vpop.f32.mrf.mxu0
      %v3221 = vadd.f32 %v2932, %v3220
      %v3222 = vpop.f32.mrf.mxu0
      %v3223 = vpop.f32.mrf.mxu0
      %v3224 = vadd.f32 %v2935, %v3223
      %v3225 = vpop.f32.mrf.mxu0
      %3226 = vmatprep.mubr.bf16.mxu0 %v1725
      %3227 = vmatmul.mubr.bf16.gmra.mxu0 %v1724
      %v3228 = vpop.f32.mrf.mxu0
      %v3229 = vadd.f32 %v2940, %v3228
      %v3230 = vpop.f32.mrf.mxu0
      %v3231 = vpop.f32.mrf.mxu0
      %v3232 = vadd.f32 %v2943, %v3231
      %v3233 = vpop.f32.mrf.mxu0
      %3234 = vmatprep.mubr.bf16.mxu0 %v1733
      %3235 = vmatmul.mubr.bf16.gmra.mxu0 %v1732
      %v3236 = vpop.f32.mrf.mxu0
      %v3237 = vadd.f32 %v2948, %v3236
      %v3238 = vpop.f32.mrf.mxu0
      %v3239 = vpop.f32.mrf.mxu0
      %v3240 = vadd.f32 %v2951, %v3239
      %v3241 = vpop.f32.mrf.mxu0
      %3242 = vmatprep.mubr.bf16.mxu0 %v1741
      %3243 = vmatmul.mubr.bf16.gmra.mxu0 %v1740
      %v3244 = vpop.f32.mrf.mxu0
      %v3245 = vadd.f32 %v2956, %v3244
      %v3246 = vpop.f32.mrf.mxu0
      %v3247 = vpop.f32.mrf.mxu0
      %v3248 = vadd.f32 %v2959, %v3247
      %v3249 = vpop.f32.mrf.mxu0
      %3250 = vmatprep.mubr.bf16.mxu0 %v1749
      %3251 = vmatmul.mubr.bf16.gmra.mxu0 %v1748
      %v3252 = vpop.f32.mrf.mxu0
      %v3253 = vadd.f32 %v2964, %v3252
      %v3254 = vpop.f32.mrf.mxu0
      %v3255 = vpop.f32.mrf.mxu0
      %v3256 = vadd.f32 %v2967, %v3255
      %v3257 = vpop.f32.mrf.mxu0
      %3258 = vmatprep.mubr.bf16.mxu0 %v1757
      %3259 = vmatmul.mubr.bf16.gmra.mxu0 %v1756
      %v3260 = vpop.f32.mrf.mxu0
      %v3261 = vadd.f32 %v2972, %v3260
      %v3262 = vpop.f32.mrf.mxu0
      %v3263 = vpop.f32.mrf.mxu0
      %v3264 = vadd.f32 %v2975, %v3263
      %v3265 = vpop.f32.mrf.mxu0
      %3266 = vmatprep.mubr.bf16.mxu0 %v1765
      %3267 = vmatmul.mubr.bf16.gmra.mxu0 %v1764
      %v3268 = vpop.f32.mrf.mxu0
      %v3269 = vadd.f32 %v2980, %v3268
      %v3270 = vpop.f32.mrf.mxu0
      %v3271 = vpop.f32.mrf.mxu0
      %v3272 = vadd.f32 %v2983, %v3271
      %v3273 = vpop.f32.mrf.mxu0
      %3274 = vmatprep.mubr.bf16.mxu0 %v1773
      %3275 = vmatmul.mubr.bf16.gmra.mxu0 %v1772
      %v3276 = vpop.f32.mrf.mxu0
      %v3277 = vadd.f32 %v2988, %v3276
      %v3278 = vpop.f32.mrf.mxu0
      %v3279 = vpop.f32.mrf.mxu0
      %v3280 = vadd.f32 %v2991, %v3279
      %v3281 = vpop.f32.mrf.mxu0
      %3282 = vmatprep.mubr.bf16.mxu0 %v1781
      %3283 = vmatmul.mubr.bf16.gmra.mxu0 %v1780
      %v3284 = vpop.f32.mrf.mxu0
      %v3285 = vadd.f32 %v2996, %v3284
      %v3286 = vpop.f32.mrf.mxu0
      %v3287 = vpop.f32.mrf.mxu0
      %v3288 = vadd.f32 %v2999, %v3287
      %v3289 = vpop.f32.mrf.mxu0
      %3290 = vmatprep.mubr.bf16.mxu0 %v1789
      %3291 = vmatmul.mubr.bf16.gmra.mxu0 %v1788
      %v3292 = vpop.f32.mrf.mxu0
      %v3293 = vadd.f32 %v3004, %v3292
      %v3294 = vpop.f32.mrf.mxu0
      %v3295 = vpop.f32.mrf.mxu0
      %v3296 = vadd.f32 %v3007, %v3295
      %v3297 = vpop.f32.mrf.mxu0
      %3298 = vmatprep.mubr.bf16.mxu0 %v1797
      %3299 = vmatmul.mubr.bf16.gmra.mxu0 %v1796
      %v3300 = vpop.f32.mrf.mxu0
      %v3301 = vadd.f32 %v3012, %v3300
      %v3302 = vpop.f32.mrf.mxu0
      %v3303 = vpop.f32.mrf.mxu0
      %v3304 = vadd.f32 %v3015, %v3303
      %v3305 = vpop.f32.mrf.mxu0
      %3306 = vmatprep.mubr.bf16.mxu0 %v1805
      %3307 = vmatmul.mubr.bf16.gmra.mxu0 %v1804
      %v3308 = vpop.f32.mrf.mxu0
      %v3309 = vadd.f32 %v3020, %v3308
      %v3310 = vpop.f32.mrf.mxu0
      %v3311 = vpop.f32.mrf.mxu0
      %v3312 = vadd.f32 %v3023, %v3311
      %v3313 = vpop.f32.mrf.mxu0
      %3314 = vdwg.mxu0
      %3315 = vmatprep.subr.bf16.mxu0 0
      %3316 = vmatpush1.bf16.msra.mxu0 %v2375
      %3317 = vmatprep.subr.bf16.mxu0 0
      %3318 = vmatpush1.bf16.msra.mxu0 %v2374
      %3319 = vmatprep.subr.bf16.mxu0 0
      %3320 = vmatpush1.bf16.msra.mxu0 %v2373
      %3321 = vmatprep.subr.bf16.mxu0 0
      %3322 = vmatpush1.bf16.msra.mxu0 %v2372
      %3323 = vmatprep.subr.bf16.mxu0 0
      %3324 = vmatpush1.bf16.msra.mxu0 %v2371
      %3325 = vmatprep.subr.bf16.mxu0 0
      %3326 = vmatpush1.bf16.msra.mxu0 %v2370
      %3327 = vmatprep.subr.bf16.mxu0 0
      %3328 = vmatpush1.bf16.msra.mxu0 %v2369
      %3329 = vmatprep.subr.bf16.mxu0 0
      %3330 = vmatpush1.bf16.msra.mxu0 %v2368
      %3331 = vmatprep.subr.bf16.mxu0 0
      %3332 = vmatpush2.bf16.msra.mxu0 %v2383
      %3333 = vmatprep.subr.bf16.mxu0 0
      %3334 = vmatpush2.bf16.msra.mxu0 %v2382
      %3335 = vmatprep.subr.bf16.mxu0 0
      %3336 = vmatpush2.bf16.msra.mxu0 %v2381
      %3337 = vmatprep.subr.bf16.mxu0 0
      %3338 = vmatpush2.bf16.msra.mxu0 %v2380
      %3339 = vmatprep.subr.bf16.mxu0 0
      %3340 = vmatpush2.bf16.msra.mxu0 %v2379
      %3341 = vmatprep.subr.bf16.mxu0 0
      %3342 = vmatpush2.bf16.msra.mxu0 %v2378
      %3343 = vmatprep.subr.bf16.mxu0 0
      %3344 = vmatpush2.bf16.msra.mxu0 %v2377
      %3345 = vmatprep.subr.bf16.mxu0 0
      %3346 = vmatpush2.bf16.msra.mxu0 %v2376
      %3347 = vmatprep.mubr.bf16.mxu0 %v1559
      %3348 = vmatmul.mubr.bf16.gmra.mxu0 %v1558
      %v3349 = vpop.f32.mrf.mxu0
      %v3350 = vadd.f32 %v3061, %v3349
      %v3351 = vpop.f32.mrf.mxu0
      %v3352 = vpop.f32.mrf.mxu0
      %v3353 = vadd.f32 %v3064, %v3352
      %v3354 = vpop.f32.mrf.mxu0
      %3355 = vmatprep.mubr.bf16.mxu0 %v1567
      %3356 = vmatmul.mubr.bf16.gmra.mxu0 %v1566
      %v3357 = vpop.f32.mrf.mxu0
      %v3358 = vadd.f32 %v3069, %v3357
      %v3359 = vpop.f32.mrf.mxu0
      %v3360 = vpop.f32.mrf.mxu0
      %v3361 = vadd.f32 %v3072, %v3360
      %v3362 = vpop.f32.mrf.mxu0
      %3363 = vmatprep.mubr.bf16.mxu0 %v1575
      %3364 = vmatmul.mubr.bf16.gmra.mxu0 %v1574
      %v3365 = vpop.f32.mrf.mxu0
      %v3366 = vadd.f32 %v3077, %v3365
      %v3367 = vpop.f32.mrf.mxu0
      %v3368 = vpop.f32.mrf.mxu0
      %v3369 = vadd.f32 %v3080, %v3368
      %v3370 = vpop.f32.mrf.mxu0
      %3371 = vmatprep.mubr.bf16.mxu0 %v1583
      %3372 = vmatmul.mubr.bf16.gmra.mxu0 %v1582
      %v3373 = vpop.f32.mrf.mxu0
      %v3374 = vadd.f32 %v3085, %v3373
      %v3375 = vpop.f32.mrf.mxu0
      %v3376 = vpop.f32.mrf.mxu0
      %v3377 = vadd.f32 %v3088, %v3376
      %v3378 = vpop.f32.mrf.mxu0
      %3379 = vmatprep.mubr.bf16.mxu0 %v1591
      %3380 = vmatmul.mubr.bf16.gmra.mxu0 %v1590
      %v3381 = vpop.f32.mrf.mxu0
      %v3382 = vadd.f32 %v3093, %v3381
      %v3383 = vpop.f32.mrf.mxu0
      %v3384 = vpop.f32.mrf.mxu0
      %v3385 = vadd.f32 %v3096, %v3384
      %v3386 = vpop.f32.mrf.mxu0
      %3387 = vmatprep.mubr.bf16.mxu0 %v1599
      %3388 = vmatmul.mubr.bf16.gmra.mxu0 %v1598
      %v3389 = vpop.f32.mrf.mxu0
      %v3390 = vadd.f32 %v3101, %v3389
      %v3391 = vpop.f32.mrf.mxu0
      %v3392 = vpop.f32.mrf.mxu0
      %v3393 = vadd.f32 %v3104, %v3392
      %v3394 = vpop.f32.mrf.mxu0
      %3395 = vmatprep.mubr.bf16.mxu0 %v1607
      %3396 = vmatmul.mubr.bf16.gmra.mxu0 %v1606
      %v3397 = vpop.f32.mrf.mxu0
      %v3398 = vadd.f32 %v3109, %v3397
      %v3399 = vpop.f32.mrf.mxu0
      %v3400 = vpop.f32.mrf.mxu0
      %v3401 = vadd.f32 %v3112, %v3400
      %v3402 = vpop.f32.mrf.mxu0
      %3403 = vmatprep.mubr.bf16.mxu0 %v1615
      %3404 = vmatmul.mubr.bf16.gmra.mxu0 %v1614
      %v3405 = vpop.f32.mrf.mxu0
      %v3406 = vadd.f32 %v3117, %v3405
      %v3407 = vpop.f32.mrf.mxu0
      %v3408 = vpop.f32.mrf.mxu0
      %v3409 = vadd.f32 %v3120, %v3408
      %v3410 = vpop.f32.mrf.mxu0
      %3411 = vmatprep.mubr.bf16.mxu0 %v1623
      %3412 = vmatmul.mubr.bf16.gmra.mxu0 %v1622
      %v3413 = vpop.f32.mrf.mxu0
      %v3414 = vadd.f32 %v3125, %v3413
      %v3415 = vpop.f32.mrf.mxu0
      %v3416 = vpop.f32.mrf.mxu0
      %v3417 = vadd.f32 %v3128, %v3416
      %v3418 = vpop.f32.mrf.mxu0
      %3419 = vmatprep.mubr.bf16.mxu0 %v1631
      %3420 = vmatmul.mubr.bf16.gmra.mxu0 %v1630
      %v3421 = vpop.f32.mrf.mxu0
      %v3422 = vadd.f32 %v3133, %v3421
      %v3423 = vpop.f32.mrf.mxu0
      %v3424 = vpop.f32.mrf.mxu0
      %v3425 = vadd.f32 %v3136, %v3424
      %v3426 = vpop.f32.mrf.mxu0
      %3427 = vmatprep.mubr.bf16.mxu0 %v1639
      %3428 = vmatmul.mubr.bf16.gmra.mxu0 %v1638
      %v3429 = vpop.f32.mrf.mxu0
      %v3430 = vadd.f32 %v3141, %v3429
      %v3431 = vpop.f32.mrf.mxu0
      %v3432 = vpop.f32.mrf.mxu0
      %v3433 = vadd.f32 %v3144, %v3432
      %v3434 = vpop.f32.mrf.mxu0
      %3435 = vmatprep.mubr.bf16.mxu0 %v1647
      %3436 = vmatmul.mubr.bf16.gmra.mxu0 %v1646
      %v3437 = vpop.f32.mrf.mxu0
      %v3438 = vadd.f32 %v3149, %v3437
      %v3439 = vpop.f32.mrf.mxu0
      %v3440 = vpop.f32.mrf.mxu0
      %v3441 = vadd.f32 %v3152, %v3440
      %v3442 = vpop.f32.mrf.mxu0
      %3443 = vmatprep.mubr.bf16.mxu0 %v1655
      %3444 = vmatmul.mubr.bf16.gmra.mxu0 %v1654
      %v3445 = vpop.f32.mrf.mxu0
      %v3446 = vadd.f32 %v3157, %v3445
      %v3447 = vpop.f32.mrf.mxu0
      %v3448 = vpop.f32.mrf.mxu0
      %v3449 = vadd.f32 %v3160, %v3448
      %v3450 = vpop.f32.mrf.mxu0
      %3451 = vmatprep.mubr.bf16.mxu0 %v1663
      %3452 = vmatmul.mubr.bf16.gmra.mxu0 %v1662
      %v3453 = vpop.f32.mrf.mxu0
      %v3454 = vadd.f32 %v3165, %v3453
      %v3455 = vpop.f32.mrf.mxu0
      %v3456 = vpop.f32.mrf.mxu0
      %v3457 = vadd.f32 %v3168, %v3456
      %v3458 = vpop.f32.mrf.mxu0
      %3459 = vmatprep.mubr.bf16.mxu0 %v1671
      %3460 = vmatmul.mubr.bf16.gmra.mxu0 %v1670
      %v3461 = vpop.f32.mrf.mxu0
      %v3462 = vadd.f32 %v3173, %v3461
      %v3463 = vpop.f32.mrf.mxu0
      %v3464 = vpop.f32.mrf.mxu0
      %v3465 = vadd.f32 %v3176, %v3464
      %v3466 = vpop.f32.mrf.mxu0
      %3467 = vmatprep.mubr.bf16.mxu0 %v1679
      %3468 = vmatmul.mubr.bf16.gmra.mxu0 %v1678
      %v3469 = vpop.f32.mrf.mxu0
      %v3470 = vadd.f32 %v3181, %v3469
      %v3471 = vpop.f32.mrf.mxu0
      %v3472 = vpop.f32.mrf.mxu0
      %v3473 = vadd.f32 %v3184, %v3472
      %v3474 = vpop.f32.mrf.mxu0
      %3475 = vmatprep.mubr.bf16.mxu0 %v1687
      %3476 = vmatmul.mubr.bf16.gmra.mxu0 %v1686
      %v3477 = vpop.f32.mrf.mxu0
      %v3478 = vadd.f32 %v3189, %v3477
      %v3479 = vpop.f32.mrf.mxu0
      %v3480 = vpop.f32.mrf.mxu0
      %v3481 = vadd.f32 %v3192, %v3480
      %v3482 = vpop.f32.mrf.mxu0
      %3483 = vmatprep.mubr.bf16.mxu0 %v1695
      %3484 = vmatmul.mubr.bf16.gmra.mxu0 %v1694
      %v3485 = vpop.f32.mrf.mxu0
      %v3486 = vadd.f32 %v3197, %v3485
      %v3487 = vpop.f32.mrf.mxu0
      %v3488 = vpop.f32.mrf.mxu0
      %v3489 = vadd.f32 %v3200, %v3488
      %v3490 = vpop.f32.mrf.mxu0
      %3491 = vmatprep.mubr.bf16.mxu0 %v1703
      %3492 = vmatmul.mubr.bf16.gmra.mxu0 %v1702
      %v3493 = vpop.f32.mrf.mxu0
      %v3494 = vadd.f32 %v3205, %v3493
      %v3495 = vpop.f32.mrf.mxu0
      %v3496 = vpop.f32.mrf.mxu0
      %v3497 = vadd.f32 %v3208, %v3496
      %v3498 = vpop.f32.mrf.mxu0
      %3499 = vmatprep.mubr.bf16.mxu0 %v1711
      %3500 = vmatmul.mubr.bf16.gmra.mxu0 %v1710
      %v3501 = vpop.f32.mrf.mxu0
      %v3502 = vadd.f32 %v3213, %v3501
      %v3503 = vpop.f32.mrf.mxu0
      %v3504 = vpop.f32.mrf.mxu0
      %v3505 = vadd.f32 %v3216, %v3504
      %v3506 = vpop.f32.mrf.mxu0
      %3507 = vmatprep.mubr.bf16.mxu0 %v1719
      %3508 = vmatmul.mubr.bf16.gmra.mxu0 %v1718
      %v3509 = vpop.f32.mrf.mxu0
      %v3510 = vadd.f32 %v3221, %v3509
      %v3511 = vpop.f32.mrf.mxu0
      %v3512 = vpop.f32.mrf.mxu0
      %v3513 = vadd.f32 %v3224, %v3512
      %v3514 = vpop.f32.mrf.mxu0
      %3515 = vmatprep.mubr.bf16.mxu0 %v1727
      %3516 = vmatmul.mubr.bf16.gmra.mxu0 %v1726
      %v3517 = vpop.f32.mrf.mxu0
      %v3518 = vadd.f32 %v3229, %v3517
      %v3519 = vpop.f32.mrf.mxu0
      %v3520 = vpop.f32.mrf.mxu0
      %v3521 = vadd.f32 %v3232, %v3520
      %v3522 = vpop.f32.mrf.mxu0
      %3523 = vmatprep.mubr.bf16.mxu0 %v1735
      %3524 = vmatmul.mubr.bf16.gmra.mxu0 %v1734
      %v3525 = vpop.f32.mrf.mxu0
      %v3526 = vadd.f32 %v3237, %v3525
      %v3527 = vpop.f32.mrf.mxu0
      %v3528 = vpop.f32.mrf.mxu0
      %v3529 = vadd.f32 %v3240, %v3528
      %v3530 = vpop.f32.mrf.mxu0
      %3531 = vmatprep.mubr.bf16.mxu0 %v1743
      %3532 = vmatmul.mubr.bf16.gmra.mxu0 %v1742
      %v3533 = vpop.f32.mrf.mxu0
      %v3534 = vadd.f32 %v3245, %v3533
      %v3535 = vpop.f32.mrf.mxu0
      %v3536 = vpop.f32.mrf.mxu0
      %v3537 = vadd.f32 %v3248, %v3536
      %v3538 = vpop.f32.mrf.mxu0
      %3539 = vmatprep.mubr.bf16.mxu0 %v1751
      %3540 = vmatmul.mubr.bf16.gmra.mxu0 %v1750
      %v3541 = vpop.f32.mrf.mxu0
      %v3542 = vadd.f32 %v3253, %v3541
      %v3543 = vpop.f32.mrf.mxu0
      %v3544 = vpop.f32.mrf.mxu0
      %v3545 = vadd.f32 %v3256, %v3544
      %v3546 = vpop.f32.mrf.mxu0
      %3547 = vmatprep.mubr.bf16.mxu0 %v1759
      %3548 = vmatmul.mubr.bf16.gmra.mxu0 %v1758
      %v3549 = vpop.f32.mrf.mxu0
      %v3550 = vadd.f32 %v3261, %v3549
      %v3551 = vpop.f32.mrf.mxu0
      %v3552 = vpop.f32.mrf.mxu0
      %v3553 = vadd.f32 %v3264, %v3552
      %v3554 = vpop.f32.mrf.mxu0
      %3555 = vmatprep.mubr.bf16.mxu0 %v1767
      %3556 = vmatmul.mubr.bf16.gmra.mxu0 %v1766
      %v3557 = vpop.f32.mrf.mxu0
      %v3558 = vadd.f32 %v3269, %v3557
      %v3559 = vpop.f32.mrf.mxu0
      %v3560 = vpop.f32.mrf.mxu0
      %v3561 = vadd.f32 %v3272, %v3560
      %v3562 = vpop.f32.mrf.mxu0
      %3563 = vmatprep.mubr.bf16.mxu0 %v1775
      %3564 = vmatmul.mubr.bf16.gmra.mxu0 %v1774
      %v3565 = vpop.f32.mrf.mxu0
      %v3566 = vadd.f32 %v3277, %v3565
      %v3567 = vpop.f32.mrf.mxu0
      %v3568 = vpop.f32.mrf.mxu0
      %v3569 = vadd.f32 %v3280, %v3568
      %v3570 = vpop.f32.mrf.mxu0
      %3571 = vmatprep.mubr.bf16.mxu0 %v1783
      %3572 = vmatmul.mubr.bf16.gmra.mxu0 %v1782
      %v3573 = vpop.f32.mrf.mxu0
      %v3574 = vadd.f32 %v3285, %v3573
      %v3575 = vpop.f32.mrf.mxu0
      %v3576 = vpop.f32.mrf.mxu0
      %v3577 = vadd.f32 %v3288, %v3576
      %v3578 = vpop.f32.mrf.mxu0
      %3579 = vmatprep.mubr.bf16.mxu0 %v1791
      %3580 = vmatmul.mubr.bf16.gmra.mxu0 %v1790
      %v3581 = vpop.f32.mrf.mxu0
      %v3582 = vadd.f32 %v3293, %v3581
      %v3583 = vpop.f32.mrf.mxu0
      %v3584 = vpop.f32.mrf.mxu0
      %v3585 = vadd.f32 %v3296, %v3584
      %v3586 = vpop.f32.mrf.mxu0
      %3587 = vmatprep.mubr.bf16.mxu0 %v1799
      %3588 = vmatmul.mubr.bf16.gmra.mxu0 %v1798
      %v3589 = vpop.f32.mrf.mxu0
      %v3590 = vadd.f32 %v3301, %v3589
      %v3591 = vpop.f32.mrf.mxu0
      %v3592 = vpop.f32.mrf.mxu0
      %v3593 = vadd.f32 %v3304, %v3592
      %v3594 = vpop.f32.mrf.mxu0
      %3595 = vmatprep.mubr.bf16.mxu0 %v1807
      %3596 = vmatmul.mubr.bf16.gmra.mxu0 %v1806
      %v3597 = vpop.f32.mrf.mxu0
      %v3598 = vadd.f32 %v3309, %v3597
      %v3599 = vpop.f32.mrf.mxu0
      %v3600 = vpop.f32.mrf.mxu0
      %v3601 = vadd.f32 %v3312, %v3600
      %v3602 = vpop.f32.mrf.mxu0
      %3603 = vdwg.mxu0
      %v3604 = vadd.f32 %v336, %v3350
      %v3605 = vadd.f32 %v337, %v3353
      %v3606 = vadd.f32 %v338, %v3358
      %v3607 = vadd.f32 %v339, %v3361
      %v3608 = vadd.f32 %v340, %v3366
      %v3609 = vadd.f32 %v341, %v3369
      %v3610 = vadd.f32 %v342, %v3374
      %v3611 = vadd.f32 %v343, %v3377
      %v3612 = vadd.f32 %v344, %v3382
      %v3613 = vadd.f32 %v345, %v3385
      %v3614 = vadd.f32 %v346, %v3390
      %v3615 = vadd.f32 %v347, %v3393
      %v3616 = vadd.f32 %v348, %v3398
      %v3617 = vadd.f32 %v349, %v3401
      %v3618 = vadd.f32 %v350, %v3406
      %v3619 = vadd.f32 %v351, %v3409
      %v3620 = vadd.f32 %v352, %v3414
      %v3621 = vadd.f32 %v353, %v3417
      %v3622 = vadd.f32 %v354, %v3422
      %v3623 = vadd.f32 %v355, %v3425
      %v3624 = vadd.f32 %v356, %v3430
      %v3625 = vadd.f32 %v357, %v3433
      %v3626 = vadd.f32 %v358, %v3438
      %v3627 = vadd.f32 %v359, %v3441
      %v3628 = vadd.f32 %v360, %v3446
      %v3629 = vadd.f32 %v361, %v3449
      %v3630 = vadd.f32 %v362, %v3454
      %v3631 = vadd.f32 %v363, %v3457
      %v3632 = vadd.f32 %v364, %v3462
      %v3633 = vadd.f32 %v365, %v3465
      %v3634 = vadd.f32 %v366, %v3470
      %v3635 = vadd.f32 %v367, %v3473
      %v3636 = vadd.f32 %v368, %v3478
      %v3637 = vadd.f32 %v369, %v3481
      %v3638 = vadd.f32 %v370, %v3486
      %v3639 = vadd.f32 %v371, %v3489
      %v3640 = vadd.f32 %v372, %v3494
      %v3641 = vadd.f32 %v373, %v3497
      %v3642 = vadd.f32 %v374, %v3502
      %v3643 = vadd.f32 %v375, %v3505
      %v3644 = vadd.f32 %v376, %v3510
      %v3645 = vadd.f32 %v377, %v3513
      %v3646 = vadd.f32 %v378, %v3518
      %v3647 = vadd.f32 %v379, %v3521
      %v3648 = vadd.f32 %v380, %v3526
      %v3649 = vadd.f32 %v381, %v3529
      %v3650 = vadd.f32 %v382, %v3534
      %v3651 = vadd.f32 %v383, %v3537
      %v3652 = vadd.f32 %v384, %v3542
      %v3653 = vadd.f32 %v385, %v3545
      %v3654 = vadd.f32 %v386, %v3550
      %v3655 = vadd.f32 %v387, %v3553
      %v3656 = vadd.f32 %v388, %v3558
      %v3657 = vadd.f32 %v389, %v3561
      %v3658 = vadd.f32 %v390, %v3566
      %v3659 = vadd.f32 %v391, %v3569
      %v3660 = vadd.f32 %v392, %v3574
      %v3661 = vadd.f32 %v393, %v3577
      %v3662 = vadd.f32 %v394, %v3582
      %v3663 = vadd.f32 %v395, %v3585
      %v3664 = vadd.f32 %v396, %v3590
      %v3665 = vadd.f32 %v397, %v3593
      %v3666 = vadd.f32 %v398, %v3598
      %v3667 = vadd.f32 %v399, %v3601
      %3668 = vst [vmem:[#allocation2] sm:$0xff] %v3604
      %3669 = vst [vmem:[#allocation2 + $0x8] sm:$0xff] %v3605
      %3670 = vst [vmem:[#allocation2 + $0x10] sm:$0xff] %v3606
      %3671 = vst [vmem:[#allocation2 + $0x18] sm:$0xff] %v3607
      %3672 = vst [vmem:[#allocation2 + $0x20] sm:$0xff] %v3608
      %3673 = vst [vmem:[#allocation2 + $0x28] sm:$0xff] %v3609
      %3674 = vst [vmem:[#allocation2 + $0x30] sm:$0xff] %v3610
      %3675 = vst [vmem:[#allocation2 + $0x38] sm:$0xff] %v3611
      %3676 = vst [vmem:[#allocation2 + $0x40] sm:$0xff] %v3612
      %3677 = vst [vmem:[#allocation2 + $0x48] sm:$0xff] %v3613
      %3678 = vst [vmem:[#allocation2 + $0x50] sm:$0xff] %v3614
      %3679 = vst [vmem:[#allocation2 + $0x58] sm:$0xff] %v3615
      %3680 = vst [vmem:[#allocation2 + $0x60] sm:$0xff] %v3616
      %3681 = vst [vmem:[#allocation2 + $0x68] sm:$0xff] %v3617
      %3682 = vst [vmem:[#allocation2 + $0x70] sm:$0xff] %v3618
      %3683 = vst [vmem:[#allocation2 + $0x78] sm:$0xff] %v3619
      %3684 = vst [vmem:[#allocation2 + $0x80] sm:$0xff] %v3620
      %3685 = vst [vmem:[#allocation2 + $0x88] sm:$0xff] %v3621
      %3686 = vst [vmem:[#allocation2 + $0x90] sm:$0xff] %v3622
      %3687 = vst [vmem:[#allocation2 + $0x98] sm:$0xff] %v3623
      %3688 = vst [vmem:[#allocation2 + $0xa0] sm:$0xff] %v3624
      %3689 = vst [vmem:[#allocation2 + $0xa8] sm:$0xff] %v3625
      %3690 = vst [vmem:[#allocation2 + $0xb0] sm:$0xff] %v3626
      %3691 = vst [vmem:[#allocation2 + $0xb8] sm:$0xff] %v3627
      %3692 = vst [vmem:[#allocation2 + $0xc0] sm:$0xff] %v3628
      %3693 = vst [vmem:[#allocation2 + $0xc8] sm:$0xff] %v3629
      %3694 = vst [vmem:[#allocation2 + $0xd0] sm:$0xff] %v3630
      %3695 = vst [vmem:[#allocation2 + $0xd8] sm:$0xff] %v3631
      %3696 = vst [vmem:[#allocation2 + $0xe0] sm:$0xff] %v3632
      %3697 = vst [vmem:[#allocation2 + $0xe8] sm:$0xff] %v3633
      %3698 = vst [vmem:[#allocation2 + $0xf0] sm:$0xff] %v3634
      %3699 = vst [vmem:[#allocation2 + $0xf8] sm:$0xff] %v3635
      %3700 = vst [vmem:[#allocation2 + $0x100] sm:$0xff] %v3636
      %3701 = vst [vmem:[#allocation2 + $0x108] sm:$0xff] %v3637
      %3702 = vst [vmem:[#allocation2 + $0x110] sm:$0xff] %v3638
      %3703 = vst [vmem:[#allocation2 + $0x118] sm:$0xff] %v3639
      %3704 = vst [vmem:[#allocation2 + $0x120] sm:$0xff] %v3640
      %3705 = vst [vmem:[#allocation2 + $0x128] sm:$0xff] %v3641
      %3706 = vst [vmem:[#allocation2 + $0x130] sm:$0xff] %v3642
      %3707 = vst [vmem:[#allocation2 + $0x138] sm:$0xff] %v3643
      %3708 = vst [vmem:[#allocation2 + $0x140] sm:$0xff] %v3644
      %3709 = vst [vmem:[#allocation2 + $0x148] sm:$0xff] %v3645
      %3710 = vst [vmem:[#allocation2 + $0x150] sm:$0xff] %v3646
      %3711 = vst [vmem:[#allocation2 + $0x158] sm:$0xff] %v3647
      %3712 = vst [vmem:[#allocation2 + $0x160] sm:$0xff] %v3648
      %3713 = vst [vmem:[#allocation2 + $0x168] sm:$0xff] %v3649
      %3714 = vst [vmem:[#allocation2 + $0x170] sm:$0xff] %v3650
      %3715 = vst [vmem:[#allocation2 + $0x178] sm:$0xff] %v3651
      %3716 = vst [vmem:[#allocation2 + $0x180] sm:$0xff] %v3652
      %3717 = vst [vmem:[#allocation2 + $0x188] sm:$0xff] %v3653
      %3718 = vst [vmem:[#allocation2 + $0x190] sm:$0xff] %v3654
      %3719 = vst [vmem:[#allocation2 + $0x198] sm:$0xff] %v3655
      %3720 = vst [vmem:[#allocation2 + $0x1a0] sm:$0xff] %v3656
      %3721 = vst [vmem:[#allocation2 + $0x1a8] sm:$0xff] %v3657
      %3722 = vst [vmem:[#allocation2 + $0x1b0] sm:$0xff] %v3658
      %3723 = vst [vmem:[#allocation2 + $0x1b8] sm:$0xff] %v3659
      %3724 = vst [vmem:[#allocation2 + $0x1c0] sm:$0xff] %v3660
      %3725 = vst [vmem:[#allocation2 + $0x1c8] sm:$0xff] %v3661
      %3726 = vst [vmem:[#allocation2 + $0x1d0] sm:$0xff] %v3662
      %3727 = vst [vmem:[#allocation2 + $0x1d8] sm:$0xff] %v3663
      %3728 = vst [vmem:[#allocation2 + $0x1e0] sm:$0xff] %v3664
      %3729 = vst [vmem:[#allocation2 + $0x1e8] sm:$0xff] %v3665
      %3730 = vst [vmem:[#allocation2 + $0x1f0] sm:$0xff] %v3666
      %3731 = vst [vmem:[#allocation2 + $0x1f8] sm:$0xff] %v3667
      // Predicated region
      $region37: #{decoder_forward.7} parent=31 // pred_check
        %p3732 = pneg %p268
      $region38: #{decoder_forward.7} parent=31 // pred_check_branch
        %3734 = sbr.rel (%p3732) target = $region40
      $region39: #{decoder_forward.7} parent=31 // pred_region
        %v3735 = vld [vmem:[#allocation2] sm:$0xff]
        %v3736 = vld [vmem:[#allocation2 + $0x8] sm:$0xff]
        %v3737 = vld [vmem:[#allocation2 + $0x10] sm:$0xff]
        %v3738 = vld [vmem:[#allocation2 + $0x18] sm:$0xff]
        %v3739 = vld [vmem:[#allocation2 + $0x20] sm:$0xff]
        %v3740 = vld [vmem:[#allocation2 + $0x28] sm:$0xff]
        %v3741 = vld [vmem:[#allocation2 + $0x30] sm:$0xff]
        %v3742 = vld [vmem:[#allocation2 + $0x38] sm:$0xff]
        %v3743 = vld [vmem:[#allocation2 + $0x40] sm:$0xff]
        %v3744 = vld [vmem:[#allocation2 + $0x48] sm:$0xff]
        %v3745 = vld [vmem:[#allocation2 + $0x50] sm:$0xff]
        %v3746 = vld [vmem:[#allocation2 + $0x58] sm:$0xff]
        %v3747 = vld [vmem:[#allocation2 + $0x60] sm:$0xff]
        %v3748 = vld [vmem:[#allocation2 + $0x68] sm:$0xff]
        %v3749 = vld [vmem:[#allocation2 + $0x70] sm:$0xff]
        %v3750 = vld [vmem:[#allocation2 + $0x78] sm:$0xff]
        %v3751 = vld [vmem:[#allocation2 + $0x80] sm:$0xff]
        %v3752 = vld [vmem:[#allocation2 + $0x88] sm:$0xff]
        %v3753 = vld [vmem:[#allocation2 + $0x90] sm:$0xff]
        %v3754 = vld [vmem:[#allocation2 + $0x98] sm:$0xff]
        %v3755 = vld [vmem:[#allocation2 + $0xa0] sm:$0xff]
        %v3756 = vld [vmem:[#allocation2 + $0xa8] sm:$0xff]
        %v3757 = vld [vmem:[#allocation2 + $0xb0] sm:$0xff]
        %v3758 = vld [vmem:[#allocation2 + $0xb8] sm:$0xff]
        %v3759 = vld [vmem:[#allocation2 + $0xc0] sm:$0xff]
        %v3760 = vld [vmem:[#allocation2 + $0xc8] sm:$0xff]
        %v3761 = vld [vmem:[#allocation2 + $0xd0] sm:$0xff]
        %v3762 = vld [vmem:[#allocation2 + $0xd8] sm:$0xff]
        %v3763 = vld [vmem:[#allocation2 + $0xe0] sm:$0xff]
        %v3764 = vld [vmem:[#allocation2 + $0xe8] sm:$0xff]
        %v3765 = vld [vmem:[#allocation2 + $0xf0] sm:$0xff]
        %v3766 = vld [vmem:[#allocation2 + $0xf8] sm:$0xff]
        %v3767 = vld [vmem:[#allocation2 + $0x100] sm:$0xff]
        %v3768 = vld [vmem:[#allocation2 + $0x108] sm:$0xff]
        %v3769 = vld [vmem:[#allocation2 + $0x110] sm:$0xff]
        %v3770 = vld [vmem:[#allocation2 + $0x118] sm:$0xff]
        %v3771 = vld [vmem:[#allocation2 + $0x120] sm:$0xff]
        %v3772 = vld [vmem:[#allocation2 + $0x128] sm:$0xff]
        %v3773 = vld [vmem:[#allocation2 + $0x130] sm:$0xff]
        %v3774 = vld [vmem:[#allocation2 + $0x138] sm:$0xff]
        %v3775 = vld [vmem:[#allocation2 + $0x140] sm:$0xff]
        %v3776 = vld [vmem:[#allocation2 + $0x148] sm:$0xff]
        %v3777 = vld [vmem:[#allocation2 + $0x150] sm:$0xff]
        %v3778 = vld [vmem:[#allocation2 + $0x158] sm:$0xff]
        %v3779 = vld [vmem:[#allocation2 + $0x160] sm:$0xff]
        %v3780 = vld [vmem:[#allocation2 + $0x168] sm:$0xff]
        %v3781 = vld [vmem:[#allocation2 + $0x170] sm:$0xff]
        %v3782 = vld [vmem:[#allocation2 + $0x178] sm:$0xff]
        %v3783 = vld [vmem:[#allocation2 + $0x180] sm:$0xff]
        %v3784 = vld [vmem:[#allocation2 + $0x188] sm:$0xff]
        %v3785 = vld [vmem:[#allocation2 + $0x190] sm:$0xff]
        %v3786 = vld [vmem:[#allocation2 + $0x198] sm:$0xff]
        %v3787 = vld [vmem:[#allocation2 + $0x1a0] sm:$0xff]
        %v3788 = vld [vmem:[#allocation2 + $0x1a8] sm:$0xff]
        %v3789 = vld [vmem:[#allocation2 + $0x1b0] sm:$0xff]
        %v3790 = vld [vmem:[#allocation2 + $0x1b8] sm:$0xff]
        %v3791 = vld [vmem:[#allocation2 + $0x1c0] sm:$0xff]
        %v3792 = vld [vmem:[#allocation2 + $0x1c8] sm:$0xff]
        %v3793 = vld [vmem:[#allocation2 + $0x1d0] sm:$0xff]
        %v3794 = vld [vmem:[#allocation2 + $0x1d8] sm:$0xff]
        %v3795 = vld [vmem:[#allocation2 + $0x1e0] sm:$0xff]
        %v3796 = vld [vmem:[#allocation2 + $0x1e8] sm:$0xff]
        %v3797 = vld [vmem:[#allocation2 + $0x1f0] sm:$0xff]
        %v3798 = vld [vmem:[#allocation2 + $0x1f8] sm:$0xff]
        %v3799 = vld [vmem:[%s257] sm:$0x1]
        %v3801 = vlaneseq
        %v3802 = vshrl.u32 %v3801, 7
        %v3803 = vsub.s32 0, %v3802
        %v3804 = vrot.slane %v3799, %v3803
        %v3806 = vadd.f32 %v3735, %v3804
        %v3807 = vadd.f32 %v3736, %v3804
        %v3808 = vadd.f32 %v3737, %v3804
        %v3809 = vadd.f32 %v3738, %v3804
        %v3810 = vadd.f32 %v3739, %v3804
        %v3811 = vadd.f32 %v3740, %v3804
        %v3812 = vadd.f32 %v3741, %v3804
        %v3813 = vadd.f32 %v3742, %v3804
        %v3814 = vadd.f32 %v3743, %v3804
        %v3815 = vadd.f32 %v3744, %v3804
        %v3816 = vadd.f32 %v3745, %v3804
        %v3817 = vadd.f32 %v3746, %v3804
        %v3818 = vadd.f32 %v3747, %v3804
        %v3819 = vadd.f32 %v3748, %v3804
        %v3820 = vadd.f32 %v3749, %v3804
        %v3821 = vadd.f32 %v3750, %v3804
        %v3822 = vadd.f32 %v3751, %v3804
        %v3823 = vadd.f32 %v3752, %v3804
        %v3824 = vadd.f32 %v3753, %v3804
        %v3825 = vadd.f32 %v3754, %v3804
        %v3826 = vadd.f32 %v3755, %v3804
        %v3827 = vadd.f32 %v3756, %v3804
        %v3828 = vadd.f32 %v3757, %v3804
        %v3829 = vadd.f32 %v3758, %v3804
        %v3830 = vadd.f32 %v3759, %v3804
        %v3831 = vadd.f32 %v3760, %v3804
        %v3832 = vadd.f32 %v3761, %v3804
        %v3833 = vadd.f32 %v3762, %v3804
        %v3834 = vadd.f32 %v3763, %v3804
        %v3835 = vadd.f32 %v3764, %v3804
        %v3836 = vadd.f32 %v3765, %v3804
        %v3837 = vadd.f32 %v3766, %v3804
        %v3838 = vadd.f32 %v3767, %v3804
        %v3839 = vadd.f32 %v3768, %v3804
        %v3840 = vadd.f32 %v3769, %v3804
        %v3841 = vadd.f32 %v3770, %v3804
        %v3842 = vadd.f32 %v3771, %v3804
        %v3843 = vadd.f32 %v3772, %v3804
        %v3844 = vadd.f32 %v3773, %v3804
        %v3845 = vadd.f32 %v3774, %v3804
        %v3846 = vadd.f32 %v3775, %v3804
        %v3847 = vadd.f32 %v3776, %v3804
        %v3848 = vadd.f32 %v3777, %v3804
        %v3849 = vadd.f32 %v3778, %v3804
        %v3850 = vadd.f32 %v3779, %v3804
        %v3851 = vadd.f32 %v3780, %v3804
        %v3852 = vadd.f32 %v3781, %v3804
        %v3853 = vadd.f32 %v3782, %v3804
        %v3854 = vadd.f32 %v3783, %v3804
        %v3855 = vadd.f32 %v3784, %v3804
        %v3856 = vadd.f32 %v3785, %v3804
        %v3857 = vadd.f32 %v3786, %v3804
        %v3858 = vadd.f32 %v3787, %v3804
        %v3859 = vadd.f32 %v3788, %v3804
        %v3860 = vadd.f32 %v3789, %v3804
        %v3861 = vadd.f32 %v3790, %v3804
        %v3862 = vadd.f32 %v3791, %v3804
        %v3863 = vadd.f32 %v3792, %v3804
        %v3864 = vadd.f32 %v3793, %v3804
        %v3865 = vadd.f32 %v3794, %v3804
        %v3866 = vadd.f32 %v3795, %v3804
        %v3867 = vadd.f32 %v3796, %v3804
        %v3868 = vadd.f32 %v3797, %v3804
        %v3869 = vadd.f32 %v3798, %v3804
        %v3870 = vmax.f32 %v3806, 0.0
        %v3871 = vmax.f32 %v3807, 0.0
        %v3872 = vmax.f32 %v3808, 0.0
        %v3873 = vmax.f32 %v3809, 0.0
        %v3874 = vmax.f32 %v3810, 0.0
        %v3875 = vmax.f32 %v3811, 0.0
        %v3876 = vmax.f32 %v3812, 0.0
        %v3877 = vmax.f32 %v3813, 0.0
        %v3878 = vmax.f32 %v3814, 0.0
        %v3879 = vmax.f32 %v3815, 0.0
        %v3880 = vmax.f32 %v3816, 0.0
        %v3881 = vmax.f32 %v3817, 0.0
        %v3882 = vmax.f32 %v3818, 0.0
        %v3883 = vmax.f32 %v3819, 0.0
        %v3884 = vmax.f32 %v3820, 0.0
        %v3885 = vmax.f32 %v3821, 0.0
        %v3886 = vmax.f32 %v3822, 0.0
        %v3887 = vmax.f32 %v3823, 0.0
        %v3888 = vmax.f32 %v3824, 0.0
        %v3889 = vmax.f32 %v3825, 0.0
        %v3890 = vmax.f32 %v3826, 0.0
        %v3891 = vmax.f32 %v3827, 0.0
        %v3892 = vmax.f32 %v3828, 0.0
        %v3893 = vmax.f32 %v3829, 0.0
        %v3894 = vmax.f32 %v3830, 0.0
        %v3895 = vmax.f32 %v3831, 0.0
        %v3896 = vmax.f32 %v3832, 0.0
        %v3897 = vmax.f32 %v3833, 0.0
        %v3898 = vmax.f32 %v3834, 0.0
        %v3899 = vmax.f32 %v3835, 0.0
        %v3900 = vmax.f32 %v3836, 0.0
        %v3901 = vmax.f32 %v3837, 0.0
        %v3902 = vmax.f32 %v3838, 0.0
        %v3903 = vmax.f32 %v3839, 0.0
        %v3904 = vmax.f32 %v3840, 0.0
        %v3905 = vmax.f32 %v3841, 0.0
        %v3906 = vmax.f32 %v3842, 0.0
        %v3907 = vmax.f32 %v3843, 0.0
        %v3908 = vmax.f32 %v3844, 0.0
        %v3909 = vmax.f32 %v3845, 0.0
        %v3910 = vmax.f32 %v3846, 0.0
        %v3911 = vmax.f32 %v3847, 0.0
        %v3912 = vmax.f32 %v3848, 0.0
        %v3913 = vmax.f32 %v3849, 0.0
        %v3914 = vmax.f32 %v3850, 0.0
        %v3915 = vmax.f32 %v3851, 0.0
        %v3916 = vmax.f32 %v3852, 0.0
        %v3917 = vmax.f32 %v3853, 0.0
        %v3918 = vmax.f32 %v3854, 0.0
        %v3919 = vmax.f32 %v3855, 0.0
        %v3920 = vmax.f32 %v3856, 0.0
        %v3921 = vmax.f32 %v3857, 0.0
        %v3922 = vmax.f32 %v3858, 0.0
        %v3923 = vmax.f32 %v3859, 0.0
        %v3924 = vmax.f32 %v3860, 0.0
        %v3925 = vmax.f32 %v3861, 0.0
        %v3926 = vmax.f32 %v3862, 0.0
        %v3927 = vmax.f32 %v3863, 0.0
        %v3928 = vmax.f32 %v3864, 0.0
        %v3929 = vmax.f32 %v3865, 0.0
        %v3930 = vmax.f32 %v3866, 0.0
        %v3931 = vmax.f32 %v3867, 0.0
        %v3932 = vmax.f32 %v3868, 0.0
        %v3933 = vmax.f32 %v3869, 0.0
        %3934 = vst [vmem:[%s265] sm:$0xff] %v3870
        %3935 = vst [vmem:[%s265 + $0x8] sm:$0xff] %v3871
        %3936 = vst [vmem:[%s265 + $0x10] sm:$0xff] %v3872
        %3937 = vst [vmem:[%s265 + $0x18] sm:$0xff] %v3873
        %3938 = vst [vmem:[%s265 + $0x20] sm:$0xff] %v3874
        %3939 = vst [vmem:[%s265 + $0x28] sm:$0xff] %v3875
        %3940 = vst [vmem:[%s265 + $0x30] sm:$0xff] %v3876
        %3941 = vst [vmem:[%s265 + $0x38] sm:$0xff] %v3877
        %3942 = vst [vmem:[%s265 + $0x40] sm:$0xff] %v3878
        %3943 = vst [vmem:[%s265 + $0x48] sm:$0xff] %v3879
        %3944 = vst [vmem:[%s265 + $0x50] sm:$0xff] %v3880
        %3945 = vst [vmem:[%s265 + $0x58] sm:$0xff] %v3881
        %3946 = vst [vmem:[%s265 + $0x60] sm:$0xff] %v3882
        %3947 = vst [vmem:[%s265 + $0x68] sm:$0xff] %v3883
        %3948 = vst [vmem:[%s265 + $0x70] sm:$0xff] %v3884
        %3949 = vst [vmem:[%s265 + $0x78] sm:$0xff] %v3885
        %3950 = vst [vmem:[%s265 + $0x80] sm:$0xff] %v3886
        %3951 = vst [vmem:[%s265 + $0x88] sm:$0xff] %v3887
        %3952 = vst [vmem:[%s265 + $0x90] sm:$0xff] %v3888
        %3953 = vst [vmem:[%s265 + $0x98] sm:$0xff] %v3889
        %3954 = vst [vmem:[%s265 + $0xa0] sm:$0xff] %v3890
        %3955 = vst [vmem:[%s265 + $0xa8] sm:$0xff] %v3891
        %3956 = vst [vmem:[%s265 + $0xb0] sm:$0xff] %v3892
        %3957 = vst [vmem:[%s265 + $0xb8] sm:$0xff] %v3893
        %3958 = vst [vmem:[%s265 + $0xc0] sm:$0xff] %v3894
        %3959 = vst [vmem:[%s265 + $0xc8] sm:$0xff] %v3895
        %3960 = vst [vmem:[%s265 + $0xd0] sm:$0xff] %v3896
        %3961 = vst [vmem:[%s265 + $0xd8] sm:$0xff] %v3897
        %3962 = vst [vmem:[%s265 + $0xe0] sm:$0xff] %v3898
        %3963 = vst [vmem:[%s265 + $0xe8] sm:$0xff] %v3899
        %3964 = vst [vmem:[%s265 + $0xf0] sm:$0xff] %v3900
        %3965 = vst [vmem:[%s265 + $0xf8] sm:$0xff] %v3901
        %3966 = vst [vmem:[%s265 + $0x100] sm:$0xff] %v3902
        %3967 = vst [vmem:[%s265 + $0x108] sm:$0xff] %v3903
        %3968 = vst [vmem:[%s265 + $0x110] sm:$0xff] %v3904
        %3969 = vst [vmem:[%s265 + $0x118] sm:$0xff] %v3905
        %3970 = vst [vmem:[%s265 + $0x120] sm:$0xff] %v3906
        %3971 = vst [vmem:[%s265 + $0x128] sm:$0xff] %v3907
        %3972 = vst [vmem:[%s265 + $0x130] sm:$0xff] %v3908
        %3973 = vst [vmem:[%s265 + $0x138] sm:$0xff] %v3909
        %3974 = vst [vmem:[%s265 + $0x140] sm:$0xff] %v3910
        %3975 = vst [vmem:[%s265 + $0x148] sm:$0xff] %v3911
        %3976 = vst [vmem:[%s265 + $0x150] sm:$0xff] %v3912
        %3977 = vst [vmem:[%s265 + $0x158] sm:$0xff] %v3913
        %3978 = vst [vmem:[%s265 + $0x160] sm:$0xff] %v3914
        %3979 = vst [vmem:[%s265 + $0x168] sm:$0xff] %v3915
        %3980 = vst [vmem:[%s265 + $0x170] sm:$0xff] %v3916
        %3981 = vst [vmem:[%s265 + $0x178] sm:$0xff] %v3917
        %3982 = vst [vmem:[%s265 + $0x180] sm:$0xff] %v3918
        %3983 = vst [vmem:[%s265 + $0x188] sm:$0xff] %v3919
        %3984 = vst [vmem:[%s265 + $0x190] sm:$0xff] %v3920
        %3985 = vst [vmem:[%s265 + $0x198] sm:$0xff] %v3921
        %3986 = vst [vmem:[%s265 + $0x1a0] sm:$0xff] %v3922
        %3987 = vst [vmem:[%s265 + $0x1a8] sm:$0xff] %v3923
        %3988 = vst [vmem:[%s265 + $0x1b0] sm:$0xff] %v3924
        %3989 = vst [vmem:[%s265 + $0x1b8] sm:$0xff] %v3925
        %3990 = vst [vmem:[%s265 + $0x1c0] sm:$0xff] %v3926
        %3991 = vst [vmem:[%s265 + $0x1c8] sm:$0xff] %v3927
        %3992 = vst [vmem:[%s265 + $0x1d0] sm:$0xff] %v3928
        %3993 = vst [vmem:[%s265 + $0x1d8] sm:$0xff] %v3929
        %3994 = vst [vmem:[%s265 + $0x1e0] sm:$0xff] %v3930
        %3995 = vst [vmem:[%s265 + $0x1e8] sm:$0xff] %v3931
        %3996 = vst [vmem:[%s265 + $0x1f0] sm:$0xff] %v3932
        %3997 = vst [vmem:[%s265 + $0x1f8] sm:$0xff] %v3933
      $region40: #{decoder_forward.7} parent=31 // pred_fallthru
        _
      %s3998 = smul.u32 64, %s19
      %p3999 = scmp.lt.s32.totalorder %s3998, 255
      %s4000 = scalar_select %p3999, %s3998, 255
      %p4001 = scmp.lt.s32.totalorder %s20, 0
      %s4002 = scalar_select %p4001, %s20, 0
      %s4003 = sadd.s32 %s4002, %s4000
      %s4004 = smul.addr %s4003, 8
      %s4005 = scalar_lea.vmem %s3, %s4004
      // Predicated region
      $region41: #{decoder_forward.7} parent=31 // pred_check
        %p4006 = pneg %p135
      $region42: #{decoder_forward.7} parent=31 // pred_check_branch
        %4008 = sbr.rel (%p4006) target = $region44
      $region43: #{decoder_forward.7} parent=31 // pred_region
        %s4009 = smul.u32 64, %s19
      $region44: #{decoder_forward.7} parent=31 // pred_fallthru
        _
    $region32: #{decoder_forward.7} parent=5 // pred_fallthru
      _
    %p4010 = scmp.le.s32.totalorder 2, %s9
    // Predicated region
    $region45: #{decoder_forward.7} parent=5 // pred_check
      %p4011 = pneg %p4010
    $region46: #{decoder_forward.7} parent=5 // pred_check_branch
      %4013 = sbr.rel (%p4011) target = $region48
    $region47: #{decoder_forward.7} parent=5 // pred_region
      %s4014 = ssub.s32 %s9, 2
      // Predicated region
      $region49: #{decoder_forward.7} parent=47 // pred_check
        %p4015 = pneg %p141
      $region50: #{decoder_forward.7} parent=47 // pred_check_branch
        %4017 = sbr.rel (%p4015) target = $region52
      $region51: #{decoder_forward.7} parent=47 // pred_region
        %s4018 = smul.u32 64, %s22
        %p4019 = scmp.lt.s32.totalorder %s4018, 255
        %s4020 = scalar_select %p4019, %s4018, 255
        %p4021 = scmp.lt.s32.totalorder %s23, 0
        %s4022 = scalar_select %p4021, %s23, 0
        %s4023 = sadd.s32 %s4022, %s4020
        %s4024 = smul.addr %s4023, 8
        %s4025 = scalar_lea.vmem %s3, %s4024
      $region52: #{decoder_forward.7} parent=47 // pred_fallthru
        _
    $region48: #{decoder_forward.7} parent=5 // pred_fallthru
      _
  $region6: #{decoder_forward.7} parent=0 // loop_footer
    %s13 = sadd.s32 1, %s9
  $region7: #{decoder_forward.7} parent=0 // loop_footer_branch
    %8 = sbr.rel target = $region3
  $region8: #{decoder_forward.7} parent=0 // loop_exit
    _

</llo_original>
